<compile_context>
chip_gen: v7x
topology: tpu7x:2x2x1
jax: 0.10.0
libtpu: 0.0.40
codegen_flags: <defaults>
</compile_context>

<pallas_src>
import jax
import jax.numpy as jnp
from jax.experimental import pallas as pl
from jax.experimental.pallas import tpu as pltpu


# ----------------------------------------------------------------------------
# Padded-flat layout helpers (XLA glue, one pass each).
# An activation of spatial size (h, w) is stored as (B, C, (h+2)*(w+2)): the
# spatially zero-padded image, row-major flattened, channels in sublanes and the
# flattened spatial extent in lanes.
# ----------------------------------------------------------------------------
def _pad_flat(x):
    """(B, C, h, w) -> (B, C, (h+2)*(w+2)) zero-padded, row-major flattened."""
    B, C, h, w = x.shape
    xp = jnp.pad(x, ((0, 0), (0, 0), (1, 1), (1, 1)))
    return xp.reshape(B, C, (h + 2) * (w + 2))


def _interior(x_flat, h, w):
    """(B, C, (h+2)*(w+2)) padded-flat -> (B, C, h, w) interior pixels."""
    B, C, _ = x_flat.shape
    return x_flat.reshape(B, C, h + 2, w + 2)[:, :, 1:h + 1, 1:w + 1]


def _subsample2(x_flat, h, w):
    """Keep every 2nd pixel == applying the preceding 3x3 conv at stride 2."""
    return _pad_flat(_interior(x_flat, h, w)[:, :, ::2, ::2])


def _upsample2(x_flat, h, w):
    """2x nearest-neighbour upsample (padded-flat in / out)."""
    y = _interior(x_flat, h, w)
    B, C = y.shape[:2]
    y = jnp.broadcast_to(y[:, :, :, None, :, None], (B, C, h, 2, w, 2))
    return _pad_flat(y.reshape(B, C, 2 * h, 2 * w))


# ----------------------------------------------------------------------------
# Pallas kernel: a fused chain of 3x3 stride-1 convs (bias + ELU / disparity head),
# operating on padded-flat tiles.  One grid step = one image.  In-chain
# intermediates live in VMEM scratch and never touch HBM.
# ----------------------------------------------------------------------------
def _make_conv_chain_kernel(dims, acts, H, W):
    """dims: ((Cin, Cout), ...) per conv; acts: ('elu'|'disp', ...) per conv."""
    Hp, Wp = H + 2, W + 2
    S = Hp * Wp
    span = (H - 1) * Wp + W          # contiguous run of output positions (padded-flat)
    L = len(dims)

    def kernel(*refs):
        # refs = x, mask, (w0, b0), (w1, b1), ..., out, scratch_0, ...
        x_ref, mask_ref = refs[0], refs[1]
        w_refs = [refs[2 + 2 * l] for l in range(L)]
        b_refs = [refs[3 + 2 * l] for l in range(L)]
        o_ref = refs[2 + 2 * L]
        scratch_refs = refs[3 + 2 * L:]

        mask = mask_ref[...]                               # (1, span) f32, 0 on pad cols

        src = x_ref                                        # (1, Cin, S) bf16 block
        for l in range(L):
            cin, cout = dims[l]
            acc = jnp.zeros((cout, span), jnp.float32)
            # 9 taps: each is one lane-dense (Cout, Cin) @ (Cin, span) MXU matmul on a
            # contiguous slice of the padded-flat input -- no im2col materialization.
            for ki in range(3):
                for kj in range(3):
                    off = ki * Wp + kj
                    xs = src[0, :, off:off + span]         # (cin, span) bf16
                    wt = w_refs[l][ki * 3 + kj]            # (cout, cin) bf16
                    acc = acc + jnp.dot(wt, xs, preferred_element_type=jnp.float32)

            acc = acc + b_refs[l][...]                     # (cout, 1) f32 bias, broadcast
            if acts[l] == "elu":
                # ELU(alpha=1), computed in f32
                acc = jnp.where(acc > 0, acc, jnp.exp(jnp.minimum(acc, 0.0)) - 1.0)
            elif acts[l] == "disp":
                # monodepth disparity head: 0.3 * sigmoid(x)
                acc = 0.3 * jax.nn.sigmoid(acc)
            # zero the positions that fall on the spatial zero-pad columns so the next
            # conv (in-chain or downstream) sees correct 'same' padding.
            acc = acc * mask

            dst = o_ref if l == L - 1 else scratch_refs[l]
            dst[0, :, :] = jnp.zeros((cout, S), dst.dtype)                 # pad ring = 0
            dst[0, :, Wp + 1:Wp + 1 + span] = acc.astype(dst.dtype)        # lane-dense
            src = dst

    return kernel


def conv_chain(x_flat, layers, acts, H, W, out_dtype=jnp.bfloat16):
    """Run a fused chain of 3x3 stride-1 convs on padded-flat activations.

    x_flat : (B, Cin, (H+2)*(W+2)) bf16 padded-flat activations.
    layers : list of (w (9, Cout, Cin) bf16, b (Cout, 1) f32).
    Returns (B, Cout_last, (H+2)*(W+2)) padded-flat output.
    """
    B, cin0, S = x_flat.shape
    Hp, Wp = H + 2, W + 2
    assert S == Hp * Wp, (S, Hp, Wp)
    span = (H - 1) * Wp + W
    L = len(layers)
    dims = tuple((w.shape[2], w.shape[1]) for (w, _) in layers)
    assert dims[0][0] == cin0, (dims, cin0)
    c_out = dims[-1][1]

    # 0/1 mask over the contiguous output span: 0 where the flat position lands on a
    # pad column.  Constant under jit (folded), tiny vs. the activation streams.
    mask = ((jnp.arange(span, dtype=jnp.int32) % Wp) < W)
    mask = mask.astype(jnp.float32).reshape(1, span)

    in_specs = [
        pl.BlockSpec((1, cin0, S), lambda b: (b, 0, 0)),   # one whole image per step
        pl.BlockSpec((1, span), lambda b: (0, 0)),         # pad-column mask (resident)
    ]
    operands = [x_flat, mask]
    for w, bias in layers:
        in_specs.append(pl.BlockSpec(w.shape, lambda b: (0, 0, 0)))    # (9, Cout, Cin)
        in_specs.append(pl.BlockSpec(bias.shape, lambda b: (0, 0)))    # (Cout, 1)
        operands += [w, bias]

    # in-chain intermediates stay in VMEM (bf16, padded-flat)
    scratch_shapes = [pltpu.VMEM((1, dims[l][1], S), jnp.bfloat16) for l in range(L - 1)]

    kernel = _make_conv_chain_kernel(dims, acts, H, W)

    return pl.pallas_call(
        kernel,
        out_shape=jax.ShapeDtypeStruct((B, c_out, S), out_dtype),
        grid_spec=pltpu.PrefetchScalarGridSpec(
            num_scalar_prefetch=0,
            grid=(B,),                               # batch is the parallel axis; for
            in_specs=in_specs,                       # large images add row-blocking to
            out_specs=pl.BlockSpec((1, c_out, S), lambda b: (b, 0, 0)),  # feed v7x's 2 TCs
            scratch_shapes=scratch_shapes,
        ),
        compiler_params=pltpu.CompilerParams(
            dimension_semantics=("parallel",),
            vmem_limit_bytes=64 * 1024 * 1024,       # explicit budget (v7x: 64 MiB VMEM)
        ),
    )(*operands)


# ----------------------------------------------------------------------------
# Deterministic parameter construction (reduced-width MonocularVGG16 replica).
# Weights stored as (9, Cout, Cin) bf16 (tap-major), bias as (Cout, 1) f32.
# ----------------------------------------------------------------------------
def _init_conv(key, cin, cout):
    kw_, kb_ = jax.random.split(key)
    fan_in = 9 * cin
    w = jax.random.normal(kw_, (9, cout, cin), jnp.float32) / jnp.sqrt(fan_in)
    b = 0.01 * jax.random.normal(kb_, (cout, 1), jnp.float32)
    return w.astype(jnp.bfloat16), b


def init_params(key):
    keys = jax.random.split(key, 9)
    p = {}
    p["enc1a"] = _init_conv(keys[0], 3, 8)     # full res
    p["enc1b"] = _init_conv(keys[1], 8, 8)     # full res, then /2 subsample (== stride 2)
    p["enc2a"] = _init_conv(keys[2], 8, 16)    # H/2
    p["enc2b"] = _init_conv(keys[3], 16, 16)   # H/2, then /2 subsample (== stride 2)
    p["dec2a"] = _init_conv(keys[4], 16, 8)    # H/2 (after upsample)
    p["dec2b"] = _init_conv(keys[5], 16, 8)    # H/2, skip-concat input (8 + 8)
    p["dec1a"] = _init_conv(keys[6], 8, 8)     # full res
    p["dec1b"] = _init_conv(keys[7], 8, 8)     # full res
    p["disp1"] = _init_conv(keys[8], 8, 2)     # disparity head: 0.3 * sigmoid, 2 ch
    return p


# ----------------------------------------------------------------------------
# DistillModel.forward: run the monocular depth net, return disp_ests[0] (NCHW).
# ----------------------------------------------------------------------------
@jax.jit
def distill_model_forward(params, input_img_nchw):
    x = input_img_nchw.astype(jnp.float32)
    B, C, H, W = x.shape
    assert H % 4 == 0 and W % 4 == 0, (H, W)
    H2, W2, H4, W4 = H // 2, W // 2, H // 4, W // 4

    xf = _pad_flat(x).astype(jnp.bfloat16)                               # bf16 streams

    # encoder block 1 (fused enc1a+enc1b), stride-2 via exact subsample
    e1 = conv_chain(xf, [params["enc1a"], params["enc1b"]], ("elu", "elu"), H, W)
    e1d = _subsample2(e1, H, W)                                          # (B, 8, ...) H/2

    # encoder block 2 (fused enc2a+enc2b), stride-2 via exact subsample
    e2 = conv_chain(e1d, [params["enc2a"], params["enc2b"]], ("elu", "elu"), H2, W2)
    e2d = _subsample2(e2, H2, W2)                                        # (B, 16, ...) H/4

    # decoder block 2: upsample to H/2, conv, skip-concat with e1d, conv
    u2 = _upsample2(e2d, H4, W4)                                         # (B, 16, ...) H/2
    d2a = conv_chain(u2, [params["dec2a"]], ("elu",), H2, W2)            # 16 -> 8
    d2in = jnp.concatenate([d2a, e1d], axis=1)                           # 8 + 8 channels
    d2 = conv_chain(d2in, [params["dec2b"]], ("elu",), H2, W2)           # 16 -> 8

    # decoder block 1 + disparity head: fused dec1a+dec1b+disp1 at full resolution
    u1 = _upsample2(d2, H2, W2)                                          # (B, 8, ...) H
    disp_flat = conv_chain(
        u1,
        [params["dec1a"], params["dec1b"], params["disp1"]],
        ("elu", "elu", "disp"),
        H, W,
        out_dtype=jnp.float32,                                           # final output f32
    )

    # padded-flat -> NCHW interior; disp_ests[0] of the PyTorch module
    return _interior(disp_flat, H, W)


# ----------------------------------------------------------------------------
# Pure-JAX f32 reference of the same replica network (validation only).
# ----------------------------------------------------------------------------
def _reference_forward(params, x):
    def conv(h, p, act):
        w, b = p
        # (9, Cout, Cin) tap-major -> OIHW
        w4 = w.astype(jnp.float32).reshape(3, 3, w.shape[1], w.shape[2]).transpose(2, 3, 0, 1)
        y = jax.lax.conv_general_dilated(
            h, w4, window_strides=(1, 1), padding="SAME",
            dimension_numbers=("NCHW", "OIHW", "NCHW"))
        y = y + b.astype(jnp.float32).reshape(1, -1, 1, 1)
        if act == "elu":
            return jnp.where(y > 0, y, jnp.exp(jnp.minimum(y, 0.0)) - 1.0)
        return 0.3 * jax.nn.sigmoid(y)

    up = lambda t: jnp.repeat(jnp.repeat(t, 2, axis=2), 2, axis=3)

    e1 = conv(conv(x, params["enc1a"], "elu"), params["enc1b"], "elu")
    e1d = e1[:, :, ::2, ::2]
    e2 = conv(conv(e1d, params["enc2a"], "elu"), params["enc2b"], "elu")
    e2d = e2[:, :, ::2, ::2]
    d2a = conv(up(e2d), params["dec2a"], "elu")
    d2 = conv(jnp.concatenate([d2a, e1d], axis=1), params["dec2b"], "elu")
    d1 = conv(conv(up(d2), params["dec1a"], "elu"), params["dec1b"], "elu")
    return conv(d1, params["disp1"], "disp")


if __name__ == "__main__":
    key = jax.random.PRNGKey(0)
    k_param, k_img = jax.random.split(key)

    params = init_params(k_param)
    input_img = jax.random.uniform(k_img, (2, 3, 16, 16), jnp.float32)   # small NCHW batch

    disp0 = jax.block_until_ready(distill_model_forward(params, input_img))

    assert disp0.shape == (2, 2, 16, 16), disp0.shape
    assert bool(jnp.all(jnp.isfinite(disp0)))
    assert bool(jnp.all(disp0 >= 0.0)) and bool(jnp.all(disp0 <= 0.3))

    # bf16 kernel path vs. f32 XLA reference (loose tolerance for bf16 streams)
    ref = _reference_forward(params, input_img.astype(jnp.float32))
    err = float(jnp.max(jnp.abs(disp0 - ref)))
    assert err < 2e-2, f"max |pallas - reference| = {err}"

    print("KERNEL_OK")
</pallas_src>

<mosaic_0001>
module attributes {stable_mosaic.version = 11 : i64} {
  func.func @kernel(%arg0: i32, %arg1: memref<1x3x324xbf16, #tpu.memory_space<vmem>>, %arg2: memref<1x286xf32, #tpu.memory_space<vmem>>, %arg3: memref<9x8x3xbf16, #tpu.memory_space<vmem>>, %arg4: memref<8x1xf32, #tpu.memory_space<vmem>>, %arg5: memref<9x8x8xbf16, #tpu.memory_space<vmem>>, %arg6: memref<8x1xf32, #tpu.memory_space<vmem>>, %arg7: memref<1x8x324xbf16, #tpu.memory_space<vmem>>, %arg8: memref<1x8x324xbf16, #tpu.memory_space<vmem>>) attributes {dimension_semantics = [#tpu.dimension_semantics<parallel>], iteration_bounds = array<i64: 2>, scalar_prefetch = 0 : i64, scratch_operands = 1 : i64, tpu.core_type = #tpu.core_type<tc>, window_params = [{transform_indices = @transform_0, window_bounds = array<i64: 1, 3, 324>}, {pipeline_mode = #tpu.pipeline_mode<synchronous>, transform_indices = @transform_1, window_bounds = array<i64: 1, 286>}, {pipeline_mode = #tpu.pipeline_mode<synchronous>, transform_indices = @transform_2, window_bounds = array<i64: 9, 8, 3>}, {pipeline_mode = #tpu.pipeline_mode<synchronous>, transform_indices = @transform_3, window_bounds = array<i64: 8, 1>}, {pipeline_mode = #tpu.pipeline_mode<synchronous>, transform_indices = @transform_4, window_bounds = array<i64: 9, 8, 8>}, {pipeline_mode = #tpu.pipeline_mode<synchronous>, transform_indices = @transform_5, window_bounds = array<i64: 8, 1>}, {transform_indices = @transform_6, window_bounds = array<i64: 1, 8, 324>}]} {
    %c0 = arith.constant 0 : index
    %c0_0 = arith.constant 0 : index
    %0 = vector.load %arg2[%c0, %c0_0] : memref<1x286xf32, #tpu.memory_space<vmem>>, vector<1x286xf32>
    %cst = arith.constant 0.000000e+00 : f32
    %1 = vector.broadcast %cst : f32 to vector<8x286xf32>
    %c0_1 = arith.constant 0 : index
    %c0_2 = arith.constant 0 : index
    %c0_3 = arith.constant 0 : index
    %2 = vector.load %arg1[%c0_1, %c0_2, %c0_3] : memref<1x3x324xbf16, #tpu.memory_space<vmem>>, vector<1x3x286xbf16>
    %3 = vector.shape_cast %2 : vector<1x3x286xbf16> to vector<3x286xbf16>
    %c0_4 = arith.constant 0 : index
    %c0_5 = arith.constant 0 : index
    %c0_6 = arith.constant 0 : index
    %4 = vector.load %arg3[%c0_4, %c0_5, %c0_6] : memref<9x8x3xbf16, #tpu.memory_space<vmem>>, vector<1x8x3xbf16>
    %5 = vector.shape_cast %4 : vector<1x8x3xbf16> to vector<8x3xbf16>
    %cst_7 = arith.constant dense<0.000000e+00> : vector<8x286xf32>
    %6 = tpu.matmul %5, %3, %cst_7 {dimension_numbers = #tpu.dot_dimension_numbers<[1], [0], [0], [1], [0, 0, 1, 1], [], []>} : vector<8x3xbf16>, vector<3x286xbf16>, vector<8x286xf32> -> vector<8x286xf32>
    %7 = arith.addf %1, %6 : vector<8x286xf32>
    %c0_8 = arith.constant 0 : index
    %c0_9 = arith.constant 0 : index
    %c1 = arith.constant 1 : index
    %8 = vector.load %arg1[%c0_8, %c0_9, %c1] : memref<1x3x324xbf16, #tpu.memory_space<vmem>>, vector<1x3x286xbf16>
    %9 = vector.shape_cast %8 : vector<1x3x286xbf16> to vector<3x286xbf16>
    %c1_10 = arith.constant 1 : index
    %c0_11 = arith.constant 0 : index
    %c0_12 = arith.constant 0 : index
    %10 = vector.load %arg3[%c1_10, %c0_11, %c0_12] : memref<9x8x3xbf16, #tpu.memory_space<vmem>>, vector<1x8x3xbf16>
    %11 = vector.shape_cast %10 : vector<1x8x3xbf16> to vector<8x3xbf16>
    %cst_13 = arith.constant dense<0.000000e+00> : vector<8x286xf32>
    %12 = tpu.matmul %11, %9, %cst_13 {dimension_numbers = #tpu.dot_dimension_numbers<[1], [0], [0], [1], [0, 0, 1, 1], [], []>} : vector<8x3xbf16>, vector<3x286xbf16>, vector<8x286xf32> -> vector<8x286xf32>
    %13 = arith.addf %7, %12 : vector<8x286xf32>
    %c0_14 = arith.constant 0 : index
    %c0_15 = arith.constant 0 : index
    %c2 = arith.constant 2 : index
    %14 = vector.load %arg1[%c0_14, %c0_15, %c2] : memref<1x3x324xbf16, #tpu.memory_space<vmem>>, vector<1x3x286xbf16>
    %15 = vector.shape_cast %14 : vector<1x3x286xbf16> to vector<3x286xbf16>
    %c2_16 = arith.constant 2 : index
    %c0_17 = arith.constant 0 : index
    %c0_18 = arith.constant 0 : index
    %16 = vector.load %arg3[%c2_16, %c0_17, %c0_18] : memref<9x8x3xbf16, #tpu.memory_space<vmem>>, vector<1x8x3xbf16>
    %17 = vector.shape_cast %16 : vector<1x8x3xbf16> to vector<8x3xbf16>
    %cst_19 = arith.constant dense<0.000000e+00> : vector<8x286xf32>
    %18 = tpu.matmul %17, %15, %cst_19 {dimension_numbers = #tpu.dot_dimension_numbers<[1], [0], [0], [1], [0, 0, 1, 1], [], []>} : vector<8x3xbf16>, vector<3x286xbf16>, vector<8x286xf32> -> vector<8x286xf32>
    %19 = arith.addf %13, %18 : vector<8x286xf32>
    %c0_20 = arith.constant 0 : index
    %c0_21 = arith.constant 0 : index
    %c18 = arith.constant 18 : index
    %20 = vector.load %arg1[%c0_20, %c0_21, %c18] : memref<1x3x324xbf16, #tpu.memory_space<vmem>>, vector<1x3x286xbf16>
    %21 = vector.shape_cast %20 : vector<1x3x286xbf16> to vector<3x286xbf16>
    %c3 = arith.constant 3 : index
    %c0_22 = arith.constant 0 : index
    %c0_23 = arith.constant 0 : index
    %22 = vector.load %arg3[%c3, %c0_22, %c0_23] : memref<9x8x3xbf16, #tpu.memory_space<vmem>>, vector<1x8x3xbf16>
    %23 = vector.shape_cast %22 : vector<1x8x3xbf16> to vector<8x3xbf16>
    %cst_24 = arith.constant dense<0.000000e+00> : vector<8x286xf32>
    %24 = tpu.matmul %23, %21, %cst_24 {dimension_numbers = #tpu.dot_dimension_numbers<[1], [0], [0], [1], [0, 0, 1, 1], [], []>} : vector<8x3xbf16>, vector<3x286xbf16>, vector<8x286xf32> -> vector<8x286xf32>
    %25 = arith.addf %19, %24 : vector<8x286xf32>
    %c0_25 = arith.constant 0 : index
    %c0_26 = arith.constant 0 : index
    %c19 = arith.constant 19 : index
    %26 = vector.load %arg1[%c0_25, %c0_26, %c19] : memref<1x3x324xbf16, #tpu.memory_space<vmem>>, vector<1x3x286xbf16>
    %27 = vector.shape_cast %26 : vector<1x3x286xbf16> to vector<3x286xbf16>
    %c4 = arith.constant 4 : index
    %c0_27 = arith.constant 0 : index
    %c0_28 = arith.constant 0 : index
    %28 = vector.load %arg3[%c4, %c0_27, %c0_28] : memref<9x8x3xbf16, #tpu.memory_space<vmem>>, vector<1x8x3xbf16>
    %29 = vector.shape_cast %28 : vector<1x8x3xbf16> to vector<8x3xbf16>
    %cst_29 = arith.constant dense<0.000000e+00> : vector<8x286xf32>
    %30 = tpu.matmul %29, %27, %cst_29 {dimension_numbers = #tpu.dot_dimension_numbers<[1], [0], [0], [1], [0, 0, 1, 1], [], []>} : vector<8x3xbf16>, vector<3x286xbf16>, vector<8x286xf32> -> vector<8x286xf32>
    %31 = arith.addf %25, %30 : vector<8x286xf32>
    %c0_30 = arith.constant 0 : index
    %c0_31 = arith.constant 0 : index
    %c20 = arith.constant 20 : index
    %32 = vector.load %arg1[%c0_30, %c0_31, %c20] : memref<1x3x324xbf16, #tpu.memory_space<vmem>>, vector<1x3x286xbf16>
    %33 = vector.shape_cast %32 : vector<1x3x286xbf16> to vector<3x286xbf16>
    %c5 = arith.constant 5 : index
    %c0_32 = arith.constant 0 : index
    %c0_33 = arith.constant 0 : index
    %34 = vector.load %arg3[%c5, %c0_32, %c0_33] : memref<9x8x3xbf16, #tpu.memory_space<vmem>>, vector<1x8x3xbf16>
    %35 = vector.shape_cast %34 : vector<1x8x3xbf16> to vector<8x3xbf16>
    %cst_34 = arith.constant dense<0.000000e+00> : vector<8x286xf32>
    %36 = tpu.matmul %35, %33, %cst_34 {dimension_numbers = #tpu.dot_dimension_numbers<[1], [0], [0], [1], [0, 0, 1, 1], [], []>} : vector<8x3xbf16>, vector<3x286xbf16>, vector<8x286xf32> -> vector<8x286xf32>
    %37 = arith.addf %31, %36 : vector<8x286xf32>
    %c0_35 = arith.constant 0 : index
    %c0_36 = arith.constant 0 : index
    %c36 = arith.constant 36 : index
    %38 = vector.load %arg1[%c0_35, %c0_36, %c36] : memref<1x3x324xbf16, #tpu.memory_space<vmem>>, vector<1x3x286xbf16>
    %39 = vector.shape_cast %38 : vector<1x3x286xbf16> to vector<3x286xbf16>
    %c6 = arith.constant 6 : index
    %c0_37 = arith.constant 0 : index
    %c0_38 = arith.constant 0 : index
    %40 = vector.load %arg3[%c6, %c0_37, %c0_38] : memref<9x8x3xbf16, #tpu.memory_space<vmem>>, vector<1x8x3xbf16>
    %41 = vector.shape_cast %40 : vector<1x8x3xbf16> to vector<8x3xbf16>
    %cst_39 = arith.constant dense<0.000000e+00> : vector<8x286xf32>
    %42 = tpu.matmul %41, %39, %cst_39 {dimension_numbers = #tpu.dot_dimension_numbers<[1], [0], [0], [1], [0, 0, 1, 1], [], []>} : vector<8x3xbf16>, vector<3x286xbf16>, vector<8x286xf32> -> vector<8x286xf32>
    %43 = arith.addf %37, %42 : vector<8x286xf32>
    %c0_40 = arith.constant 0 : index
    %c0_41 = arith.constant 0 : index
    %c37 = arith.constant 37 : index
    %44 = vector.load %arg1[%c0_40, %c0_41, %c37] : memref<1x3x324xbf16, #tpu.memory_space<vmem>>, vector<1x3x286xbf16>
    %45 = vector.shape_cast %44 : vector<1x3x286xbf16> to vector<3x286xbf16>
    %c7 = arith.constant 7 : index
    %c0_42 = arith.constant 0 : index
    %c0_43 = arith.constant 0 : index
    %46 = vector.load %arg3[%c7, %c0_42, %c0_43] : memref<9x8x3xbf16, #tpu.memory_space<vmem>>, vector<1x8x3xbf16>
    %47 = vector.shape_cast %46 : vector<1x8x3xbf16> to vector<8x3xbf16>
    %cst_44 = arith.constant dense<0.000000e+00> : vector<8x286xf32>
    %48 = tpu.matmul %47, %45, %cst_44 {dimension_numbers = #tpu.dot_dimension_numbers<[1], [0], [0], [1], [0, 0, 1, 1], [], []>} : vector<8x3xbf16>, vector<3x286xbf16>, vector<8x286xf32> -> vector<8x286xf32>
    %49 = arith.addf %43, %48 : vector<8x286xf32>
    %c0_45 = arith.constant 0 : index
    %c0_46 = arith.constant 0 : index
    %c38 = arith.constant 38 : index
    %50 = vector.load %arg1[%c0_45, %c0_46, %c38] : memref<1x3x324xbf16, #tpu.memory_space<vmem>>, vector<1x3x286xbf16>
    %51 = vector.shape_cast %50 : vector<1x3x286xbf16> to vector<3x286xbf16>
    %c8 = arith.constant 8 : index
    %c0_47 = arith.constant 0 : index
    %c0_48 = arith.constant 0 : index
    %52 = vector.load %arg3[%c8, %c0_47, %c0_48] : memref<9x8x3xbf16, #tpu.memory_space<vmem>>, vector<1x8x3xbf16>
    %53 = vector.shape_cast %52 : vector<1x8x3xbf16> to vector<8x3xbf16>
    %cst_49 = arith.constant dense<0.000000e+00> : vector<8x286xf32>
    %54 = tpu.matmul %53, %51, %cst_49 {dimension_numbers = #tpu.dot_dimension_numbers<[1], [0], [0], [1], [0, 0, 1, 1], [], []>} : vector<8x3xbf16>, vector<3x286xbf16>, vector<8x286xf32> -> vector<8x286xf32>
    %55 = arith.addf %49, %54 : vector<8x286xf32>
    %c0_50 = arith.constant 0 : index
    %c0_51 = arith.constant 0 : index
    %56 = vector.load %arg4[%c0_50, %c0_51] : memref<8x1xf32, #tpu.memory_space<vmem>>, vector<8x1xf32>
    %57 = vector.broadcast %56 : vector<8x1xf32> to vector<8x286xf32>
    %58 = arith.addf %55, %57 : vector<8x286xf32>
    %cst_52 = arith.constant 0.000000e+00 : f32
    %59 = vector.broadcast %cst_52 : f32 to vector<8x286xf32>
    %60 = arith.cmpf ogt, %58, %59 : vector<8x286xf32>
    %cst_53 = arith.constant 0.000000e+00 : f32
    %61 = vector.broadcast %cst_53 : f32 to vector<8x286xf32>
    %62 = arith.minimumf %58, %61 : vector<8x286xf32>
    %63 = math.exp %62 : vector<8x286xf32>
    %cst_54 = arith.constant 1.000000e+00 : f32
    %64 = vector.broadcast %cst_54 : f32 to vector<8x286xf32>
    %65 = arith.subf %63, %64 : vector<8x286xf32>
    %66 = arith.select %60, %58, %65 : vector<8x286xi1>, vector<8x286xf32>
    %67 = vector.broadcast %0 : vector<1x286xf32> to vector<8x286xf32>
    %68 = arith.mulf %66, %67 : vector<8x286xf32>
    %cst_55 = arith.constant 0.000000e+00 : bf16
    %69 = vector.broadcast %cst_55 : bf16 to vector<8x324xbf16>
    %c0_56 = arith.constant 0 : index
    %c0_57 = arith.constant 0 : index
    %c0_58 = arith.constant 0 : index
    %70 = vector.load %arg8[%c0_56, %c0_57, %c0_58] : memref<1x8x324xbf16, #tpu.memory_space<vmem>>, vector<1x8x324xbf16>
    %71 = vector.shape_cast %70 : vector<1x8x324xbf16> to vector<8x324xbf16>
    %72 = vector.shape_cast %69 : vector<8x324xbf16> to vector<1x8x324xbf16>
    tpu.vector_store %arg8[%c0_56, %c0_57, %c0_58], %72 {strides = array<i32>} : memref<1x8x324xbf16, #tpu.memory_space<vmem>>, vector<1x8x324xbf16>,
    %73 = arith.truncf %68 : vector<8x286xf32> to vector<8x286xbf16>
    %c0_59 = arith.constant 0 : index
    %c0_60 = arith.constant 0 : index
    %c19_61 = arith.constant 19 : index
    %74 = vector.load %arg8[%c0_59, %c0_60, %c19_61] : memref<1x8x324xbf16, #tpu.memory_space<vmem>>, vector<1x8x286xbf16>
    %75 = vector.shape_cast %74 : vector<1x8x286xbf16> to vector<8x286xbf16>
    %76 = vector.shape_cast %73 : vector<8x286xbf16> to vector<1x8x286xbf16>
    tpu.vector_store %arg8[%c0_59, %c0_60, %c19_61], %76 {strides = array<i32>} : memref<1x8x324xbf16, #tpu.memory_space<vmem>>, vector<1x8x286xbf16>,
    %cst_62 = arith.constant 0.000000e+00 : f32
    %77 = vector.broadcast %cst_62 : f32 to vector<8x286xf32>
    %c0_63 = arith.constant 0 : index
    %c0_64 = arith.constant 0 : index
    %c0_65 = arith.constant 0 : index
    %78 = vector.load %arg8[%c0_63, %c0_64, %c0_65] : memref<1x8x324xbf16, #tpu.memory_space<vmem>>, vector<1x8x286xbf16>
    %79 = vector.shape_cast %78 : vector<1x8x286xbf16> to vector<8x286xbf16>
    %c0_66 = arith.constant 0 : index
    %c0_67 = arith.constant 0 : index
    %c0_68 = arith.constant 0 : index
    %80 = vector.load %arg5[%c0_66, %c0_67, %c0_68] : memref<9x8x8xbf16, #tpu.memory_space<vmem>>, vector<1x8x8xbf16>
    %81 = vector.shape_cast %80 : vector<1x8x8xbf16> to vector<8x8xbf16>
    %cst_69 = arith.constant dense<0.000000e+00> : vector<8x286xf32>
    %82 = tpu.matmul %81, %79, %cst_69 {dimension_numbers = #tpu.dot_dimension_numbers<[1], [0], [0], [1], [0, 0, 1, 1], [], []>} : vector<8x8xbf16>, vector<8x286xbf16>, vector<8x286xf32> -> vector<8x286xf32>
    %83 = arith.addf %77, %82 : vector<8x286xf32>
    %c0_70 = arith.constant 0 : index
    %c0_71 = arith.constant 0 : index
    %c1_72 = arith.constant 1 : index
    %84 = vector.load %arg8[%c0_70, %c0_71, %c1_72] : memref<1x8x324xbf16, #tpu.memory_space<vmem>>, vector<1x8x286xbf16>
    %85 = vector.shape_cast %84 : vector<1x8x286xbf16> to vector<8x286xbf16>
    %c1_73 = arith.constant 1 : index
    %c0_74 = arith.constant 0 : index
    %c0_75 = arith.constant 0 : index
    %86 = vector.load %arg5[%c1_73, %c0_74, %c0_75] : memref<9x8x8xbf16, #tpu.memory_space<vmem>>, vector<1x8x8xbf16>
    %87 = vector.shape_cast %86 : vector<1x8x8xbf16> to vector<8x8xbf16>
    %cst_76 = arith.constant dense<0.000000e+00> : vector<8x286xf32>
    %88 = tpu.matmul %87, %85, %cst_76 {dimension_numbers = #tpu.dot_dimension_numbers<[1], [0], [0], [1], [0, 0, 1, 1], [], []>} : vector<8x8xbf16>, vector<8x286xbf16>, vector<8x286xf32> -> vector<8x286xf32>
    %89 = arith.addf %83, %88 : vector<8x286xf32>
    %c0_77 = arith.constant 0 : index
    %c0_78 = arith.constant 0 : index
    %c2_79 = arith.constant 2 : index
    %90 = vector.load %arg8[%c0_77, %c0_78, %c2_79] : memref<1x8x324xbf16, #tpu.memory_space<vmem>>, vector<1x8x286xbf16>
    %91 = vector.shape_cast %90 : vector<1x8x286xbf16> to vector<8x286xbf16>
    %c2_80 = arith.constant 2 : index
    %c0_81 = arith.constant 0 : index
    %c0_82 = arith.constant 0 : index
    %92 = vector.load %arg5[%c2_80, %c0_81, %c0_82] : memref<9x8x8xbf16, #tpu.memory_space<vmem>>, vector<1x8x8xbf16>
    %93 = vector.shape_cast %92 : vector<1x8x8xbf16> to vector<8x8xbf16>
    %cst_83 = arith.constant dense<0.000000e+00> : vector<8x286xf32>
    %94 = tpu.matmul %93, %91, %cst_83 {dimension_numbers = #tpu.dot_dimension_numbers<[1], [0], [0], [1], [0, 0, 1, 1], [], []>} : vector<8x8xbf16>, vector<8x286xbf16>, vector<8x286xf32> -> vector<8x286xf32>
    %95 = arith.addf %89, %94 : vector<8x286xf32>
    %c0_84 = arith.constant 0 : index
    %c0_85 = arith.constant 0 : index
    %c18_86 = arith.constant 18 : index
    %96 = vector.load %arg8[%c0_84, %c0_85, %c18_86] : memref<1x8x324xbf16, #tpu.memory_space<vmem>>, vector<1x8x286xbf16>
    %97 = vector.shape_cast %96 : vector<1x8x286xbf16> to vector<8x286xbf16>
    %c3_87 = arith.constant 3 : index
    %c0_88 = arith.constant 0 : index
    %c0_89 = arith.constant 0 : index
    %98 = vector.load %arg5[%c3_87, %c0_88, %c0_89] : memref<9x8x8xbf16, #tpu.memory_space<vmem>>, vector<1x8x8xbf16>
    %99 = vector.shape_cast %98 : vector<1x8x8xbf16> to vector<8x8xbf16>
    %cst_90 = arith.constant dense<0.000000e+00> : vector<8x286xf32>
    %100 = tpu.matmul %99, %97, %cst_90 {dimension_numbers = #tpu.dot_dimension_numbers<[1], [0], [0], [1], [0, 0, 1, 1], [], []>} : vector<8x8xbf16>, vector<8x286xbf16>, vector<8x286xf32> -> vector<8x286xf32>
    %101 = arith.addf %95, %100 : vector<8x286xf32>
    %c0_91 = arith.constant 0 : index
    %c0_92 = arith.constant 0 : index
    %c19_93 = arith.constant 19 : index
    %102 = vector.load %arg8[%c0_91, %c0_92, %c19_93] : memref<1x8x324xbf16, #tpu.memory_space<vmem>>, vector<1x8x286xbf16>
    %103 = vector.shape_cast %102 : vector<1x8x286xbf16> to vector<8x286xbf16>
    %c4_94 = arith.constant 4 : index
    %c0_95 = arith.constant 0 : index
    %c0_96 = arith.constant 0 : index
    %104 = vector.load %arg5[%c4_94, %c0_95, %c0_96] : memref<9x8x8xbf16, #tpu.memory_space<vmem>>, vector<1x8x8xbf16>
    %105 = vector.shape_cast %104 : vector<1x8x8xbf16> to vector<8x8xbf16>
    %cst_97 = arith.constant dense<0.000000e+00> : vector<8x286xf32>
    %106 = tpu.matmul %105, %103, %cst_97 {dimension_numbers = #tpu.dot_dimension_numbers<[1], [0], [0], [1], [0, 0, 1, 1], [], []>} : vector<8x8xbf16>, vector<8x286xbf16>, vector<8x286xf32> -> vector<8x286xf32>
    %107 = arith.addf %101, %106 : vector<8x286xf32>
    %c0_98 = arith.constant 0 : index
    %c0_99 = arith.constant 0 : index
    %c20_100 = arith.constant 20 : index
    %108 = vector.load %arg8[%c0_98, %c0_99, %c20_100] : memref<1x8x324xbf16, #tpu.memory_space<vmem>>, vector<1x8x286xbf16>
    %109 = vector.shape_cast %108 : vector<1x8x286xbf16> to vector<8x286xbf16>
    %c5_101 = arith.constant 5 : index
    %c0_102 = arith.constant 0 : index
    %c0_103 = arith.constant 0 : index
    %110 = vector.load %arg5[%c5_101, %c0_102, %c0_103] : memref<9x8x8xbf16, #tpu.memory_space<vmem>>, vector<1x8x8xbf16>
    %111 = vector.shape_cast %110 : vector<1x8x8xbf16> to vector<8x8xbf16>
    %cst_104 = arith.constant dense<0.000000e+00> : vector<8x286xf32>
    %112 = tpu.matmul %111, %109, %cst_104 {dimension_numbers = #tpu.dot_dimension_numbers<[1], [0], [0], [1], [0, 0, 1, 1], [], []>} : vector<8x8xbf16>, vector<8x286xbf16>, vector<8x286xf32> -> vector<8x286xf32>
    %113 = arith.addf %107, %112 : vector<8x286xf32>
    %c0_105 = arith.constant 0 : index
    %c0_106 = arith.constant 0 : index
    %c36_107 = arith.constant 36 : index
    %114 = vector.load %arg8[%c0_105, %c0_106, %c36_107] : memref<1x8x324xbf16, #tpu.memory_space<vmem>>, vector<1x8x286xbf16>
    %115 = vector.shape_cast %114 : vector<1x8x286xbf16> to vector<8x286xbf16>
    %c6_108 = arith.constant 6 : index
    %c0_109 = arith.constant 0 : index
    %c0_110 = arith.constant 0 : index
    %116 = vector.load %arg5[%c6_108, %c0_109, %c0_110] : memref<9x8x8xbf16, #tpu.memory_space<vmem>>, vector<1x8x8xbf16>
    %117 = vector.shape_cast %116 : vector<1x8x8xbf16> to vector<8x8xbf16>
    %cst_111 = arith.constant dense<0.000000e+00> : vector<8x286xf32>
    %118 = tpu.matmul %117, %115, %cst_111 {dimension_numbers = #tpu.dot_dimension_numbers<[1], [0], [0], [1], [0, 0, 1, 1], [], []>} : vector<8x8xbf16>, vector<8x286xbf16>, vector<8x286xf32> -> vector<8x286xf32>
    %119 = arith.addf %113, %118 : vector<8x286xf32>
    %c0_112 = arith.constant 0 : index
    %c0_113 = arith.constant 0 : index
    %c37_114 = arith.constant 37 : index
    %120 = vector.load %arg8[%c0_112, %c0_113, %c37_114] : memref<1x8x324xbf16, #tpu.memory_space<vmem>>, vector<1x8x286xbf16>
    %121 = vector.shape_cast %120 : vector<1x8x286xbf16> to vector<8x286xbf16>
    %c7_115 = arith.constant 7 : index
    %c0_116 = arith.constant 0 : index
    %c0_117 = arith.constant 0 : index
    %122 = vector.load %arg5[%c7_115, %c0_116, %c0_117] : memref<9x8x8xbf16, #tpu.memory_space<vmem>>, vector<1x8x8xbf16>
    %123 = vector.shape_cast %122 : vector<1x8x8xbf16> to vector<8x8xbf16>
    %cst_118 = arith.constant dense<0.000000e+00> : vector<8x286xf32>
    %124 = tpu.matmul %123, %121, %cst_118 {dimension_numbers = #tpu.dot_dimension_numbers<[1], [0], [0], [1], [0, 0, 1, 1], [], []>} : vector<8x8xbf16>, vector<8x286xbf16>, vector<8x286xf32> -> vector<8x286xf32>
    %125 = arith.addf %119, %124 : vector<8x286xf32>
    %c0_119 = arith.constant 0 : index
    %c0_120 = arith.constant 0 : index
    %c38_121 = arith.constant 38 : index
    %126 = vector.load %arg8[%c0_119, %c0_120, %c38_121] : memref<1x8x324xbf16, #tpu.memory_space<vmem>>, vector<1x8x286xbf16>
    %127 = vector.shape_cast %126 : vector<1x8x286xbf16> to vector<8x286xbf16>
    %c8_122 = arith.constant 8 : index
    %c0_123 = arith.constant 0 : index
    %c0_124 = arith.constant 0 : index
    %128 = vector.load %arg5[%c8_122, %c0_123, %c0_124] : memref<9x8x8xbf16, #tpu.memory_space<vmem>>, vector<1x8x8xbf16>
    %129 = vector.shape_cast %128 : vector<1x8x8xbf16> to vector<8x8xbf16>
    %cst_125 = arith.constant dense<0.000000e+00> : vector<8x286xf32>
    %130 = tpu.matmul %129, %127, %cst_125 {dimension_numbers = #tpu.dot_dimension_numbers<[1], [0], [0], [1], [0, 0, 1, 1], [], []>} : vector<8x8xbf16>, vector<8x286xbf16>, vector<8x286xf32> -> vector<8x286xf32>
    %131 = arith.addf %125, %130 : vector<8x286xf32>
    %c0_126 = arith.constant 0 : index
    %c0_127 = arith.constant 0 : index
    %132 = vector.load %arg6[%c0_126, %c0_127] : memref<8x1xf32, #tpu.memory_space<vmem>>, vector<8x1xf32>
    %133 = vector.broadcast %132 : vector<8x1xf32> to vector<8x286xf32>
    %134 = arith.addf %131, %133 : vector<8x286xf32>
    %cst_128 = arith.constant 0.000000e+00 : f32
    %135 = vector.broadcast %cst_128 : f32 to vector<8x286xf32>
    %136 = arith.cmpf ogt, %134, %135 : vector<8x286xf32>
    %cst_129 = arith.constant 0.000000e+00 : f32
    %137 = vector.broadcast %cst_129 : f32 to vector<8x286xf32>
    %138 = arith.minimumf %134, %137 : vector<8x286xf32>
    %139 = math.exp %138 : vector<8x286xf32>
    %cst_130 = arith.constant 1.000000e+00 : f32
    %140 = vector.broadcast %cst_130 : f32 to vector<8x286xf32>
    %141 = arith.subf %139, %140 : vector<8x286xf32>
    %142 = arith.select %136, %134, %141 : vector<8x286xi1>, vector<8x286xf32>
    %143 = vector.broadcast %0 : vector<1x286xf32> to vector<8x286xf32>
    %144 = arith.mulf %142, %143 : vector<8x286xf32>
    %cst_131 = arith.constant 0.000000e+00 : bf16
    %145 = vector.broadcast %cst_131 : bf16 to vector<8x324xbf16>
    %c0_132 = arith.constant 0 : index
    %c0_133 = arith.constant 0 : index
    %c0_134 = arith.constant 0 : index
    %146 = vector.load %arg7[%c0_132, %c0_133, %c0_134] : memref<1x8x324xbf16, #tpu.memory_space<vmem>>, vector<1x8x324xbf16>
    %147 = vector.shape_cast %146 : vector<1x8x324xbf16> to vector<8x324xbf16>
    %148 = vector.shape_cast %145 : vector<8x324xbf16> to vector<1x8x324xbf16>
    tpu.vector_store %arg7[%c0_132, %c0_133, %c0_134], %148 {strides = array<i32>} : memref<1x8x324xbf16, #tpu.memory_space<vmem>>, vector<1x8x324xbf16>,
    %149 = arith.truncf %144 : vector<8x286xf32> to vector<8x286xbf16>
    %c0_135 = arith.constant 0 : index
    %c0_136 = arith.constant 0 : index
    %c19_137 = arith.constant 19 : index
    %150 = vector.load %arg7[%c0_135, %c0_136, %c19_137] : memref<1x8x324xbf16, #tpu.memory_space<vmem>>, vector<1x8x286xbf16>
    %151 = vector.shape_cast %150 : vector<1x8x286xbf16> to vector<8x286xbf16>
    %152 = vector.shape_cast %149 : vector<8x286xbf16> to vector<1x8x286xbf16>
    tpu.vector_store %arg7[%c0_135, %c0_136, %c19_137], %152 {strides = array<i32>} : memref<1x8x324xbf16, #tpu.memory_space<vmem>>, vector<1x8x286xbf16>,
    return
  }
  func.func @transform_0(%arg0: i32) -> (i32, i32, i32) {
    %c0_i32 = arith.constant 0 : i32
    %c0_i32_0 = arith.constant 0 : i32
    %c0_i32_1 = arith.constant 0 : i32
    return %arg0, %c0_i32, %c0_i32_0 : i32, i32, i32
  }
  func.func @transform_1(%arg0: i32) -> (i32, i32) {
    %c0_i32 = arith.constant 0 : i32
    %c0_i32_0 = arith.constant 0 : i32
    %c0_i32_1 = arith.constant 0 : i32
    return %c0_i32, %c0_i32_0 : i32, i32
  }
  func.func @transform_2(%arg0: i32) -> (i32, i32, i32) {
    %c0_i32 = arith.constant 0 : i32
    %c0_i32_0 = arith.constant 0 : i32
    %c0_i32_1 = arith.constant 0 : i32
    %c0_i32_2 = arith.constant 0 : i32
    return %c0_i32, %c0_i32_0, %c0_i32_1 : i32, i32, i32
  }
  func.func @transform_3(%arg0: i32) -> (i32, i32) {
    %c0_i32 = arith.constant 0 : i32
    %c0_i32_0 = arith.constant 0 : i32
    %c0_i32_1 = arith.constant 0 : i32
    return %c0_i32, %c0_i32_0 : i32, i32
  }
  func.func @transform_4(%arg0: i32) -> (i32, i32, i32) {
    %c0_i32 = arith.constant 0 : i32
    %c0_i32_0 = arith.constant 0 : i32
    %c0_i32_1 = arith.constant 0 : i32
    %c0_i32_2 = arith.constant 0 : i32
    return %c0_i32, %c0_i32_0, %c0_i32_1 : i32, i32, i32
  }
  func.func @transform_5(%arg0: i32) -> (i32, i32) {
    %c0_i32 = arith.constant 0 : i32
    %c0_i32_0 = arith.constant 0 : i32
    %c0_i32_1 = arith.constant 0 : i32
    return %c0_i32, %c0_i32_0 : i32, i32
  }
  func.func @transform_6(%arg0: i32) -> (i32, i32, i32) {
    %c0_i32 = arith.constant 0 : i32
    %c0_i32_0 = arith.constant 0 : i32
    %c0_i32_1 = arith.constant 0 : i32
    return %arg0, %c0_i32, %c0_i32_0 : i32, i32, i32
  }
}

module attributes {stable_mosaic.version = 11 : i64} {
  func.func @kernel(%arg0: i32, %arg1: memref<1x8x100xbf16, #tpu.memory_space<vmem>>, %arg2: memref<1x78xf32, #tpu.memory_space<vmem>>, %arg3: memref<9x16x8xbf16, #tpu.memory_space<vmem>>, %arg4: memref<16x1xf32, #tpu.memory_space<vmem>>, %arg5: memref<9x16x16xbf16, #tpu.memory_space<vmem>>, %arg6: memref<16x1xf32, #tpu.memory_space<vmem>>, %arg7: memref<1x16x100xbf16, #tpu.memory_space<vmem>>, %arg8: memref<1x16x100xbf16, #tpu.memory_space<vmem>>) attributes {dimension_semantics = [#tpu.dimension_semantics<parallel>], iteration_bounds = array<i64: 2>, scalar_prefetch = 0 : i64, scratch_operands = 1 : i64, tpu.core_type = #tpu.core_type<tc>, window_params = [{transform_indices = @transform_0, window_bounds = array<i64: 1, 8, 100>}, {pipeline_mode = #tpu.pipeline_mode<synchronous>, transform_indices = @transform_1, window_bounds = array<i64: 1, 78>}, {pipeline_mode = #tpu.pipeline_mode<synchronous>, transform_indices = @transform_2, window_bounds = array<i64: 9, 16, 8>}, {pipeline_mode = #tpu.pipeline_mode<synchronous>, transform_indices = @transform_3, window_bounds = array<i64: 16, 1>}, {pipeline_mode = #tpu.pipeline_mode<synchronous>, transform_indices = @transform_4, window_bounds = array<i64: 9, 16, 16>}, {pipeline_mode = #tpu.pipeline_mode<synchronous>, transform_indices = @transform_5, window_bounds = array<i64: 16, 1>}, {transform_indices = @transform_6, window_bounds = array<i64: 1, 16, 100>}]} {
    %c0 = arith.constant 0 : index
    %c0_0 = arith.constant 0 : index
    %0 = vector.load %arg2[%c0, %c0_0] : memref<1x78xf32, #tpu.memory_space<vmem>>, vector<1x78xf32>
    %cst = arith.constant 0.000000e+00 : f32
    %1 = vector.broadcast %cst : f32 to vector<16x78xf32>
    %c0_1 = arith.constant 0 : index
    %c0_2 = arith.constant 0 : index
    %c0_3 = arith.constant 0 : index
    %2 = vector.load %arg1[%c0_1, %c0_2, %c0_3] : memref<1x8x100xbf16, #tpu.memory_space<vmem>>, vector<1x8x78xbf16>
    %3 = vector.shape_cast %2 : vector<1x8x78xbf16> to vector<8x78xbf16>
    %c0_4 = arith.constant 0 : index
    %c0_5 = arith.constant 0 : index
    %c0_6 = arith.constant 0 : index
    %4 = vector.load %arg3[%c0_4, %c0_5, %c0_6] : memref<9x16x8xbf16, #tpu.memory_space<vmem>>, vector<1x16x8xbf16>
    %5 = vector.shape_cast %4 : vector<1x16x8xbf16> to vector<16x8xbf16>
    %cst_7 = arith.constant dense<0.000000e+00> : vector<16x78xf32>
    %6 = tpu.matmul %5, %3, %cst_7 {dimension_numbers = #tpu.dot_dimension_numbers<[1], [0], [0], [1], [0, 0, 1, 1], [], []>} : vector<16x8xbf16>, vector<8x78xbf16>, vector<16x78xf32> -> vector<16x78xf32>
    %7 = arith.addf %1, %6 : vector<16x78xf32>
    %c0_8 = arith.constant 0 : index
    %c0_9 = arith.constant 0 : index
    %c1 = arith.constant 1 : index
    %8 = vector.load %arg1[%c0_8, %c0_9, %c1] : memref<1x8x100xbf16, #tpu.memory_space<vmem>>, vector<1x8x78xbf16>
    %9 = vector.shape_cast %8 : vector<1x8x78xbf16> to vector<8x78xbf16>
    %c1_10 = arith.constant 1 : index
    %c0_11 = arith.constant 0 : index
    %c0_12 = arith.constant 0 : index
    %10 = vector.load %arg3[%c1_10, %c0_11, %c0_12] : memref<9x16x8xbf16, #tpu.memory_space<vmem>>, vector<1x16x8xbf16>
    %11 = vector.shape_cast %10 : vector<1x16x8xbf16> to vector<16x8xbf16>
    %cst_13 = arith.constant dense<0.000000e+00> : vector<16x78xf32>
    %12 = tpu.matmul %11, %9, %cst_13 {dimension_numbers = #tpu.dot_dimension_numbers<[1], [0], [0], [1], [0, 0, 1, 1], [], []>} : vector<16x8xbf16>, vector<8x78xbf16>, vector<16x78xf32> -> vector<16x78xf32>
    %13 = arith.addf %7, %12 : vector<16x78xf32>
    %c0_14 = arith.constant 0 : index
    %c0_15 = arith.constant 0 : index
    %c2 = arith.constant 2 : index
    %14 = vector.load %arg1[%c0_14, %c0_15, %c2] : memref<1x8x100xbf16, #tpu.memory_space<vmem>>, vector<1x8x78xbf16>
    %15 = vector.shape_cast %14 : vector<1x8x78xbf16> to vector<8x78xbf16>
    %c2_16 = arith.constant 2 : index
    %c0_17 = arith.constant 0 : index
    %c0_18 = arith.constant 0 : index
    %16 = vector.load %arg3[%c2_16, %c0_17, %c0_18] : memref<9x16x8xbf16, #tpu.memory_space<vmem>>, vector<1x16x8xbf16>
    %17 = vector.shape_cast %16 : vector<1x16x8xbf16> to vector<16x8xbf16>
    %cst_19 = arith.constant dense<0.000000e+00> : vector<16x78xf32>
    %18 = tpu.matmul %17, %15, %cst_19 {dimension_numbers = #tpu.dot_dimension_numbers<[1], [0], [0], [1], [0, 0, 1, 1], [], []>} : vector<16x8xbf16>, vector<8x78xbf16>, vector<16x78xf32> -> vector<16x78xf32>
    %19 = arith.addf %13, %18 : vector<16x78xf32>
    %c0_20 = arith.constant 0 : index
    %c0_21 = arith.constant 0 : index
    %c10 = arith.constant 10 : index
    %20 = vector.load %arg1[%c0_20, %c0_21, %c10] : memref<1x8x100xbf16, #tpu.memory_space<vmem>>, vector<1x8x78xbf16>
    %21 = vector.shape_cast %20 : vector<1x8x78xbf16> to vector<8x78xbf16>
    %c3 = arith.constant 3 : index
    %c0_22 = arith.constant 0 : index
    %c0_23 = arith.constant 0 : index
    %22 = vector.load %arg3[%c3, %c0_22, %c0_23] : memref<9x16x8xbf16, #tpu.memory_space<vmem>>, vector<1x16x8xbf16>
    %23 = vector.shape_cast %22 : vector<1x16x8xbf16> to vector<16x8xbf16>
    %cst_24 = arith.constant dense<0.000000e+00> : vector<16x78xf32>
    %24 = tpu.matmul %23, %21, %cst_24 {dimension_numbers = #tpu.dot_dimension_numbers<[1], [0], [0], [1], [0, 0, 1, 1], [], []>} : vector<16x8xbf16>, vector<8x78xbf16>, vector<16x78xf32> -> vector<16x78xf32>
    %25 = arith.addf %19, %24 : vector<16x78xf32>
    %c0_25 = arith.constant 0 : index
    %c0_26 = arith.constant 0 : index
    %c11 = arith.constant 11 : index
    %26 = vector.load %arg1[%c0_25, %c0_26, %c11] : memref<1x8x100xbf16, #tpu.memory_space<vmem>>, vector<1x8x78xbf16>
    %27 = vector.shape_cast %26 : vector<1x8x78xbf16> to vector<8x78xbf16>
    %c4 = arith.constant 4 : index
    %c0_27 = arith.constant 0 : index
    %c0_28 = arith.constant 0 : index
    %28 = vector.load %arg3[%c4, %c0_27, %c0_28] : memref<9x16x8xbf16, #tpu.memory_space<vmem>>, vector<1x16x8xbf16>
    %29 = vector.shape_cast %28 : vector<1x16x8xbf16> to vector<16x8xbf16>
    %cst_29 = arith.constant dense<0.000000e+00> : vector<16x78xf32>
    %30 = tpu.matmul %29, %27, %cst_29 {dimension_numbers = #tpu.dot_dimension_numbers<[1], [0], [0], [1], [0, 0, 1, 1], [], []>} : vector<16x8xbf16>, vector<8x78xbf16>, vector<16x78xf32> -> vector<16x78xf32>
    %31 = arith.addf %25, %30 : vector<16x78xf32>
    %c0_30 = arith.constant 0 : index
    %c0_31 = arith.constant 0 : index
    %c12 = arith.constant 12 : index
    %32 = vector.load %arg1[%c0_30, %c0_31, %c12] : memref<1x8x100xbf16, #tpu.memory_space<vmem>>, vector<1x8x78xbf16>
    %33 = vector.shape_cast %32 : vector<1x8x78xbf16> to vector<8x78xbf16>
    %c5 = arith.constant 5 : index
    %c0_32 = arith.constant 0 : index
    %c0_33 = arith.constant 0 : index
    %34 = vector.load %arg3[%c5, %c0_32, %c0_33] : memref<9x16x8xbf16, #tpu.memory_space<vmem>>, vector<1x16x8xbf16>
    %35 = vector.shape_cast %34 : vector<1x16x8xbf16> to vector<16x8xbf16>
    %cst_34 = arith.constant dense<0.000000e+00> : vector<16x78xf32>
    %36 = tpu.matmul %35, %33, %cst_34 {dimension_numbers = #tpu.dot_dimension_numbers<[1], [0], [0], [1], [0, 0, 1, 1], [], []>} : vector<16x8xbf16>, vector<8x78xbf16>, vector<16x78xf32> -> vector<16x78xf32>
    %37 = arith.addf %31, %36 : vector<16x78xf32>
    %c0_35 = arith.constant 0 : index
    %c0_36 = arith.constant 0 : index
    %c20 = arith.constant 20 : index
    %38 = vector.load %arg1[%c0_35, %c0_36, %c20] : memref<1x8x100xbf16, #tpu.memory_space<vmem>>, vector<1x8x78xbf16>
    %39 = vector.shape_cast %38 : vector<1x8x78xbf16> to vector<8x78xbf16>
    %c6 = arith.constant 6 : index
    %c0_37 = arith.constant 0 : index
    %c0_38 = arith.constant 0 : index
    %40 = vector.load %arg3[%c6, %c0_37, %c0_38] : memref<9x16x8xbf16, #tpu.memory_space<vmem>>, vector<1x16x8xbf16>
    %41 = vector.shape_cast %40 : vector<1x16x8xbf16> to vector<16x8xbf16>
    %cst_39 = arith.constant dense<0.000000e+00> : vector<16x78xf32>
    %42 = tpu.matmul %41, %39, %cst_39 {dimension_numbers = #tpu.dot_dimension_numbers<[1], [0], [0], [1], [0, 0, 1, 1], [], []>} : vector<16x8xbf16>, vector<8x78xbf16>, vector<16x78xf32> -> vector<16x78xf32>
    %43 = arith.addf %37, %42 : vector<16x78xf32>
    %c0_40 = arith.constant 0 : index
    %c0_41 = arith.constant 0 : index
    %c21 = arith.constant 21 : index
    %44 = vector.load %arg1[%c0_40, %c0_41, %c21] : memref<1x8x100xbf16, #tpu.memory_space<vmem>>, vector<1x8x78xbf16>
    %45 = vector.shape_cast %44 : vector<1x8x78xbf16> to vector<8x78xbf16>
    %c7 = arith.constant 7 : index
    %c0_42 = arith.constant 0 : index
    %c0_43 = arith.constant 0 : index
    %46 = vector.load %arg3[%c7, %c0_42, %c0_43] : memref<9x16x8xbf16, #tpu.memory_space<vmem>>, vector<1x16x8xbf16>
    %47 = vector.shape_cast %46 : vector<1x16x8xbf16> to vector<16x8xbf16>
    %cst_44 = arith.constant dense<0.000000e+00> : vector<16x78xf32>
    %48 = tpu.matmul %47, %45, %cst_44 {dimension_numbers = #tpu.dot_dimension_numbers<[1], [0], [0], [1], [0, 0, 1, 1], [], []>} : vector<16x8xbf16>, vector<8x78xbf16>, vector<16x78xf32> -> vector<16x78xf32>
    %49 = arith.addf %43, %48 : vector<16x78xf32>
    %c0_45 = arith.constant 0 : index
    %c0_46 = arith.constant 0 : index
    %c22 = arith.constant 22 : index
    %50 = vector.load %arg1[%c0_45, %c0_46, %c22] : memref<1x8x100xbf16, #tpu.memory_space<vmem>>, vector<1x8x78xbf16>
    %51 = vector.shape_cast %50 : vector<1x8x78xbf16> to vector<8x78xbf16>
    %c8 = arith.constant 8 : index
    %c0_47 = arith.constant 0 : index
    %c0_48 = arith.constant 0 : index
    %52 = vector.load %arg3[%c8, %c0_47, %c0_48] : memref<9x16x8xbf16, #tpu.memory_space<vmem>>, vector<1x16x8xbf16>
    %53 = vector.shape_cast %52 : vector<1x16x8xbf16> to vector<16x8xbf16>
    %cst_49 = arith.constant dense<0.000000e+00> : vector<16x78xf32>
    %54 = tpu.matmul %53, %51, %cst_49 {dimension_numbers = #tpu.dot_dimension_numbers<[1], [0], [0], [1], [0, 0, 1, 1], [], []>} : vector<16x8xbf16>, vector<8x78xbf16>, vector<16x78xf32> -> vector<16x78xf32>
    %55 = arith.addf %49, %54 : vector<16x78xf32>
    %c0_50 = arith.constant 0 : index
    %c0_51 = arith.constant 0 : index
    %56 = vector.load %arg4[%c0_50, %c0_51] : memref<16x1xf32, #tpu.memory_space<vmem>>, vector<16x1xf32>
    %57 = vector.broadcast %56 : vector<16x1xf32> to vector<16x78xf32>
    %58 = arith.addf %55, %57 : vector<16x78xf32>
    %cst_52 = arith.constant 0.000000e+00 : f32
    %59 = vector.broadcast %cst_52 : f32 to vector<16x78xf32>
    %60 = arith.cmpf ogt, %58, %59 : vector<16x78xf32>
    %cst_53 = arith.constant 0.000000e+00 : f32
    %61 = vector.broadcast %cst_53 : f32 to vector<16x78xf32>
    %62 = arith.minimumf %58, %61 : vector<16x78xf32>
    %63 = math.exp %62 : vector<16x78xf32>
    %cst_54 = arith.constant 1.000000e+00 : f32
    %64 = vector.broadcast %cst_54 : f32 to vector<16x78xf32>
    %65 = arith.subf %63, %64 : vector<16x78xf32>
    %66 = arith.select %60, %58, %65 : vector<16x78xi1>, vector<16x78xf32>
    %67 = vector.broadcast %0 : vector<1x78xf32> to vector<16x78xf32>
    %68 = arith.mulf %66, %67 : vector<16x78xf32>
    %cst_55 = arith.constant 0.000000e+00 : bf16
    %69 = vector.broadcast %cst_55 : bf16 to vector<16x100xbf16>
    %c0_56 = arith.constant 0 : index
    %c0_57 = arith.constant 0 : index
    %c0_58 = arith.constant 0 : index
    %70 = vector.load %arg8[%c0_56, %c0_57, %c0_58] : memref<1x16x100xbf16, #tpu.memory_space<vmem>>, vector<1x16x100xbf16>
    %71 = vector.shape_cast %70 : vector<1x16x100xbf16> to vector<16x100xbf16>
    %72 = vector.shape_cast %69 : vector<16x100xbf16> to vector<1x16x100xbf16>
    tpu.vector_store %arg8[%c0_56, %c0_57, %c0_58], %72 {strides = array<i32>} : memref<1x16x100xbf16, #tpu.memory_space<vmem>>, vector<1x16x100xbf16>,
    %73 = arith.truncf %68 : vector<16x78xf32> to vector<16x78xbf16>
    %c0_59 = arith.constant 0 : index
    %c0_60 = arith.constant 0 : index
    %c11_61 = arith.constant 11 : index
    %74 = vector.load %arg8[%c0_59, %c0_60, %c11_61] : memref<1x16x100xbf16, #tpu.memory_space<vmem>>, vector<1x16x78xbf16>
    %75 = vector.shape_cast %74 : vector<1x16x78xbf16> to vector<16x78xbf16>
    %76 = vector.shape_cast %73 : vector<16x78xbf16> to vector<1x16x78xbf16>
    tpu.vector_store %arg8[%c0_59, %c0_60, %c11_61], %76 {strides = array<i32>} : memref<1x16x100xbf16, #tpu.memory_space<vmem>>, vector<1x16x78xbf16>,
    %cst_62 = arith.constant 0.000000e+00 : f32
    %77 = vector.broadcast %cst_62 : f32 to vector<16x78xf32>
    %c0_63 = arith.constant 0 : index
    %c0_64 = arith.constant 0 : index
    %c0_65 = arith.constant 0 : index
    %78 = vector.load %arg8[%c0_63, %c0_64, %c0_65] : memref<1x16x100xbf16, #tpu.memory_space<vmem>>, vector<1x16x78xbf16>
    %79 = vector.shape_cast %78 : vector<1x16x78xbf16> to vector<16x78xbf16>
    %c0_66 = arith.constant 0 : index
    %c0_67 = arith.constant 0 : index
    %c0_68 = arith.constant 0 : index
    %80 = vector.load %arg5[%c0_66, %c0_67, %c0_68] : memref<9x16x16xbf16, #tpu.memory_space<vmem>>, vector<1x16x16xbf16>
    %81 = vector.shape_cast %80 : vector<1x16x16xbf16> to vector<16x16xbf16>
    %cst_69 = arith.constant dense<0.000000e+00> : vector<16x78xf32>
    %82 = tpu.matmul %81, %79, %cst_69 {dimension_numbers = #tpu.dot_dimension_numbers<[1], [0], [0], [1], [0, 0, 1, 1], [], []>} : vector<16x16xbf16>, vector<16x78xbf16>, vector<16x78xf32> -> vector<16x78xf32>
    %83 = arith.addf %77, %82 : vector<16x78xf32>
    %c0_70 = arith.constant 0 : index
    %c0_71 = arith.constant 0 : index
    %c1_72 = arith.constant 1 : index
    %84 = vector.load %arg8[%c0_70, %c0_71, %c1_72] : memref<1x16x100xbf16, #tpu.memory_space<vmem>>, vector<1x16x78xbf16>
    %85 = vector.shape_cast %84 : vector<1x16x78xbf16> to vector<16x78xbf16>
    %c1_73 = arith.constant 1 : index
    %c0_74 = arith.constant 0 : index
    %c0_75 = arith.constant 0 : index
    %86 = vector.load %arg5[%c1_73, %c0_74, %c0_75] : memref<9x16x16xbf16, #tpu.memory_space<vmem>>, vector<1x16x16xbf16>
    %87 = vector.shape_cast %86 : vector<1x16x16xbf16> to vector<16x16xbf16>
    %cst_76 = arith.constant dense<0.000000e+00> : vector<16x78xf32>
    %88 = tpu.matmul %87, %85, %cst_76 {dimension_numbers = #tpu.dot_dimension_numbers<[1], [0], [0], [1], [0, 0, 1, 1], [], []>} : vector<16x16xbf16>, vector<16x78xbf16>, vector<16x78xf32> -> vector<16x78xf32>
    %89 = arith.addf %83, %88 : vector<16x78xf32>
    %c0_77 = arith.constant 0 : index
    %c0_78 = arith.constant 0 : index
    %c2_79 = arith.constant 2 : index
    %90 = vector.load %arg8[%c0_77, %c0_78, %c2_79] : memref<1x16x100xbf16, #tpu.memory_space<vmem>>, vector<1x16x78xbf16>
    %91 = vector.shape_cast %90 : vector<1x16x78xbf16> to vector<16x78xbf16>
    %c2_80 = arith.constant 2 : index
    %c0_81 = arith.constant 0 : index
    %c0_82 = arith.constant 0 : index
    %92 = vector.load %arg5[%c2_80, %c0_81, %c0_82] : memref<9x16x16xbf16, #tpu.memory_space<vmem>>, vector<1x16x16xbf16>
    %93 = vector.shape_cast %92 : vector<1x16x16xbf16> to vector<16x16xbf16>
    %cst_83 = arith.constant dense<0.000000e+00> : vector<16x78xf32>
    %94 = tpu.matmul %93, %91, %cst_83 {dimension_numbers = #tpu.dot_dimension_numbers<[1], [0], [0], [1], [0, 0, 1, 1], [], []>} : vector<16x16xbf16>, vector<16x78xbf16>, vector<16x78xf32> -> vector<16x78xf32>
    %95 = arith.addf %89, %94 : vector<16x78xf32>
    %c0_84 = arith.constant 0 : index
    %c0_85 = arith.constant 0 : index
    %c10_86 = arith.constant 10 : index
    %96 = vector.load %arg8[%c0_84, %c0_85, %c10_86] : memref<1x16x100xbf16, #tpu.memory_space<vmem>>, vector<1x16x78xbf16>
    %97 = vector.shape_cast %96 : vector<1x16x78xbf16> to vector<16x78xbf16>
    %c3_87 = arith.constant 3 : index
    %c0_88 = arith.constant 0 : index
    %c0_89 = arith.constant 0 : index
    %98 = vector.load %arg5[%c3_87, %c0_88, %c0_89] : memref<9x16x16xbf16, #tpu.memory_space<vmem>>, vector<1x16x16xbf16>
    %99 = vector.shape_cast %98 : vector<1x16x16xbf16> to vector<16x16xbf16>
    %cst_90 = arith.constant dense<0.000000e+00> : vector<16x78xf32>
    %100 = tpu.matmul %99, %97, %cst_90 {dimension_numbers = #tpu.dot_dimension_numbers<[1], [0], [0], [1], [0, 0, 1, 1], [], []>} : vector<16x16xbf16>, vector<16x78xbf16>, vector<16x78xf32> -> vector<16x78xf32>
    %101 = arith.addf %95, %100 : vector<16x78xf32>
    %c0_91 = arith.constant 0 : index
    %c0_92 = arith.constant 0 : index
    %c11_93 = arith.constant 11 : index
    %102 = vector.load %arg8[%c0_91, %c0_92, %c11_93] : memref<1x16x100xbf16, #tpu.memory_space<vmem>>, vector<1x16x78xbf16>
    %103 = vector.shape_cast %102 : vector<1x16x78xbf16> to vector<16x78xbf16>
    %c4_94 = arith.constant 4 : index
    %c0_95 = arith.constant 0 : index
    %c0_96 = arith.constant 0 : index
    %104 = vector.load %arg5[%c4_94, %c0_95, %c0_96] : memref<9x16x16xbf16, #tpu.memory_space<vmem>>, vector<1x16x16xbf16>
    %105 = vector.shape_cast %104 : vector<1x16x16xbf16> to vector<16x16xbf16>
    %cst_97 = arith.constant dense<0.000000e+00> : vector<16x78xf32>
    %106 = tpu.matmul %105, %103, %cst_97 {dimension_numbers = #tpu.dot_dimension_numbers<[1], [0], [0], [1], [0, 0, 1, 1], [], []>} : vector<16x16xbf16>, vector<16x78xbf16>, vector<16x78xf32> -> vector<16x78xf32>
    %107 = arith.addf %101, %106 : vector<16x78xf32>
    %c0_98 = arith.constant 0 : index
    %c0_99 = arith.constant 0 : index
    %c12_100 = arith.constant 12 : index
    %108 = vector.load %arg8[%c0_98, %c0_99, %c12_100] : memref<1x16x100xbf16, #tpu.memory_space<vmem>>, vector<1x16x78xbf16>
    %109 = vector.shape_cast %108 : vector<1x16x78xbf16> to vector<16x78xbf16>
    %c5_101 = arith.constant 5 : index
    %c0_102 = arith.constant 0 : index
    %c0_103 = arith.constant 0 : index
    %110 = vector.load %arg5[%c5_101, %c0_102, %c0_103] : memref<9x16x16xbf16, #tpu.memory_space<vmem>>, vector<1x16x16xbf16>
    %111 = vector.shape_cast %110 : vector<1x16x16xbf16> to vector<16x16xbf16>
    %cst_104 = arith.constant dense<0.000000e+00> : vector<16x78xf32>
    %112 = tpu.matmul %111, %109, %cst_104 {dimension_numbers = #tpu.dot_dimension_numbers<[1], [0], [0], [1], [0, 0, 1, 1], [], []>} : vector<16x16xbf16>, vector<16x78xbf16>, vector<16x78xf32> -> vector<16x78xf32>
    %113 = arith.addf %107, %112 : vector<16x78xf32>
    %c0_105 = arith.constant 0 : index
    %c0_106 = arith.constant 0 : index
    %c20_107 = arith.constant 20 : index
    %114 = vector.load %arg8[%c0_105, %c0_106, %c20_107] : memref<1x16x100xbf16, #tpu.memory_space<vmem>>, vector<1x16x78xbf16>
    %115 = vector.shape_cast %114 : vector<1x16x78xbf16> to vector<16x78xbf16>
    %c6_108 = arith.constant 6 : index
    %c0_109 = arith.constant 0 : index
    %c0_110 = arith.constant 0 : index
    %116 = vector.load %arg5[%c6_108, %c0_109, %c0_110] : memref<9x16x16xbf16, #tpu.memory_space<vmem>>, vector<1x16x16xbf16>
    %117 = vector.shape_cast %116 : vector<1x16x16xbf16> to vector<16x16xbf16>
    %cst_111 = arith.constant dense<0.000000e+00> : vector<16x78xf32>
    %118 = tpu.matmul %117, %115, %cst_111 {dimension_numbers = #tpu.dot_dimension_numbers<[1], [0], [0], [1], [0, 0, 1, 1], [], []>} : vector<16x16xbf16>, vector<16x78xbf16>, vector<16x78xf32> -> vector<16x78xf32>
    %119 = arith.addf %113, %118 : vector<16x78xf32>
    %c0_112 = arith.constant 0 : index
    %c0_113 = arith.constant 0 : index
    %c21_114 = arith.constant 21 : index
    %120 = vector.load %arg8[%c0_112, %c0_113, %c21_114] : memref<1x16x100xbf16, #tpu.memory_space<vmem>>, vector<1x16x78xbf16>
    %121 = vector.shape_cast %120 : vector<1x16x78xbf16> to vector<16x78xbf16>
    %c7_115 = arith.constant 7 : index
    %c0_116 = arith.constant 0 : index
    %c0_117 = arith.constant 0 : index
    %122 = vector.load %arg5[%c7_115, %c0_116, %c0_117] : memref<9x16x16xbf16, #tpu.memory_space<vmem>>, vector<1x16x16xbf16>
    %123 = vector.shape_cast %122 : vector<1x16x16xbf16> to vector<16x16xbf16>
    %cst_118 = arith.constant dense<0.000000e+00> : vector<16x78xf32>
    %124 = tpu.matmul %123, %121, %cst_118 {dimension_numbers = #tpu.dot_dimension_numbers<[1], [0], [0], [1], [0, 0, 1, 1], [], []>} : vector<16x16xbf16>, vector<16x78xbf16>, vector<16x78xf32> -> vector<16x78xf32>
    %125 = arith.addf %119, %124 : vector<16x78xf32>
    %c0_119 = arith.constant 0 : index
    %c0_120 = arith.constant 0 : index
    %c22_121 = arith.constant 22 : index
    %126 = vector.load %arg8[%c0_119, %c0_120, %c22_121] : memref<1x16x100xbf16, #tpu.memory_space<vmem>>, vector<1x16x78xbf16>
    %127 = vector.shape_cast %126 : vector<1x16x78xbf16> to vector<16x78xbf16>
    %c8_122 = arith.constant 8 : index
    %c0_123 = arith.constant 0 : index
    %c0_124 = arith.constant 0 : index
    %128 = vector.load %arg5[%c8_122, %c0_123, %c0_124] : memref<9x16x16xbf16, #tpu.memory_space<vmem>>, vector<1x16x16xbf16>
    %129 = vector.shape_cast %128 : vector<1x16x16xbf16> to vector<16x16xbf16>
    %cst_125 = arith.constant dense<0.000000e+00> : vector<16x78xf32>
    %130 = tpu.matmul %129, %127, %cst_125 {dimension_numbers = #tpu.dot_dimension_numbers<[1], [0], [0], [1], [0, 0, 1, 1], [], []>} : vector<16x16xbf16>, vector<16x78xbf16>, vector<16x78xf32> -> vector<16x78xf32>
    %131 = arith.addf %125, %130 : vector<16x78xf32>
    %c0_126 = arith.constant 0 : index
    %c0_127 = arith.constant 0 : index
    %132 = vector.load %arg6[%c0_126, %c0_127] : memref<16x1xf32, #tpu.memory_space<vmem>>, vector<16x1xf32>
    %133 = vector.broadcast %132 : vector<16x1xf32> to vector<16x78xf32>
    %134 = arith.addf %131, %133 : vector<16x78xf32>
    %cst_128 = arith.constant 0.000000e+00 : f32
    %135 = vector.broadcast %cst_128 : f32 to vector<16x78xf32>
    %136 = arith.cmpf ogt, %134, %135 : vector<16x78xf32>
    %cst_129 = arith.constant 0.000000e+00 : f32
    %137 = vector.broadcast %cst_129 : f32 to vector<16x78xf32>
    %138 = arith.minimumf %134, %137 : vector<16x78xf32>
    %139 = math.exp %138 : vector<16x78xf32>
    %cst_130 = arith.constant 1.000000e+00 : f32
    %140 = vector.broadcast %cst_130 : f32 to vector<16x78xf32>
    %141 = arith.subf %139, %140 : vector<16x78xf32>
    %142 = arith.select %136, %134, %141 : vector<16x78xi1>, vector<16x78xf32>
    %143 = vector.broadcast %0 : vector<1x78xf32> to vector<16x78xf32>
    %144 = arith.mulf %142, %143 : vector<16x78xf32>
    %cst_131 = arith.constant 0.000000e+00 : bf16
    %145 = vector.broadcast %cst_131 : bf16 to vector<16x100xbf16>
    %c0_132 = arith.constant 0 : index
    %c0_133 = arith.constant 0 : index
    %c0_134 = arith.constant 0 : index
    %146 = vector.load %arg7[%c0_132, %c0_133, %c0_134] : memref<1x16x100xbf16, #tpu.memory_space<vmem>>, vector<1x16x100xbf16>
    %147 = vector.shape_cast %146 : vector<1x16x100xbf16> to vector<16x100xbf16>
    %148 = vector.shape_cast %145 : vector<16x100xbf16> to vector<1x16x100xbf16>
    tpu.vector_store %arg7[%c0_132, %c0_133, %c0_134], %148 {strides = array<i32>} : memref<1x16x100xbf16, #tpu.memory_space<vmem>>, vector<1x16x100xbf16>,
    %149 = arith.truncf %144 : vector<16x78xf32> to vector<16x78xbf16>
    %c0_135 = arith.constant 0 : index
    %c0_136 = arith.constant 0 : index
    %c11_137 = arith.constant 11 : index
    %150 = vector.load %arg7[%c0_135, %c0_136, %c11_137] : memref<1x16x100xbf16, #tpu.memory_space<vmem>>, vector<1x16x78xbf16>
    %151 = vector.shape_cast %150 : vector<1x16x78xbf16> to vector<16x78xbf16>
    %152 = vector.shape_cast %149 : vector<16x78xbf16> to vector<1x16x78xbf16>
    tpu.vector_store %arg7[%c0_135, %c0_136, %c11_137], %152 {strides = array<i32>} : memref<1x16x100xbf16, #tpu.memory_space<vmem>>, vector<1x16x78xbf16>,
    return
  }
  func.func @transform_0(%arg0: i32) -> (i32, i32, i32) {
    %c0_i32 = arith.constant 0 : i32
    %c0_i32_0 = arith.constant 0 : i32
    %c0_i32_1 = arith.constant 0 : i32
    return %arg0, %c0_i32, %c0_i32_0 : i32, i32, i32
  }
  func.func @transform_1(%arg0: i32) -> (i32, i32) {
    %c0_i32 = arith.constant 0 : i32
    %c0_i32_0 = arith.constant 0 : i32
    %c0_i32_1 = arith.constant 0 : i32
    return %c0_i32, %c0_i32_0 : i32, i32
  }
  func.func @transform_2(%arg0: i32) -> (i32, i32, i32) {
    %c0_i32 = arith.constant 0 : i32
    %c0_i32_0 = arith.constant 0 : i32
    %c0_i32_1 = arith.constant 0 : i32
    %c0_i32_2 = arith.constant 0 : i32
    return %c0_i32, %c0_i32_0, %c0_i32_1 : i32, i32, i32
  }
  func.func @transform_3(%arg0: i32) -> (i32, i32) {
    %c0_i32 = arith.constant 0 : i32
    %c0_i32_0 = arith.constant 0 : i32
    %c0_i32_1 = arith.constant 0 : i32
    return %c0_i32, %c0_i32_0 : i32, i32
  }
  func.func @transform_4(%arg0: i32) -> (i32, i32, i32) {
    %c0_i32 = arith.constant 0 : i32
    %c0_i32_0 = arith.constant 0 : i32
    %c0_i32_1 = arith.constant 0 : i32
    %c0_i32_2 = arith.constant 0 : i32
    return %c0_i32, %c0_i32_0, %c0_i32_1 : i32, i32, i32
  }
  func.func @transform_5(%arg0: i32) -> (i32, i32) {
    %c0_i32 = arith.constant 0 : i32
    %c0_i32_0 = arith.constant 0 : i32
    %c0_i32_1 = arith.constant 0 : i32
    return %c0_i32, %c0_i32_0 : i32, i32
  }
  func.func @transform_6(%arg0: i32) -> (i32, i32, i32) {
    %c0_i32 = arith.constant 0 : i32
    %c0_i32_0 = arith.constant 0 : i32
    %c0_i32_1 = arith.constant 0 : i32
    return %arg0, %c0_i32, %c0_i32_0 : i32, i32, i32
  }
}

module attributes {stable_mosaic.version = 11 : i64} {
  func.func @kernel(%arg0: i32, %arg1: memref<1x16x100xbf16, #tpu.memory_space<vmem>>, %arg2: memref<1x78xf32, #tpu.memory_space<vmem>>, %arg3: memref<9x8x16xbf16, #tpu.memory_space<vmem>>, %arg4: memref<8x1xf32, #tpu.memory_space<vmem>>, %arg5: memref<1x8x100xbf16, #tpu.memory_space<vmem>>) attributes {dimension_semantics = [#tpu.dimension_semantics<parallel>], iteration_bounds = array<i64: 2>, scalar_prefetch = 0 : i64, scratch_operands = 0 : i64, tpu.core_type = #tpu.core_type<tc>, window_params = [{transform_indices = @transform_0, window_bounds = array<i64: 1, 16, 100>}, {pipeline_mode = #tpu.pipeline_mode<synchronous>, transform_indices = @transform_1, window_bounds = array<i64: 1, 78>}, {pipeline_mode = #tpu.pipeline_mode<synchronous>, transform_indices = @transform_2, window_bounds = array<i64: 9, 8, 16>}, {pipeline_mode = #tpu.pipeline_mode<synchronous>, transform_indices = @transform_3, window_bounds = array<i64: 8, 1>}, {transform_indices = @transform_4, window_bounds = array<i64: 1, 8, 100>}]} {
    %c0 = arith.constant 0 : index
    %c0_0 = arith.constant 0 : index
    %0 = vector.load %arg2[%c0, %c0_0] : memref<1x78xf32, #tpu.memory_space<vmem>>, vector<1x78xf32>
    %cst = arith.constant 0.000000e+00 : f32
    %1 = vector.broadcast %cst : f32 to vector<8x78xf32>
    %c0_1 = arith.constant 0 : index
    %c0_2 = arith.constant 0 : index
    %c0_3 = arith.constant 0 : index
    %2 = vector.load %arg1[%c0_1, %c0_2, %c0_3] : memref<1x16x100xbf16, #tpu.memory_space<vmem>>, vector<1x16x78xbf16>
    %3 = vector.shape_cast %2 : vector<1x16x78xbf16> to vector<16x78xbf16>
    %c0_4 = arith.constant 0 : index
    %c0_5 = arith.constant 0 : index
    %c0_6 = arith.constant 0 : index
    %4 = vector.load %arg3[%c0_4, %c0_5, %c0_6] : memref<9x8x16xbf16, #tpu.memory_space<vmem>>, vector<1x8x16xbf16>
    %5 = vector.shape_cast %4 : vector<1x8x16xbf16> to vector<8x16xbf16>
    %cst_7 = arith.constant dense<0.000000e+00> : vector<8x78xf32>
    %6 = tpu.matmul %5, %3, %cst_7 {dimension_numbers = #tpu.dot_dimension_numbers<[1], [0], [0], [1], [0, 0, 1, 1], [], []>} : vector<8x16xbf16>, vector<16x78xbf16>, vector<8x78xf32> -> vector<8x78xf32>
    %7 = arith.addf %1, %6 : vector<8x78xf32>
    %c0_8 = arith.constant 0 : index
    %c0_9 = arith.constant 0 : index
    %c1 = arith.constant 1 : index
    %8 = vector.load %arg1[%c0_8, %c0_9, %c1] : memref<1x16x100xbf16, #tpu.memory_space<vmem>>, vector<1x16x78xbf16>
    %9 = vector.shape_cast %8 : vector<1x16x78xbf16> to vector<16x78xbf16>
    %c1_10 = arith.constant 1 : index
    %c0_11 = arith.constant 0 : index
    %c0_12 = arith.constant 0 : index
    %10 = vector.load %arg3[%c1_10, %c0_11, %c0_12] : memref<9x8x16xbf16, #tpu.memory_space<vmem>>, vector<1x8x16xbf16>
    %11 = vector.shape_cast %10 : vector<1x8x16xbf16> to vector<8x16xbf16>
    %cst_13 = arith.constant dense<0.000000e+00> : vector<8x78xf32>
    %12 = tpu.matmul %11, %9, %cst_13 {dimension_numbers = #tpu.dot_dimension_numbers<[1], [0], [0], [1], [0, 0, 1, 1], [], []>} : vector<8x16xbf16>, vector<16x78xbf16>, vector<8x78xf32> -> vector<8x78xf32>
    %13 = arith.addf %7, %12 : vector<8x78xf32>
    %c0_14 = arith.constant 0 : index
    %c0_15 = arith.constant 0 : index
    %c2 = arith.constant 2 : index
    %14 = vector.load %arg1[%c0_14, %c0_15, %c2] : memref<1x16x100xbf16, #tpu.memory_space<vmem>>, vector<1x16x78xbf16>
    %15 = vector.shape_cast %14 : vector<1x16x78xbf16> to vector<16x78xbf16>
    %c2_16 = arith.constant 2 : index
    %c0_17 = arith.constant 0 : index
    %c0_18 = arith.constant 0 : index
    %16 = vector.load %arg3[%c2_16, %c0_17, %c0_18] : memref<9x8x16xbf16, #tpu.memory_space<vmem>>, vector<1x8x16xbf16>
    %17 = vector.shape_cast %16 : vector<1x8x16xbf16> to vector<8x16xbf16>
    %cst_19 = arith.constant dense<0.000000e+00> : vector<8x78xf32>
    %18 = tpu.matmul %17, %15, %cst_19 {dimension_numbers = #tpu.dot_dimension_numbers<[1], [0], [0], [1], [0, 0, 1, 1], [], []>} : vector<8x16xbf16>, vector<16x78xbf16>, vector<8x78xf32> -> vector<8x78xf32>
    %19 = arith.addf %13, %18 : vector<8x78xf32>
    %c0_20 = arith.constant 0 : index
    %c0_21 = arith.constant 0 : index
    %c10 = arith.constant 10 : index
    %20 = vector.load %arg1[%c0_20, %c0_21, %c10] : memref<1x16x100xbf16, #tpu.memory_space<vmem>>, vector<1x16x78xbf16>
    %21 = vector.shape_cast %20 : vector<1x16x78xbf16> to vector<16x78xbf16>
    %c3 = arith.constant 3 : index
    %c0_22 = arith.constant 0 : index
    %c0_23 = arith.constant 0 : index
    %22 = vector.load %arg3[%c3, %c0_22, %c0_23] : memref<9x8x16xbf16, #tpu.memory_space<vmem>>, vector<1x8x16xbf16>
    %23 = vector.shape_cast %22 : vector<1x8x16xbf16> to vector<8x16xbf16>
    %cst_24 = arith.constant dense<0.000000e+00> : vector<8x78xf32>
    %24 = tpu.matmul %23, %21, %cst_24 {dimension_numbers = #tpu.dot_dimension_numbers<[1], [0], [0], [1], [0, 0, 1, 1], [], []>} : vector<8x16xbf16>, vector<16x78xbf16>, vector<8x78xf32> -> vector<8x78xf32>
    %25 = arith.addf %19, %24 : vector<8x78xf32>
    %c0_25 = arith.constant 0 : index
    %c0_26 = arith.constant 0 : index
    %c11 = arith.constant 11 : index
    %26 = vector.load %arg1[%c0_25, %c0_26, %c11] : memref<1x16x100xbf16, #tpu.memory_space<vmem>>, vector<1x16x78xbf16>
    %27 = vector.shape_cast %26 : vector<1x16x78xbf16> to vector<16x78xbf16>
    %c4 = arith.constant 4 : index
    %c0_27 = arith.constant 0 : index
    %c0_28 = arith.constant 0 : index
    %28 = vector.load %arg3[%c4, %c0_27, %c0_28] : memref<9x8x16xbf16, #tpu.memory_space<vmem>>, vector<1x8x16xbf16>
    %29 = vector.shape_cast %28 : vector<1x8x16xbf16> to vector<8x16xbf16>
    %cst_29 = arith.constant dense<0.000000e+00> : vector<8x78xf32>
    %30 = tpu.matmul %29, %27, %cst_29 {dimension_numbers = #tpu.dot_dimension_numbers<[1], [0], [0], [1], [0, 0, 1, 1], [], []>} : vector<8x16xbf16>, vector<16x78xbf16>, vector<8x78xf32> -> vector<8x78xf32>
    %31 = arith.addf %25, %30 : vector<8x78xf32>
    %c0_30 = arith.constant 0 : index
    %c0_31 = arith.constant 0 : index
    %c12 = arith.constant 12 : index
    %32 = vector.load %arg1[%c0_30, %c0_31, %c12] : memref<1x16x100xbf16, #tpu.memory_space<vmem>>, vector<1x16x78xbf16>
    %33 = vector.shape_cast %32 : vector<1x16x78xbf16> to vector<16x78xbf16>
    %c5 = arith.constant 5 : index
    %c0_32 = arith.constant 0 : index
    %c0_33 = arith.constant 0 : index
    %34 = vector.load %arg3[%c5, %c0_32, %c0_33] : memref<9x8x16xbf16, #tpu.memory_space<vmem>>, vector<1x8x16xbf16>
    %35 = vector.shape_cast %34 : vector<1x8x16xbf16> to vector<8x16xbf16>
    %cst_34 = arith.constant dense<0.000000e+00> : vector<8x78xf32>
    %36 = tpu.matmul %35, %33, %cst_34 {dimension_numbers = #tpu.dot_dimension_numbers<[1], [0], [0], [1], [0, 0, 1, 1], [], []>} : vector<8x16xbf16>, vector<16x78xbf16>, vector<8x78xf32> -> vector<8x78xf32>
    %37 = arith.addf %31, %36 : vector<8x78xf32>
    %c0_35 = arith.constant 0 : index
    %c0_36 = arith.constant 0 : index
    %c20 = arith.constant 20 : index
    %38 = vector.load %arg1[%c0_35, %c0_36, %c20] : memref<1x16x100xbf16, #tpu.memory_space<vmem>>, vector<1x16x78xbf16>
    %39 = vector.shape_cast %38 : vector<1x16x78xbf16> to vector<16x78xbf16>
    %c6 = arith.constant 6 : index
    %c0_37 = arith.constant 0 : index
    %c0_38 = arith.constant 0 : index
    %40 = vector.load %arg3[%c6, %c0_37, %c0_38] : memref<9x8x16xbf16, #tpu.memory_space<vmem>>, vector<1x8x16xbf16>
    %41 = vector.shape_cast %40 : vector<1x8x16xbf16> to vector<8x16xbf16>
    %cst_39 = arith.constant dense<0.000000e+00> : vector<8x78xf32>
    %42 = tpu.matmul %41, %39, %cst_39 {dimension_numbers = #tpu.dot_dimension_numbers<[1], [0], [0], [1], [0, 0, 1, 1], [], []>} : vector<8x16xbf16>, vector<16x78xbf16>, vector<8x78xf32> -> vector<8x78xf32>
    %43 = arith.addf %37, %42 : vector<8x78xf32>
    %c0_40 = arith.constant 0 : index
    %c0_41 = arith.constant 0 : index
    %c21 = arith.constant 21 : index
    %44 = vector.load %arg1[%c0_40, %c0_41, %c21] : memref<1x16x100xbf16, #tpu.memory_space<vmem>>, vector<1x16x78xbf16>
    %45 = vector.shape_cast %44 : vector<1x16x78xbf16> to vector<16x78xbf16>
    %c7 = arith.constant 7 : index
    %c0_42 = arith.constant 0 : index
    %c0_43 = arith.constant 0 : index
    %46 = vector.load %arg3[%c7, %c0_42, %c0_43] : memref<9x8x16xbf16, #tpu.memory_space<vmem>>, vector<1x8x16xbf16>
    %47 = vector.shape_cast %46 : vector<1x8x16xbf16> to vector<8x16xbf16>
    %cst_44 = arith.constant dense<0.000000e+00> : vector<8x78xf32>
    %48 = tpu.matmul %47, %45, %cst_44 {dimension_numbers = #tpu.dot_dimension_numbers<[1], [0], [0], [1], [0, 0, 1, 1], [], []>} : vector<8x16xbf16>, vector<16x78xbf16>, vector<8x78xf32> -> vector<8x78xf32>
    %49 = arith.addf %43, %48 : vector<8x78xf32>
    %c0_45 = arith.constant 0 : index
    %c0_46 = arith.constant 0 : index
    %c22 = arith.constant 22 : index
    %50 = vector.load %arg1[%c0_45, %c0_46, %c22] : memref<1x16x100xbf16, #tpu.memory_space<vmem>>, vector<1x16x78xbf16>
    %51 = vector.shape_cast %50 : vector<1x16x78xbf16> to vector<16x78xbf16>
    %c8 = arith.constant 8 : index
    %c0_47 = arith.constant 0 : index
    %c0_48 = arith.constant 0 : index
    %52 = vector.load %arg3[%c8, %c0_47, %c0_48] : memref<9x8x16xbf16, #tpu.memory_space<vmem>>, vector<1x8x16xbf16>
    %53 = vector.shape_cast %52 : vector<1x8x16xbf16> to vector<8x16xbf16>
    %cst_49 = arith.constant dense<0.000000e+00> : vector<8x78xf32>
    %54 = tpu.matmul %53, %51, %cst_49 {dimension_numbers = #tpu.dot_dimension_numbers<[1], [0], [0], [1], [0, 0, 1, 1], [], []>} : vector<8x16xbf16>, vector<16x78xbf16>, vector<8x78xf32> -> vector<8x78xf32>
    %55 = arith.addf %49, %54 : vector<8x78xf32>
    %c0_50 = arith.constant 0 : index
    %c0_51 = arith.constant 0 : index
    %56 = vector.load %arg4[%c0_50, %c0_51] : memref<8x1xf32, #tpu.memory_space<vmem>>, vector<8x1xf32>
    %57 = vector.broadcast %56 : vector<8x1xf32> to vector<8x78xf32>
    %58 = arith.addf %55, %57 : vector<8x78xf32>
    %cst_52 = arith.constant 0.000000e+00 : f32
    %59 = vector.broadcast %cst_52 : f32 to vector<8x78xf32>
    %60 = arith.cmpf ogt, %58, %59 : vector<8x78xf32>
    %cst_53 = arith.constant 0.000000e+00 : f32
    %61 = vector.broadcast %cst_53 : f32 to vector<8x78xf32>
    %62 = arith.minimumf %58, %61 : vector<8x78xf32>
    %63 = math.exp %62 : vector<8x78xf32>
    %cst_54 = arith.constant 1.000000e+00 : f32
    %64 = vector.broadcast %cst_54 : f32 to vector<8x78xf32>
    %65 = arith.subf %63, %64 : vector<8x78xf32>
    %66 = arith.select %60, %58, %65 : vector<8x78xi1>, vector<8x78xf32>
    %67 = vector.broadcast %0 : vector<1x78xf32> to vector<8x78xf32>
    %68 = arith.mulf %66, %67 : vector<8x78xf32>
    %cst_55 = arith.constant 0.000000e+00 : bf16
    %69 = vector.broadcast %cst_55 : bf16 to vector<8x100xbf16>
    %c0_56 = arith.constant 0 : index
    %c0_57 = arith.constant 0 : index
    %c0_58 = arith.constant 0 : index
    %70 = vector.load %arg5[%c0_56, %c0_57, %c0_58] : memref<1x8x100xbf16, #tpu.memory_space<vmem>>, vector<1x8x100xbf16>
    %71 = vector.shape_cast %70 : vector<1x8x100xbf16> to vector<8x100xbf16>
    %72 = vector.shape_cast %69 : vector<8x100xbf16> to vector<1x8x100xbf16>
    tpu.vector_store %arg5[%c0_56, %c0_57, %c0_58], %72 {strides = array<i32>} : memref<1x8x100xbf16, #tpu.memory_space<vmem>>, vector<1x8x100xbf16>,
    %73 = arith.truncf %68 : vector<8x78xf32> to vector<8x78xbf16>
    %c0_59 = arith.constant 0 : index
    %c0_60 = arith.constant 0 : index
    %c11_61 = arith.constant 11 : index
    %74 = vector.load %arg5[%c0_59, %c0_60, %c11_61] : memref<1x8x100xbf16, #tpu.memory_space<vmem>>, vector<1x8x78xbf16>
    %75 = vector.shape_cast %74 : vector<1x8x78xbf16> to vector<8x78xbf16>
    %76 = vector.shape_cast %73 : vector<8x78xbf16> to vector<1x8x78xbf16>
    tpu.vector_store %arg5[%c0_59, %c0_60, %c11_61], %76 {strides = array<i32>} : memref<1x8x100xbf16, #tpu.memory_space<vmem>>, vector<1x8x78xbf16>,
    return
  }
  func.func @transform_0(%arg0: i32) -> (i32, i32, i32) {
    %c0_i32 = arith.constant 0 : i32
    %c0_i32_0 = arith.constant 0 : i32
    %c0_i32_1 = arith.constant 0 : i32
    return %arg0, %c0_i32, %c0_i32_0 : i32, i32, i32
  }
  func.func @transform_1(%arg0: i32) -> (i32, i32) {
    %c0_i32 = arith.constant 0 : i32
    %c0_i32_0 = arith.constant 0 : i32
    %c0_i32_1 = arith.constant 0 : i32
    return %c0_i32, %c0_i32_0 : i32, i32
  }
  func.func @transform_2(%arg0: i32) -> (i32, i32, i32) {
    %c0_i32 = arith.constant 0 : i32
    %c0_i32_0 = arith.constant 0 : i32
    %c0_i32_1 = arith.constant 0 : i32
    %c0_i32_2 = arith.constant 0 : i32
    return %c0_i32, %c0_i32_0, %c0_i32_1 : i32, i32, i32
  }
  func.func @transform_3(%arg0: i32) -> (i32, i32) {
    %c0_i32 = arith.constant 0 : i32
    %c0_i32_0 = arith.constant 0 : i32
    %c0_i32_1 = arith.constant 0 : i32
    return %c0_i32, %c0_i32_0 : i32, i32
  }
  func.func @transform_4(%arg0: i32) -> (i32, i32, i32) {
    %c0_i32 = arith.constant 0 : i32
    %c0_i32_0 = arith.constant 0 : i32
    %c0_i32_1 = arith.constant 0 : i32
    return %arg0, %c0_i32, %c0_i32_0 : i32, i32, i32
  }
}

module attributes {stable_mosaic.version = 11 : i64} {
  func.func @kernel(%arg0: i32, %arg1: memref<1x8x324xbf16, #tpu.memory_space<vmem>>, %arg2: memref<1x286xf32, #tpu.memory_space<vmem>>, %arg3: memref<9x8x8xbf16, #tpu.memory_space<vmem>>, %arg4: memref<8x1xf32, #tpu.memory_space<vmem>>, %arg5: memref<9x8x8xbf16, #tpu.memory_space<vmem>>, %arg6: memref<8x1xf32, #tpu.memory_space<vmem>>, %arg7: memref<9x2x8xbf16, #tpu.memory_space<vmem>>, %arg8: memref<2x1xf32, #tpu.memory_space<vmem>>, %arg9: memref<1x2x324xf32, #tpu.memory_space<vmem>>, %arg10: memref<1x8x324xbf16, #tpu.memory_space<vmem>>, %arg11: memref<1x8x324xbf16, #tpu.memory_space<vmem>>) attributes {dimension_semantics = [#tpu.dimension_semantics<parallel>], iteration_bounds = array<i64: 2>, scalar_prefetch = 0 : i64, scratch_operands = 2 : i64, tpu.core_type = #tpu.core_type<tc>, window_params = [{transform_indices = @transform_0, window_bounds = array<i64: 1, 8, 324>}, {pipeline_mode = #tpu.pipeline_mode<synchronous>, transform_indices = @transform_1, window_bounds = array<i64: 1, 286>}, {pipeline_mode = #tpu.pipeline_mode<synchronous>, transform_indices = @transform_2, window_bounds = array<i64: 9, 8, 8>}, {pipeline_mode = #tpu.pipeline_mode<synchronous>, transform_indices = @transform_3, window_bounds = array<i64: 8, 1>}, {pipeline_mode = #tpu.pipeline_mode<synchronous>, transform_indices = @transform_4, window_bounds = array<i64: 9, 8, 8>}, {pipeline_mode = #tpu.pipeline_mode<synchronous>, transform_indices = @transform_5, window_bounds = array<i64: 8, 1>}, {pipeline_mode = #tpu.pipeline_mode<synchronous>, transform_indices = @transform_6, window_bounds = array<i64: 9, 2, 8>}, {pipeline_mode = #tpu.pipeline_mode<synchronous>, transform_indices = @transform_7, window_bounds = array<i64: 2, 1>}, {transform_indices = @transform_8, window_bounds = array<i64: 1, 2, 324>}]} {
    %c0 = arith.constant 0 : index
    %c0_0 = arith.constant 0 : index
    %0 = vector.load %arg2[%c0, %c0_0] : memref<1x286xf32, #tpu.memory_space<vmem>>, vector<1x286xf32>
    %cst = arith.constant 0.000000e+00 : f32
    %1 = vector.broadcast %cst : f32 to vector<8x286xf32>
    %c0_1 = arith.constant 0 : index
    %c0_2 = arith.constant 0 : index
    %c0_3 = arith.constant 0 : index
    %2 = vector.load %arg1[%c0_1, %c0_2, %c0_3] : memref<1x8x324xbf16, #tpu.memory_space<vmem>>, vector<1x8x286xbf16>
    %3 = vector.shape_cast %2 : vector<1x8x286xbf16> to vector<8x286xbf16>
    %c0_4 = arith.constant 0 : index
    %c0_5 = arith.constant 0 : index
    %c0_6 = arith.constant 0 : index
    %4 = vector.load %arg3[%c0_4, %c0_5, %c0_6] : memref<9x8x8xbf16, #tpu.memory_space<vmem>>, vector<1x8x8xbf16>
    %5 = vector.shape_cast %4 : vector<1x8x8xbf16> to vector<8x8xbf16>
    %cst_7 = arith.constant dense<0.000000e+00> : vector<8x286xf32>
    %6 = tpu.matmul %5, %3, %cst_7 {dimension_numbers = #tpu.dot_dimension_numbers<[1], [0], [0], [1], [0, 0, 1, 1], [], []>} : vector<8x8xbf16>, vector<8x286xbf16>, vector<8x286xf32> -> vector<8x286xf32>
    %7 = arith.addf %1, %6 : vector<8x286xf32>
    %c0_8 = arith.constant 0 : index
    %c0_9 = arith.constant 0 : index
    %c1 = arith.constant 1 : index
    %8 = vector.load %arg1[%c0_8, %c0_9, %c1] : memref<1x8x324xbf16, #tpu.memory_space<vmem>>, vector<1x8x286xbf16>
    %9 = vector.shape_cast %8 : vector<1x8x286xbf16> to vector<8x286xbf16>
    %c1_10 = arith.constant 1 : index
    %c0_11 = arith.constant 0 : index
    %c0_12 = arith.constant 0 : index
    %10 = vector.load %arg3[%c1_10, %c0_11, %c0_12] : memref<9x8x8xbf16, #tpu.memory_space<vmem>>, vector<1x8x8xbf16>
    %11 = vector.shape_cast %10 : vector<1x8x8xbf16> to vector<8x8xbf16>
    %cst_13 = arith.constant dense<0.000000e+00> : vector<8x286xf32>
    %12 = tpu.matmul %11, %9, %cst_13 {dimension_numbers = #tpu.dot_dimension_numbers<[1], [0], [0], [1], [0, 0, 1, 1], [], []>} : vector<8x8xbf16>, vector<8x286xbf16>, vector<8x286xf32> -> vector<8x286xf32>
    %13 = arith.addf %7, %12 : vector<8x286xf32>
    %c0_14 = arith.constant 0 : index
    %c0_15 = arith.constant 0 : index
    %c2 = arith.constant 2 : index
    %14 = vector.load %arg1[%c0_14, %c0_15, %c2] : memref<1x8x324xbf16, #tpu.memory_space<vmem>>, vector<1x8x286xbf16>
    %15 = vector.shape_cast %14 : vector<1x8x286xbf16> to vector<8x286xbf16>
    %c2_16 = arith.constant 2 : index
    %c0_17 = arith.constant 0 : index
    %c0_18 = arith.constant 0 : index
    %16 = vector.load %arg3[%c2_16, %c0_17, %c0_18] : memref<9x8x8xbf16, #tpu.memory_space<vmem>>, vector<1x8x8xbf16>
    %17 = vector.shape_cast %16 : vector<1x8x8xbf16> to vector<8x8xbf16>
    %cst_19 = arith.constant dense<0.000000e+00> : vector<8x286xf32>
    %18 = tpu.matmul %17, %15, %cst_19 {dimension_numbers = #tpu.dot_dimension_numbers<[1], [0], [0], [1], [0, 0, 1, 1], [], []>} : vector<8x8xbf16>, vector<8x286xbf16>, vector<8x286xf32> -> vector<8x286xf32>
    %19 = arith.addf %13, %18 : vector<8x286xf32>
    %c0_20 = arith.constant 0 : index
    %c0_21 = arith.constant 0 : index
    %c18 = arith.constant 18 : index
    %20 = vector.load %arg1[%c0_20, %c0_21, %c18] : memref<1x8x324xbf16, #tpu.memory_space<vmem>>, vector<1x8x286xbf16>
    %21 = vector.shape_cast %20 : vector<1x8x286xbf16> to vector<8x286xbf16>
    %c3 = arith.constant 3 : index
    %c0_22 = arith.constant 0 : index
    %c0_23 = arith.constant 0 : index
    %22 = vector.load %arg3[%c3, %c0_22, %c0_23] : memref<9x8x8xbf16, #tpu.memory_space<vmem>>, vector<1x8x8xbf16>
    %23 = vector.shape_cast %22 : vector<1x8x8xbf16> to vector<8x8xbf16>
    %cst_24 = arith.constant dense<0.000000e+00> : vector<8x286xf32>
    %24 = tpu.matmul %23, %21, %cst_24 {dimension_numbers = #tpu.dot_dimension_numbers<[1], [0], [0], [1], [0, 0, 1, 1], [], []>} : vector<8x8xbf16>, vector<8x286xbf16>, vector<8x286xf32> -> vector<8x286xf32>
    %25 = arith.addf %19, %24 : vector<8x286xf32>
    %c0_25 = arith.constant 0 : index
    %c0_26 = arith.constant 0 : index
    %c19 = arith.constant 19 : index
    %26 = vector.load %arg1[%c0_25, %c0_26, %c19] : memref<1x8x324xbf16, #tpu.memory_space<vmem>>, vector<1x8x286xbf16>
    %27 = vector.shape_cast %26 : vector<1x8x286xbf16> to vector<8x286xbf16>
    %c4 = arith.constant 4 : index
    %c0_27 = arith.constant 0 : index
    %c0_28 = arith.constant 0 : index
    %28 = vector.load %arg3[%c4, %c0_27, %c0_28] : memref<9x8x8xbf16, #tpu.memory_space<vmem>>, vector<1x8x8xbf16>
    %29 = vector.shape_cast %28 : vector<1x8x8xbf16> to vector<8x8xbf16>
    %cst_29 = arith.constant dense<0.000000e+00> : vector<8x286xf32>
    %30 = tpu.matmul %29, %27, %cst_29 {dimension_numbers = #tpu.dot_dimension_numbers<[1], [0], [0], [1], [0, 0, 1, 1], [], []>} : vector<8x8xbf16>, vector<8x286xbf16>, vector<8x286xf32> -> vector<8x286xf32>
    %31 = arith.addf %25, %30 : vector<8x286xf32>
    %c0_30 = arith.constant 0 : index
    %c0_31 = arith.constant 0 : index
    %c20 = arith.constant 20 : index
    %32 = vector.load %arg1[%c0_30, %c0_31, %c20] : memref<1x8x324xbf16, #tpu.memory_space<vmem>>, vector<1x8x286xbf16>
    %33 = vector.shape_cast %32 : vector<1x8x286xbf16> to vector<8x286xbf16>
    %c5 = arith.constant 5 : index
    %c0_32 = arith.constant 0 : index
    %c0_33 = arith.constant 0 : index
    %34 = vector.load %arg3[%c5, %c0_32, %c0_33] : memref<9x8x8xbf16, #tpu.memory_space<vmem>>, vector<1x8x8xbf16>
    %35 = vector.shape_cast %34 : vector<1x8x8xbf16> to vector<8x8xbf16>
    %cst_34 = arith.constant dense<0.000000e+00> : vector<8x286xf32>
    %36 = tpu.matmul %35, %33, %cst_34 {dimension_numbers = #tpu.dot_dimension_numbers<[1], [0], [0], [1], [0, 0, 1, 1], [], []>} : vector<8x8xbf16>, vector<8x286xbf16>, vector<8x286xf32> -> vector<8x286xf32>
    %37 = arith.addf %31, %36 : vector<8x286xf32>
    %c0_35 = arith.constant 0 : index
    %c0_36 = arith.constant 0 : index
    %c36 = arith.constant 36 : index
    %38 = vector.load %arg1[%c0_35, %c0_36, %c36] : memref<1x8x324xbf16, #tpu.memory_space<vmem>>, vector<1x8x286xbf16>
    %39 = vector.shape_cast %38 : vector<1x8x286xbf16> to vector<8x286xbf16>
    %c6 = arith.constant 6 : index
    %c0_37 = arith.constant 0 : index
    %c0_38 = arith.constant 0 : index
    %40 = vector.load %arg3[%c6, %c0_37, %c0_38] : memref<9x8x8xbf16, #tpu.memory_space<vmem>>, vector<1x8x8xbf16>
    %41 = vector.shape_cast %40 : vector<1x8x8xbf16> to vector<8x8xbf16>
    %cst_39 = arith.constant dense<0.000000e+00> : vector<8x286xf32>
    %42 = tpu.matmul %41, %39, %cst_39 {dimension_numbers = #tpu.dot_dimension_numbers<[1], [0], [0], [1], [0, 0, 1, 1], [], []>} : vector<8x8xbf16>, vector<8x286xbf16>, vector<8x286xf32> -> vector<8x286xf32>
    %43 = arith.addf %37, %42 : vector<8x286xf32>
    %c0_40 = arith.constant 0 : index
    %c0_41 = arith.constant 0 : index
    %c37 = arith.constant 37 : index
    %44 = vector.load %arg1[%c0_40, %c0_41, %c37] : memref<1x8x324xbf16, #tpu.memory_space<vmem>>, vector<1x8x286xbf16>
    %45 = vector.shape_cast %44 : vector<1x8x286xbf16> to vector<8x286xbf16>
    %c7 = arith.constant 7 : index
    %c0_42 = arith.constant 0 : index
    %c0_43 = arith.constant 0 : index
    %46 = vector.load %arg3[%c7, %c0_42, %c0_43] : memref<9x8x8xbf16, #tpu.memory_space<vmem>>, vector<1x8x8xbf16>
    %47 = vector.shape_cast %46 : vector<1x8x8xbf16> to vector<8x8xbf16>
    %cst_44 = arith.constant dense<0.000000e+00> : vector<8x286xf32>
    %48 = tpu.matmul %47, %45, %cst_44 {dimension_numbers = #tpu.dot_dimension_numbers<[1], [0], [0], [1], [0, 0, 1, 1], [], []>} : vector<8x8xbf16>, vector<8x286xbf16>, vector<8x286xf32> -> vector<8x286xf32>
    %49 = arith.addf %43, %48 : vector<8x286xf32>
    %c0_45 = arith.constant 0 : index
    %c0_46 = arith.constant 0 : index
    %c38 = arith.constant 38 : index
    %50 = vector.load %arg1[%c0_45, %c0_46, %c38] : memref<1x8x324xbf16, #tpu.memory_space<vmem>>, vector<1x8x286xbf16>
    %51 = vector.shape_cast %50 : vector<1x8x286xbf16> to vector<8x286xbf16>
    %c8 = arith.constant 8 : index
    %c0_47 = arith.constant 0 : index
    %c0_48 = arith.constant 0 : index
    %52 = vector.load %arg3[%c8, %c0_47, %c0_48] : memref<9x8x8xbf16, #tpu.memory_space<vmem>>, vector<1x8x8xbf16>
    %53 = vector.shape_cast %52 : vector<1x8x8xbf16> to vector<8x8xbf16>
    %cst_49 = arith.constant dense<0.000000e+00> : vector<8x286xf32>
    %54 = tpu.matmul %53, %51, %cst_49 {dimension_numbers = #tpu.dot_dimension_numbers<[1], [0], [0], [1], [0, 0, 1, 1], [], []>} : vector<8x8xbf16>, vector<8x286xbf16>, vector<8x286xf32> -> vector<8x286xf32>
    %55 = arith.addf %49, %54 : vector<8x286xf32>
    %c0_50 = arith.constant 0 : index
    %c0_51 = arith.constant 0 : index
    %56 = vector.load %arg4[%c0_50, %c0_51] : memref<8x1xf32, #tpu.memory_space<vmem>>, vector<8x1xf32>
    %57 = vector.broadcast %56 : vector<8x1xf32> to vector<8x286xf32>
    %58 = arith.addf %55, %57 : vector<8x286xf32>
    %cst_52 = arith.constant 0.000000e+00 : f32
    %59 = vector.broadcast %cst_52 : f32 to vector<8x286xf32>
    %60 = arith.cmpf ogt, %58, %59 : vector<8x286xf32>
    %cst_53 = arith.constant 0.000000e+00 : f32
    %61 = vector.broadcast %cst_53 : f32 to vector<8x286xf32>
    %62 = arith.minimumf %58, %61 : vector<8x286xf32>
    %63 = math.exp %62 : vector<8x286xf32>
    %cst_54 = arith.constant 1.000000e+00 : f32
    %64 = vector.broadcast %cst_54 : f32 to vector<8x286xf32>
    %65 = arith.subf %63, %64 : vector<8x286xf32>
    %66 = arith.select %60, %58, %65 : vector<8x286xi1>, vector<8x286xf32>
    %67 = vector.broadcast %0 : vector<1x286xf32> to vector<8x286xf32>
    %68 = arith.mulf %66, %67 : vector<8x286xf32>
    %cst_55 = arith.constant 0.000000e+00 : bf16
    %69 = vector.broadcast %cst_55 : bf16 to vector<8x324xbf16>
    %c0_56 = arith.constant 0 : index
    %c0_57 = arith.constant 0 : index
    %c0_58 = arith.constant 0 : index
    %70 = vector.load %arg10[%c0_56, %c0_57, %c0_58] : memref<1x8x324xbf16, #tpu.memory_space<vmem>>, vector<1x8x324xbf16>
    %71 = vector.shape_cast %70 : vector<1x8x324xbf16> to vector<8x324xbf16>
    %72 = vector.shape_cast %69 : vector<8x324xbf16> to vector<1x8x324xbf16>
    tpu.vector_store %arg10[%c0_56, %c0_57, %c0_58], %72 {strides = array<i32>} : memref<1x8x324xbf16, #tpu.memory_space<vmem>>, vector<1x8x324xbf16>,
    %73 = arith.truncf %68 : vector<8x286xf32> to vector<8x286xbf16>
    %c0_59 = arith.constant 0 : index
    %c0_60 = arith.constant 0 : index
    %c19_61 = arith.constant 19 : index
    %74 = vector.load %arg10[%c0_59, %c0_60, %c19_61] : memref<1x8x324xbf16, #tpu.memory_space<vmem>>, vector<1x8x286xbf16>
    %75 = vector.shape_cast %74 : vector<1x8x286xbf16> to vector<8x286xbf16>
    %76 = vector.shape_cast %73 : vector<8x286xbf16> to vector<1x8x286xbf16>
    tpu.vector_store %arg10[%c0_59, %c0_60, %c19_61], %76 {strides = array<i32>} : memref<1x8x324xbf16, #tpu.memory_space<vmem>>, vector<1x8x286xbf16>,
    %cst_62 = arith.constant 0.000000e+00 : f32
    %77 = vector.broadcast %cst_62 : f32 to vector<8x286xf32>
    %c0_63 = arith.constant 0 : index
    %c0_64 = arith.constant 0 : index
    %c0_65 = arith.constant 0 : index
    %78 = vector.load %arg10[%c0_63, %c0_64, %c0_65] : memref<1x8x324xbf16, #tpu.memory_space<vmem>>, vector<1x8x286xbf16>
    %79 = vector.shape_cast %78 : vector<1x8x286xbf16> to vector<8x286xbf16>
    %c0_66 = arith.constant 0 : index
    %c0_67 = arith.constant 0 : index
    %c0_68 = arith.constant 0 : index
    %80 = vector.load %arg5[%c0_66, %c0_67, %c0_68] : memref<9x8x8xbf16, #tpu.memory_space<vmem>>, vector<1x8x8xbf16>
    %81 = vector.shape_cast %80 : vector<1x8x8xbf16> to vector<8x8xbf16>
    %cst_69 = arith.constant dense<0.000000e+00> : vector<8x286xf32>
    %82 = tpu.matmul %81, %79, %cst_69 {dimension_numbers = #tpu.dot_dimension_numbers<[1], [0], [0], [1], [0, 0, 1, 1], [], []>} : vector<8x8xbf16>, vector<8x286xbf16>, vector<8x286xf32> -> vector<8x286xf32>
    %83 = arith.addf %77, %82 : vector<8x286xf32>
    %c0_70 = arith.constant 0 : index
    %c0_71 = arith.constant 0 : index
    %c1_72 = arith.constant 1 : index
    %84 = vector.load %arg10[%c0_70, %c0_71, %c1_72] : memref<1x8x324xbf16, #tpu.memory_space<vmem>>, vector<1x8x286xbf16>
    %85 = vector.shape_cast %84 : vector<1x8x286xbf16> to vector<8x286xbf16>
    %c1_73 = arith.constant 1 : index
    %c0_74 = arith.constant 0 : index
    %c0_75 = arith.constant 0 : index
    %86 = vector.load %arg5[%c1_73, %c0_74, %c0_75] : memref<9x8x8xbf16, #tpu.memory_space<vmem>>, vector<1x8x8xbf16>
    %87 = vector.shape_cast %86 : vector<1x8x8xbf16> to vector<8x8xbf16>
    %cst_76 = arith.constant dense<0.000000e+00> : vector<8x286xf32>
    %88 = tpu.matmul %87, %85, %cst_76 {dimension_numbers = #tpu.dot_dimension_numbers<[1], [0], [0], [1], [0, 0, 1, 1], [], []>} : vector<8x8xbf16>, vector<8x286xbf16>, vector<8x286xf32> -> vector<8x286xf32>
    %89 = arith.addf %83, %88 : vector<8x286xf32>
    %c0_77 = arith.constant 0 : index
    %c0_78 = arith.constant 0 : index
    %c2_79 = arith.constant 2 : index
    %90 = vector.load %arg10[%c0_77, %c0_78, %c2_79] : memref<1x8x324xbf16, #tpu.memory_space<vmem>>, vector<1x8x286xbf16>
    %91 = vector.shape_cast %90 : vector<1x8x286xbf16> to vector<8x286xbf16>
    %c2_80 = arith.constant 2 : index
    %c0_81 = arith.constant 0 : index
    %c0_82 = arith.constant 0 : index
    %92 = vector.load %arg5[%c2_80, %c0_81, %c0_82] : memref<9x8x8xbf16, #tpu.memory_space<vmem>>, vector<1x8x8xbf16>
    %93 = vector.shape_cast %92 : vector<1x8x8xbf16> to vector<8x8xbf16>
    %cst_83 = arith.constant dense<0.000000e+00> : vector<8x286xf32>
    %94 = tpu.matmul %93, %91, %cst_83 {dimension_numbers = #tpu.dot_dimension_numbers<[1], [0], [0], [1], [0, 0, 1, 1], [], []>} : vector<8x8xbf16>, vector<8x286xbf16>, vector<8x286xf32> -> vector<8x286xf32>
    %95 = arith.addf %89, %94 : vector<8x286xf32>
    %c0_84 = arith.constant 0 : index
    %c0_85 = arith.constant 0 : index
    %c18_86 = arith.constant 18 : index
    %96 = vector.load %arg10[%c0_84, %c0_85, %c18_86] : memref<1x8x324xbf16, #tpu.memory_space<vmem>>, vector<1x8x286xbf16>
    %97 = vector.shape_cast %96 : vector<1x8x286xbf16> to vector<8x286xbf16>
    %c3_87 = arith.constant 3 : index
    %c0_88 = arith.constant 0 : index
    %c0_89 = arith.constant 0 : index
    %98 = vector.load %arg5[%c3_87, %c0_88, %c0_89] : memref<9x8x8xbf16, #tpu.memory_space<vmem>>, vector<1x8x8xbf16>
    %99 = vector.shape_cast %98 : vector<1x8x8xbf16> to vector<8x8xbf16>
    %cst_90 = arith.constant dense<0.000000e+00> : vector<8x286xf32>
    %100 = tpu.matmul %99, %97, %cst_90 {dimension_numbers = #tpu.dot_dimension_numbers<[1], [0], [0], [1], [0, 0, 1, 1], [], []>} : vector<8x8xbf16>, vector<8x286xbf16>, vector<8x286xf32> -> vector<8x286xf32>
    %101 = arith.addf %95, %100 : vector<8x286xf32>
    %c0_91 = arith.constant 0 : index
    %c0_92 = arith.constant 0 : index
    %c19_93 = arith.constant 19 : index
    %102 = vector.load %arg10[%c0_91, %c0_92, %c19_93] : memref<1x8x324xbf16, #tpu.memory_space<vmem>>, vector<1x8x286xbf16>
    %103 = vector.shape_cast %102 : vector<1x8x286xbf16> to vector<8x286xbf16>
    %c4_94 = arith.constant 4 : index
    %c0_95 = arith.constant 0 : index
    %c0_96 = arith.constant 0 : index
    %104 = vector.load %arg5[%c4_94, %c0_95, %c0_96] : memref<9x8x8xbf16, #tpu.memory_space<vmem>>, vector<1x8x8xbf16>
    %105 = vector.shape_cast %104 : vector<1x8x8xbf16> to vector<8x8xbf16>
    %cst_97 = arith.constant dense<0.000000e+00> : vector<8x286xf32>
    %106 = tpu.matmul %105, %103, %cst_97 {dimension_numbers = #tpu.dot_dimension_numbers<[1], [0], [0], [1], [0, 0, 1, 1], [], []>} : vector<8x8xbf16>, vector<8x286xbf16>, vector<8x286xf32> -> vector<8x286xf32>
    %107 = arith.addf %101, %106 : vector<8x286xf32>
    %c0_98 = arith.constant 0 : index
    %c0_99 = arith.constant 0 : index
    %c20_100 = arith.constant 20 : index
    %108 = vector.load %arg10[%c0_98, %c0_99, %c20_100] : memref<1x8x324xbf16, #tpu.memory_space<vmem>>, vector<1x8x286xbf16>
    %109 = vector.shape_cast %108 : vector<1x8x286xbf16> to vector<8x286xbf16>
    %c5_101 = arith.constant 5 : index
    %c0_102 = arith.constant 0 : index
    %c0_103 = arith.constant 0 : index
    %110 = vector.load %arg5[%c5_101, %c0_102, %c0_103] : memref<9x8x8xbf16, #tpu.memory_space<vmem>>, vector<1x8x8xbf16>
    %111 = vector.shape_cast %110 : vector<1x8x8xbf16> to vector<8x8xbf16>
    %cst_104 = arith.constant dense<0.000000e+00> : vector<8x286xf32>
    %112 = tpu.matmul %111, %109, %cst_104 {dimension_numbers = #tpu.dot_dimension_numbers<[1], [0], [0], [1], [0, 0, 1, 1], [], []>} : vector<8x8xbf16>, vector<8x286xbf16>, vector<8x286xf32> -> vector<8x286xf32>
    %113 = arith.addf %107, %112 : vector<8x286xf32>
    %c0_105 = arith.constant 0 : index
    %c0_106 = arith.constant 0 : index
    %c36_107 = arith.constant 36 : index
    %114 = vector.load %arg10[%c0_105, %c0_106, %c36_107] : memref<1x8x324xbf16, #tpu.memory_space<vmem>>, vector<1x8x286xbf16>
    %115 = vector.shape_cast %114 : vector<1x8x286xbf16> to vector<8x286xbf16>
    %c6_108 = arith.constant 6 : index
    %c0_109 = arith.constant 0 : index
    %c0_110 = arith.constant 0 : index
    %116 = vector.load %arg5[%c6_108, %c0_109, %c0_110] : memref<9x8x8xbf16, #tpu.memory_space<vmem>>, vector<1x8x8xbf16>
    %117 = vector.shape_cast %116 : vector<1x8x8xbf16> to vector<8x8xbf16>
    %cst_111 = arith.constant dense<0.000000e+00> : vector<8x286xf32>
    %118 = tpu.matmul %117, %115, %cst_111 {dimension_numbers = #tpu.dot_dimension_numbers<[1], [0], [0], [1], [0, 0, 1, 1], [], []>} : vector<8x8xbf16>, vector<8x286xbf16>, vector<8x286xf32> -> vector<8x286xf32>
    %119 = arith.addf %113, %118 : vector<8x286xf32>
    %c0_112 = arith.constant 0 : index
    %c0_113 = arith.constant 0 : index
    %c37_114 = arith.constant 37 : index
    %120 = vector.load %arg10[%c0_112, %c0_113, %c37_114] : memref<1x8x324xbf16, #tpu.memory_space<vmem>>, vector<1x8x286xbf16>
    %121 = vector.shape_cast %120 : vector<1x8x286xbf16> to vector<8x286xbf16>
    %c7_115 = arith.constant 7 : index
    %c0_116 = arith.constant 0 : index
    %c0_117 = arith.constant 0 : index
    %122 = vector.load %arg5[%c7_115, %c0_116, %c0_117] : memref<9x8x8xbf16, #tpu.memory_space<vmem>>, vector<1x8x8xbf16>
    %123 = vector.shape_cast %122 : vector<1x8x8xbf16> to vector<8x8xbf16>
    %cst_118 = arith.constant dense<0.000000e+00> : vector<8x286xf32>
    %124 = tpu.matmul %123, %121, %cst_118 {dimension_numbers = #tpu.dot_dimension_numbers<[1], [0], [0], [1], [0, 0, 1, 1], [], []>} : vector<8x8xbf16>, vector<8x286xbf16>, vector<8x286xf32> -> vector<8x286xf32>
    %125 = arith.addf %119, %124 : vector<8x286xf32>
    %c0_119 = arith.constant 0 : index
    %c0_120 = arith.constant 0 : index
    %c38_121 = arith.constant 38 : index
    %126 = vector.load %arg10[%c0_119, %c0_120, %c38_121] : memref<1x8x324xbf16, #tpu.memory_space<vmem>>, vector<1x8x286xbf16>
    %127 = vector.shape_cast %126 : vector<1x8x286xbf16> to vector<8x286xbf16>
    %c8_122 = arith.constant 8 : index
    %c0_123 = arith.constant 0 : index
    %c0_124 = arith.constant 0 : index
    %128 = vector.load %arg5[%c8_122, %c0_123, %c0_124] : memref<9x8x8xbf16, #tpu.memory_space<vmem>>, vector<1x8x8xbf16>
    %129 = vector.shape_cast %128 : vector<1x8x8xbf16> to vector<8x8xbf16>
    %cst_125 = arith.constant dense<0.000000e+00> : vector<8x286xf32>
    %130 = tpu.matmul %129, %127, %cst_125 {dimension_numbers = #tpu.dot_dimension_numbers<[1], [0], [0], [1], [0, 0, 1, 1], [], []>} : vector<8x8xbf16>, vector<8x286xbf16>, vector<8x286xf32> -> vector<8x286xf32>
    %131 = arith.addf %125, %130 : vector<8x286xf32>
    %c0_126 = arith.constant 0 : index
    %c0_127 = arith.constant 0 : index
    %132 = vector.load %arg6[%c0_126, %c0_127] : memref<8x1xf32, #tpu.memory_space<vmem>>, vector<8x1xf32>
    %133 = vector.broadcast %132 : vector<8x1xf32> to vector<8x286xf32>
    %134 = arith.addf %131, %133 : vector<8x286xf32>
    %cst_128 = arith.constant 0.000000e+00 : f32
    %135 = vector.broadcast %cst_128 : f32 to vector<8x286xf32>
    %136 = arith.cmpf ogt, %134, %135 : vector<8x286xf32>
    %cst_129 = arith.constant 0.000000e+00 : f32
    %137 = vector.broadcast %cst_129 : f32 to vector<8x286xf32>
    %138 = arith.minimumf %134, %137 : vector<8x286xf32>
    %139 = math.exp %138 : vector<8x286xf32>
    %cst_130 = arith.constant 1.000000e+00 : f32
    %140 = vector.broadcast %cst_130 : f32 to vector<8x286xf32>
    %141 = arith.subf %139, %140 : vector<8x286xf32>
    %142 = arith.select %136, %134, %141 : vector<8x286xi1>, vector<8x286xf32>
    %143 = vector.broadcast %0 : vector<1x286xf32> to vector<8x286xf32>
    %144 = arith.mulf %142, %143 : vector<8x286xf32>
    %cst_131 = arith.constant 0.000000e+00 : bf16
    %145 = vector.broadcast %cst_131 : bf16 to vector<8x324xbf16>
    %c0_132 = arith.constant 0 : index
    %c0_133 = arith.constant 0 : index
    %c0_134 = arith.constant 0 : index
    %146 = vector.load %arg11[%c0_132, %c0_133, %c0_134] : memref<1x8x324xbf16, #tpu.memory_space<vmem>>, vector<1x8x324xbf16>
    %147 = vector.shape_cast %146 : vector<1x8x324xbf16> to vector<8x324xbf16>
    %148 = vector.shape_cast %145 : vector<8x324xbf16> to vector<1x8x324xbf16>
    tpu.vector_store %arg11[%c0_132, %c0_133, %c0_134], %148 {strides = array<i32>} : memref<1x8x324xbf16, #tpu.memory_space<vmem>>, vector<1x8x324xbf16>,
    %149 = arith.truncf %144 : vector<8x286xf32> to vector<8x286xbf16>
    %c0_135 = arith.constant 0 : index
    %c0_136 = arith.constant 0 : index
    %c19_137 = arith.constant 19 : index
    %150 = vector.load %arg11[%c0_135, %c0_136, %c19_137] : memref<1x8x324xbf16, #tpu.memory_space<vmem>>, vector<1x8x286xbf16>
    %151 = vector.shape_cast %150 : vector<1x8x286xbf16> to vector<8x286xbf16>
    %152 = vector.shape_cast %149 : vector<8x286xbf16> to vector<1x8x286xbf16>
    tpu.vector_store %arg11[%c0_135, %c0_136, %c19_137], %152 {strides = array<i32>} : memref<1x8x324xbf16, #tpu.memory_space<vmem>>, vector<1x8x286xbf16>,
    %cst_138 = arith.constant 0.000000e+00 : f32
    %153 = vector.broadcast %cst_138 : f32 to vector<2x286xf32>
    %c0_139 = arith.constant 0 : index
    %c0_140 = arith.constant 0 : index
    %c0_141 = arith.constant 0 : index
    %154 = vector.load %arg11[%c0_139, %c0_140, %c0_141] : memref<1x8x324xbf16, #tpu.memory_space<vmem>>, vector<1x8x286xbf16>
    %155 = vector.shape_cast %154 : vector<1x8x286xbf16> to vector<8x286xbf16>
    %c0_142 = arith.constant 0 : index
    %c0_143 = arith.constant 0 : index
    %c0_144 = arith.constant 0 : index
    %156 = vector.load %arg7[%c0_142, %c0_143, %c0_144] : memref<9x2x8xbf16, #tpu.memory_space<vmem>>, vector<1x2x8xbf16>
    %157 = vector.shape_cast %156 : vector<1x2x8xbf16> to vector<2x8xbf16>
    %cst_145 = arith.constant dense<0.000000e+00> : vector<2x286xf32>
    %158 = tpu.matmul %157, %155, %cst_145 {dimension_numbers = #tpu.dot_dimension_numbers<[1], [0], [0], [1], [0, 0, 1, 1], [], []>} : vector<2x8xbf16>, vector<8x286xbf16>, vector<2x286xf32> -> vector<2x286xf32>
    %159 = arith.addf %153, %158 : vector<2x286xf32>
    %c0_146 = arith.constant 0 : index
    %c0_147 = arith.constant 0 : index
    %c1_148 = arith.constant 1 : index
    %160 = vector.load %arg11[%c0_146, %c0_147, %c1_148] : memref<1x8x324xbf16, #tpu.memory_space<vmem>>, vector<1x8x286xbf16>
    %161 = vector.shape_cast %160 : vector<1x8x286xbf16> to vector<8x286xbf16>
    %c1_149 = arith.constant 1 : index
    %c0_150 = arith.constant 0 : index
    %c0_151 = arith.constant 0 : index
    %162 = vector.load %arg7[%c1_149, %c0_150, %c0_151] : memref<9x2x8xbf16, #tpu.memory_space<vmem>>, vector<1x2x8xbf16>
    %163 = vector.shape_cast %162 : vector<1x2x8xbf16> to vector<2x8xbf16>
    %cst_152 = arith.constant dense<0.000000e+00> : vector<2x286xf32>
    %164 = tpu.matmul %163, %161, %cst_152 {dimension_numbers = #tpu.dot_dimension_numbers<[1], [0], [0], [1], [0, 0, 1, 1], [], []>} : vector<2x8xbf16>, vector<8x286xbf16>, vector<2x286xf32> -> vector<2x286xf32>
    %165 = arith.addf %159, %164 : vector<2x286xf32>
    %c0_153 = arith.constant 0 : index
    %c0_154 = arith.constant 0 : index
    %c2_155 = arith.constant 2 : index
    %166 = vector.load %arg11[%c0_153, %c0_154, %c2_155] : memref<1x8x324xbf16, #tpu.memory_space<vmem>>, vector<1x8x286xbf16>
    %167 = vector.shape_cast %166 : vector<1x8x286xbf16> to vector<8x286xbf16>
    %c2_156 = arith.constant 2 : index
    %c0_157 = arith.constant 0 : index
    %c0_158 = arith.constant 0 : index
    %168 = vector.load %arg7[%c2_156, %c0_157, %c0_158] : memref<9x2x8xbf16, #tpu.memory_space<vmem>>, vector<1x2x8xbf16>
    %169 = vector.shape_cast %168 : vector<1x2x8xbf16> to vector<2x8xbf16>
    %cst_159 = arith.constant dense<0.000000e+00> : vector<2x286xf32>
    %170 = tpu.matmul %169, %167, %cst_159 {dimension_numbers = #tpu.dot_dimension_numbers<[1], [0], [0], [1], [0, 0, 1, 1], [], []>} : vector<2x8xbf16>, vector<8x286xbf16>, vector<2x286xf32> -> vector<2x286xf32>
    %171 = arith.addf %165, %170 : vector<2x286xf32>
    %c0_160 = arith.constant 0 : index
    %c0_161 = arith.constant 0 : index
    %c18_162 = arith.constant 18 : index
    %172 = vector.load %arg11[%c0_160, %c0_161, %c18_162] : memref<1x8x324xbf16, #tpu.memory_space<vmem>>, vector<1x8x286xbf16>
    %173 = vector.shape_cast %172 : vector<1x8x286xbf16> to vector<8x286xbf16>
    %c3_163 = arith.constant 3 : index
    %c0_164 = arith.constant 0 : index
    %c0_165 = arith.constant 0 : index
    %174 = vector.load %arg7[%c3_163, %c0_164, %c0_165] : memref<9x2x8xbf16, #tpu.memory_space<vmem>>, vector<1x2x8xbf16>
    %175 = vector.shape_cast %174 : vector<1x2x8xbf16> to vector<2x8xbf16>
    %cst_166 = arith.constant dense<0.000000e+00> : vector<2x286xf32>
    %176 = tpu.matmul %175, %173, %cst_166 {dimension_numbers = #tpu.dot_dimension_numbers<[1], [0], [0], [1], [0, 0, 1, 1], [], []>} : vector<2x8xbf16>, vector<8x286xbf16>, vector<2x286xf32> -> vector<2x286xf32>
    %177 = arith.addf %171, %176 : vector<2x286xf32>
    %c0_167 = arith.constant 0 : index
    %c0_168 = arith.constant 0 : index
    %c19_169 = arith.constant 19 : index
    %178 = vector.load %arg11[%c0_167, %c0_168, %c19_169] : memref<1x8x324xbf16, #tpu.memory_space<vmem>>, vector<1x8x286xbf16>
    %179 = vector.shape_cast %178 : vector<1x8x286xbf16> to vector<8x286xbf16>
    %c4_170 = arith.constant 4 : index
    %c0_171 = arith.constant 0 : index
    %c0_172 = arith.constant 0 : index
    %180 = vector.load %arg7[%c4_170, %c0_171, %c0_172] : memref<9x2x8xbf16, #tpu.memory_space<vmem>>, vector<1x2x8xbf16>
    %181 = vector.shape_cast %180 : vector<1x2x8xbf16> to vector<2x8xbf16>
    %cst_173 = arith.constant dense<0.000000e+00> : vector<2x286xf32>
    %182 = tpu.matmul %181, %179, %cst_173 {dimension_numbers = #tpu.dot_dimension_numbers<[1], [0], [0], [1], [0, 0, 1, 1], [], []>} : vector<2x8xbf16>, vector<8x286xbf16>, vector<2x286xf32> -> vector<2x286xf32>
    %183 = arith.addf %177, %182 : vector<2x286xf32>
    %c0_174 = arith.constant 0 : index
    %c0_175 = arith.constant 0 : index
    %c20_176 = arith.constant 20 : index
    %184 = vector.load %arg11[%c0_174, %c0_175, %c20_176] : memref<1x8x324xbf16, #tpu.memory_space<vmem>>, vector<1x8x286xbf16>
    %185 = vector.shape_cast %184 : vector<1x8x286xbf16> to vector<8x286xbf16>
    %c5_177 = arith.constant 5 : index
    %c0_178 = arith.constant 0 : index
    %c0_179 = arith.constant 0 : index
    %186 = vector.load %arg7[%c5_177, %c0_178, %c0_179] : memref<9x2x8xbf16, #tpu.memory_space<vmem>>, vector<1x2x8xbf16>
    %187 = vector.shape_cast %186 : vector<1x2x8xbf16> to vector<2x8xbf16>
    %cst_180 = arith.constant dense<0.000000e+00> : vector<2x286xf32>
    %188 = tpu.matmul %187, %185, %cst_180 {dimension_numbers = #tpu.dot_dimension_numbers<[1], [0], [0], [1], [0, 0, 1, 1], [], []>} : vector<2x8xbf16>, vector<8x286xbf16>, vector<2x286xf32> -> vector<2x286xf32>
    %189 = arith.addf %183, %188 : vector<2x286xf32>
    %c0_181 = arith.constant 0 : index
    %c0_182 = arith.constant 0 : index
    %c36_183 = arith.constant 36 : index
    %190 = vector.load %arg11[%c0_181, %c0_182, %c36_183] : memref<1x8x324xbf16, #tpu.memory_space<vmem>>, vector<1x8x286xbf16>
    %191 = vector.shape_cast %190 : vector<1x8x286xbf16> to vector<8x286xbf16>
    %c6_184 = arith.constant 6 : index
    %c0_185 = arith.constant 0 : index
    %c0_186 = arith.constant 0 : index
    %192 = vector.load %arg7[%c6_184, %c0_185, %c0_186] : memref<9x2x8xbf16, #tpu.memory_space<vmem>>, vector<1x2x8xbf16>
    %193 = vector.shape_cast %192 : vector<1x2x8xbf16> to vector<2x8xbf16>
    %cst_187 = arith.constant dense<0.000000e+00> : vector<2x286xf32>
    %194 = tpu.matmul %193, %191, %cst_187 {dimension_numbers = #tpu.dot_dimension_numbers<[1], [0], [0], [1], [0, 0, 1, 1], [], []>} : vector<2x8xbf16>, vector<8x286xbf16>, vector<2x286xf32> -> vector<2x286xf32>
    %195 = arith.addf %189, %194 : vector<2x286xf32>
    %c0_188 = arith.constant 0 : index
    %c0_189 = arith.constant 0 : index
    %c37_190 = arith.constant 37 : index
    %196 = vector.load %arg11[%c0_188, %c0_189, %c37_190] : memref<1x8x324xbf16, #tpu.memory_space<vmem>>, vector<1x8x286xbf16>
    %197 = vector.shape_cast %196 : vector<1x8x286xbf16> to vector<8x286xbf16>
    %c7_191 = arith.constant 7 : index
    %c0_192 = arith.constant 0 : index
    %c0_193 = arith.constant 0 : index
    %198 = vector.load %arg7[%c7_191, %c0_192, %c0_193] : memref<9x2x8xbf16, #tpu.memory_space<vmem>>, vector<1x2x8xbf16>
    %199 = vector.shape_cast %198 : vector<1x2x8xbf16> to vector<2x8xbf16>
    %cst_194 = arith.constant dense<0.000000e+00> : vector<2x286xf32>
    %200 = tpu.matmul %199, %197, %cst_194 {dimension_numbers = #tpu.dot_dimension_numbers<[1], [0], [0], [1], [0, 0, 1, 1], [], []>} : vector<2x8xbf16>, vector<8x286xbf16>, vector<2x286xf32> -> vector<2x286xf32>
    %201 = arith.addf %195, %200 : vector<2x286xf32>
    %c0_195 = arith.constant 0 : index
    %c0_196 = arith.constant 0 : index
    %c38_197 = arith.constant 38 : index
    %202 = vector.load %arg11[%c0_195, %c0_196, %c38_197] : memref<1x8x324xbf16, #tpu.memory_space<vmem>>, vector<1x8x286xbf16>
    %203 = vector.shape_cast %202 : vector<1x8x286xbf16> to vector<8x286xbf16>
    %c8_198 = arith.constant 8 : index
    %c0_199 = arith.constant 0 : index
    %c0_200 = arith.constant 0 : index
    %204 = vector.load %arg7[%c8_198, %c0_199, %c0_200] : memref<9x2x8xbf16, #tpu.memory_space<vmem>>, vector<1x2x8xbf16>
    %205 = vector.shape_cast %204 : vector<1x2x8xbf16> to vector<2x8xbf16>
    %cst_201 = arith.constant dense<0.000000e+00> : vector<2x286xf32>
    %206 = tpu.matmul %205, %203, %cst_201 {dimension_numbers = #tpu.dot_dimension_numbers<[1], [0], [0], [1], [0, 0, 1, 1], [], []>} : vector<2x8xbf16>, vector<8x286xbf16>, vector<2x286xf32> -> vector<2x286xf32>
    %207 = arith.addf %201, %206 : vector<2x286xf32>
    %c0_202 = arith.constant 0 : index
    %c0_203 = arith.constant 0 : index
    %208 = vector.load %arg8[%c0_202, %c0_203] : memref<2x1xf32, #tpu.memory_space<vmem>>, vector<2x1xf32>
    %209 = vector.broadcast %208 : vector<2x1xf32> to vector<2x286xf32>
    %210 = arith.addf %207, %209 : vector<2x286xf32>
    %211 = arith.negf %210 : vector<2x286xf32>
    %212 = math.exp %211 : vector<2x286xf32>
    %cst_204 = arith.constant 1.000000e+00 : f32
    %213 = vector.broadcast %cst_204 : f32 to vector<2x286xf32>
    %214 = arith.addf %213, %212 : vector<2x286xf32>
    %215 = arith.divf %213, %214 : vector<2x286xf32>
    %cst_205 = arith.constant 3.000000e-01 : f32
    %216 = vector.broadcast %cst_205 : f32 to vector<2x286xf32>
    %217 = arith.mulf %216, %215 : vector<2x286xf32>
    %218 = vector.broadcast %0 : vector<1x286xf32> to vector<2x286xf32>
    %219 = arith.mulf %217, %218 : vector<2x286xf32>
    %cst_206 = arith.constant 0.000000e+00 : f32
    %220 = vector.broadcast %cst_206 : f32 to vector<2x324xf32>
    %c0_207 = arith.constant 0 : index
    %c0_208 = arith.constant 0 : index
    %c0_209 = arith.constant 0 : index
    %221 = vector.load %arg9[%c0_207, %c0_208, %c0_209] : memref<1x2x324xf32, #tpu.memory_space<vmem>>, vector<1x2x324xf32>
    %222 = vector.shape_cast %221 : vector<1x2x324xf32> to vector<2x324xf32>
    %223 = vector.shape_cast %220 : vector<2x324xf32> to vector<1x2x324xf32>
    tpu.vector_store %arg9[%c0_207, %c0_208, %c0_209], %223 {strides = array<i32>} : memref<1x2x324xf32, #tpu.memory_space<vmem>>, vector<1x2x324xf32>,
    %c0_210 = arith.constant 0 : index
    %c0_211 = arith.constant 0 : index
    %c19_212 = arith.constant 19 : index
    %224 = vector.load %arg9[%c0_210, %c0_211, %c19_212] : memref<1x2x324xf32, #tpu.memory_space<vmem>>, vector<1x2x286xf32>
    %225 = vector.shape_cast %224 : vector<1x2x286xf32> to vector<2x286xf32>
    %226 = vector.shape_cast %219 : vector<2x286xf32> to vector<1x2x286xf32>
    tpu.vector_store %arg9[%c0_210, %c0_211, %c19_212], %226 {strides = array<i32>} : memref<1x2x324xf32, #tpu.memory_space<vmem>>, vector<1x2x286xf32>,
    return
  }
  func.func @transform_0(%arg0: i32) -> (i32, i32, i32) {
    %c0_i32 = arith.constant 0 : i32
    %c0_i32_0 = arith.constant 0 : i32
    %c0_i32_1 = arith.constant 0 : i32
    return %arg0, %c0_i32, %c0_i32_0 : i32, i32, i32
  }
  func.func @transform_1(%arg0: i32) -> (i32, i32) {
    %c0_i32 = arith.constant 0 : i32
    %c0_i32_0 = arith.constant 0 : i32
    %c0_i32_1 = arith.constant 0 : i32
    return %c0_i32, %c0_i32_0 : i32, i32
  }
  func.func @transform_2(%arg0: i32) -> (i32, i32, i32) {
    %c0_i32 = arith.constant 0 : i32
    %c0_i32_0 = arith.constant 0 : i32
    %c0_i32_1 = arith.constant 0 : i32
    %c0_i32_2 = arith.constant 0 : i32
    return %c0_i32, %c0_i32_0, %c0_i32_1 : i32, i32, i32
  }
  func.func @transform_3(%arg0: i32) -> (i32, i32) {
    %c0_i32 = arith.constant 0 : i32
    %c0_i32_0 = arith.constant 0 : i32
    %c0_i32_1 = arith.constant 0 : i32
    return %c0_i32, %c0_i32_0 : i32, i32
  }
  func.func @transform_4(%arg0: i32) -> (i32, i32, i32) {
    %c0_i32 = arith.constant 0 : i32
    %c0_i32_0 = arith.constant 0 : i32
    %c0_i32_1 = arith.constant 0 : i32
    %c0_i32_2 = arith.constant 0 : i32
    return %c0_i32, %c0_i32_0, %c0_i32_1 : i32, i32, i32
  }
  func.func @transform_5(%arg0: i32) -> (i32, i32) {
    %c0_i32 = arith.constant 0 : i32
    %c0_i32_0 = arith.constant 0 : i32
    %c0_i32_1 = arith.constant 0 : i32
    return %c0_i32, %c0_i32_0 : i32, i32
  }
  func.func @transform_6(%arg0: i32) -> (i32, i32, i32) {
    %c0_i32 = arith.constant 0 : i32
    %c0_i32_0 = arith.constant 0 : i32
    %c0_i32_1 = arith.constant 0 : i32
    %c0_i32_2 = arith.constant 0 : i32
    return %c0_i32, %c0_i32_0, %c0_i32_1 : i32, i32, i32
  }
  func.func @transform_7(%arg0: i32) -> (i32, i32) {
    %c0_i32 = arith.constant 0 : i32
    %c0_i32_0 = arith.constant 0 : i32
    %c0_i32_1 = arith.constant 0 : i32
    return %c0_i32, %c0_i32_0 : i32, i32
  }
  func.func @transform_8(%arg0: i32) -> (i32, i32, i32) {
    %c0_i32 = arith.constant 0 : i32
    %c0_i32_0 = arith.constant 0 : i32
    %c0_i32_1 = arith.constant 0 : i32
    return %arg0, %c0_i32, %c0_i32_0 : i32, i32, i32
  }
}

</mosaic_0001>

<llo_original>
// kernel: distill_model_forward.5
$region0: #{distill_model_forward.5}
  #allocation0 [shape = 'u32[]', space=smem, size = 0x4, offset = 0x4, fixed_abs, tag = 'smem constant byte address 0x4 - core index']
  #allocation1 [shape = 'u32[144,128]{1,0:T(1,128)}', space=vmem, size = 0x12000, scoped, tag = 'internal scratch']
  #allocation2 [shape = 'bf16[1,8,324]{2,1,0:T(8,128)(2,1)}', space=vmem, size = 0x1800, scoped, tag = 'scratch operand']
  %s0 = inlined_call_operand.hbm [shape: bf16[2,3,324], index: 0, kind: input, shape index: {}]
  %s1 = inlined_call_operand.hbm [shape: f32[1,286], index: 1, kind: input, shape index: {}]
  %s2 = inlined_call_operand.hbm [shape: bf16[9,8,3], index: 2, kind: input, shape index: {}]
  %s3 = inlined_call_operand.hbm [shape: f32[8,1], index: 3, kind: input, shape index: {}]
  %s4 = inlined_call_operand.hbm [shape: bf16[9,8,8], index: 4, kind: input, shape index: {}]
  %s5 = inlined_call_operand.hbm [shape: f32[8,1], index: 5, kind: input, shape index: {}]
  %s6 = inlined_call_operand.hbm [shape: bf16[2,8,324], index: 6, kind: output, shape index: {}]
  %s7 = sld [smem:[#allocation0]]
  $region81: #{distill_model_forward.5} parent=0
    _
  %s9 = ssub.s32 1, %s7
  %s10 = scalar_select 0, %s9, %s7
  $region1: #{distill_model_forward.5} parent=0
    #allocation3 [shape = 'u8[6144]{0}', space=vmem, size = 0x1800, scoped, tag = 'input window, operand 0']
    #allocation4 [shape = 's32[2]{0}', space=sflag, size = 0x8, scoped, tag = 'scoped memory for distill_model_forward.5']
    #allocation5 [shape = 's32[2]{0}', space=sflag, size = 0x8, scoped, tag = 'scoped memory for distill_model_forward.5']
    #allocation6 [shape = 'u8[1536]{0}', space=vmem, size = 0x800, scoped, tag = 'input window, operand 1, single buffered']
    #allocation7 [shape = 's32[1]{0}', space=sflag, size = 0x4, scoped, tag = 'scoped memory for distill_model_forward.5']
    #allocation8 [shape = 'u8[18432]{0}', space=vmem, size = 0x4800, scoped, tag = 'input window, operand 2, single buffered']
    #allocation9 [shape = 'u8[4096]{0}', space=vmem, size = 0x1000, scoped, tag = 'input window, operand 3, single buffered']
    #allocation10 [shape = 's32[1]{0}', space=sflag, size = 0x4, scoped, tag = 'scoped memory for distill_model_forward.5']
    #allocation11 [shape = 'u8[18432]{0}', space=vmem, size = 0x4800, scoped, tag = 'input window, operand 4, single buffered']
    #allocation12 [shape = 'u8[4096]{0}', space=vmem, size = 0x1000, scoped, tag = 'input window, operand 5, single buffered']
    #allocation13 [shape = 's32[1]{0}', space=sflag, size = 0x4, scoped, tag = 'scoped memory for distill_model_forward.5']
    #allocation14 [shape = 'u8[12288]{0}', space=vmem, size = 0x3000, scoped, tag = 'output window, operand 0']
    %11 = vsyncpa [#allocation4], 0
    %s12 = scalar_lea.sflag [#allocation4], 1
    %13 = vsyncpa %s12, 0
    %14 = vsyncpa [#allocation7], 0
    %15 = vsyncpa [#allocation10], 0
    %16 = vsyncpa [#allocation13], 0
    %17 = vsyncpa [#allocation5], 0
    %s18 = scalar_lea.sflag [#allocation5], 1
    %19 = vsyncpa %s18, 0
    loop: start=0, step=1, limit=4
    $region2: #{distill_model_forward.5} parent=1 // loop_pre_header
      _
    $region3: #{distill_model_forward.5} parent=1 // loop_header
      %s21 = sphi 0, %s25
      %p22 = scmp.ge.s32.totalorder %s21, 4
      %s31 = sphi 0, %s33
      %s34 = sphi 0, %s31
      %s35 = sphi 0, %s34
      %s51 = sphi 0, %s35
      %s55 = sphi 0, %s55
      %s57 = sphi 0, %s55
      %s58 = sphi 0, %s57
      %s72 = sphi 0, %s58
      %s76 = sphi 0, %s76
      %s78 = sphi 0, %s76
      %s79 = sphi 0, %s78
      %s93 = sphi 0, %s79
      %s97 = sphi 0, %s97
      %s99 = sphi 0, %s97
      %s100 = sphi 0, %s99
      %s114 = sphi 0, %s100
      %s118 = sphi 0, %s118
      %s120 = sphi 0, %s118
      %s121 = sphi 0, %s120
      %s135 = sphi 0, %s121
      %s139 = sphi 0, %s139
      %s141 = sphi 0, %s139
      %s142 = sphi 0, %s141
      %s156 = sphi 0, %s142
      %s162 = sphi 0, %s164
      %s165 = sphi 0, %s162
      %s166 = sphi 0, %s165
      %s182 = sphi 0, %s166
    $region4: #{distill_model_forward.5} parent=1 // loop_header_branch
      %24 = sbr.rel (%p22) target = $region8
    $region5: #{distill_model_forward.5} parent=1 // loop_body
      %s26 = ssub.s32 %s21, 1
      %s27 = ssub.s32 %s21, 2
      %s28 = sadd.s32 %s21, 1
      %s29 = ssub.s32 %s21, %s28
      %p30 = scmp.eq.s32.totalorder %s29, 0
      %s32 = sadd.s32 %s31, 1
      %s33 = scalar_select %p30, %s31, %s32
      %p36 = pneg %p30
      %p37 = scmp.eq.s32.totalorder %s21, 1
      %p38 = por %p36, %p37
      %p39 = scmp.ne.s32.totalorder %s31, %s34
      %p40 = scmp.eq.s32.totalorder %s21, 0
      %p41 = por %p39, %p40
      %p42 = scmp.ne.s32.totalorder %s31, %s34
      %p43 = scmp.eq.s32.totalorder %s26, 1
      %p44 = por %p42, %p43
      %p45 = scmp.ne.s32.totalorder %s34, %s35
      %p46 = scmp.eq.s32.totalorder %s26, 0
      %p47 = por %p45, %p46
      %p48 = scmp.ne.s32.totalorder %s34, %s35
      %p49 = scmp.eq.s32.totalorder %s27, 1
      %p50 = por %p48, %p49
      %p52 = scmp.ne.s32.totalorder %s35, %s51
      %p53 = scmp.eq.s32.totalorder %s27, 0
      %p54 = por %p52, %p53
      %s56 = sadd.s32 %s55, 1
      %p59 = scmp.eq.s32.totalorder %s21, 1
      %p60 = scmp.ne.s32.totalorder %s55, %s57
      %p61 = scmp.eq.s32.totalorder %s21, 0
      %p62 = por %p60, %p61
      %p63 = scmp.ne.s32.totalorder %s55, %s57
      %p64 = scmp.eq.s32.totalorder %s26, 1
      %p65 = por %p63, %p64
      %p66 = scmp.ne.s32.totalorder %s57, %s58
      %p67 = scmp.eq.s32.totalorder %s26, 0
      %p68 = por %p66, %p67
      %p69 = scmp.ne.s32.totalorder %s57, %s58
      %p70 = scmp.eq.s32.totalorder %s27, 1
      %p71 = por %p69, %p70
      %p73 = scmp.ne.s32.totalorder %s58, %s72
      %p74 = scmp.eq.s32.totalorder %s27, 0
      %p75 = por %p73, %p74
      %s77 = sadd.s32 %s76, 1
      %p80 = scmp.eq.s32.totalorder %s21, 1
      %p81 = scmp.ne.s32.totalorder %s76, %s78
      %p82 = scmp.eq.s32.totalorder %s21, 0
      %p83 = por %p81, %p82
      %p84 = scmp.ne.s32.totalorder %s76, %s78
      %p85 = scmp.eq.s32.totalorder %s26, 1
      %p86 = por %p84, %p85
      %p87 = scmp.ne.s32.totalorder %s78, %s79
      %p88 = scmp.eq.s32.totalorder %s26, 0
      %p89 = por %p87, %p88
      %p90 = scmp.ne.s32.totalorder %s78, %s79
      %p91 = scmp.eq.s32.totalorder %s27, 1
      %p92 = por %p90, %p91
      %p94 = scmp.ne.s32.totalorder %s79, %s93
      %p95 = scmp.eq.s32.totalorder %s27, 0
      %p96 = por %p94, %p95
      %s98 = sadd.s32 %s97, 1
      %p101 = scmp.eq.s32.totalorder %s21, 1
      %p102 = scmp.ne.s32.totalorder %s97, %s99
      %p103 = scmp.eq.s32.totalorder %s21, 0
      %p104 = por %p102, %p103
      %p105 = scmp.ne.s32.totalorder %s97, %s99
      %p106 = scmp.eq.s32.totalorder %s26, 1
      %p107 = por %p105, %p106
      %p108 = scmp.ne.s32.totalorder %s99, %s100
      %p109 = scmp.eq.s32.totalorder %s26, 0
      %p110 = por %p108, %p109
      %p111 = scmp.ne.s32.totalorder %s99, %s100
      %p112 = scmp.eq.s32.totalorder %s27, 1
      %p113 = por %p111, %p112
      %p115 = scmp.ne.s32.totalorder %s100, %s114
      %p116 = scmp.eq.s32.totalorder %s27, 0
      %p117 = por %p115, %p116
      %s119 = sadd.s32 %s118, 1
      %p122 = scmp.eq.s32.totalorder %s21, 1
      %p123 = scmp.ne.s32.totalorder %s118, %s120
      %p124 = scmp.eq.s32.totalorder %s21, 0
      %p125 = por %p123, %p124
      %p126 = scmp.ne.s32.totalorder %s118, %s120
      %p127 = scmp.eq.s32.totalorder %s26, 1
      %p128 = por %p126, %p127
      %p129 = scmp.ne.s32.totalorder %s120, %s121
      %p130 = scmp.eq.s32.totalorder %s26, 0
      %p131 = por %p129, %p130
      %p132 = scmp.ne.s32.totalorder %s120, %s121
      %p133 = scmp.eq.s32.totalorder %s27, 1
      %p134 = por %p132, %p133
      %p136 = scmp.ne.s32.totalorder %s121, %s135
      %p137 = scmp.eq.s32.totalorder %s27, 0
      %p138 = por %p136, %p137
      %s140 = sadd.s32 %s139, 1
      %p143 = scmp.eq.s32.totalorder %s21, 1
      %p144 = scmp.ne.s32.totalorder %s139, %s141
      %p145 = scmp.eq.s32.totalorder %s21, 0
      %p146 = por %p144, %p145
      %p147 = scmp.ne.s32.totalorder %s139, %s141
      %p148 = scmp.eq.s32.totalorder %s26, 1
      %p149 = por %p147, %p148
      %p150 = scmp.ne.s32.totalorder %s141, %s142
      %p151 = scmp.eq.s32.totalorder %s26, 0
      %p152 = por %p150, %p151
      %p153 = scmp.ne.s32.totalorder %s141, %s142
      %p154 = scmp.eq.s32.totalorder %s27, 1
      %p155 = por %p153, %p154
      %p157 = scmp.ne.s32.totalorder %s142, %s156
      %p158 = scmp.eq.s32.totalorder %s27, 0
      %p159 = por %p157, %p158
      %s160 = ssub.s32 %s21, %s28
      %p161 = scmp.eq.s32.totalorder %s160, 0
      %s163 = sadd.s32 %s162, 1
      %s164 = scalar_select %p161, %s162, %s163
      %p167 = pneg %p161
      %p168 = scmp.eq.s32.totalorder %s21, 1
      %p169 = por %p167, %p168
      %p170 = scmp.ne.s32.totalorder %s162, %s165
      %p171 = scmp.eq.s32.totalorder %s21, 0
      %p172 = por %p170, %p171
      %p173 = scmp.ne.s32.totalorder %s162, %s165
      %p174 = scmp.eq.s32.totalorder %s26, 1
      %p175 = por %p173, %p174
      %p176 = scmp.ne.s32.totalorder %s165, %s166
      %p177 = scmp.eq.s32.totalorder %s26, 0
      %p178 = por %p176, %p177
      %p179 = scmp.ne.s32.totalorder %s165, %s166
      %p180 = scmp.eq.s32.totalorder %s27, 1
      %p181 = por %p179, %p180
      %p183 = scmp.ne.s32.totalorder %s166, %s182
      %p184 = scmp.eq.s32.totalorder %s27, 0
      %p185 = por %p183, %p184
      %p186 = scmp.le.s32.totalorder 1, %s21
      %p187 = scmp.lt.s32.totalorder %s21, 3
      %p188 = pnand %p186, %p187
      %p189 = pneg %p188
      // Predicated region
      $region9: #{distill_model_forward.5} parent=5 // pred_check
        _
      $region10: #{distill_model_forward.5} parent=5 // pred_check_branch
        %191 = sbr.rel (%p188) target = $region12
      $region11: #{distill_model_forward.5} parent=5 // pred_region
        %s192 = ssub.s32 %s21, 1
        // Predicated region
        $region13: #{distill_model_forward.5} parent=11 // pred_check
          %p193 = pneg %p68
        $region14: #{distill_model_forward.5} parent=11 // pred_check_branch
          %195 = sbr.rel (%p193) target = $region16
        $region15: #{distill_model_forward.5} parent=11 // pred_region
          %s197 = ssub.s32 48, 48
          %198 = vsyncadd [#allocation7], %s197
          %s200 = sshll.u32 [#allocation6], 4
          %s201 = int_to_ptr.vmem [resolvable:$true] %s200
          %203 = dma.hbm_to_vmem [thread:$0]  %s1, 48, %s201, [#allocation7]
        $region16: #{distill_model_forward.5} parent=11 // pred_fallthru
          _
        // Predicated region
        $region17: #{distill_model_forward.5} parent=11 // pred_check
          %p204 = pneg %p89
        $region18: #{distill_model_forward.5} parent=11 // pred_check_branch
          %206 = sbr.rel (%p204) target = $region20
        $region19: #{distill_model_forward.5} parent=11 // pred_region
          %s208 = ssub.s32 576, 576
          %209 = vsyncadd [#allocation7], %s208
          %s210 = sshll.u32 [#allocation8], 4
          %s211 = int_to_ptr.vmem [resolvable:$true] %s210
          %216 = dma.hbm_to_vmem [thread:$0]  %s2, 576, %s211, [#allocation7], 64, 64, 4
        $region20: #{distill_model_forward.5} parent=11 // pred_fallthru
          _
        // Predicated region
        $region21: #{distill_model_forward.5} parent=11 // pred_check
          %p217 = pneg %p110
        $region22: #{distill_model_forward.5} parent=11 // pred_check_branch
          %219 = sbr.rel (%p217) target = $region24
        $region23: #{distill_model_forward.5} parent=11 // pred_region
          %s221 = ssub.s32 128, 128
          %222 = vsyncadd [#allocation10], %s221
          %s224 = sshll.u32 [#allocation9], 4
          %s225 = int_to_ptr.vmem [resolvable:$true] %s224
          %227 = dma.hbm_to_vmem [thread:$0]  %s3, 128, %s225, [#allocation10]
        $region24: #{distill_model_forward.5} parent=11 // pred_fallthru
          _
        // Predicated region
        $region25: #{distill_model_forward.5} parent=11 // pred_check
          %p228 = pneg %p131
        $region26: #{distill_model_forward.5} parent=11 // pred_check_branch
          %230 = sbr.rel (%p228) target = $region28
        $region27: #{distill_model_forward.5} parent=11 // pred_region
          %s232 = ssub.s32 576, 576
          %233 = vsyncadd [#allocation10], %s232
          %s234 = sshll.u32 [#allocation11], 4
          %s235 = int_to_ptr.vmem [resolvable:$true] %s234
          %240 = dma.hbm_to_vmem [thread:$0]  %s4, 576, %s235, [#allocation10], 64, 64, 4
        $region28: #{distill_model_forward.5} parent=11 // pred_fallthru
          _
        // Predicated region
        $region29: #{distill_model_forward.5} parent=11 // pred_check
          %p241 = pneg %p152
        $region30: #{distill_model_forward.5} parent=11 // pred_check_branch
          %243 = sbr.rel (%p241) target = $region32
        $region31: #{distill_model_forward.5} parent=11 // pred_region
          %s245 = ssub.s32 128, 128
          %246 = vsyncadd [#allocation13], %s245
          %s248 = sshll.u32 [#allocation12], 4
          %s249 = int_to_ptr.vmem [resolvable:$true] %s248
          %251 = dma.hbm_to_vmem [thread:$0]  %s5, 128, %s249, [#allocation13]
        $region32: #{distill_model_forward.5} parent=11 // pred_fallthru
          _
      $region12: #{distill_model_forward.5} parent=5 // pred_fallthru
        _
      %p252 = scmp.lt.s32.totalorder %s21, 2
      // Predicated region
      $region33: #{distill_model_forward.5} parent=5 // pred_check
        %p253 = pneg %p252
      $region34: #{distill_model_forward.5} parent=5 // pred_check_branch
        %255 = sbr.rel (%p253) target = $region36
      $region35: #{distill_model_forward.5} parent=5 // pred_region
        // Predicated region
        $region37: #{distill_model_forward.5} parent=35 // pred_check
          %p256 = pneg %p41
        $region38: #{distill_model_forward.5} parent=35 // pred_check_branch
          %258 = sbr.rel (%p256) target = $region40
        $region39: #{distill_model_forward.5} parent=35 // pred_region
          %s259 = sand.u32 %s31, 1
          %s260 = scalar_lea.sflag [#allocation4], %s259
          %s261 = sand.u32 %s31, 1
          %s262 = smul.addr %s261, 6
          %s263 = scalar_lea.vmem [#allocation3], %s262
          %s265 = ssub.s32 96, 96
          %266 = vsyncadd %s260, %s265
          %s267 = smul.addr %s21, 3
          %s268 = smul.addr %s267, 32
          %s269 = scalar_lea.hbm %s0, %s268
          %s271 = sshll.u32 %s263, 4
          %s272 = int_to_ptr.vmem [resolvable:$true] %s271
          %274 = dma.hbm_to_vmem [thread:$0]  %s269, 96, %s272, %s260
        $region40: #{distill_model_forward.5} parent=35 // pred_fallthru
          _
      $region36: #{distill_model_forward.5} parent=5 // pred_fallthru
        _
      %p275 = scmp.le.s32.totalorder 1, %s21
      %p276 = scmp.lt.s32.totalorder %s21, 3
      %p277 = pnand %p275, %p276
      %p278 = pneg %p277
      // Predicated region
      $region41: #{distill_model_forward.5} parent=5 // pred_check
        _
      $region42: #{distill_model_forward.5} parent=5 // pred_check_branch
        %280 = sbr.rel (%p277) target = $region44
      $region43: #{distill_model_forward.5} parent=5 // pred_region
        %s281 = ssub.s32 %s21, 1
        %s282 = sand.u32 %s34, 1
        %s283 = scalar_lea.sflag [#allocation4], %s282
        %s284 = sand.u32 %s34, 1
        %s285 = smul.addr %s284, 6
        %s286 = scalar_lea.vmem [#allocation3], %s285
        // Predicated region
        $region45: #{distill_model_forward.5} parent=43 // pred_check
          %p287 = pneg %p47
        $region46: #{distill_model_forward.5} parent=43 // pred_check_branch
          %289 = sbr.rel (%p287) target = $region48
        $region47: #{distill_model_forward.5} parent=43 // pred_region
          %290 = dma.done %s283, 96
        $region48: #{distill_model_forward.5} parent=43 // pred_fallthru
          _
        // Predicated region
        $region49: #{distill_model_forward.5} parent=43 // pred_check
          %p291 = pneg %p68
        $region50: #{distill_model_forward.5} parent=43 // pred_check_branch
          %293 = sbr.rel (%p291) target = $region52
        $region51: #{distill_model_forward.5} parent=43 // pred_region
          %294 = dma.done [#allocation7], 48
        $region52: #{distill_model_forward.5} parent=43 // pred_fallthru
          _
        // Predicated region
        $region53: #{distill_model_forward.5} parent=43 // pred_check
          %p295 = pneg %p89
        $region54: #{distill_model_forward.5} parent=43 // pred_check_branch
          %297 = sbr.rel (%p295) target = $region56
        $region55: #{distill_model_forward.5} parent=43 // pred_region
          %298 = dma.done [#allocation7], 576
        $region56: #{distill_model_forward.5} parent=43 // pred_fallthru
          _
        // Predicated region
        $region57: #{distill_model_forward.5} parent=43 // pred_check
          %p299 = pneg %p110
        $region58: #{distill_model_forward.5} parent=43 // pred_check_branch
          %301 = sbr.rel (%p299) target = $region60
        $region59: #{distill_model_forward.5} parent=43 // pred_region
          %302 = dma.done [#allocation10], 128
        $region60: #{distill_model_forward.5} parent=43 // pred_fallthru
          _
        // Predicated region
        $region61: #{distill_model_forward.5} parent=43 // pred_check
          %p303 = pneg %p131
        $region62: #{distill_model_forward.5} parent=43 // pred_check_branch
          %305 = sbr.rel (%p303) target = $region64
        $region63: #{distill_model_forward.5} parent=43 // pred_region
          %306 = dma.done [#allocation10], 576
        $region64: #{distill_model_forward.5} parent=43 // pred_fallthru
          _
        // Predicated region
        $region65: #{distill_model_forward.5} parent=43 // pred_check
          %p307 = pneg %p152
        $region66: #{distill_model_forward.5} parent=43 // pred_check_branch
          %309 = sbr.rel (%p307) target = $region68
        $region67: #{distill_model_forward.5} parent=43 // pred_region
          %310 = dma.done [#allocation13], 128
        $region68: #{distill_model_forward.5} parent=43 // pred_fallthru
          _
        %s311 = sand.u32 %s34, 1
        %s312 = scalar_lea.sflag [#allocation4], %s311
        %s313 = sand.u32 %s34, 1
        %s314 = smul.addr %s313, 6
        %s315 = scalar_lea.vmem [#allocation3], %s314
        %p316 = pneg %p47
        %p317 = pneg %p44
        %p318 = pneg %p68
        %p319 = pneg %p65
        %p320 = pneg %p89
        %p321 = pneg %p86
        %p322 = pneg %p110
        %p323 = pneg %p107
        %p324 = pneg %p131
        %p325 = pneg %p128
        %p326 = pneg %p152
        %p327 = pneg %p149
        %p328 = pneg %p178
        %p329 = pneg %p175
        %s330 = sand.u32 %s165, 1
        %s331 = scalar_lea.sflag [#allocation5], %s330
        %s332 = sand.u32 %s165, 1
        %s333 = smul.addr %s332, 12
        %s334 = scalar_lea.vmem [#allocation14], %s333
        %v336 = vld [vmem:[#allocation6] sm:$0x7]
        %v337 = vld [vmem:[%s286] sm:$0x3f]
        %v338 = vld [vmem:[#allocation8] sm:$0xf]
        %s339 = scalar_lea.vmem [#allocation8], 4
        %v340 = vld [vmem:[%s339] sm:$0xf]
        %v342 = vcombine.high %v337, %v337
        %v344 = vunpack.c.l.s4 1983009808
        %v345 = vunpack.c.0.s8 %v344
        %v346 = vlaneseq
        %v347 = vshrl.u32 %v346, 7
        %v348 = vsub.s32 %v345, %v347
        %v349 = vrot.slane %v337, %v348
        %v351 = vunpack.c.l.s4 1983009808
        %v352 = vunpack.c.0.s8 %v351
        %v353 = vlaneseq
        %v354 = vshrl.u32 %v353, 7
        %v355 = vsub.s32 %v352, %v354
        %v356 = vrot.slane %v342, %v355
        %v357 = vcombine.high %v349, %v349
        %358 = vrot.lane.b32.xlu0 %v349, 127
        %v359 = vpop.permute.xlu0 %358
        %360 = vrot.lane.b32.xlu0 %v357, 127
        %v361 = vpop.permute.xlu0 %360
        %362 = vrot.lane.b32.xlu0 %v356, 127
        %v363 = vpop.permute.xlu0 %362
        %vm364 = vcmask 1039360
        %v365 = vsel %vm364, %v359, %v361
        %v366 = vsel %vm364, %v361, %v363
        %vm367 = vcmask 23552
        %v369 = vsel %vm367, %v340, 0
        %vm371 = vcmask 1040384
        %vm372 = vcmask 1041408
        %v373 = vsel %vm371, 4294967295, 65535
        %v374 = vsel %vm372, %v373, 0
        %v376 = vand.u32 %v365, %v374
        %v379 = vand.u32 %v366, %v374
        %v382 = vand.u32 %v363, %v374
        %384 = vmatprep.subr.bf16.mxu0 %v379
        %385 = vmatpush1.bf16.msra.mxu0 %v376
        %386 = vmatprep.subr.bf16.mxu0 0
        %387 = vmatpush1.bf16.msra.mxu0 0
        %388 = vmatprep.subr.bf16.mxu0 0
        %389 = vmatpush1.bf16.msra.mxu0 0
        %390 = vmatprep.subr.bf16.mxu0 0
        %391 = vmatpush1.bf16.msra.mxu0 0
        %392 = vmatprep.subr.bf16.mxu0 0
        %393 = vmatpush1.bf16.msra.mxu0 0
        %394 = vmatprep.subr.bf16.mxu0 0
        %395 = vmatpush1.bf16.msra.mxu0 0
        %396 = vmatprep.subr.bf16.mxu0 0
        %397 = vmatpush1.bf16.msra.mxu0 0
        %398 = vmatprep.subr.bf16.mxu0 0
        %399 = vmatpush1.bf16.msra.mxu0 0
        %400 = vmatprep.subr.bf16.mxu0 0
        %401 = vmatpush1.bf16.msra.mxu0 0
        %402 = vmatprep.subr.bf16.mxu0 0
        %403 = vmatpush1.bf16.msra.mxu0 0
        %404 = vmatprep.subr.bf16.mxu0 0
        %405 = vmatpush1.bf16.msra.mxu0 0
        %406 = vmatprep.subr.bf16.mxu0 0
        %407 = vmatpush1.bf16.msra.mxu0 0
        %408 = vmatprep.subr.bf16.mxu0 0
        %409 = vmatpush1.bf16.msra.mxu0 0
        %410 = vmatprep.subr.bf16.mxu0 0
        %411 = vmatpush1.bf16.msra.mxu0 0
        %412 = vmatprep.subr.bf16.mxu0 0
        %413 = vmatpush1.bf16.msra.mxu0 0
        %414 = vmatprep.subr.bf16.mxu0 0
        %415 = vmatpush1.bf16.msra.mxu0 0
        %416 = vmatprep.mubr.bf16.mxu0 0
        %417 = vmatmul.mubr.bf16.gmra.mrb[0].mxu0 %v369
        %v418 = vpop.f32.mrb[0].mxu0
        %v419 = vadd.f32 0.0, %v418
        %v420 = vpop.f32.mrb[0].mxu0
        %v421 = vadd.f32 0.0, %v420
        %v422 = vpop.f32.mrb[0].mxu0
        %v423 = vpop.f32.mrb[0].mxu0
        %424 = vdwg.mxu0
        %425 = vmatprep.subr.bf16.mxu0 0
        %426 = vmatpush1.bf16.msra.mxu0 %v382
        %427 = vmatprep.subr.bf16.mxu0 0
        %428 = vmatpush1.bf16.msra.mxu0 0
        %429 = vmatprep.subr.bf16.mxu0 0
        %430 = vmatpush1.bf16.msra.mxu0 0
        %431 = vmatprep.subr.bf16.mxu0 0
        %432 = vmatpush1.bf16.msra.mxu0 0
        %433 = vmatprep.subr.bf16.mxu0 0
        %434 = vmatpush1.bf16.msra.mxu0 0
        %435 = vmatprep.subr.bf16.mxu0 0
        %436 = vmatpush1.bf16.msra.mxu0 0
        %437 = vmatprep.subr.bf16.mxu0 0
        %438 = vmatpush1.bf16.msra.mxu0 0
        %439 = vmatprep.subr.bf16.mxu0 0
        %440 = vmatpush1.bf16.msra.mxu0 0
        %441 = vmatprep.subr.bf16.mxu0 0
        %442 = vmatpush1.bf16.msra.mxu0 0
        %443 = vmatprep.subr.bf16.mxu0 0
        %444 = vmatpush1.bf16.msra.mxu0 0
        %445 = vmatprep.subr.bf16.mxu0 0
        %446 = vmatpush1.bf16.msra.mxu0 0
        %447 = vmatprep.subr.bf16.mxu0 0
        %448 = vmatpush1.bf16.msra.mxu0 0
        %449 = vmatprep.subr.bf16.mxu0 0
        %450 = vmatpush1.bf16.msra.mxu0 0
        %451 = vmatprep.subr.bf16.mxu0 0
        %452 = vmatpush1.bf16.msra.mxu0 0
        %453 = vmatprep.subr.bf16.mxu0 0
        %454 = vmatpush1.bf16.msra.mxu0 0
        %455 = vmatprep.subr.bf16.mxu0 0
        %456 = vmatpush1.bf16.msra.mxu0 0
        %457 = vmatprep.mubr.bf16.mxu0 0
        %458 = vmatmul.mubr.bf16.gmra.mrb[0].mxu0 %v369
        %v459 = vpop.f32.mrb[0].mxu0
        %v460 = vadd.f32 0.0, %v459
        %v461 = vpop.f32.mrb[0].mxu0
        %v462 = vpop.f32.mrb[0].mxu0
        %v463 = vpop.f32.mrb[0].mxu0
        %464 = vdwg.mxu0
        %v466 = vsel %vm367, %v338, 0
        %v469 = vand.u32 %v349, %v374
        %v472 = vand.u32 %v357, %v374
        %v475 = vand.u32 %v356, %v374
        %477 = vmatprep.subr.bf16.mxu0 %v472
        %478 = vmatpush1.bf16.msra.mxu0 %v469
        %479 = vmatprep.subr.bf16.mxu0 0
        %480 = vmatpush1.bf16.msra.mxu0 0
        %481 = vmatprep.subr.bf16.mxu0 0
        %482 = vmatpush1.bf16.msra.mxu0 0
        %483 = vmatprep.subr.bf16.mxu0 0
        %484 = vmatpush1.bf16.msra.mxu0 0
        %485 = vmatprep.subr.bf16.mxu0 0
        %486 = vmatpush1.bf16.msra.mxu0 0
        %487 = vmatprep.subr.bf16.mxu0 0
        %488 = vmatpush1.bf16.msra.mxu0 0
        %489 = vmatprep.subr.bf16.mxu0 0
        %490 = vmatpush1.bf16.msra.mxu0 0
        %491 = vmatprep.subr.bf16.mxu0 0
        %492 = vmatpush1.bf16.msra.mxu0 0
        %493 = vmatprep.subr.bf16.mxu0 0
        %494 = vmatpush1.bf16.msra.mxu0 0
        %495 = vmatprep.subr.bf16.mxu0 0
        %496 = vmatpush1.bf16.msra.mxu0 0
        %497 = vmatprep.subr.bf16.mxu0 0
        %498 = vmatpush1.bf16.msra.mxu0 0
        %499 = vmatprep.subr.bf16.mxu0 0
        %500 = vmatpush1.bf16.msra.mxu0 0
        %501 = vmatprep.subr.bf16.mxu0 0
        %502 = vmatpush1.bf16.msra.mxu0 0
        %503 = vmatprep.subr.bf16.mxu0 0
        %504 = vmatpush1.bf16.msra.mxu0 0
        %505 = vmatprep.subr.bf16.mxu0 0
        %506 = vmatpush1.bf16.msra.mxu0 0
        %507 = vmatprep.subr.bf16.mxu0 0
        %508 = vmatpush1.bf16.msra.mxu0 0
        %509 = vmatprep.mubr.bf16.mxu0 0
        %510 = vmatmul.mubr.bf16.gmra.mrb[0].mxu0 %v466
        %v511 = vpop.f32.mrb[0].mxu0
        %v512 = vadd.f32 %v419, %v511
        %v513 = vpop.f32.mrb[0].mxu0
        %v514 = vadd.f32 %v421, %v513
        %v515 = vpop.f32.mrb[0].mxu0
        %v516 = vpop.f32.mrb[0].mxu0
        %517 = vdwg.mxu0
        %518 = vmatprep.subr.bf16.mxu0 0
        %519 = vmatpush1.bf16.msra.mxu0 %v475
        %520 = vmatprep.subr.bf16.mxu0 0
        %521 = vmatpush1.bf16.msra.mxu0 0
        %522 = vmatprep.subr.bf16.mxu0 0
        %523 = vmatpush1.bf16.msra.mxu0 0
        %524 = vmatprep.subr.bf16.mxu0 0
        %525 = vmatpush1.bf16.msra.mxu0 0
        %526 = vmatprep.subr.bf16.mxu0 0
        %527 = vmatpush1.bf16.msra.mxu0 0
        %528 = vmatprep.subr.bf16.mxu0 0
        %529 = vmatpush1.bf16.msra.mxu0 0
        %530 = vmatprep.subr.bf16.mxu0 0
        %531 = vmatpush1.bf16.msra.mxu0 0
        %532 = vmatprep.subr.bf16.mxu0 0
        %533 = vmatpush1.bf16.msra.mxu0 0
        %534 = vmatprep.subr.bf16.mxu0 0
        %535 = vmatpush1.bf16.msra.mxu0 0
        %536 = vmatprep.subr.bf16.mxu0 0
        %537 = vmatpush1.bf16.msra.mxu0 0
        %538 = vmatprep.subr.bf16.mxu0 0
        %539 = vmatpush1.bf16.msra.mxu0 0
        %540 = vmatprep.subr.bf16.mxu0 0
        %541 = vmatpush1.bf16.msra.mxu0 0
        %542 = vmatprep.subr.bf16.mxu0 0
        %543 = vmatpush1.bf16.msra.mxu0 0
        %544 = vmatprep.subr.bf16.mxu0 0
        %545 = vmatpush1.bf16.msra.mxu0 0
        %546 = vmatprep.subr.bf16.mxu0 0
        %547 = vmatpush1.bf16.msra.mxu0 0
        %548 = vmatprep.subr.bf16.mxu0 0
        %549 = vmatpush1.bf16.msra.mxu0 0
        %550 = vmatprep.mubr.bf16.mxu0 0
        %551 = vmatmul.mubr.bf16.gmra.mrb[0].mxu0 %v466
        %v552 = vpop.f32.mrb[0].mxu0
        %v553 = vadd.f32 %v460, %v552
        %v554 = vpop.f32.mrb[0].mxu0
        %v555 = vpop.f32.mrb[0].mxu0
        %v556 = vpop.f32.mrb[0].mxu0
        %557 = vdwg.mxu0
        %v558 = vld [vmem:[%s286] sm:$0x3f]
        %s559 = scalar_lea.vmem [#allocation8], 8
        %v560 = vld [vmem:[%s559] sm:$0xf]
        %v562 = vcombine.high %v558, %v558
        %v564 = vunpack.c.l.s4 1983009808
        %v565 = vunpack.c.0.s8 %v564
        %v566 = vlaneseq
        %v567 = vshrl.u32 %v566, 7
        %v568 = vsub.s32 %v565, %v567
        %v569 = vrot.slane %v558, %v568
        %v571 = vunpack.c.l.s4 1983009808
        %v572 = vunpack.c.0.s8 %v571
        %v573 = vlaneseq
        %v574 = vshrl.u32 %v573, 7
        %v575 = vsub.s32 %v572, %v574
        %v576 = vrot.slane %v562, %v575
        %v577 = vcombine.high %v569, %v569
        %578 = vrot.lane.b32.xlu0 %v569, 126
        %v579 = vpop.permute.xlu0 %578
        %580 = vrot.lane.b32.xlu0 %v577, 126
        %v581 = vpop.permute.xlu0 %580
        %582 = vrot.lane.b32.xlu0 %v576, 126
        %v583 = vpop.permute.xlu0 %582
        %vm584 = vcmask 1031168
        %v585 = vsel %vm584, %v579, %v581
        %v586 = vsel %vm584, %v581, %v583
        %v588 = vsel %vm367, %v560, 0
        %v591 = vand.u32 %v585, %v374
        %v594 = vand.u32 %v586, %v374
        %v597 = vand.u32 %v583, %v374
        %599 = vmatprep.subr.bf16.mxu0 %v594
        %600 = vmatpush1.bf16.msra.mxu0 %v591
        %601 = vmatprep.subr.bf16.mxu0 0
        %602 = vmatpush1.bf16.msra.mxu0 0
        %603 = vmatprep.subr.bf16.mxu0 0
        %604 = vmatpush1.bf16.msra.mxu0 0
        %605 = vmatprep.subr.bf16.mxu0 0
        %606 = vmatpush1.bf16.msra.mxu0 0
        %607 = vmatprep.subr.bf16.mxu0 0
        %608 = vmatpush1.bf16.msra.mxu0 0
        %609 = vmatprep.subr.bf16.mxu0 0
        %610 = vmatpush1.bf16.msra.mxu0 0
        %611 = vmatprep.subr.bf16.mxu0 0
        %612 = vmatpush1.bf16.msra.mxu0 0
        %613 = vmatprep.subr.bf16.mxu0 0
        %614 = vmatpush1.bf16.msra.mxu0 0
        %615 = vmatprep.subr.bf16.mxu0 0
        %616 = vmatpush1.bf16.msra.mxu0 0
        %617 = vmatprep.subr.bf16.mxu0 0
        %618 = vmatpush1.bf16.msra.mxu0 0
        %619 = vmatprep.subr.bf16.mxu0 0
        %620 = vmatpush1.bf16.msra.mxu0 0
        %621 = vmatprep.subr.bf16.mxu0 0
        %622 = vmatpush1.bf16.msra.mxu0 0
        %623 = vmatprep.subr.bf16.mxu0 0
        %624 = vmatpush1.bf16.msra.mxu0 0
        %625 = vmatprep.subr.bf16.mxu0 0
        %626 = vmatpush1.bf16.msra.mxu0 0
        %627 = vmatprep.subr.bf16.mxu0 0
        %628 = vmatpush1.bf16.msra.mxu0 0
        %629 = vmatprep.subr.bf16.mxu0 0
        %630 = vmatpush1.bf16.msra.mxu0 0
        %631 = vmatprep.mubr.bf16.mxu0 0
        %632 = vmatmul.mubr.bf16.gmra.mrb[0].mxu0 %v588
        %v633 = vpop.f32.mrb[0].mxu0
        %v634 = vadd.f32 0.0, %v633
        %v635 = vpop.f32.mrb[0].mxu0
        %v636 = vadd.f32 0.0, %v635
        %v637 = vpop.f32.mrb[0].mxu0
        %v638 = vpop.f32.mrb[0].mxu0
        %639 = vdwg.mxu0
        %640 = vmatprep.subr.bf16.mxu0 0
        %641 = vmatpush1.bf16.msra.mxu0 %v597
        %642 = vmatprep.subr.bf16.mxu0 0
        %643 = vmatpush1.bf16.msra.mxu0 0
        %644 = vmatprep.subr.bf16.mxu0 0
        %645 = vmatpush1.bf16.msra.mxu0 0
        %646 = vmatprep.subr.bf16.mxu0 0
        %647 = vmatpush1.bf16.msra.mxu0 0
        %648 = vmatprep.subr.bf16.mxu0 0
        %649 = vmatpush1.bf16.msra.mxu0 0
        %650 = vmatprep.subr.bf16.mxu0 0
        %651 = vmatpush1.bf16.msra.mxu0 0
        %652 = vmatprep.subr.bf16.mxu0 0
        %653 = vmatpush1.bf16.msra.mxu0 0
        %654 = vmatprep.subr.bf16.mxu0 0
        %655 = vmatpush1.bf16.msra.mxu0 0
        %656 = vmatprep.subr.bf16.mxu0 0
        %657 = vmatpush1.bf16.msra.mxu0 0
        %658 = vmatprep.subr.bf16.mxu0 0
        %659 = vmatpush1.bf16.msra.mxu0 0
        %660 = vmatprep.subr.bf16.mxu0 0
        %661 = vmatpush1.bf16.msra.mxu0 0
        %662 = vmatprep.subr.bf16.mxu0 0
        %663 = vmatpush1.bf16.msra.mxu0 0
        %664 = vmatprep.subr.bf16.mxu0 0
        %665 = vmatpush1.bf16.msra.mxu0 0
        %666 = vmatprep.subr.bf16.mxu0 0
        %667 = vmatpush1.bf16.msra.mxu0 0
        %668 = vmatprep.subr.bf16.mxu0 0
        %669 = vmatpush1.bf16.msra.mxu0 0
        %670 = vmatprep.subr.bf16.mxu0 0
        %671 = vmatpush1.bf16.msra.mxu0 0
        %672 = vmatprep.mubr.bf16.mxu0 0
        %673 = vmatmul.mubr.bf16.gmra.mrb[0].mxu0 %v588
        %v674 = vpop.f32.mrb[0].mxu0
        %v675 = vadd.f32 0.0, %v674
        %v676 = vpop.f32.mrb[0].mxu0
        %v677 = vpop.f32.mrb[0].mxu0
        %v678 = vpop.f32.mrb[0].mxu0
        %679 = vdwg.mxu0
        %v680 = vadd.f32 %v512, %v634
        %v681 = vadd.f32 %v514, %v636
        %v682 = vadd.f32 %v553, %v675
        %v683 = vld [vmem:[%s286] sm:$0x3f]
        %s684 = scalar_lea.vmem [#allocation8], 12
        %v685 = vld [vmem:[%s684] sm:$0xf]
        %v687 = vcombine.high %v683, %v683
        %v689 = vunpack.c.l.s4 1983009808
        %v690 = vunpack.c.0.s8 %v689
        %v691 = vlaneseq
        %v692 = vshrl.u32 %v691, 7
        %v693 = vsub.s32 %v690, %v692
        %v694 = vrot.slane %v683, %v693
        %v696 = vunpack.c.l.s4 1983009808
        %v697 = vunpack.c.0.s8 %v696
        %v698 = vlaneseq
        %v699 = vshrl.u32 %v698, 7
        %v700 = vsub.s32 %v697, %v699
        %v701 = vrot.slane %v687, %v700
        %v702 = vcombine.high %v694, %v694
        %703 = vrot.lane.b32.xlu0 %v694, 110
        %v704 = vpop.permute.xlu0 %703
        %705 = vrot.lane.b32.xlu0 %v702, 110
        %v706 = vpop.permute.xlu0 %705
        %707 = vrot.lane.b32.xlu0 %v701, 110
        %v708 = vpop.permute.xlu0 %707
        %vm709 = vcmask 900096
        %v710 = vsel %vm709, %v704, %v706
        %v711 = vsel %vm709, %v706, %v708
        %v713 = vsel %vm367, %v685, 0
        %v716 = vand.u32 %v710, %v374
        %v719 = vand.u32 %v711, %v374
        %v722 = vand.u32 %v708, %v374
        %724 = vmatprep.subr.bf16.mxu0 %v719
        %725 = vmatpush1.bf16.msra.mxu0 %v716
        %726 = vmatprep.subr.bf16.mxu0 0
        %727 = vmatpush1.bf16.msra.mxu0 0
        %728 = vmatprep.subr.bf16.mxu0 0
        %729 = vmatpush1.bf16.msra.mxu0 0
        %730 = vmatprep.subr.bf16.mxu0 0
        %731 = vmatpush1.bf16.msra.mxu0 0
        %732 = vmatprep.subr.bf16.mxu0 0
        %733 = vmatpush1.bf16.msra.mxu0 0
        %734 = vmatprep.subr.bf16.mxu0 0
        %735 = vmatpush1.bf16.msra.mxu0 0
        %736 = vmatprep.subr.bf16.mxu0 0
        %737 = vmatpush1.bf16.msra.mxu0 0
        %738 = vmatprep.subr.bf16.mxu0 0
        %739 = vmatpush1.bf16.msra.mxu0 0
        %740 = vmatprep.subr.bf16.mxu0 0
        %741 = vmatpush1.bf16.msra.mxu0 0
        %742 = vmatprep.subr.bf16.mxu0 0
        %743 = vmatpush1.bf16.msra.mxu0 0
        %744 = vmatprep.subr.bf16.mxu0 0
        %745 = vmatpush1.bf16.msra.mxu0 0
        %746 = vmatprep.subr.bf16.mxu0 0
        %747 = vmatpush1.bf16.msra.mxu0 0
        %748 = vmatprep.subr.bf16.mxu0 0
        %749 = vmatpush1.bf16.msra.mxu0 0
        %750 = vmatprep.subr.bf16.mxu0 0
        %751 = vmatpush1.bf16.msra.mxu0 0
        %752 = vmatprep.subr.bf16.mxu0 0
        %753 = vmatpush1.bf16.msra.mxu0 0
        %754 = vmatprep.subr.bf16.mxu0 0
        %755 = vmatpush1.bf16.msra.mxu0 0
        %756 = vmatprep.mubr.bf16.mxu0 0
        %757 = vmatmul.mubr.bf16.gmra.mrb[0].mxu0 %v713
        %v758 = vpop.f32.mrb[0].mxu0
        %v759 = vadd.f32 0.0, %v758
        %v760 = vpop.f32.mrb[0].mxu0
        %v761 = vadd.f32 0.0, %v760
        %v762 = vpop.f32.mrb[0].mxu0
        %v763 = vpop.f32.mrb[0].mxu0
        %764 = vdwg.mxu0
        %765 = vmatprep.subr.bf16.mxu0 0
        %766 = vmatpush1.bf16.msra.mxu0 %v722
        %767 = vmatprep.subr.bf16.mxu0 0
        %768 = vmatpush1.bf16.msra.mxu0 0
        %769 = vmatprep.subr.bf16.mxu0 0
        %770 = vmatpush1.bf16.msra.mxu0 0
        %771 = vmatprep.subr.bf16.mxu0 0
        %772 = vmatpush1.bf16.msra.mxu0 0
        %773 = vmatprep.subr.bf16.mxu0 0
        %774 = vmatpush1.bf16.msra.mxu0 0
        %775 = vmatprep.subr.bf16.mxu0 0
        %776 = vmatpush1.bf16.msra.mxu0 0
        %777 = vmatprep.subr.bf16.mxu0 0
        %778 = vmatpush1.bf16.msra.mxu0 0
        %779 = vmatprep.subr.bf16.mxu0 0
        %780 = vmatpush1.bf16.msra.mxu0 0
        %781 = vmatprep.subr.bf16.mxu0 0
        %782 = vmatpush1.bf16.msra.mxu0 0
        %783 = vmatprep.subr.bf16.mxu0 0
        %784 = vmatpush1.bf16.msra.mxu0 0
        %785 = vmatprep.subr.bf16.mxu0 0
        %786 = vmatpush1.bf16.msra.mxu0 0
        %787 = vmatprep.subr.bf16.mxu0 0
        %788 = vmatpush1.bf16.msra.mxu0 0
        %789 = vmatprep.subr.bf16.mxu0 0
        %790 = vmatpush1.bf16.msra.mxu0 0
        %791 = vmatprep.subr.bf16.mxu0 0
        %792 = vmatpush1.bf16.msra.mxu0 0
        %793 = vmatprep.subr.bf16.mxu0 0
        %794 = vmatpush1.bf16.msra.mxu0 0
        %795 = vmatprep.subr.bf16.mxu0 0
        %796 = vmatpush1.bf16.msra.mxu0 0
        %797 = vmatprep.mubr.bf16.mxu0 0
        %798 = vmatmul.mubr.bf16.gmra.mrb[0].mxu0 %v713
        %v799 = vpop.f32.mrb[0].mxu0
        %v800 = vadd.f32 0.0, %v799
        %v801 = vpop.f32.mrb[0].mxu0
        %v802 = vpop.f32.mrb[0].mxu0
        %v803 = vpop.f32.mrb[0].mxu0
        %804 = vdwg.mxu0
        %v805 = vadd.f32 %v680, %v759
        %v806 = vadd.f32 %v681, %v761
        %v807 = vadd.f32 %v682, %v800
        %v808 = vld [vmem:[%s286] sm:$0x3f]
        %s809 = scalar_lea.vmem [#allocation8], 16
        %v810 = vld [vmem:[%s809] sm:$0xf]
        %v812 = vcombine.high %v808, %v808
        %v814 = vunpack.c.l.s4 1983009808
        %v815 = vunpack.c.0.s8 %v814
        %v816 = vlaneseq
        %v817 = vshrl.u32 %v816, 7
        %v818 = vsub.s32 %v815, %v817
        %v819 = vrot.slane %v808, %v818
        %v821 = vunpack.c.l.s4 1983009808
        %v822 = vunpack.c.0.s8 %v821
        %v823 = vlaneseq
        %v824 = vshrl.u32 %v823, 7
        %v825 = vsub.s32 %v822, %v824
        %v826 = vrot.slane %v812, %v825
        %v827 = vcombine.high %v819, %v819
        %828 = vrot.lane.b32.xlu0 %v819, 109
        %v829 = vpop.permute.xlu0 %828
        %830 = vrot.lane.b32.xlu0 %v827, 109
        %v831 = vpop.permute.xlu0 %830
        %832 = vrot.lane.b32.xlu0 %v826, 109
        %v833 = vpop.permute.xlu0 %832
        %vm834 = vcmask 891904
        %v835 = vsel %vm834, %v829, %v831
        %v836 = vsel %vm834, %v831, %v833
        %v838 = vsel %vm367, %v810, 0
        %v841 = vand.u32 %v835, %v374
        %v844 = vand.u32 %v836, %v374
        %v847 = vand.u32 %v833, %v374
        %849 = vmatprep.subr.bf16.mxu0 %v844
        %850 = vmatpush1.bf16.msra.mxu0 %v841
        %851 = vmatprep.subr.bf16.mxu0 0
        %852 = vmatpush1.bf16.msra.mxu0 0
        %853 = vmatprep.subr.bf16.mxu0 0
        %854 = vmatpush1.bf16.msra.mxu0 0
        %855 = vmatprep.subr.bf16.mxu0 0
        %856 = vmatpush1.bf16.msra.mxu0 0
        %857 = vmatprep.subr.bf16.mxu0 0
        %858 = vmatpush1.bf16.msra.mxu0 0
        %859 = vmatprep.subr.bf16.mxu0 0
        %860 = vmatpush1.bf16.msra.mxu0 0
        %861 = vmatprep.subr.bf16.mxu0 0
        %862 = vmatpush1.bf16.msra.mxu0 0
        %863 = vmatprep.subr.bf16.mxu0 0
        %864 = vmatpush1.bf16.msra.mxu0 0
        %865 = vmatprep.subr.bf16.mxu0 0
        %866 = vmatpush1.bf16.msra.mxu0 0
        %867 = vmatprep.subr.bf16.mxu0 0
        %868 = vmatpush1.bf16.msra.mxu0 0
        %869 = vmatprep.subr.bf16.mxu0 0
        %870 = vmatpush1.bf16.msra.mxu0 0
        %871 = vmatprep.subr.bf16.mxu0 0
        %872 = vmatpush1.bf16.msra.mxu0 0
        %873 = vmatprep.subr.bf16.mxu0 0
        %874 = vmatpush1.bf16.msra.mxu0 0
        %875 = vmatprep.subr.bf16.mxu0 0
        %876 = vmatpush1.bf16.msra.mxu0 0
        %877 = vmatprep.subr.bf16.mxu0 0
        %878 = vmatpush1.bf16.msra.mxu0 0
        %879 = vmatprep.subr.bf16.mxu0 0
        %880 = vmatpush1.bf16.msra.mxu0 0
        %881 = vmatprep.mubr.bf16.mxu0 0
        %882 = vmatmul.mubr.bf16.gmra.mrb[0].mxu0 %v838
        %v883 = vpop.f32.mrb[0].mxu0
        %v884 = vadd.f32 0.0, %v883
        %v885 = vpop.f32.mrb[0].mxu0
        %v886 = vadd.f32 0.0, %v885
        %v887 = vpop.f32.mrb[0].mxu0
        %v888 = vpop.f32.mrb[0].mxu0
        %889 = vdwg.mxu0
        %890 = vmatprep.subr.bf16.mxu0 0
        %891 = vmatpush1.bf16.msra.mxu0 %v847
        %892 = vmatprep.subr.bf16.mxu0 0
        %893 = vmatpush1.bf16.msra.mxu0 0
        %894 = vmatprep.subr.bf16.mxu0 0
        %895 = vmatpush1.bf16.msra.mxu0 0
        %896 = vmatprep.subr.bf16.mxu0 0
        %897 = vmatpush1.bf16.msra.mxu0 0
        %898 = vmatprep.subr.bf16.mxu0 0
        %899 = vmatpush1.bf16.msra.mxu0 0
        %900 = vmatprep.subr.bf16.mxu0 0
        %901 = vmatpush1.bf16.msra.mxu0 0
        %902 = vmatprep.subr.bf16.mxu0 0
        %903 = vmatpush1.bf16.msra.mxu0 0
        %904 = vmatprep.subr.bf16.mxu0 0
        %905 = vmatpush1.bf16.msra.mxu0 0
        %906 = vmatprep.subr.bf16.mxu0 0
        %907 = vmatpush1.bf16.msra.mxu0 0
        %908 = vmatprep.subr.bf16.mxu0 0
        %909 = vmatpush1.bf16.msra.mxu0 0
        %910 = vmatprep.subr.bf16.mxu0 0
        %911 = vmatpush1.bf16.msra.mxu0 0
        %912 = vmatprep.subr.bf16.mxu0 0
        %913 = vmatpush1.bf16.msra.mxu0 0
        %914 = vmatprep.subr.bf16.mxu0 0
        %915 = vmatpush1.bf16.msra.mxu0 0
        %916 = vmatprep.subr.bf16.mxu0 0
        %917 = vmatpush1.bf16.msra.mxu0 0
        %918 = vmatprep.subr.bf16.mxu0 0
        %919 = vmatpush1.bf16.msra.mxu0 0
        %920 = vmatprep.subr.bf16.mxu0 0
        %921 = vmatpush1.bf16.msra.mxu0 0
        %922 = vmatprep.mubr.bf16.mxu0 0
        %923 = vmatmul.mubr.bf16.gmra.mrb[0].mxu0 %v838
        %v924 = vpop.f32.mrb[0].mxu0
        %v925 = vadd.f32 0.0, %v924
        %v926 = vpop.f32.mrb[0].mxu0
        %v927 = vpop.f32.mrb[0].mxu0
        %v928 = vpop.f32.mrb[0].mxu0
        %929 = vdwg.mxu0
        %v930 = vadd.f32 %v805, %v884
        %v931 = vadd.f32 %v806, %v886
        %v932 = vadd.f32 %v807, %v925
        %v933 = vld [vmem:[%s286] sm:$0x3f]
        %s934 = scalar_lea.vmem [#allocation8], 20
        %v935 = vld [vmem:[%s934] sm:$0xf]
        %v937 = vcombine.high %v933, %v933
        %v939 = vunpack.c.l.s4 1983009808
        %v940 = vunpack.c.0.s8 %v939
        %v941 = vlaneseq
        %v942 = vshrl.u32 %v941, 7
        %v943 = vsub.s32 %v940, %v942
        %v944 = vrot.slane %v933, %v943
        %v946 = vunpack.c.l.s4 1983009808
        %v947 = vunpack.c.0.s8 %v946
        %v948 = vlaneseq
        %v949 = vshrl.u32 %v948, 7
        %v950 = vsub.s32 %v947, %v949
        %v951 = vrot.slane %v937, %v950
        %v952 = vcombine.high %v944, %v944
        %953 = vrot.lane.b32.xlu0 %v944, 108
        %v954 = vpop.permute.xlu0 %953
        %955 = vrot.lane.b32.xlu0 %v952, 108
        %v956 = vpop.permute.xlu0 %955
        %957 = vrot.lane.b32.xlu0 %v951, 108
        %v958 = vpop.permute.xlu0 %957
        %vm959 = vcmask 883712
        %v960 = vsel %vm959, %v954, %v956
        %v961 = vsel %vm959, %v956, %v958
        %v963 = vsel %vm367, %v935, 0
        %v966 = vand.u32 %v960, %v374
        %v969 = vand.u32 %v961, %v374
        %v972 = vand.u32 %v958, %v374
        %974 = vmatprep.subr.bf16.mxu0 %v969
        %975 = vmatpush1.bf16.msra.mxu0 %v966
        %976 = vmatprep.subr.bf16.mxu0 0
        %977 = vmatpush1.bf16.msra.mxu0 0
        %978 = vmatprep.subr.bf16.mxu0 0
        %979 = vmatpush1.bf16.msra.mxu0 0
        %980 = vmatprep.subr.bf16.mxu0 0
        %981 = vmatpush1.bf16.msra.mxu0 0
        %982 = vmatprep.subr.bf16.mxu0 0
        %983 = vmatpush1.bf16.msra.mxu0 0
        %984 = vmatprep.subr.bf16.mxu0 0
        %985 = vmatpush1.bf16.msra.mxu0 0
        %986 = vmatprep.subr.bf16.mxu0 0
        %987 = vmatpush1.bf16.msra.mxu0 0
        %988 = vmatprep.subr.bf16.mxu0 0
        %989 = vmatpush1.bf16.msra.mxu0 0
        %990 = vmatprep.subr.bf16.mxu0 0
        %991 = vmatpush1.bf16.msra.mxu0 0
        %992 = vmatprep.subr.bf16.mxu0 0
        %993 = vmatpush1.bf16.msra.mxu0 0
        %994 = vmatprep.subr.bf16.mxu0 0
        %995 = vmatpush1.bf16.msra.mxu0 0
        %996 = vmatprep.subr.bf16.mxu0 0
        %997 = vmatpush1.bf16.msra.mxu0 0
        %998 = vmatprep.subr.bf16.mxu0 0
        %999 = vmatpush1.bf16.msra.mxu0 0
        %1000 = vmatprep.subr.bf16.mxu0 0
        %1001 = vmatpush1.bf16.msra.mxu0 0
        %1002 = vmatprep.subr.bf16.mxu0 0
        %1003 = vmatpush1.bf16.msra.mxu0 0
        %1004 = vmatprep.subr.bf16.mxu0 0
        %1005 = vmatpush1.bf16.msra.mxu0 0
        %1006 = vmatprep.mubr.bf16.mxu0 0
        %1007 = vmatmul.mubr.bf16.gmra.mrb[0].mxu0 %v963
        %v1008 = vpop.f32.mrb[0].mxu0
        %v1009 = vadd.f32 0.0, %v1008
        %v1010 = vpop.f32.mrb[0].mxu0
        %v1011 = vadd.f32 0.0, %v1010
        %v1012 = vpop.f32.mrb[0].mxu0
        %v1013 = vpop.f32.mrb[0].mxu0
        %1014 = vdwg.mxu0
        %1015 = vmatprep.subr.bf16.mxu0 0
        %1016 = vmatpush1.bf16.msra.mxu0 %v972
        %1017 = vmatprep.subr.bf16.mxu0 0
        %1018 = vmatpush1.bf16.msra.mxu0 0
        %1019 = vmatprep.subr.bf16.mxu0 0
        %1020 = vmatpush1.bf16.msra.mxu0 0
        %1021 = vmatprep.subr.bf16.mxu0 0
        %1022 = vmatpush1.bf16.msra.mxu0 0
        %1023 = vmatprep.subr.bf16.mxu0 0
        %1024 = vmatpush1.bf16.msra.mxu0 0
        %1025 = vmatprep.subr.bf16.mxu0 0
        %1026 = vmatpush1.bf16.msra.mxu0 0
        %1027 = vmatprep.subr.bf16.mxu0 0
        %1028 = vmatpush1.bf16.msra.mxu0 0
        %1029 = vmatprep.subr.bf16.mxu0 0
        %1030 = vmatpush1.bf16.msra.mxu0 0
        %1031 = vmatprep.subr.bf16.mxu0 0
        %1032 = vmatpush1.bf16.msra.mxu0 0
        %1033 = vmatprep.subr.bf16.mxu0 0
        %1034 = vmatpush1.bf16.msra.mxu0 0
        %1035 = vmatprep.subr.bf16.mxu0 0
        %1036 = vmatpush1.bf16.msra.mxu0 0
        %1037 = vmatprep.subr.bf16.mxu0 0
        %1038 = vmatpush1.bf16.msra.mxu0 0
        %1039 = vmatprep.subr.bf16.mxu0 0
        %1040 = vmatpush1.bf16.msra.mxu0 0
        %1041 = vmatprep.subr.bf16.mxu0 0
        %1042 = vmatpush1.bf16.msra.mxu0 0
        %1043 = vmatprep.subr.bf16.mxu0 0
        %1044 = vmatpush1.bf16.msra.mxu0 0
        %1045 = vmatprep.subr.bf16.mxu0 0
        %1046 = vmatpush1.bf16.msra.mxu0 0
        %1047 = vmatprep.mubr.bf16.mxu0 0
        %1048 = vmatmul.mubr.bf16.gmra.mrb[0].mxu0 %v963
        %v1049 = vpop.f32.mrb[0].mxu0
        %v1050 = vadd.f32 0.0, %v1049
        %v1051 = vpop.f32.mrb[0].mxu0
        %v1052 = vpop.f32.mrb[0].mxu0
        %v1053 = vpop.f32.mrb[0].mxu0
        %1054 = vdwg.mxu0
        %v1055 = vadd.f32 %v930, %v1009
        %v1056 = vadd.f32 %v931, %v1011
        %v1057 = vadd.f32 %v932, %v1050
        %v1058 = vld [vmem:[%s286] sm:$0x3f]
        %s1059 = scalar_lea.vmem [#allocation8], 24
        %v1060 = vld [vmem:[%s1059] sm:$0xf]
        %v1062 = vcombine.high %v1058, %v1058
        %v1064 = vunpack.c.l.s4 1983009808
        %v1065 = vunpack.c.0.s8 %v1064
        %v1066 = vlaneseq
        %v1067 = vshrl.u32 %v1066, 7
        %v1068 = vsub.s32 %v1065, %v1067
        %v1069 = vrot.slane %v1058, %v1068
        %v1071 = vunpack.c.l.s4 1983009808
        %v1072 = vunpack.c.0.s8 %v1071
        %v1073 = vlaneseq
        %v1074 = vshrl.u32 %v1073, 7
        %v1075 = vsub.s32 %v1072, %v1074
        %v1076 = vrot.slane %v1062, %v1075
        %v1077 = vcombine.high %v1069, %v1069
        %1078 = vrot.lane.b32.xlu0 %v1069, 92
        %v1079 = vpop.permute.xlu0 %1078
        %1080 = vrot.lane.b32.xlu0 %v1077, 92
        %v1081 = vpop.permute.xlu0 %1080
        %1082 = vrot.lane.b32.xlu0 %v1076, 92
        %v1083 = vpop.permute.xlu0 %1082
        %vm1084 = vcmask 752640
        %v1085 = vsel %vm1084, %v1079, %v1081
        %v1086 = vsel %vm1084, %v1081, %v1083
        %v1088 = vsel %vm367, %v1060, 0
        %v1091 = vand.u32 %v1085, %v374
        %v1094 = vand.u32 %v1086, %v374
        %v1097 = vand.u32 %v1083, %v374
        %1099 = vmatprep.subr.bf16.mxu0 %v1094
        %1100 = vmatpush1.bf16.msra.mxu0 %v1091
        %1101 = vmatprep.subr.bf16.mxu0 0
        %1102 = vmatpush1.bf16.msra.mxu0 0
        %1103 = vmatprep.subr.bf16.mxu0 0
        %1104 = vmatpush1.bf16.msra.mxu0 0
        %1105 = vmatprep.subr.bf16.mxu0 0
        %1106 = vmatpush1.bf16.msra.mxu0 0
        %1107 = vmatprep.subr.bf16.mxu0 0
        %1108 = vmatpush1.bf16.msra.mxu0 0
        %1109 = vmatprep.subr.bf16.mxu0 0
        %1110 = vmatpush1.bf16.msra.mxu0 0
        %1111 = vmatprep.subr.bf16.mxu0 0
        %1112 = vmatpush1.bf16.msra.mxu0 0
        %1113 = vmatprep.subr.bf16.mxu0 0
        %1114 = vmatpush1.bf16.msra.mxu0 0
        %1115 = vmatprep.subr.bf16.mxu0 0
        %1116 = vmatpush1.bf16.msra.mxu0 0
        %1117 = vmatprep.subr.bf16.mxu0 0
        %1118 = vmatpush1.bf16.msra.mxu0 0
        %1119 = vmatprep.subr.bf16.mxu0 0
        %1120 = vmatpush1.bf16.msra.mxu0 0
        %1121 = vmatprep.subr.bf16.mxu0 0
        %1122 = vmatpush1.bf16.msra.mxu0 0
        %1123 = vmatprep.subr.bf16.mxu0 0
        %1124 = vmatpush1.bf16.msra.mxu0 0
        %1125 = vmatprep.subr.bf16.mxu0 0
        %1126 = vmatpush1.bf16.msra.mxu0 0
        %1127 = vmatprep.subr.bf16.mxu0 0
        %1128 = vmatpush1.bf16.msra.mxu0 0
        %1129 = vmatprep.subr.bf16.mxu0 0
        %1130 = vmatpush1.bf16.msra.mxu0 0
        %1131 = vmatprep.mubr.bf16.mxu0 0
        %1132 = vmatmul.mubr.bf16.gmra.mrb[0].mxu0 %v1088
        %v1133 = vpop.f32.mrb[0].mxu0
        %v1134 = vadd.f32 0.0, %v1133
        %v1135 = vpop.f32.mrb[0].mxu0
        %v1136 = vadd.f32 0.0, %v1135
        %v1137 = vpop.f32.mrb[0].mxu0
        %v1138 = vpop.f32.mrb[0].mxu0
        %1139 = vdwg.mxu0
        %1140 = vmatprep.subr.bf16.mxu0 0
        %1141 = vmatpush1.bf16.msra.mxu0 %v1097
        %1142 = vmatprep.subr.bf16.mxu0 0
        %1143 = vmatpush1.bf16.msra.mxu0 0
        %1144 = vmatprep.subr.bf16.mxu0 0
        %1145 = vmatpush1.bf16.msra.mxu0 0
        %1146 = vmatprep.subr.bf16.mxu0 0
        %1147 = vmatpush1.bf16.msra.mxu0 0
        %1148 = vmatprep.subr.bf16.mxu0 0
        %1149 = vmatpush1.bf16.msra.mxu0 0
        %1150 = vmatprep.subr.bf16.mxu0 0
        %1151 = vmatpush1.bf16.msra.mxu0 0
        %1152 = vmatprep.subr.bf16.mxu0 0
        %1153 = vmatpush1.bf16.msra.mxu0 0
        %1154 = vmatprep.subr.bf16.mxu0 0
        %1155 = vmatpush1.bf16.msra.mxu0 0
        %1156 = vmatprep.subr.bf16.mxu0 0
        %1157 = vmatpush1.bf16.msra.mxu0 0
        %1158 = vmatprep.subr.bf16.mxu0 0
        %1159 = vmatpush1.bf16.msra.mxu0 0
        %1160 = vmatprep.subr.bf16.mxu0 0
        %1161 = vmatpush1.bf16.msra.mxu0 0
        %1162 = vmatprep.subr.bf16.mxu0 0
        %1163 = vmatpush1.bf16.msra.mxu0 0
        %1164 = vmatprep.subr.bf16.mxu0 0
        %1165 = vmatpush1.bf16.msra.mxu0 0
        %1166 = vmatprep.subr.bf16.mxu0 0
        %1167 = vmatpush1.bf16.msra.mxu0 0
        %1168 = vmatprep.subr.bf16.mxu0 0
        %1169 = vmatpush1.bf16.msra.mxu0 0
        %1170 = vmatprep.subr.bf16.mxu0 0
        %1171 = vmatpush1.bf16.msra.mxu0 0
        %1172 = vmatprep.mubr.bf16.mxu0 0
        %1173 = vmatmul.mubr.bf16.gmra.mrb[0].mxu0 %v1088
        %v1174 = vpop.f32.mrb[0].mxu0
        %v1175 = vadd.f32 0.0, %v1174
        %v1176 = vpop.f32.mrb[0].mxu0
        %v1177 = vpop.f32.mrb[0].mxu0
        %v1178 = vpop.f32.mrb[0].mxu0
        %1179 = vdwg.mxu0
        %v1180 = vadd.f32 %v1055, %v1134
        %v1181 = vadd.f32 %v1056, %v1136
        %v1182 = vadd.f32 %v1057, %v1175
        %v1183 = vld [vmem:[%s286] sm:$0x3f]
        %s1184 = scalar_lea.vmem [#allocation8], 28
        %v1185 = vld [vmem:[%s1184] sm:$0xf]
        %v1187 = vcombine.high %v1183, %v1183
        %v1189 = vunpack.c.l.s4 1983009808
        %v1190 = vunpack.c.0.s8 %v1189
        %v1191 = vlaneseq
        %v1192 = vshrl.u32 %v1191, 7
        %v1193 = vsub.s32 %v1190, %v1192
        %v1194 = vrot.slane %v1183, %v1193
        %v1196 = vunpack.c.l.s4 1983009808
        %v1197 = vunpack.c.0.s8 %v1196
        %v1198 = vlaneseq
        %v1199 = vshrl.u32 %v1198, 7
        %v1200 = vsub.s32 %v1197, %v1199
        %v1201 = vrot.slane %v1187, %v1200
        %v1202 = vcombine.high %v1194, %v1194
        %1203 = vrot.lane.b32.xlu0 %v1194, 91
        %v1204 = vpop.permute.xlu0 %1203
        %1205 = vrot.lane.b32.xlu0 %v1202, 91
        %v1206 = vpop.permute.xlu0 %1205
        %1207 = vrot.lane.b32.xlu0 %v1201, 91
        %v1208 = vpop.permute.xlu0 %1207
        %vm1209 = vcmask 744448
        %v1210 = vsel %vm1209, %v1204, %v1206
        %v1211 = vsel %vm1209, %v1206, %v1208
        %v1213 = vsel %vm367, %v1185, 0
        %v1216 = vand.u32 %v1210, %v374
        %v1219 = vand.u32 %v1211, %v374
        %v1222 = vand.u32 %v1208, %v374
        %1224 = vmatprep.subr.bf16.mxu0 %v1219
        %1225 = vmatpush1.bf16.msra.mxu0 %v1216
        %1226 = vmatprep.subr.bf16.mxu0 0
        %1227 = vmatpush1.bf16.msra.mxu0 0
        %1228 = vmatprep.subr.bf16.mxu0 0
        %1229 = vmatpush1.bf16.msra.mxu0 0
        %1230 = vmatprep.subr.bf16.mxu0 0
        %1231 = vmatpush1.bf16.msra.mxu0 0
        %1232 = vmatprep.subr.bf16.mxu0 0
        %1233 = vmatpush1.bf16.msra.mxu0 0
        %1234 = vmatprep.subr.bf16.mxu0 0
        %1235 = vmatpush1.bf16.msra.mxu0 0
        %1236 = vmatprep.subr.bf16.mxu0 0
        %1237 = vmatpush1.bf16.msra.mxu0 0
        %1238 = vmatprep.subr.bf16.mxu0 0
        %1239 = vmatpush1.bf16.msra.mxu0 0
        %1240 = vmatprep.subr.bf16.mxu0 0
        %1241 = vmatpush1.bf16.msra.mxu0 0
        %1242 = vmatprep.subr.bf16.mxu0 0
        %1243 = vmatpush1.bf16.msra.mxu0 0
        %1244 = vmatprep.subr.bf16.mxu0 0
        %1245 = vmatpush1.bf16.msra.mxu0 0
        %1246 = vmatprep.subr.bf16.mxu0 0
        %1247 = vmatpush1.bf16.msra.mxu0 0
        %1248 = vmatprep.subr.bf16.mxu0 0
        %1249 = vmatpush1.bf16.msra.mxu0 0
        %1250 = vmatprep.subr.bf16.mxu0 0
        %1251 = vmatpush1.bf16.msra.mxu0 0
        %1252 = vmatprep.subr.bf16.mxu0 0
        %1253 = vmatpush1.bf16.msra.mxu0 0
        %1254 = vmatprep.subr.bf16.mxu0 0
        %1255 = vmatpush1.bf16.msra.mxu0 0
        %1256 = vmatprep.mubr.bf16.mxu0 0
        %1257 = vmatmul.mubr.bf16.gmra.mrb[0].mxu0 %v1213
        %v1258 = vpop.f32.mrb[0].mxu0
        %v1259 = vadd.f32 0.0, %v1258
        %v1260 = vpop.f32.mrb[0].mxu0
        %v1261 = vadd.f32 0.0, %v1260
        %v1262 = vpop.f32.mrb[0].mxu0
        %v1263 = vpop.f32.mrb[0].mxu0
        %1264 = vdwg.mxu0
        %1265 = vmatprep.subr.bf16.mxu0 0
        %1266 = vmatpush1.bf16.msra.mxu0 %v1222
        %1267 = vmatprep.subr.bf16.mxu0 0
        %1268 = vmatpush1.bf16.msra.mxu0 0
        %1269 = vmatprep.subr.bf16.mxu0 0
        %1270 = vmatpush1.bf16.msra.mxu0 0
        %1271 = vmatprep.subr.bf16.mxu0 0
        %1272 = vmatpush1.bf16.msra.mxu0 0
        %1273 = vmatprep.subr.bf16.mxu0 0
        %1274 = vmatpush1.bf16.msra.mxu0 0
        %1275 = vmatprep.subr.bf16.mxu0 0
        %1276 = vmatpush1.bf16.msra.mxu0 0
        %1277 = vmatprep.subr.bf16.mxu0 0
        %1278 = vmatpush1.bf16.msra.mxu0 0
        %1279 = vmatprep.subr.bf16.mxu0 0
        %1280 = vmatpush1.bf16.msra.mxu0 0
        %1281 = vmatprep.subr.bf16.mxu0 0
        %1282 = vmatpush1.bf16.msra.mxu0 0
        %1283 = vmatprep.subr.bf16.mxu0 0
        %1284 = vmatpush1.bf16.msra.mxu0 0
        %1285 = vmatprep.subr.bf16.mxu0 0
        %1286 = vmatpush1.bf16.msra.mxu0 0
        %1287 = vmatprep.subr.bf16.mxu0 0
        %1288 = vmatpush1.bf16.msra.mxu0 0
        %1289 = vmatprep.subr.bf16.mxu0 0
        %1290 = vmatpush1.bf16.msra.mxu0 0
        %1291 = vmatprep.subr.bf16.mxu0 0
        %1292 = vmatpush1.bf16.msra.mxu0 0
        %1293 = vmatprep.subr.bf16.mxu0 0
        %1294 = vmatpush1.bf16.msra.mxu0 0
        %1295 = vmatprep.subr.bf16.mxu0 0
        %1296 = vmatpush1.bf16.msra.mxu0 0
        %1297 = vmatprep.mubr.bf16.mxu0 0
        %1298 = vmatmul.mubr.bf16.gmra.mrb[0].mxu0 %v1213
        %v1299 = vpop.f32.mrb[0].mxu0
        %v1300 = vadd.f32 0.0, %v1299
        %v1301 = vpop.f32.mrb[0].mxu0
        %v1302 = vpop.f32.mrb[0].mxu0
        %v1303 = vpop.f32.mrb[0].mxu0
        %1304 = vdwg.mxu0
        %v1305 = vadd.f32 %v1180, %v1259
        %v1306 = vadd.f32 %v1181, %v1261
        %v1307 = vadd.f32 %v1182, %v1300
        %v1308 = vld [vmem:[%s286] sm:$0x3f]
        %s1309 = scalar_lea.vmem [#allocation8], 32
        %v1310 = vld [vmem:[%s1309] sm:$0xf]
        %v1312 = vcombine.high %v1308, %v1308
        %v1314 = vunpack.c.l.s4 1983009808
        %v1315 = vunpack.c.0.s8 %v1314
        %v1316 = vlaneseq
        %v1317 = vshrl.u32 %v1316, 7
        %v1318 = vsub.s32 %v1315, %v1317
        %v1319 = vrot.slane %v1308, %v1318
        %v1321 = vunpack.c.l.s4 1983009808
        %v1322 = vunpack.c.0.s8 %v1321
        %v1323 = vlaneseq
        %v1324 = vshrl.u32 %v1323, 7
        %v1325 = vsub.s32 %v1322, %v1324
        %v1326 = vrot.slane %v1312, %v1325
        %v1327 = vcombine.high %v1319, %v1319
        %1328 = vrot.lane.b32.xlu0 %v1319, 90
        %v1329 = vpop.permute.xlu0 %1328
        %1330 = vrot.lane.b32.xlu0 %v1327, 90
        %v1331 = vpop.permute.xlu0 %1330
        %1332 = vrot.lane.b32.xlu0 %v1326, 90
        %v1333 = vpop.permute.xlu0 %1332
        %vm1334 = vcmask 736256
        %v1335 = vsel %vm1334, %v1329, %v1331
        %v1336 = vsel %vm1334, %v1331, %v1333
        %v1338 = vsel %vm367, %v1310, 0
        %v1341 = vand.u32 %v1335, %v374
        %v1344 = vand.u32 %v1336, %v374
        %v1347 = vand.u32 %v1333, %v374
        %1349 = vmatprep.subr.bf16.mxu0 %v1344
        %1350 = vmatpush1.bf16.msra.mxu0 %v1341
        %1351 = vmatprep.subr.bf16.mxu0 0
        %1352 = vmatpush1.bf16.msra.mxu0 0
        %1353 = vmatprep.subr.bf16.mxu0 0
        %1354 = vmatpush1.bf16.msra.mxu0 0
        %1355 = vmatprep.subr.bf16.mxu0 0
        %1356 = vmatpush1.bf16.msra.mxu0 0
        %1357 = vmatprep.subr.bf16.mxu0 0
        %1358 = vmatpush1.bf16.msra.mxu0 0
        %1359 = vmatprep.subr.bf16.mxu0 0
        %1360 = vmatpush1.bf16.msra.mxu0 0
        %1361 = vmatprep.subr.bf16.mxu0 0
        %1362 = vmatpush1.bf16.msra.mxu0 0
        %1363 = vmatprep.subr.bf16.mxu0 0
        %1364 = vmatpush1.bf16.msra.mxu0 0
        %1365 = vmatprep.subr.bf16.mxu0 0
        %1366 = vmatpush1.bf16.msra.mxu0 0
        %1367 = vmatprep.subr.bf16.mxu0 0
        %1368 = vmatpush1.bf16.msra.mxu0 0
        %1369 = vmatprep.subr.bf16.mxu0 0
        %1370 = vmatpush1.bf16.msra.mxu0 0
        %1371 = vmatprep.subr.bf16.mxu0 0
        %1372 = vmatpush1.bf16.msra.mxu0 0
        %1373 = vmatprep.subr.bf16.mxu0 0
        %1374 = vmatpush1.bf16.msra.mxu0 0
        %1375 = vmatprep.subr.bf16.mxu0 0
        %1376 = vmatpush1.bf16.msra.mxu0 0
        %1377 = vmatprep.subr.bf16.mxu0 0
        %1378 = vmatpush1.bf16.msra.mxu0 0
        %1379 = vmatprep.subr.bf16.mxu0 0
        %1380 = vmatpush1.bf16.msra.mxu0 0
        %1381 = vmatprep.mubr.bf16.mxu0 0
        %1382 = vmatmul.mubr.bf16.gmra.mrb[0].mxu0 %v1338
        %v1383 = vpop.f32.mrb[0].mxu0
        %v1384 = vadd.f32 0.0, %v1383
        %v1385 = vpop.f32.mrb[0].mxu0
        %v1386 = vadd.f32 0.0, %v1385
        %v1387 = vpop.f32.mrb[0].mxu0
        %v1388 = vpop.f32.mrb[0].mxu0
        %1389 = vdwg.mxu0
        %1390 = vmatprep.subr.bf16.mxu0 0
        %1391 = vmatpush1.bf16.msra.mxu0 %v1347
        %1392 = vmatprep.subr.bf16.mxu0 0
        %1393 = vmatpush1.bf16.msra.mxu0 0
        %1394 = vmatprep.subr.bf16.mxu0 0
        %1395 = vmatpush1.bf16.msra.mxu0 0
        %1396 = vmatprep.subr.bf16.mxu0 0
        %1397 = vmatpush1.bf16.msra.mxu0 0
        %1398 = vmatprep.subr.bf16.mxu0 0
        %1399 = vmatpush1.bf16.msra.mxu0 0
        %1400 = vmatprep.subr.bf16.mxu0 0
        %1401 = vmatpush1.bf16.msra.mxu0 0
        %1402 = vmatprep.subr.bf16.mxu0 0
        %1403 = vmatpush1.bf16.msra.mxu0 0
        %1404 = vmatprep.subr.bf16.mxu0 0
        %1405 = vmatpush1.bf16.msra.mxu0 0
        %1406 = vmatprep.subr.bf16.mxu0 0
        %1407 = vmatpush1.bf16.msra.mxu0 0
        %1408 = vmatprep.subr.bf16.mxu0 0
        %1409 = vmatpush1.bf16.msra.mxu0 0
        %1410 = vmatprep.subr.bf16.mxu0 0
        %1411 = vmatpush1.bf16.msra.mxu0 0
        %1412 = vmatprep.subr.bf16.mxu0 0
        %1413 = vmatpush1.bf16.msra.mxu0 0
        %1414 = vmatprep.subr.bf16.mxu0 0
        %1415 = vmatpush1.bf16.msra.mxu0 0
        %1416 = vmatprep.subr.bf16.mxu0 0
        %1417 = vmatpush1.bf16.msra.mxu0 0
        %1418 = vmatprep.subr.bf16.mxu0 0
        %1419 = vmatpush1.bf16.msra.mxu0 0
        %1420 = vmatprep.subr.bf16.mxu0 0
        %1421 = vmatpush1.bf16.msra.mxu0 0
        %1422 = vmatprep.mubr.bf16.mxu0 0
        %1423 = vmatmul.mubr.bf16.gmra.mrb[0].mxu0 %v1338
        %v1424 = vpop.f32.mrb[0].mxu0
        %v1425 = vadd.f32 0.0, %v1424
        %v1426 = vpop.f32.mrb[0].mxu0
        %v1427 = vpop.f32.mrb[0].mxu0
        %v1428 = vpop.f32.mrb[0].mxu0
        %1429 = vdwg.mxu0
        %v1430 = vadd.f32 %v1305, %v1384
        %v1431 = vadd.f32 %v1306, %v1386
        %v1432 = vadd.f32 %v1307, %v1425
        %v1433 = vld [vmem:[#allocation9] sm:$0xff]
        %1435 = vset.pattern.permute.xlu0 0
        %1436 = vperm.xlu0 %1435, %v1433
        %v1437 = vpop.permute.xlu0 %1436
        %v1439 = vadd.f32 %v1430, %v1437
        %v1440 = vadd.f32 %v1431, %v1437
        %v1441 = vadd.f32 %v1432, %v1437
        %vm1442 = vcmp.gt.f32.partialorder %v1439, 0.0
        %vm1443 = vcmp.gt.f32.partialorder %v1440, 0.0
        %vm1444 = vcmp.gt.f32.partialorder %v1441, 0.0
        %v1445 = vmin.f32 %v1439, 0.0
        %v1446 = vmin.f32 %v1440, 0.0
        %v1447 = vmin.f32 %v1441, 0.0
        %v1448 = vmul.f32 %v1445, 1.442695
        %v1449 = vpow.pop %v1448
        %v1450 = vmul.f32 %v1446, 1.442695
        %v1451 = vpow.pop %v1450
        %v1452 = vmul.f32 %v1447, 1.442695
        %v1453 = vpow.pop %v1452
        %v1454 = vsub.f32 %v1449, 1.0
        %v1455 = vsub.f32 %v1451, 1.0
        %v1456 = vsub.f32 %v1453, 1.0
        %v1457 = vsel %vm1442, %v1439, %v1454
        %v1458 = vsel %vm1443, %v1440, %v1455
        %v1459 = vsel %vm1444, %v1441, %v1456
        %v1461 = vlaneseq
        %v1462 = vshrl.u32 %v1461, 7
        %v1463 = vsub.s32 0, %v1462
        %v1464 = vrot.slane %v336, %v1463
        %v1465 = vlaneseq
        %v1466 = vshrl.u32 %v1465, 7
        %v1467 = vsub.s32 1, %v1466
        %v1468 = vrot.slane %v336, %v1467
        %v1469 = vlaneseq
        %v1470 = vshrl.u32 %v1469, 7
        %v1471 = vsub.s32 2, %v1470
        %v1472 = vrot.slane %v336, %v1471
        %v1476 = vmul.f32 %v1457, %v1464
        %v1477 = vmul.f32 %v1458, %v1468
        %v1478 = vmul.f32 %v1459, %v1472
        %1479 = vst [vmem:[#allocation2] sm:$0xff] 0
        %vm1480 = vcmask 551936
        %1481 = vst.msk [vmem:[#allocation2 + $0x8] sm:$0xf] %vm1480, 0
        %v1482 = vpack.c.bf16 %v1476, %v1476
        %v1483 = vpack.c.bf16 %v1477, %v1477
        %v1484 = vpack.c.bf16 %v1478, %v1478
        %v1488 = vunpack.c.l.b16 %v1482
        %v1489 = vunpack.c.l.b16 %v1483
        %v1490 = vunpack.c.l.b16 %v1484
        %v1491 = vpack.c.b16 %v1489, %v1488
        %v1492 = vpack.c.b16 %v1490, %v1490
        %1493 = vrot.lane.b32.xlu0 %v1491, 19
        %v1494 = vpop.permute.xlu0 %1493
        %1495 = vrot.lane.b32.xlu0 %v1492, 19
        %v1496 = vpop.permute.xlu0 %1495
        %v1497 = vrot.slane %v1494, 4
        %vm1498 = vcmask 154624
        %v1499 = vsel %vm1498, %v1497, %v1494
        %v1500 = vsel %vm1498, %v1497, %v1496
        %vm1503 = vcmask 1043608
        %vm1504 = vcmask 1047556
        %vm1505 = vmor %vm1504, %vm1503
        %1506 = vst.msk [vmem:[#allocation2] sm:$0xff] %vm1505, %v1499
        %vm1507 = vcmask 396288
        %1508 = vst.msk [vmem:[#allocation2 + $0x8] sm:$0xf] %vm1507, %v1500
        %v1509 = vld [vmem:[#allocation2] sm:$0xff]
        %v1510 = vld [vmem:[#allocation2 + $0x8] sm:$0xf]
        %v1511 = vld [vmem:[#allocation11] sm:$0xf]
        %s1512 = scalar_lea.vmem [#allocation11], 4
        %v1513 = vld [vmem:[%s1512] sm:$0xf]
        %v1516 = vunpack.c.l.b16 %v1509
        %v1517 = vunpack.c.h.b16 %v1509
        %v1518 = vunpack.c.l.b16 %v1510
        %v1519 = vpack.c.b16 %v1516, %v1516
        %v1520 = vpack.c.b16 %v1517, %v1517
        %v1521 = vpack.c.b16 %v1518, %v1518
        %1522 = vrot.lane.b32.xlu0 %v1519, 127
        %v1523 = vpop.permute.xlu0 %1522
        %1524 = vrot.lane.b32.xlu0 %v1520, 127
        %v1525 = vpop.permute.xlu0 %1524
        %1526 = vrot.lane.b32.xlu0 %v1521, 127
        %v1527 = vpop.permute.xlu0 %1526
        %v1528 = vsel %vm364, %v1523, %v1525
        %v1529 = vsel %vm364, %v1525, %v1527
        %vm1530 = vcmask 64512
        %v1532 = vsel %vm1530, %v1513, 0
        %vm1534 = vcmask 1043456
        %v1536 = vsel %vm1534, %v1528, 0
        %v1539 = vsel %vm1534, %v1529, 0
        %v1542 = vsel %vm1534, %v1527, 0
        %1544 = vmatprep.subr.bf16.mxu0 %v1539
        %1545 = vmatpush1.bf16.msra.mxu0 %v1536
        %1546 = vmatprep.subr.bf16.mxu0 0
        %1547 = vmatpush1.bf16.msra.mxu0 0
        %1548 = vmatprep.subr.bf16.mxu0 0
        %1549 = vmatpush1.bf16.msra.mxu0 0
        %1550 = vmatprep.subr.bf16.mxu0 0
        %1551 = vmatpush1.bf16.msra.mxu0 0
        %1552 = vmatprep.subr.bf16.mxu0 0
        %1553 = vmatpush1.bf16.msra.mxu0 0
        %1554 = vmatprep.subr.bf16.mxu0 0
        %1555 = vmatpush1.bf16.msra.mxu0 0
        %1556 = vmatprep.subr.bf16.mxu0 0
        %1557 = vmatpush1.bf16.msra.mxu0 0
        %1558 = vmatprep.subr.bf16.mxu0 0
        %1559 = vmatpush1.bf16.msra.mxu0 0
        %1560 = vmatprep.subr.bf16.mxu0 0
        %1561 = vmatpush1.bf16.msra.mxu0 0
        %1562 = vmatprep.subr.bf16.mxu0 0
        %1563 = vmatpush1.bf16.msra.mxu0 0
        %1564 = vmatprep.subr.bf16.mxu0 0
        %1565 = vmatpush1.bf16.msra.mxu0 0
        %1566 = vmatprep.subr.bf16.mxu0 0
        %1567 = vmatpush1.bf16.msra.mxu0 0
        %1568 = vmatprep.subr.bf16.mxu0 0
        %1569 = vmatpush1.bf16.msra.mxu0 0
        %1570 = vmatprep.subr.bf16.mxu0 0
        %1571 = vmatpush1.bf16.msra.mxu0 0
        %1572 = vmatprep.subr.bf16.mxu0 0
        %1573 = vmatpush1.bf16.msra.mxu0 0
        %1574 = vmatprep.subr.bf16.mxu0 0
        %1575 = vmatpush1.bf16.msra.mxu0 0
        %1576 = vmatprep.mubr.bf16.mxu0 0
        %1577 = vmatmul.mubr.bf16.gmra.mrb[0].mxu0 %v1532
        %v1578 = vpop.f32.mrb[0].mxu0
        %v1579 = vadd.f32 0.0, %v1578
        %v1580 = vpop.f32.mrb[0].mxu0
        %v1581 = vadd.f32 0.0, %v1580
        %v1582 = vpop.f32.mrb[0].mxu0
        %v1583 = vpop.f32.mrb[0].mxu0
        %1584 = vdwg.mxu0
        %1585 = vmatprep.subr.bf16.mxu0 0
        %1586 = vmatpush1.bf16.msra.mxu0 %v1542
        %1587 = vmatprep.subr.bf16.mxu0 0
        %1588 = vmatpush1.bf16.msra.mxu0 0
        %1589 = vmatprep.subr.bf16.mxu0 0
        %1590 = vmatpush1.bf16.msra.mxu0 0
        %1591 = vmatprep.subr.bf16.mxu0 0
        %1592 = vmatpush1.bf16.msra.mxu0 0
        %1593 = vmatprep.subr.bf16.mxu0 0
        %1594 = vmatpush1.bf16.msra.mxu0 0
        %1595 = vmatprep.subr.bf16.mxu0 0
        %1596 = vmatpush1.bf16.msra.mxu0 0
        %1597 = vmatprep.subr.bf16.mxu0 0
        %1598 = vmatpush1.bf16.msra.mxu0 0
        %1599 = vmatprep.subr.bf16.mxu0 0
        %1600 = vmatpush1.bf16.msra.mxu0 0
        %1601 = vmatprep.subr.bf16.mxu0 0
        %1602 = vmatpush1.bf16.msra.mxu0 0
        %1603 = vmatprep.subr.bf16.mxu0 0
        %1604 = vmatpush1.bf16.msra.mxu0 0
        %1605 = vmatprep.subr.bf16.mxu0 0
        %1606 = vmatpush1.bf16.msra.mxu0 0
        %1607 = vmatprep.subr.bf16.mxu0 0
        %1608 = vmatpush1.bf16.msra.mxu0 0
        %1609 = vmatprep.subr.bf16.mxu0 0
        %1610 = vmatpush1.bf16.msra.mxu0 0
        %1611 = vmatprep.subr.bf16.mxu0 0
        %1612 = vmatpush1.bf16.msra.mxu0 0
        %1613 = vmatprep.subr.bf16.mxu0 0
        %1614 = vmatpush1.bf16.msra.mxu0 0
        %1615 = vmatprep.subr.bf16.mxu0 0
        %1616 = vmatpush1.bf16.msra.mxu0 0
        %1617 = vmatprep.mubr.bf16.mxu0 0
        %1618 = vmatmul.mubr.bf16.gmra.mrb[0].mxu0 %v1532
        %v1619 = vpop.f32.mrb[0].mxu0
        %v1620 = vadd.f32 0.0, %v1619
        %v1621 = vpop.f32.mrb[0].mxu0
        %v1622 = vpop.f32.mrb[0].mxu0
        %v1623 = vpop.f32.mrb[0].mxu0
        %1624 = vdwg.mxu0
        %v1626 = vsel %vm1530, %v1511, 0
        %v1629 = vsel %vm1534, %v1519, 0
        %v1632 = vsel %vm1534, %v1520, 0
        %v1635 = vsel %vm1534, %v1521, 0
        %1637 = vmatprep.subr.bf16.mxu0 %v1632
        %1638 = vmatpush1.bf16.msra.mxu0 %v1629
        %1639 = vmatprep.subr.bf16.mxu0 0
        %1640 = vmatpush1.bf16.msra.mxu0 0
        %1641 = vmatprep.subr.bf16.mxu0 0
        %1642 = vmatpush1.bf16.msra.mxu0 0
        %1643 = vmatprep.subr.bf16.mxu0 0
        %1644 = vmatpush1.bf16.msra.mxu0 0
        %1645 = vmatprep.subr.bf16.mxu0 0
        %1646 = vmatpush1.bf16.msra.mxu0 0
        %1647 = vmatprep.subr.bf16.mxu0 0
        %1648 = vmatpush1.bf16.msra.mxu0 0
        %1649 = vmatprep.subr.bf16.mxu0 0
        %1650 = vmatpush1.bf16.msra.mxu0 0
        %1651 = vmatprep.subr.bf16.mxu0 0
        %1652 = vmatpush1.bf16.msra.mxu0 0
        %1653 = vmatprep.subr.bf16.mxu0 0
        %1654 = vmatpush1.bf16.msra.mxu0 0
        %1655 = vmatprep.subr.bf16.mxu0 0
        %1656 = vmatpush1.bf16.msra.mxu0 0
        %1657 = vmatprep.subr.bf16.mxu0 0
        %1658 = vmatpush1.bf16.msra.mxu0 0
        %1659 = vmatprep.subr.bf16.mxu0 0
        %1660 = vmatpush1.bf16.msra.mxu0 0
        %1661 = vmatprep.subr.bf16.mxu0 0
        %1662 = vmatpush1.bf16.msra.mxu0 0
        %1663 = vmatprep.subr.bf16.mxu0 0
        %1664 = vmatpush1.bf16.msra.mxu0 0
        %1665 = vmatprep.subr.bf16.mxu0 0
        %1666 = vmatpush1.bf16.msra.mxu0 0
        %1667 = vmatprep.subr.bf16.mxu0 0
        %1668 = vmatpush1.bf16.msra.mxu0 0
        %1669 = vmatprep.mubr.bf16.mxu0 0
        %1670 = vmatmul.mubr.bf16.gmra.mrb[0].mxu0 %v1626
        %v1671 = vpop.f32.mrb[0].mxu0
        %v1672 = vadd.f32 %v1579, %v1671
        %v1673 = vpop.f32.mrb[0].mxu0
        %v1674 = vadd.f32 %v1581, %v1673
        %v1675 = vpop.f32.mrb[0].mxu0
        %v1676 = vpop.f32.mrb[0].mxu0
        %1677 = vdwg.mxu0
        %1678 = vmatprep.subr.bf16.mxu0 0
        %1679 = vmatpush1.bf16.msra.mxu0 %v1635
        %1680 = vmatprep.subr.bf16.mxu0 0
        %1681 = vmatpush1.bf16.msra.mxu0 0
        %1682 = vmatprep.subr.bf16.mxu0 0
        %1683 = vmatpush1.bf16.msra.mxu0 0
        %1684 = vmatprep.subr.bf16.mxu0 0
        %1685 = vmatpush1.bf16.msra.mxu0 0
        %1686 = vmatprep.subr.bf16.mxu0 0
        %1687 = vmatpush1.bf16.msra.mxu0 0
        %1688 = vmatprep.subr.bf16.mxu0 0
        %1689 = vmatpush1.bf16.msra.mxu0 0
        %1690 = vmatprep.subr.bf16.mxu0 0
        %1691 = vmatpush1.bf16.msra.mxu0 0
        %1692 = vmatprep.subr.bf16.mxu0 0
        %1693 = vmatpush1.bf16.msra.mxu0 0
        %1694 = vmatprep.subr.bf16.mxu0 0
        %1695 = vmatpush1.bf16.msra.mxu0 0
        %1696 = vmatprep.subr.bf16.mxu0 0
        %1697 = vmatpush1.bf16.msra.mxu0 0
        %1698 = vmatprep.subr.bf16.mxu0 0
        %1699 = vmatpush1.bf16.msra.mxu0 0
        %1700 = vmatprep.subr.bf16.mxu0 0
        %1701 = vmatpush1.bf16.msra.mxu0 0
        %1702 = vmatprep.subr.bf16.mxu0 0
        %1703 = vmatpush1.bf16.msra.mxu0 0
        %1704 = vmatprep.subr.bf16.mxu0 0
        %1705 = vmatpush1.bf16.msra.mxu0 0
        %1706 = vmatprep.subr.bf16.mxu0 0
        %1707 = vmatpush1.bf16.msra.mxu0 0
        %1708 = vmatprep.subr.bf16.mxu0 0
        %1709 = vmatpush1.bf16.msra.mxu0 0
        %1710 = vmatprep.mubr.bf16.mxu0 0
        %1711 = vmatmul.mubr.bf16.gmra.mrb[0].mxu0 %v1626
        %v1712 = vpop.f32.mrb[0].mxu0
        %v1713 = vadd.f32 %v1620, %v1712
        %v1714 = vpop.f32.mrb[0].mxu0
        %v1715 = vpop.f32.mrb[0].mxu0
        %v1716 = vpop.f32.mrb[0].mxu0
        %1717 = vdwg.mxu0
        %s1718 = scalar_lea.vmem [#allocation11], 8
        %v1719 = vld [vmem:[%s1718] sm:$0xf]
        %1720 = vrot.lane.b32.xlu0 %v1519, 126
        %v1721 = vpop.permute.xlu0 %1720
        %1722 = vrot.lane.b32.xlu0 %v1520, 126
        %v1723 = vpop.permute.xlu0 %1722
        %1724 = vrot.lane.b32.xlu0 %v1521, 126
        %v1725 = vpop.permute.xlu0 %1724
        %v1726 = vsel %vm584, %v1721, %v1723
        %v1727 = vsel %vm584, %v1723, %v1725
        %v1729 = vsel %vm1530, %v1719, 0
        %v1732 = vsel %vm1534, %v1726, 0
        %v1735 = vsel %vm1534, %v1727, 0
        %v1738 = vsel %vm1534, %v1725, 0
        %1740 = vmatprep.subr.bf16.mxu0 %v1735
        %1741 = vmatpush1.bf16.msra.mxu0 %v1732
        %1742 = vmatprep.subr.bf16.mxu0 0
        %1743 = vmatpush1.bf16.msra.mxu0 0
        %1744 = vmatprep.subr.bf16.mxu0 0
        %1745 = vmatpush1.bf16.msra.mxu0 0
        %1746 = vmatprep.subr.bf16.mxu0 0
        %1747 = vmatpush1.bf16.msra.mxu0 0
        %1748 = vmatprep.subr.bf16.mxu0 0
        %1749 = vmatpush1.bf16.msra.mxu0 0
        %1750 = vmatprep.subr.bf16.mxu0 0
        %1751 = vmatpush1.bf16.msra.mxu0 0
        %1752 = vmatprep.subr.bf16.mxu0 0
        %1753 = vmatpush1.bf16.msra.mxu0 0
        %1754 = vmatprep.subr.bf16.mxu0 0
        %1755 = vmatpush1.bf16.msra.mxu0 0
        %1756 = vmatprep.subr.bf16.mxu0 0
        %1757 = vmatpush1.bf16.msra.mxu0 0
        %1758 = vmatprep.subr.bf16.mxu0 0
        %1759 = vmatpush1.bf16.msra.mxu0 0
        %1760 = vmatprep.subr.bf16.mxu0 0
        %1761 = vmatpush1.bf16.msra.mxu0 0
        %1762 = vmatprep.subr.bf16.mxu0 0
        %1763 = vmatpush1.bf16.msra.mxu0 0
        %1764 = vmatprep.subr.bf16.mxu0 0
        %1765 = vmatpush1.bf16.msra.mxu0 0
        %1766 = vmatprep.subr.bf16.mxu0 0
        %1767 = vmatpush1.bf16.msra.mxu0 0
        %1768 = vmatprep.subr.bf16.mxu0 0
        %1769 = vmatpush1.bf16.msra.mxu0 0
        %1770 = vmatprep.subr.bf16.mxu0 0
        %1771 = vmatpush1.bf16.msra.mxu0 0
        %1772 = vmatprep.mubr.bf16.mxu0 0
        %1773 = vmatmul.mubr.bf16.gmra.mrb[0].mxu0 %v1729
        %v1774 = vpop.f32.mrb[0].mxu0
        %v1775 = vadd.f32 0.0, %v1774
        %v1776 = vpop.f32.mrb[0].mxu0
        %v1777 = vadd.f32 0.0, %v1776
        %v1778 = vpop.f32.mrb[0].mxu0
        %v1779 = vpop.f32.mrb[0].mxu0
        %1780 = vdwg.mxu0
        %1781 = vmatprep.subr.bf16.mxu0 0
        %1782 = vmatpush1.bf16.msra.mxu0 %v1738
        %1783 = vmatprep.subr.bf16.mxu0 0
        %1784 = vmatpush1.bf16.msra.mxu0 0
        %1785 = vmatprep.subr.bf16.mxu0 0
        %1786 = vmatpush1.bf16.msra.mxu0 0
        %1787 = vmatprep.subr.bf16.mxu0 0
        %1788 = vmatpush1.bf16.msra.mxu0 0
        %1789 = vmatprep.subr.bf16.mxu0 0
        %1790 = vmatpush1.bf16.msra.mxu0 0
        %1791 = vmatprep.subr.bf16.mxu0 0
        %1792 = vmatpush1.bf16.msra.mxu0 0
        %1793 = vmatprep.subr.bf16.mxu0 0
        %1794 = vmatpush1.bf16.msra.mxu0 0
        %1795 = vmatprep.subr.bf16.mxu0 0
        %1796 = vmatpush1.bf16.msra.mxu0 0
        %1797 = vmatprep.subr.bf16.mxu0 0
        %1798 = vmatpush1.bf16.msra.mxu0 0
        %1799 = vmatprep.subr.bf16.mxu0 0
        %1800 = vmatpush1.bf16.msra.mxu0 0
        %1801 = vmatprep.subr.bf16.mxu0 0
        %1802 = vmatpush1.bf16.msra.mxu0 0
        %1803 = vmatprep.subr.bf16.mxu0 0
        %1804 = vmatpush1.bf16.msra.mxu0 0
        %1805 = vmatprep.subr.bf16.mxu0 0
        %1806 = vmatpush1.bf16.msra.mxu0 0
        %1807 = vmatprep.subr.bf16.mxu0 0
        %1808 = vmatpush1.bf16.msra.mxu0 0
        %1809 = vmatprep.subr.bf16.mxu0 0
        %1810 = vmatpush1.bf16.msra.mxu0 0
        %1811 = vmatprep.subr.bf16.mxu0 0
        %1812 = vmatpush1.bf16.msra.mxu0 0
        %1813 = vmatprep.mubr.bf16.mxu0 0
        %1814 = vmatmul.mubr.bf16.gmra.mrb[0].mxu0 %v1729
        %v1815 = vpop.f32.mrb[0].mxu0
        %v1816 = vadd.f32 0.0, %v1815
        %v1817 = vpop.f32.mrb[0].mxu0
        %v1818 = vpop.f32.mrb[0].mxu0
        %v1819 = vpop.f32.mrb[0].mxu0
        %1820 = vdwg.mxu0
        %v1821 = vadd.f32 %v1672, %v1775
        %v1822 = vadd.f32 %v1674, %v1777
        %v1823 = vadd.f32 %v1713, %v1816
        %s1824 = scalar_lea.vmem [#allocation11], 12
        %v1825 = vld [vmem:[%s1824] sm:$0xf]
        %1826 = vrot.lane.b32.xlu0 %v1519, 110
        %v1827 = vpop.permute.xlu0 %1826
        %1828 = vrot.lane.b32.xlu0 %v1520, 110
        %v1829 = vpop.permute.xlu0 %1828
        %1830 = vrot.lane.b32.xlu0 %v1521, 110
        %v1831 = vpop.permute.xlu0 %1830
        %v1832 = vsel %vm709, %v1827, %v1829
        %v1833 = vsel %vm709, %v1829, %v1831
        %v1835 = vsel %vm1530, %v1825, 0
        %v1838 = vsel %vm1534, %v1832, 0
        %v1841 = vsel %vm1534, %v1833, 0
        %v1844 = vsel %vm1534, %v1831, 0
        %1846 = vmatprep.subr.bf16.mxu0 %v1841
        %1847 = vmatpush1.bf16.msra.mxu0 %v1838
        %1848 = vmatprep.subr.bf16.mxu0 0
        %1849 = vmatpush1.bf16.msra.mxu0 0
        %1850 = vmatprep.subr.bf16.mxu0 0
        %1851 = vmatpush1.bf16.msra.mxu0 0
        %1852 = vmatprep.subr.bf16.mxu0 0
        %1853 = vmatpush1.bf16.msra.mxu0 0
        %1854 = vmatprep.subr.bf16.mxu0 0
        %1855 = vmatpush1.bf16.msra.mxu0 0
        %1856 = vmatprep.subr.bf16.mxu0 0
        %1857 = vmatpush1.bf16.msra.mxu0 0
        %1858 = vmatprep.subr.bf16.mxu0 0
        %1859 = vmatpush1.bf16.msra.mxu0 0
        %1860 = vmatprep.subr.bf16.mxu0 0
        %1861 = vmatpush1.bf16.msra.mxu0 0
        %1862 = vmatprep.subr.bf16.mxu0 0
        %1863 = vmatpush1.bf16.msra.mxu0 0
        %1864 = vmatprep.subr.bf16.mxu0 0
        %1865 = vmatpush1.bf16.msra.mxu0 0
        %1866 = vmatprep.subr.bf16.mxu0 0
        %1867 = vmatpush1.bf16.msra.mxu0 0
        %1868 = vmatprep.subr.bf16.mxu0 0
        %1869 = vmatpush1.bf16.msra.mxu0 0
        %1870 = vmatprep.subr.bf16.mxu0 0
        %1871 = vmatpush1.bf16.msra.mxu0 0
        %1872 = vmatprep.subr.bf16.mxu0 0
        %1873 = vmatpush1.bf16.msra.mxu0 0
        %1874 = vmatprep.subr.bf16.mxu0 0
        %1875 = vmatpush1.bf16.msra.mxu0 0
        %1876 = vmatprep.subr.bf16.mxu0 0
        %1877 = vmatpush1.bf16.msra.mxu0 0
        %1878 = vmatprep.mubr.bf16.mxu0 0
        %1879 = vmatmul.mubr.bf16.gmra.mrb[0].mxu0 %v1835
        %v1880 = vpop.f32.mrb[0].mxu0
        %v1881 = vadd.f32 0.0, %v1880
        %v1882 = vpop.f32.mrb[0].mxu0
        %v1883 = vadd.f32 0.0, %v1882
        %v1884 = vpop.f32.mrb[0].mxu0
        %v1885 = vpop.f32.mrb[0].mxu0
        %1886 = vdwg.mxu0
        %1887 = vmatprep.subr.bf16.mxu0 0
        %1888 = vmatpush1.bf16.msra.mxu0 %v1844
        %1889 = vmatprep.subr.bf16.mxu0 0
        %1890 = vmatpush1.bf16.msra.mxu0 0
        %1891 = vmatprep.subr.bf16.mxu0 0
        %1892 = vmatpush1.bf16.msra.mxu0 0
        %1893 = vmatprep.subr.bf16.mxu0 0
        %1894 = vmatpush1.bf16.msra.mxu0 0
        %1895 = vmatprep.subr.bf16.mxu0 0
        %1896 = vmatpush1.bf16.msra.mxu0 0
        %1897 = vmatprep.subr.bf16.mxu0 0
        %1898 = vmatpush1.bf16.msra.mxu0 0
        %1899 = vmatprep.subr.bf16.mxu0 0
        %1900 = vmatpush1.bf16.msra.mxu0 0
        %1901 = vmatprep.subr.bf16.mxu0 0
        %1902 = vmatpush1.bf16.msra.mxu0 0
        %1903 = vmatprep.subr.bf16.mxu0 0
        %1904 = vmatpush1.bf16.msra.mxu0 0
        %1905 = vmatprep.subr.bf16.mxu0 0
        %1906 = vmatpush1.bf16.msra.mxu0 0
        %1907 = vmatprep.subr.bf16.mxu0 0
        %1908 = vmatpush1.bf16.msra.mxu0 0
        %1909 = vmatprep.subr.bf16.mxu0 0
        %1910 = vmatpush1.bf16.msra.mxu0 0
        %1911 = vmatprep.subr.bf16.mxu0 0
        %1912 = vmatpush1.bf16.msra.mxu0 0
        %1913 = vmatprep.subr.bf16.mxu0 0
        %1914 = vmatpush1.bf16.msra.mxu0 0
        %1915 = vmatprep.subr.bf16.mxu0 0
        %1916 = vmatpush1.bf16.msra.mxu0 0
        %1917 = vmatprep.subr.bf16.mxu0 0
        %1918 = vmatpush1.bf16.msra.mxu0 0
        %1919 = vmatprep.mubr.bf16.mxu0 0
        %1920 = vmatmul.mubr.bf16.gmra.mrb[0].mxu0 %v1835
        %v1921 = vpop.f32.mrb[0].mxu0
        %v1922 = vadd.f32 0.0, %v1921
        %v1923 = vpop.f32.mrb[0].mxu0
        %v1924 = vpop.f32.mrb[0].mxu0
        %v1925 = vpop.f32.mrb[0].mxu0
        %1926 = vdwg.mxu0
        %v1927 = vadd.f32 %v1821, %v1881
        %v1928 = vadd.f32 %v1822, %v1883
        %v1929 = vadd.f32 %v1823, %v1922
        %s1930 = scalar_lea.vmem [#allocation11], 16
        %v1931 = vld [vmem:[%s1930] sm:$0xf]
        %1932 = vrot.lane.b32.xlu0 %v1519, 109
        %v1933 = vpop.permute.xlu0 %1932
        %1934 = vrot.lane.b32.xlu0 %v1520, 109
        %v1935 = vpop.permute.xlu0 %1934
        %1936 = vrot.lane.b32.xlu0 %v1521, 109
        %v1937 = vpop.permute.xlu0 %1936
        %v1938 = vsel %vm834, %v1933, %v1935
        %v1939 = vsel %vm834, %v1935, %v1937
        %v1941 = vsel %vm1530, %v1931, 0
        %v1944 = vsel %vm1534, %v1938, 0
        %v1947 = vsel %vm1534, %v1939, 0
        %v1950 = vsel %vm1534, %v1937, 0
        %1952 = vmatprep.subr.bf16.mxu0 %v1947
        %1953 = vmatpush1.bf16.msra.mxu0 %v1944
        %1954 = vmatprep.subr.bf16.mxu0 0
        %1955 = vmatpush1.bf16.msra.mxu0 0
        %1956 = vmatprep.subr.bf16.mxu0 0
        %1957 = vmatpush1.bf16.msra.mxu0 0
        %1958 = vmatprep.subr.bf16.mxu0 0
        %1959 = vmatpush1.bf16.msra.mxu0 0
        %1960 = vmatprep.subr.bf16.mxu0 0
        %1961 = vmatpush1.bf16.msra.mxu0 0
        %1962 = vmatprep.subr.bf16.mxu0 0
        %1963 = vmatpush1.bf16.msra.mxu0 0
        %1964 = vmatprep.subr.bf16.mxu0 0
        %1965 = vmatpush1.bf16.msra.mxu0 0
        %1966 = vmatprep.subr.bf16.mxu0 0
        %1967 = vmatpush1.bf16.msra.mxu0 0
        %1968 = vmatprep.subr.bf16.mxu0 0
        %1969 = vmatpush1.bf16.msra.mxu0 0
        %1970 = vmatprep.subr.bf16.mxu0 0
        %1971 = vmatpush1.bf16.msra.mxu0 0
        %1972 = vmatprep.subr.bf16.mxu0 0
        %1973 = vmatpush1.bf16.msra.mxu0 0
        %1974 = vmatprep.subr.bf16.mxu0 0
        %1975 = vmatpush1.bf16.msra.mxu0 0
        %1976 = vmatprep.subr.bf16.mxu0 0
        %1977 = vmatpush1.bf16.msra.mxu0 0
        %1978 = vmatprep.subr.bf16.mxu0 0
        %1979 = vmatpush1.bf16.msra.mxu0 0
        %1980 = vmatprep.subr.bf16.mxu0 0
        %1981 = vmatpush1.bf16.msra.mxu0 0
        %1982 = vmatprep.subr.bf16.mxu0 0
        %1983 = vmatpush1.bf16.msra.mxu0 0
        %1984 = vmatprep.mubr.bf16.mxu0 0
        %1985 = vmatmul.mubr.bf16.gmra.mrb[0].mxu0 %v1941
        %v1986 = vpop.f32.mrb[0].mxu0
        %v1987 = vadd.f32 0.0, %v1986
        %v1988 = vpop.f32.mrb[0].mxu0
        %v1989 = vadd.f32 0.0, %v1988
        %v1990 = vpop.f32.mrb[0].mxu0
        %v1991 = vpop.f32.mrb[0].mxu0
        %1992 = vdwg.mxu0
        %1993 = vmatprep.subr.bf16.mxu0 0
        %1994 = vmatpush1.bf16.msra.mxu0 %v1950
        %1995 = vmatprep.subr.bf16.mxu0 0
        %1996 = vmatpush1.bf16.msra.mxu0 0
        %1997 = vmatprep.subr.bf16.mxu0 0
        %1998 = vmatpush1.bf16.msra.mxu0 0
        %1999 = vmatprep.subr.bf16.mxu0 0
        %2000 = vmatpush1.bf16.msra.mxu0 0
        %2001 = vmatprep.subr.bf16.mxu0 0
        %2002 = vmatpush1.bf16.msra.mxu0 0
        %2003 = vmatprep.subr.bf16.mxu0 0
        %2004 = vmatpush1.bf16.msra.mxu0 0
        %2005 = vmatprep.subr.bf16.mxu0 0
        %2006 = vmatpush1.bf16.msra.mxu0 0
        %2007 = vmatprep.subr.bf16.mxu0 0
        %2008 = vmatpush1.bf16.msra.mxu0 0
        %2009 = vmatprep.subr.bf16.mxu0 0
        %2010 = vmatpush1.bf16.msra.mxu0 0
        %2011 = vmatprep.subr.bf16.mxu0 0
        %2012 = vmatpush1.bf16.msra.mxu0 0
        %2013 = vmatprep.subr.bf16.mxu0 0
        %2014 = vmatpush1.bf16.msra.mxu0 0
        %2015 = vmatprep.subr.bf16.mxu0 0
        %2016 = vmatpush1.bf16.msra.mxu0 0
        %2017 = vmatprep.subr.bf16.mxu0 0
        %2018 = vmatpush1.bf16.msra.mxu0 0
        %2019 = vmatprep.subr.bf16.mxu0 0
        %2020 = vmatpush1.bf16.msra.mxu0 0
        %2021 = vmatprep.subr.bf16.mxu0 0
        %2022 = vmatpush1.bf16.msra.mxu0 0
        %2023 = vmatprep.subr.bf16.mxu0 0
        %2024 = vmatpush1.bf16.msra.mxu0 0
        %2025 = vmatprep.mubr.bf16.mxu0 0
        %2026 = vmatmul.mubr.bf16.gmra.mrb[0].mxu0 %v1941
        %v2027 = vpop.f32.mrb[0].mxu0
        %v2028 = vadd.f32 0.0, %v2027
        %v2029 = vpop.f32.mrb[0].mxu0
        %v2030 = vpop.f32.mrb[0].mxu0
        %v2031 = vpop.f32.mrb[0].mxu0
        %2032 = vdwg.mxu0
        %v2033 = vadd.f32 %v1927, %v1987
        %v2034 = vadd.f32 %v1928, %v1989
        %v2035 = vadd.f32 %v1929, %v2028
        %s2036 = scalar_lea.vmem [#allocation11], 20
        %v2037 = vld [vmem:[%s2036] sm:$0xf]
        %2038 = vrot.lane.b32.xlu0 %v1519, 108
        %v2039 = vpop.permute.xlu0 %2038
        %2040 = vrot.lane.b32.xlu0 %v1520, 108
        %v2041 = vpop.permute.xlu0 %2040
        %2042 = vrot.lane.b32.xlu0 %v1521, 108
        %v2043 = vpop.permute.xlu0 %2042
        %v2044 = vsel %vm959, %v2039, %v2041
        %v2045 = vsel %vm959, %v2041, %v2043
        %v2047 = vsel %vm1530, %v2037, 0
        %v2050 = vsel %vm1534, %v2044, 0
        %v2053 = vsel %vm1534, %v2045, 0
        %v2056 = vsel %vm1534, %v2043, 0
        %2058 = vmatprep.subr.bf16.mxu0 %v2053
        %2059 = vmatpush1.bf16.msra.mxu0 %v2050
        %2060 = vmatprep.subr.bf16.mxu0 0
        %2061 = vmatpush1.bf16.msra.mxu0 0
        %2062 = vmatprep.subr.bf16.mxu0 0
        %2063 = vmatpush1.bf16.msra.mxu0 0
        %2064 = vmatprep.subr.bf16.mxu0 0
        %2065 = vmatpush1.bf16.msra.mxu0 0
        %2066 = vmatprep.subr.bf16.mxu0 0
        %2067 = vmatpush1.bf16.msra.mxu0 0
        %2068 = vmatprep.subr.bf16.mxu0 0
        %2069 = vmatpush1.bf16.msra.mxu0 0
        %2070 = vmatprep.subr.bf16.mxu0 0
        %2071 = vmatpush1.bf16.msra.mxu0 0
        %2072 = vmatprep.subr.bf16.mxu0 0
        %2073 = vmatpush1.bf16.msra.mxu0 0
        %2074 = vmatprep.subr.bf16.mxu0 0
        %2075 = vmatpush1.bf16.msra.mxu0 0
        %2076 = vmatprep.subr.bf16.mxu0 0
        %2077 = vmatpush1.bf16.msra.mxu0 0
        %2078 = vmatprep.subr.bf16.mxu0 0
        %2079 = vmatpush1.bf16.msra.mxu0 0
        %2080 = vmatprep.subr.bf16.mxu0 0
        %2081 = vmatpush1.bf16.msra.mxu0 0
        %2082 = vmatprep.subr.bf16.mxu0 0
        %2083 = vmatpush1.bf16.msra.mxu0 0
        %2084 = vmatprep.subr.bf16.mxu0 0
        %2085 = vmatpush1.bf16.msra.mxu0 0
        %2086 = vmatprep.subr.bf16.mxu0 0
        %2087 = vmatpush1.bf16.msra.mxu0 0
        %2088 = vmatprep.subr.bf16.mxu0 0
        %2089 = vmatpush1.bf16.msra.mxu0 0
        %2090 = vmatprep.mubr.bf16.mxu0 0
        %2091 = vmatmul.mubr.bf16.gmra.mrb[0].mxu0 %v2047
        %v2092 = vpop.f32.mrb[0].mxu0
        %v2093 = vadd.f32 0.0, %v2092
        %v2094 = vpop.f32.mrb[0].mxu0
        %v2095 = vadd.f32 0.0, %v2094
        %v2096 = vpop.f32.mrb[0].mxu0
        %v2097 = vpop.f32.mrb[0].mxu0
        %2098 = vdwg.mxu0
        %2099 = vmatprep.subr.bf16.mxu0 0
        %2100 = vmatpush1.bf16.msra.mxu0 %v2056
        %2101 = vmatprep.subr.bf16.mxu0 0
        %2102 = vmatpush1.bf16.msra.mxu0 0
        %2103 = vmatprep.subr.bf16.mxu0 0
        %2104 = vmatpush1.bf16.msra.mxu0 0
        %2105 = vmatprep.subr.bf16.mxu0 0
        %2106 = vmatpush1.bf16.msra.mxu0 0
        %2107 = vmatprep.subr.bf16.mxu0 0
        %2108 = vmatpush1.bf16.msra.mxu0 0
        %2109 = vmatprep.subr.bf16.mxu0 0
        %2110 = vmatpush1.bf16.msra.mxu0 0
        %2111 = vmatprep.subr.bf16.mxu0 0
        %2112 = vmatpush1.bf16.msra.mxu0 0
        %2113 = vmatprep.subr.bf16.mxu0 0
        %2114 = vmatpush1.bf16.msra.mxu0 0
        %2115 = vmatprep.subr.bf16.mxu0 0
        %2116 = vmatpush1.bf16.msra.mxu0 0
        %2117 = vmatprep.subr.bf16.mxu0 0
        %2118 = vmatpush1.bf16.msra.mxu0 0
        %2119 = vmatprep.subr.bf16.mxu0 0
        %2120 = vmatpush1.bf16.msra.mxu0 0
        %2121 = vmatprep.subr.bf16.mxu0 0
        %2122 = vmatpush1.bf16.msra.mxu0 0
        %2123 = vmatprep.subr.bf16.mxu0 0
        %2124 = vmatpush1.bf16.msra.mxu0 0
        %2125 = vmatprep.subr.bf16.mxu0 0
        %2126 = vmatpush1.bf16.msra.mxu0 0
        %2127 = vmatprep.subr.bf16.mxu0 0
        %2128 = vmatpush1.bf16.msra.mxu0 0
        %2129 = vmatprep.subr.bf16.mxu0 0
        %2130 = vmatpush1.bf16.msra.mxu0 0
        %2131 = vmatprep.mubr.bf16.mxu0 0
        %2132 = vmatmul.mubr.bf16.gmra.mrb[0].mxu0 %v2047
        %v2133 = vpop.f32.mrb[0].mxu0
        %v2134 = vadd.f32 0.0, %v2133
        %v2135 = vpop.f32.mrb[0].mxu0
        %v2136 = vpop.f32.mrb[0].mxu0
        %v2137 = vpop.f32.mrb[0].mxu0
        %2138 = vdwg.mxu0
        %v2139 = vadd.f32 %v2033, %v2093
        %v2140 = vadd.f32 %v2034, %v2095
        %v2141 = vadd.f32 %v2035, %v2134
        %s2142 = scalar_lea.vmem [#allocation11], 24
        %v2143 = vld [vmem:[%s2142] sm:$0xf]
        %2144 = vrot.lane.b32.xlu0 %v1519, 92
        %v2145 = vpop.permute.xlu0 %2144
        %2146 = vrot.lane.b32.xlu0 %v1520, 92
        %v2147 = vpop.permute.xlu0 %2146
        %2148 = vrot.lane.b32.xlu0 %v1521, 92
        %v2149 = vpop.permute.xlu0 %2148
        %v2150 = vsel %vm1084, %v2145, %v2147
        %v2151 = vsel %vm1084, %v2147, %v2149
        %v2153 = vsel %vm1530, %v2143, 0
        %v2156 = vsel %vm1534, %v2150, 0
        %v2159 = vsel %vm1534, %v2151, 0
        %v2162 = vsel %vm1534, %v2149, 0
        %2164 = vmatprep.subr.bf16.mxu0 %v2159
        %2165 = vmatpush1.bf16.msra.mxu0 %v2156
        %2166 = vmatprep.subr.bf16.mxu0 0
        %2167 = vmatpush1.bf16.msra.mxu0 0
        %2168 = vmatprep.subr.bf16.mxu0 0
        %2169 = vmatpush1.bf16.msra.mxu0 0
        %2170 = vmatprep.subr.bf16.mxu0 0
        %2171 = vmatpush1.bf16.msra.mxu0 0
        %2172 = vmatprep.subr.bf16.mxu0 0
        %2173 = vmatpush1.bf16.msra.mxu0 0
        %2174 = vmatprep.subr.bf16.mxu0 0
        %2175 = vmatpush1.bf16.msra.mxu0 0
        %2176 = vmatprep.subr.bf16.mxu0 0
        %2177 = vmatpush1.bf16.msra.mxu0 0
        %2178 = vmatprep.subr.bf16.mxu0 0
        %2179 = vmatpush1.bf16.msra.mxu0 0
        %2180 = vmatprep.subr.bf16.mxu0 0
        %2181 = vmatpush1.bf16.msra.mxu0 0
        %2182 = vmatprep.subr.bf16.mxu0 0
        %2183 = vmatpush1.bf16.msra.mxu0 0
        %2184 = vmatprep.subr.bf16.mxu0 0
        %2185 = vmatpush1.bf16.msra.mxu0 0
        %2186 = vmatprep.subr.bf16.mxu0 0
        %2187 = vmatpush1.bf16.msra.mxu0 0
        %2188 = vmatprep.subr.bf16.mxu0 0
        %2189 = vmatpush1.bf16.msra.mxu0 0
        %2190 = vmatprep.subr.bf16.mxu0 0
        %2191 = vmatpush1.bf16.msra.mxu0 0
        %2192 = vmatprep.subr.bf16.mxu0 0
        %2193 = vmatpush1.bf16.msra.mxu0 0
        %2194 = vmatprep.subr.bf16.mxu0 0
        %2195 = vmatpush1.bf16.msra.mxu0 0
        %2196 = vmatprep.mubr.bf16.mxu0 0
        %2197 = vmatmul.mubr.bf16.gmra.mrb[0].mxu0 %v2153
        %v2198 = vpop.f32.mrb[0].mxu0
        %v2199 = vadd.f32 0.0, %v2198
        %v2200 = vpop.f32.mrb[0].mxu0
        %v2201 = vadd.f32 0.0, %v2200
        %v2202 = vpop.f32.mrb[0].mxu0
        %v2203 = vpop.f32.mrb[0].mxu0
        %2204 = vdwg.mxu0
        %2205 = vmatprep.subr.bf16.mxu0 0
        %2206 = vmatpush1.bf16.msra.mxu0 %v2162
        %2207 = vmatprep.subr.bf16.mxu0 0
        %2208 = vmatpush1.bf16.msra.mxu0 0
        %2209 = vmatprep.subr.bf16.mxu0 0
        %2210 = vmatpush1.bf16.msra.mxu0 0
        %2211 = vmatprep.subr.bf16.mxu0 0
        %2212 = vmatpush1.bf16.msra.mxu0 0
        %2213 = vmatprep.subr.bf16.mxu0 0
        %2214 = vmatpush1.bf16.msra.mxu0 0
        %2215 = vmatprep.subr.bf16.mxu0 0
        %2216 = vmatpush1.bf16.msra.mxu0 0
        %2217 = vmatprep.subr.bf16.mxu0 0
        %2218 = vmatpush1.bf16.msra.mxu0 0
        %2219 = vmatprep.subr.bf16.mxu0 0
        %2220 = vmatpush1.bf16.msra.mxu0 0
        %2221 = vmatprep.subr.bf16.mxu0 0
        %2222 = vmatpush1.bf16.msra.mxu0 0
        %2223 = vmatprep.subr.bf16.mxu0 0
        %2224 = vmatpush1.bf16.msra.mxu0 0
        %2225 = vmatprep.subr.bf16.mxu0 0
        %2226 = vmatpush1.bf16.msra.mxu0 0
        %2227 = vmatprep.subr.bf16.mxu0 0
        %2228 = vmatpush1.bf16.msra.mxu0 0
        %2229 = vmatprep.subr.bf16.mxu0 0
        %2230 = vmatpush1.bf16.msra.mxu0 0
        %2231 = vmatprep.subr.bf16.mxu0 0
        %2232 = vmatpush1.bf16.msra.mxu0 0
        %2233 = vmatprep.subr.bf16.mxu0 0
        %2234 = vmatpush1.bf16.msra.mxu0 0
        %2235 = vmatprep.subr.bf16.mxu0 0
        %2236 = vmatpush1.bf16.msra.mxu0 0
        %2237 = vmatprep.mubr.bf16.mxu0 0
        %2238 = vmatmul.mubr.bf16.gmra.mrb[0].mxu0 %v2153
        %v2239 = vpop.f32.mrb[0].mxu0
        %v2240 = vadd.f32 0.0, %v2239
        %v2241 = vpop.f32.mrb[0].mxu0
        %v2242 = vpop.f32.mrb[0].mxu0
        %v2243 = vpop.f32.mrb[0].mxu0
        %2244 = vdwg.mxu0
        %v2245 = vadd.f32 %v2139, %v2199
        %v2246 = vadd.f32 %v2140, %v2201
        %v2247 = vadd.f32 %v2141, %v2240
        %s2248 = scalar_lea.vmem [#allocation11], 28
        %v2249 = vld [vmem:[%s2248] sm:$0xf]
        %2250 = vrot.lane.b32.xlu0 %v1519, 91
        %v2251 = vpop.permute.xlu0 %2250
        %2252 = vrot.lane.b32.xlu0 %v1520, 91
        %v2253 = vpop.permute.xlu0 %2252
        %2254 = vrot.lane.b32.xlu0 %v1521, 91
        %v2255 = vpop.permute.xlu0 %2254
        %v2256 = vsel %vm1209, %v2251, %v2253
        %v2257 = vsel %vm1209, %v2253, %v2255
        %v2259 = vsel %vm1530, %v2249, 0
        %v2262 = vsel %vm1534, %v2256, 0
        %v2265 = vsel %vm1534, %v2257, 0
        %v2268 = vsel %vm1534, %v2255, 0
        %2270 = vmatprep.subr.bf16.mxu0 %v2265
        %2271 = vmatpush1.bf16.msra.mxu0 %v2262
        %2272 = vmatprep.subr.bf16.mxu0 0
        %2273 = vmatpush1.bf16.msra.mxu0 0
        %2274 = vmatprep.subr.bf16.mxu0 0
        %2275 = vmatpush1.bf16.msra.mxu0 0
        %2276 = vmatprep.subr.bf16.mxu0 0
        %2277 = vmatpush1.bf16.msra.mxu0 0
        %2278 = vmatprep.subr.bf16.mxu0 0
        %2279 = vmatpush1.bf16.msra.mxu0 0
        %2280 = vmatprep.subr.bf16.mxu0 0
        %2281 = vmatpush1.bf16.msra.mxu0 0
        %2282 = vmatprep.subr.bf16.mxu0 0
        %2283 = vmatpush1.bf16.msra.mxu0 0
        %2284 = vmatprep.subr.bf16.mxu0 0
        %2285 = vmatpush1.bf16.msra.mxu0 0
        %2286 = vmatprep.subr.bf16.mxu0 0
        %2287 = vmatpush1.bf16.msra.mxu0 0
        %2288 = vmatprep.subr.bf16.mxu0 0
        %2289 = vmatpush1.bf16.msra.mxu0 0
        %2290 = vmatprep.subr.bf16.mxu0 0
        %2291 = vmatpush1.bf16.msra.mxu0 0
        %2292 = vmatprep.subr.bf16.mxu0 0
        %2293 = vmatpush1.bf16.msra.mxu0 0
        %2294 = vmatprep.subr.bf16.mxu0 0
        %2295 = vmatpush1.bf16.msra.mxu0 0
        %2296 = vmatprep.subr.bf16.mxu0 0
        %2297 = vmatpush1.bf16.msra.mxu0 0
        %2298 = vmatprep.subr.bf16.mxu0 0
        %2299 = vmatpush1.bf16.msra.mxu0 0
        %2300 = vmatprep.subr.bf16.mxu0 0
        %2301 = vmatpush1.bf16.msra.mxu0 0
        %2302 = vmatprep.mubr.bf16.mxu0 0
        %2303 = vmatmul.mubr.bf16.gmra.mrb[0].mxu0 %v2259
        %v2304 = vpop.f32.mrb[0].mxu0
        %v2305 = vadd.f32 0.0, %v2304
        %v2306 = vpop.f32.mrb[0].mxu0
        %v2307 = vadd.f32 0.0, %v2306
        %v2308 = vpop.f32.mrb[0].mxu0
        %v2309 = vpop.f32.mrb[0].mxu0
        %2310 = vdwg.mxu0
        %2311 = vmatprep.subr.bf16.mxu0 0
        %2312 = vmatpush1.bf16.msra.mxu0 %v2268
        %2313 = vmatprep.subr.bf16.mxu0 0
        %2314 = vmatpush1.bf16.msra.mxu0 0
        %2315 = vmatprep.subr.bf16.mxu0 0
        %2316 = vmatpush1.bf16.msra.mxu0 0
        %2317 = vmatprep.subr.bf16.mxu0 0
        %2318 = vmatpush1.bf16.msra.mxu0 0
        %2319 = vmatprep.subr.bf16.mxu0 0
        %2320 = vmatpush1.bf16.msra.mxu0 0
        %2321 = vmatprep.subr.bf16.mxu0 0
        %2322 = vmatpush1.bf16.msra.mxu0 0
        %2323 = vmatprep.subr.bf16.mxu0 0
        %2324 = vmatpush1.bf16.msra.mxu0 0
        %2325 = vmatprep.subr.bf16.mxu0 0
        %2326 = vmatpush1.bf16.msra.mxu0 0
        %2327 = vmatprep.subr.bf16.mxu0 0
        %2328 = vmatpush1.bf16.msra.mxu0 0
        %2329 = vmatprep.subr.bf16.mxu0 0
        %2330 = vmatpush1.bf16.msra.mxu0 0
        %2331 = vmatprep.subr.bf16.mxu0 0
        %2332 = vmatpush1.bf16.msra.mxu0 0
        %2333 = vmatprep.subr.bf16.mxu0 0
        %2334 = vmatpush1.bf16.msra.mxu0 0
        %2335 = vmatprep.subr.bf16.mxu0 0
        %2336 = vmatpush1.bf16.msra.mxu0 0
        %2337 = vmatprep.subr.bf16.mxu0 0
        %2338 = vmatpush1.bf16.msra.mxu0 0
        %2339 = vmatprep.subr.bf16.mxu0 0
        %2340 = vmatpush1.bf16.msra.mxu0 0
        %2341 = vmatprep.subr.bf16.mxu0 0
        %2342 = vmatpush1.bf16.msra.mxu0 0
        %2343 = vmatprep.mubr.bf16.mxu0 0
        %2344 = vmatmul.mubr.bf16.gmra.mrb[0].mxu0 %v2259
        %v2345 = vpop.f32.mrb[0].mxu0
        %v2346 = vadd.f32 0.0, %v2345
        %v2347 = vpop.f32.mrb[0].mxu0
        %v2348 = vpop.f32.mrb[0].mxu0
        %v2349 = vpop.f32.mrb[0].mxu0
        %2350 = vdwg.mxu0
        %v2351 = vadd.f32 %v2245, %v2305
        %v2352 = vadd.f32 %v2246, %v2307
        %v2353 = vadd.f32 %v2247, %v2346
        %s2354 = scalar_lea.vmem [#allocation11], 32
        %v2355 = vld [vmem:[%s2354] sm:$0xf]
        %2356 = vrot.lane.b32.xlu0 %v1519, 90
        %v2357 = vpop.permute.xlu0 %2356
        %2358 = vrot.lane.b32.xlu0 %v1520, 90
        %v2359 = vpop.permute.xlu0 %2358
        %2360 = vrot.lane.b32.xlu0 %v1521, 90
        %v2361 = vpop.permute.xlu0 %2360
        %v2362 = vsel %vm1334, %v2357, %v2359
        %v2363 = vsel %vm1334, %v2359, %v2361
        %v2365 = vsel %vm1530, %v2355, 0
        %v2368 = vsel %vm1534, %v2362, 0
        %v2371 = vsel %vm1534, %v2363, 0
        %v2374 = vsel %vm1534, %v2361, 0
        %2376 = vmatprep.subr.bf16.mxu0 %v2371
        %2377 = vmatpush1.bf16.msra.mxu0 %v2368
        %2378 = vmatprep.subr.bf16.mxu0 0
        %2379 = vmatpush1.bf16.msra.mxu0 0
        %2380 = vmatprep.subr.bf16.mxu0 0
        %2381 = vmatpush1.bf16.msra.mxu0 0
        %2382 = vmatprep.subr.bf16.mxu0 0
        %2383 = vmatpush1.bf16.msra.mxu0 0
        %2384 = vmatprep.subr.bf16.mxu0 0
        %2385 = vmatpush1.bf16.msra.mxu0 0
        %2386 = vmatprep.subr.bf16.mxu0 0
        %2387 = vmatpush1.bf16.msra.mxu0 0
        %2388 = vmatprep.subr.bf16.mxu0 0
        %2389 = vmatpush1.bf16.msra.mxu0 0
        %2390 = vmatprep.subr.bf16.mxu0 0
        %2391 = vmatpush1.bf16.msra.mxu0 0
        %2392 = vmatprep.subr.bf16.mxu0 0
        %2393 = vmatpush1.bf16.msra.mxu0 0
        %2394 = vmatprep.subr.bf16.mxu0 0
        %2395 = vmatpush1.bf16.msra.mxu0 0
        %2396 = vmatprep.subr.bf16.mxu0 0
        %2397 = vmatpush1.bf16.msra.mxu0 0
        %2398 = vmatprep.subr.bf16.mxu0 0
        %2399 = vmatpush1.bf16.msra.mxu0 0
        %2400 = vmatprep.subr.bf16.mxu0 0
        %2401 = vmatpush1.bf16.msra.mxu0 0
        %2402 = vmatprep.subr.bf16.mxu0 0
        %2403 = vmatpush1.bf16.msra.mxu0 0
        %2404 = vmatprep.subr.bf16.mxu0 0
        %2405 = vmatpush1.bf16.msra.mxu0 0
        %2406 = vmatprep.subr.bf16.mxu0 0
        %2407 = vmatpush1.bf16.msra.mxu0 0
        %2408 = vmatprep.mubr.bf16.mxu0 0
        %2409 = vmatmul.mubr.bf16.gmra.mrb[0].mxu0 %v2365
        %v2410 = vpop.f32.mrb[0].mxu0
        %v2411 = vadd.f32 0.0, %v2410
        %v2412 = vpop.f32.mrb[0].mxu0
        %v2413 = vadd.f32 0.0, %v2412
        %v2414 = vpop.f32.mrb[0].mxu0
        %v2415 = vpop.f32.mrb[0].mxu0
        %2416 = vdwg.mxu0
        %2417 = vmatprep.subr.bf16.mxu0 0
        %2418 = vmatpush1.bf16.msra.mxu0 %v2374
        %2419 = vmatprep.subr.bf16.mxu0 0
        %2420 = vmatpush1.bf16.msra.mxu0 0
        %2421 = vmatprep.subr.bf16.mxu0 0
        %2422 = vmatpush1.bf16.msra.mxu0 0
        %2423 = vmatprep.subr.bf16.mxu0 0
        %2424 = vmatpush1.bf16.msra.mxu0 0
        %2425 = vmatprep.subr.bf16.mxu0 0
        %2426 = vmatpush1.bf16.msra.mxu0 0
        %2427 = vmatprep.subr.bf16.mxu0 0
        %2428 = vmatpush1.bf16.msra.mxu0 0
        %2429 = vmatprep.subr.bf16.mxu0 0
        %2430 = vmatpush1.bf16.msra.mxu0 0
        %2431 = vmatprep.subr.bf16.mxu0 0
        %2432 = vmatpush1.bf16.msra.mxu0 0
        %2433 = vmatprep.subr.bf16.mxu0 0
        %2434 = vmatpush1.bf16.msra.mxu0 0
        %2435 = vmatprep.subr.bf16.mxu0 0
        %2436 = vmatpush1.bf16.msra.mxu0 0
        %2437 = vmatprep.subr.bf16.mxu0 0
        %2438 = vmatpush1.bf16.msra.mxu0 0
        %2439 = vmatprep.subr.bf16.mxu0 0
        %2440 = vmatpush1.bf16.msra.mxu0 0
        %2441 = vmatprep.subr.bf16.mxu0 0
        %2442 = vmatpush1.bf16.msra.mxu0 0
        %2443 = vmatprep.subr.bf16.mxu0 0
        %2444 = vmatpush1.bf16.msra.mxu0 0
        %2445 = vmatprep.subr.bf16.mxu0 0
        %2446 = vmatpush1.bf16.msra.mxu0 0
        %2447 = vmatprep.subr.bf16.mxu0 0
        %2448 = vmatpush1.bf16.msra.mxu0 0
        %2449 = vmatprep.mubr.bf16.mxu0 0
        %2450 = vmatmul.mubr.bf16.gmra.mrb[0].mxu0 %v2365
        %v2451 = vpop.f32.mrb[0].mxu0
        %v2452 = vadd.f32 0.0, %v2451
        %v2453 = vpop.f32.mrb[0].mxu0
        %v2454 = vpop.f32.mrb[0].mxu0
        %v2455 = vpop.f32.mrb[0].mxu0
        %2456 = vdwg.mxu0
        %v2457 = vadd.f32 %v2351, %v2411
        %v2458 = vadd.f32 %v2352, %v2413
        %v2459 = vadd.f32 %v2353, %v2452
        %v2460 = vld [vmem:[#allocation12] sm:$0xff]
        %2462 = vset.pattern.permute.xlu0 0
        %2463 = vperm.xlu0 %2462, %v2460
        %v2464 = vpop.permute.xlu0 %2463
        %v2466 = vadd.f32 %v2457, %v2464
        %v2467 = vadd.f32 %v2458, %v2464
        %v2468 = vadd.f32 %v2459, %v2464
        %vm2469 = vcmp.gt.f32.partialorder %v2466, 0.0
        %vm2470 = vcmp.gt.f32.partialorder %v2467, 0.0
        %vm2471 = vcmp.gt.f32.partialorder %v2468, 0.0
        %v2472 = vmin.f32 %v2466, 0.0
        %v2473 = vmin.f32 %v2467, 0.0
        %v2474 = vmin.f32 %v2468, 0.0
        %v2475 = vmul.f32 %v2472, 1.442695
        %v2476 = vpow.pop %v2475
        %v2477 = vmul.f32 %v2473, 1.442695
        %v2478 = vpow.pop %v2477
        %v2479 = vmul.f32 %v2474, 1.442695
        %v2480 = vpow.pop %v2479
        %v2481 = vsub.f32 %v2476, 1.0
        %v2482 = vsub.f32 %v2478, 1.0
        %v2483 = vsub.f32 %v2480, 1.0
        %v2484 = vsel %vm2469, %v2466, %v2481
        %v2485 = vsel %vm2470, %v2467, %v2482
        %v2486 = vsel %vm2471, %v2468, %v2483
        %v2487 = vmul.f32 %v2484, %v1464
        %v2488 = vmul.f32 %v2485, %v1468
        %v2489 = vmul.f32 %v2486, %v1472
        %2490 = vst [vmem:[%s334] sm:$0xff] 0
        %2491 = vst.msk [vmem:[%s334 + $0x8] sm:$0xf] %vm1480, 0
        %v2492 = vpack.c.bf16 %v2487, %v2487
        %v2493 = vpack.c.bf16 %v2488, %v2488
        %v2494 = vpack.c.bf16 %v2489, %v2489
        %v2498 = vunpack.c.l.b16 %v2492
        %v2499 = vunpack.c.l.b16 %v2493
        %v2500 = vunpack.c.l.b16 %v2494
        %v2501 = vpack.c.b16 %v2499, %v2498
        %v2502 = vpack.c.b16 %v2500, %v2500
        %2503 = vrot.lane.b32.xlu0 %v2501, 19
        %v2504 = vpop.permute.xlu0 %2503
        %2505 = vrot.lane.b32.xlu0 %v2502, 19
        %v2506 = vpop.permute.xlu0 %2505
        %v2507 = vrot.slane %v2504, 4
        %v2508 = vsel %vm1498, %v2507, %v2504
        %v2509 = vsel %vm1498, %v2507, %v2506
        %2512 = vst.msk [vmem:[%s334] sm:$0xff] %vm1505, %v2508
        %2513 = vst.msk [vmem:[%s334 + $0x8] sm:$0xf] %vm1507, %v2509
        %s2514 = sand.u32 %s165, 1
        %s2515 = scalar_lea.sflag [#allocation5], %s2514
        %s2516 = sand.u32 %s165, 1
        %s2517 = smul.addr %s2516, 12
        %s2518 = scalar_lea.vmem [#allocation14], %s2517
        // Predicated region
        $region69: #{distill_model_forward.5} parent=43 // pred_check
          %p2519 = pneg %p175
        $region70: #{distill_model_forward.5} parent=43 // pred_check_branch
          %2521 = sbr.rel (%p2519) target = $region72
        $region71: #{distill_model_forward.5} parent=43 // pred_region
          %s2523 = ssub.s32 192, 192
          %2524 = vsyncadd %s2515, %s2523
          %s2525 = smul.addr %s26, 3
          %s2526 = smul.addr %s2525, 64
          %s2527 = scalar_lea.hbm %s6, %s2526
          %s2529 = sshll.u32 %s2518, 4
          %s2530 = int_to_ptr.vmem [resolvable:$true] %s2529
          %2532 = dma.vmem_to_hbm [thread:$0]  %s2530, 192, %s2527, %s2515
        $region72: #{distill_model_forward.5} parent=43 // pred_fallthru
          _
      $region44: #{distill_model_forward.5} parent=5 // pred_fallthru
        _
      %p2533 = scmp.le.s32.totalorder 2, %s21
      // Predicated region
      $region73: #{distill_model_forward.5} parent=5 // pred_check
        %p2534 = pneg %p2533
      $region74: #{distill_model_forward.5} parent=5 // pred_check_branch
        %2536 = sbr.rel (%p2534) target = $region76
      $region75: #{distill_model_forward.5} parent=5 // pred_region
        %s2537 = ssub.s32 %s21, 2
        // Predicated region
        $region77: #{distill_model_forward.5} parent=75 // pred_check
          %p2538 = pneg %p181
        $region78: #{distill_model_forward.5} parent=75 // pred_check_branch
          %2540 = sbr.rel (%p2538) target = $region80
        $region79: #{distill_model_forward.5} parent=75 // pred_region
          %s2541 = sand.u32 %s166, 1
          %s2542 = scalar_lea.sflag [#allocation5], %s2541
          %s2543 = sand.u32 %s166, 1
          %s2544 = smul.addr %s2543, 12
          %s2545 = scalar_lea.vmem [#allocation14], %s2544
          %2546 = dma.done %s2542, 192
        $region80: #{distill_model_forward.5} parent=75 // pred_fallthru
          _
      $region76: #{distill_model_forward.5} parent=5 // pred_fallthru
        _
    $region6: #{distill_model_forward.5} parent=1 // loop_footer
      %s25 = sadd.s32 1, %s21
    $region7: #{distill_model_forward.5} parent=1 // loop_footer_branch
      %20 = sbr.rel target = $region3
    $region8: #{distill_model_forward.5} parent=1 // loop_exit
      _
    %2547 = vsyncpa [#allocation4], 1
    %s2548 = scalar_lea.sflag [#allocation4], 1
    %2549 = vsyncpa %s2548, 1
    %2550 = vsyncpa [#allocation7], 1
    %2551 = vsyncpa [#allocation10], 1
    %2552 = vsyncpa [#allocation13], 1
    %2553 = vsyncpa [#allocation5], 1
    %s2554 = scalar_lea.sflag [#allocation5], 1
    %2555 = vsyncpa %s2554, 1

// kernel: distill_model_forward.6
$region0: #{distill_model_forward.6}
  #allocation0 [shape = 'u32[]', space=smem, size = 0x4, offset = 0x4, fixed_abs, tag = 'smem constant byte address 0x4 - core index']
  #allocation1 [shape = 'u32[144,128]{1,0:T(1,128)}', space=vmem, size = 0x12000, scoped, tag = 'internal scratch']
  #allocation2 [shape = 'bf16[1,16,100]{2,1,0:T(16,128)(2,1)}', space=vmem, size = 0x1000, scoped, tag = 'scratch operand']
  %s0 = inlined_call_operand.hbm [shape: bf16[2,8,100], index: 0, kind: input, shape index: {}]
  %s1 = inlined_call_operand.hbm [shape: f32[1,78], index: 1, kind: input, shape index: {}]
  %s2 = inlined_call_operand.hbm [shape: bf16[9,16,8], index: 2, kind: input, shape index: {}]
  %s3 = inlined_call_operand.hbm [shape: f32[16,1], index: 3, kind: input, shape index: {}]
  %s4 = inlined_call_operand.hbm [shape: bf16[9,16,16], index: 4, kind: input, shape index: {}]
  %s5 = inlined_call_operand.hbm [shape: f32[16,1], index: 5, kind: input, shape index: {}]
  %s6 = inlined_call_operand.hbm [shape: bf16[2,16,100], index: 6, kind: output, shape index: {}]
  %s7 = sld [smem:[#allocation0]]
  $region81: #{distill_model_forward.6} parent=0
    _
  %s9 = ssub.s32 1, %s7
  %s10 = scalar_select 0, %s9, %s7
  $region1: #{distill_model_forward.6} parent=0
    #allocation3 [shape = 'u8[4096]{0}', space=vmem, size = 0x1000, scoped, tag = 'input window, operand 0']
    #allocation4 [shape = 's32[2]{0}', space=sflag, size = 0x8, scoped, tag = 'scoped memory for distill_model_forward.6']
    #allocation5 [shape = 's32[2]{0}', space=sflag, size = 0x8, scoped, tag = 'scoped memory for distill_model_forward.6']
    #allocation6 [shape = 'u8[512]{0}', space=vmem, size = 0x400, scoped, tag = 'input window, operand 1, single buffered']
    #allocation7 [shape = 's32[1]{0}', space=sflag, size = 0x4, scoped, tag = 'scoped memory for distill_model_forward.6']
    #allocation8 [shape = 'u8[36864]{0}', space=vmem, size = 0x9000, scoped, tag = 'input window, operand 2, single buffered']
    #allocation9 [shape = 'u8[8192]{0}', space=vmem, size = 0x2000, scoped, tag = 'input window, operand 3, single buffered']
    #allocation10 [shape = 's32[1]{0}', space=sflag, size = 0x4, scoped, tag = 'scoped memory for distill_model_forward.6']
    #allocation11 [shape = 'u8[36864]{0}', space=vmem, size = 0x9000, scoped, tag = 'input window, operand 4, single buffered']
    #allocation12 [shape = 'u8[8192]{0}', space=vmem, size = 0x2000, scoped, tag = 'input window, operand 5, single buffered']
    #allocation13 [shape = 's32[1]{0}', space=sflag, size = 0x4, scoped, tag = 'scoped memory for distill_model_forward.6']
    #allocation14 [shape = 'u8[8192]{0}', space=vmem, size = 0x2000, scoped, tag = 'output window, operand 0']
    %11 = vsyncpa [#allocation4], 0
    %s12 = scalar_lea.sflag [#allocation4], 1
    %13 = vsyncpa %s12, 0
    %14 = vsyncpa [#allocation7], 0
    %15 = vsyncpa [#allocation10], 0
    %16 = vsyncpa [#allocation13], 0
    %17 = vsyncpa [#allocation5], 0
    %s18 = scalar_lea.sflag [#allocation5], 1
    %19 = vsyncpa %s18, 0
    loop: start=0, step=1, limit=4
    $region2: #{distill_model_forward.6} parent=1 // loop_pre_header
      _
    $region3: #{distill_model_forward.6} parent=1 // loop_header
      %s21 = sphi 0, %s25
      %p22 = scmp.ge.s32.totalorder %s21, 4
      %s31 = sphi 0, %s33
      %s34 = sphi 0, %s31
      %s35 = sphi 0, %s34
      %s51 = sphi 0, %s35
      %s55 = sphi 0, %s55
      %s57 = sphi 0, %s55
      %s58 = sphi 0, %s57
      %s72 = sphi 0, %s58
      %s76 = sphi 0, %s76
      %s78 = sphi 0, %s76
      %s79 = sphi 0, %s78
      %s93 = sphi 0, %s79
      %s97 = sphi 0, %s97
      %s99 = sphi 0, %s97
      %s100 = sphi 0, %s99
      %s114 = sphi 0, %s100
      %s118 = sphi 0, %s118
      %s120 = sphi 0, %s118
      %s121 = sphi 0, %s120
      %s135 = sphi 0, %s121
      %s139 = sphi 0, %s139
      %s141 = sphi 0, %s139
      %s142 = sphi 0, %s141
      %s156 = sphi 0, %s142
      %s162 = sphi 0, %s164
      %s165 = sphi 0, %s162
      %s166 = sphi 0, %s165
      %s182 = sphi 0, %s166
    $region4: #{distill_model_forward.6} parent=1 // loop_header_branch
      %24 = sbr.rel (%p22) target = $region8
    $region5: #{distill_model_forward.6} parent=1 // loop_body
      %s26 = ssub.s32 %s21, 1
      %s27 = ssub.s32 %s21, 2
      %s28 = sadd.s32 %s21, 1
      %s29 = ssub.s32 %s21, %s28
      %p30 = scmp.eq.s32.totalorder %s29, 0
      %s32 = sadd.s32 %s31, 1
      %s33 = scalar_select %p30, %s31, %s32
      %p36 = pneg %p30
      %p37 = scmp.eq.s32.totalorder %s21, 1
      %p38 = por %p36, %p37
      %p39 = scmp.ne.s32.totalorder %s31, %s34
      %p40 = scmp.eq.s32.totalorder %s21, 0
      %p41 = por %p39, %p40
      %p42 = scmp.ne.s32.totalorder %s31, %s34
      %p43 = scmp.eq.s32.totalorder %s26, 1
      %p44 = por %p42, %p43
      %p45 = scmp.ne.s32.totalorder %s34, %s35
      %p46 = scmp.eq.s32.totalorder %s26, 0
      %p47 = por %p45, %p46
      %p48 = scmp.ne.s32.totalorder %s34, %s35
      %p49 = scmp.eq.s32.totalorder %s27, 1
      %p50 = por %p48, %p49
      %p52 = scmp.ne.s32.totalorder %s35, %s51
      %p53 = scmp.eq.s32.totalorder %s27, 0
      %p54 = por %p52, %p53
      %s56 = sadd.s32 %s55, 1
      %p59 = scmp.eq.s32.totalorder %s21, 1
      %p60 = scmp.ne.s32.totalorder %s55, %s57
      %p61 = scmp.eq.s32.totalorder %s21, 0
      %p62 = por %p60, %p61
      %p63 = scmp.ne.s32.totalorder %s55, %s57
      %p64 = scmp.eq.s32.totalorder %s26, 1
      %p65 = por %p63, %p64
      %p66 = scmp.ne.s32.totalorder %s57, %s58
      %p67 = scmp.eq.s32.totalorder %s26, 0
      %p68 = por %p66, %p67
      %p69 = scmp.ne.s32.totalorder %s57, %s58
      %p70 = scmp.eq.s32.totalorder %s27, 1
      %p71 = por %p69, %p70
      %p73 = scmp.ne.s32.totalorder %s58, %s72
      %p74 = scmp.eq.s32.totalorder %s27, 0
      %p75 = por %p73, %p74
      %s77 = sadd.s32 %s76, 1
      %p80 = scmp.eq.s32.totalorder %s21, 1
      %p81 = scmp.ne.s32.totalorder %s76, %s78
      %p82 = scmp.eq.s32.totalorder %s21, 0
      %p83 = por %p81, %p82
      %p84 = scmp.ne.s32.totalorder %s76, %s78
      %p85 = scmp.eq.s32.totalorder %s26, 1
      %p86 = por %p84, %p85
      %p87 = scmp.ne.s32.totalorder %s78, %s79
      %p88 = scmp.eq.s32.totalorder %s26, 0
      %p89 = por %p87, %p88
      %p90 = scmp.ne.s32.totalorder %s78, %s79
      %p91 = scmp.eq.s32.totalorder %s27, 1
      %p92 = por %p90, %p91
      %p94 = scmp.ne.s32.totalorder %s79, %s93
      %p95 = scmp.eq.s32.totalorder %s27, 0
      %p96 = por %p94, %p95
      %s98 = sadd.s32 %s97, 1
      %p101 = scmp.eq.s32.totalorder %s21, 1
      %p102 = scmp.ne.s32.totalorder %s97, %s99
      %p103 = scmp.eq.s32.totalorder %s21, 0
      %p104 = por %p102, %p103
      %p105 = scmp.ne.s32.totalorder %s97, %s99
      %p106 = scmp.eq.s32.totalorder %s26, 1
      %p107 = por %p105, %p106
      %p108 = scmp.ne.s32.totalorder %s99, %s100
      %p109 = scmp.eq.s32.totalorder %s26, 0
      %p110 = por %p108, %p109
      %p111 = scmp.ne.s32.totalorder %s99, %s100
      %p112 = scmp.eq.s32.totalorder %s27, 1
      %p113 = por %p111, %p112
      %p115 = scmp.ne.s32.totalorder %s100, %s114
      %p116 = scmp.eq.s32.totalorder %s27, 0
      %p117 = por %p115, %p116
      %s119 = sadd.s32 %s118, 1
      %p122 = scmp.eq.s32.totalorder %s21, 1
      %p123 = scmp.ne.s32.totalorder %s118, %s120
      %p124 = scmp.eq.s32.totalorder %s21, 0
      %p125 = por %p123, %p124
      %p126 = scmp.ne.s32.totalorder %s118, %s120
      %p127 = scmp.eq.s32.totalorder %s26, 1
      %p128 = por %p126, %p127
      %p129 = scmp.ne.s32.totalorder %s120, %s121
      %p130 = scmp.eq.s32.totalorder %s26, 0
      %p131 = por %p129, %p130
      %p132 = scmp.ne.s32.totalorder %s120, %s121
      %p133 = scmp.eq.s32.totalorder %s27, 1
      %p134 = por %p132, %p133
      %p136 = scmp.ne.s32.totalorder %s121, %s135
      %p137 = scmp.eq.s32.totalorder %s27, 0
      %p138 = por %p136, %p137
      %s140 = sadd.s32 %s139, 1
      %p143 = scmp.eq.s32.totalorder %s21, 1
      %p144 = scmp.ne.s32.totalorder %s139, %s141
      %p145 = scmp.eq.s32.totalorder %s21, 0
      %p146 = por %p144, %p145
      %p147 = scmp.ne.s32.totalorder %s139, %s141
      %p148 = scmp.eq.s32.totalorder %s26, 1
      %p149 = por %p147, %p148
      %p150 = scmp.ne.s32.totalorder %s141, %s142
      %p151 = scmp.eq.s32.totalorder %s26, 0
      %p152 = por %p150, %p151
      %p153 = scmp.ne.s32.totalorder %s141, %s142
      %p154 = scmp.eq.s32.totalorder %s27, 1
      %p155 = por %p153, %p154
      %p157 = scmp.ne.s32.totalorder %s142, %s156
      %p158 = scmp.eq.s32.totalorder %s27, 0
      %p159 = por %p157, %p158
      %s160 = ssub.s32 %s21, %s28
      %p161 = scmp.eq.s32.totalorder %s160, 0
      %s163 = sadd.s32 %s162, 1
      %s164 = scalar_select %p161, %s162, %s163
      %p167 = pneg %p161
      %p168 = scmp.eq.s32.totalorder %s21, 1
      %p169 = por %p167, %p168
      %p170 = scmp.ne.s32.totalorder %s162, %s165
      %p171 = scmp.eq.s32.totalorder %s21, 0
      %p172 = por %p170, %p171
      %p173 = scmp.ne.s32.totalorder %s162, %s165
      %p174 = scmp.eq.s32.totalorder %s26, 1
      %p175 = por %p173, %p174
      %p176 = scmp.ne.s32.totalorder %s165, %s166
      %p177 = scmp.eq.s32.totalorder %s26, 0
      %p178 = por %p176, %p177
      %p179 = scmp.ne.s32.totalorder %s165, %s166
      %p180 = scmp.eq.s32.totalorder %s27, 1
      %p181 = por %p179, %p180
      %p183 = scmp.ne.s32.totalorder %s166, %s182
      %p184 = scmp.eq.s32.totalorder %s27, 0
      %p185 = por %p183, %p184
      %p186 = scmp.le.s32.totalorder 1, %s21
      %p187 = scmp.lt.s32.totalorder %s21, 3
      %p188 = pnand %p186, %p187
      %p189 = pneg %p188
      // Predicated region
      $region9: #{distill_model_forward.6} parent=5 // pred_check
        _
      $region10: #{distill_model_forward.6} parent=5 // pred_check_branch
        %191 = sbr.rel (%p188) target = $region12
      $region11: #{distill_model_forward.6} parent=5 // pred_region
        %s192 = ssub.s32 %s21, 1
        // Predicated region
        $region13: #{distill_model_forward.6} parent=11 // pred_check
          %p193 = pneg %p68
        $region14: #{distill_model_forward.6} parent=11 // pred_check_branch
          %195 = sbr.rel (%p193) target = $region16
        $region15: #{distill_model_forward.6} parent=11 // pred_region
          %s197 = ssub.s32 16, 16
          %198 = vsyncadd [#allocation7], %s197
          %s200 = sshll.u32 [#allocation6], 4
          %s201 = int_to_ptr.vmem [resolvable:$true] %s200
          %203 = dma.hbm_to_vmem [thread:$0]  %s1, 16, %s201, [#allocation7]
        $region16: #{distill_model_forward.6} parent=11 // pred_fallthru
          _
        // Predicated region
        $region17: #{distill_model_forward.6} parent=11 // pred_check
          %p204 = pneg %p89
        $region18: #{distill_model_forward.6} parent=11 // pred_check_branch
          %206 = sbr.rel (%p204) target = $region20
        $region19: #{distill_model_forward.6} parent=11 // pred_region
          %s208 = ssub.s32 1152, 1152
          %209 = vsyncadd [#allocation7], %s208
          %s210 = sshll.u32 [#allocation8], 4
          %s211 = int_to_ptr.vmem [resolvable:$true] %s210
          %216 = dma.hbm_to_vmem [thread:$0]  %s2, 1152, %s211, [#allocation7], 64, 64, 4
        $region20: #{distill_model_forward.6} parent=11 // pred_fallthru
          _
        // Predicated region
        $region21: #{distill_model_forward.6} parent=11 // pred_check
          %p217 = pneg %p110
        $region22: #{distill_model_forward.6} parent=11 // pred_check_branch
          %219 = sbr.rel (%p217) target = $region24
        $region23: #{distill_model_forward.6} parent=11 // pred_region
          %s221 = ssub.s32 256, 256
          %222 = vsyncadd [#allocation10], %s221
          %s223 = sshll.u32 [#allocation9], 4
          %s224 = int_to_ptr.vmem [resolvable:$true] %s223
          %229 = dma.hbm_to_vmem [thread:$0]  %s3, 256, %s224, [#allocation10], 128, 128, 8
        $region24: #{distill_model_forward.6} parent=11 // pred_fallthru
          _
        // Predicated region
        $region25: #{distill_model_forward.6} parent=11 // pred_check
          %p230 = pneg %p131
        $region26: #{distill_model_forward.6} parent=11 // pred_check_branch
          %232 = sbr.rel (%p230) target = $region28
        $region27: #{distill_model_forward.6} parent=11 // pred_region
          %s234 = ssub.s32 1152, 1152
          %235 = vsyncadd [#allocation10], %s234
          %s236 = sshll.u32 [#allocation11], 4
          %s237 = int_to_ptr.vmem [resolvable:$true] %s236
          %242 = dma.hbm_to_vmem [thread:$0]  %s4, 1152, %s237, [#allocation10], 64, 64, 4
        $region28: #{distill_model_forward.6} parent=11 // pred_fallthru
          _
        // Predicated region
        $region29: #{distill_model_forward.6} parent=11 // pred_check
          %p243 = pneg %p152
        $region30: #{distill_model_forward.6} parent=11 // pred_check_branch
          %245 = sbr.rel (%p243) target = $region32
        $region31: #{distill_model_forward.6} parent=11 // pred_region
          %s247 = ssub.s32 256, 256
          %248 = vsyncadd [#allocation13], %s247
          %s249 = sshll.u32 [#allocation12], 4
          %s250 = int_to_ptr.vmem [resolvable:$true] %s249
          %255 = dma.hbm_to_vmem [thread:$0]  %s5, 256, %s250, [#allocation13], 128, 128, 8
        $region32: #{distill_model_forward.6} parent=11 // pred_fallthru
          _
      $region12: #{distill_model_forward.6} parent=5 // pred_fallthru
        _
      %p256 = scmp.lt.s32.totalorder %s21, 2
      // Predicated region
      $region33: #{distill_model_forward.6} parent=5 // pred_check
        %p257 = pneg %p256
      $region34: #{distill_model_forward.6} parent=5 // pred_check_branch
        %259 = sbr.rel (%p257) target = $region36
      $region35: #{distill_model_forward.6} parent=5 // pred_region
        // Predicated region
        $region37: #{distill_model_forward.6} parent=35 // pred_check
          %p260 = pneg %p41
        $region38: #{distill_model_forward.6} parent=35 // pred_check_branch
          %262 = sbr.rel (%p260) target = $region40
        $region39: #{distill_model_forward.6} parent=35 // pred_region
          %s263 = sand.u32 %s31, 1
          %s264 = scalar_lea.sflag [#allocation4], %s263
          %s265 = sand.u32 %s31, 1
          %s266 = smul.addr %s265, 4
          %s267 = scalar_lea.vmem [#allocation3], %s266
          %s269 = ssub.s32 64, 64
          %270 = vsyncadd %s264, %s269
          %s271 = smul.addr %s21, 64
          %s272 = scalar_lea.hbm %s0, %s271
          %s274 = sshll.u32 %s267, 4
          %s275 = int_to_ptr.vmem [resolvable:$true] %s274
          %277 = dma.hbm_to_vmem [thread:$0]  %s272, 64, %s275, %s264
        $region40: #{distill_model_forward.6} parent=35 // pred_fallthru
          _
      $region36: #{distill_model_forward.6} parent=5 // pred_fallthru
        _
      %p278 = scmp.le.s32.totalorder 1, %s21
      %p279 = scmp.lt.s32.totalorder %s21, 3
      %p280 = pnand %p278, %p279
      %p281 = pneg %p280
      // Predicated region
      $region41: #{distill_model_forward.6} parent=5 // pred_check
        _
      $region42: #{distill_model_forward.6} parent=5 // pred_check_branch
        %283 = sbr.rel (%p280) target = $region44
      $region43: #{distill_model_forward.6} parent=5 // pred_region
        %s284 = ssub.s32 %s21, 1
        %s285 = sand.u32 %s34, 1
        %s286 = scalar_lea.sflag [#allocation4], %s285
        %s287 = sand.u32 %s34, 1
        %s288 = smul.addr %s287, 4
        %s289 = scalar_lea.vmem [#allocation3], %s288
        // Predicated region
        $region45: #{distill_model_forward.6} parent=43 // pred_check
          %p290 = pneg %p47
        $region46: #{distill_model_forward.6} parent=43 // pred_check_branch
          %292 = sbr.rel (%p290) target = $region48
        $region47: #{distill_model_forward.6} parent=43 // pred_region
          %293 = dma.done %s286, 64
        $region48: #{distill_model_forward.6} parent=43 // pred_fallthru
          _
        // Predicated region
        $region49: #{distill_model_forward.6} parent=43 // pred_check
          %p294 = pneg %p68
        $region50: #{distill_model_forward.6} parent=43 // pred_check_branch
          %296 = sbr.rel (%p294) target = $region52
        $region51: #{distill_model_forward.6} parent=43 // pred_region
          %297 = dma.done [#allocation7], 16
        $region52: #{distill_model_forward.6} parent=43 // pred_fallthru
          _
        // Predicated region
        $region53: #{distill_model_forward.6} parent=43 // pred_check
          %p298 = pneg %p89
        $region54: #{distill_model_forward.6} parent=43 // pred_check_branch
          %300 = sbr.rel (%p298) target = $region56
        $region55: #{distill_model_forward.6} parent=43 // pred_region
          %301 = dma.done [#allocation7], 1152
        $region56: #{distill_model_forward.6} parent=43 // pred_fallthru
          _
        // Predicated region
        $region57: #{distill_model_forward.6} parent=43 // pred_check
          %p302 = pneg %p110
        $region58: #{distill_model_forward.6} parent=43 // pred_check_branch
          %304 = sbr.rel (%p302) target = $region60
        $region59: #{distill_model_forward.6} parent=43 // pred_region
          %305 = dma.done [#allocation10], 256
        $region60: #{distill_model_forward.6} parent=43 // pred_fallthru
          _
        // Predicated region
        $region61: #{distill_model_forward.6} parent=43 // pred_check
          %p306 = pneg %p131
        $region62: #{distill_model_forward.6} parent=43 // pred_check_branch
          %308 = sbr.rel (%p306) target = $region64
        $region63: #{distill_model_forward.6} parent=43 // pred_region
          %309 = dma.done [#allocation10], 1152
        $region64: #{distill_model_forward.6} parent=43 // pred_fallthru
          _
        // Predicated region
        $region65: #{distill_model_forward.6} parent=43 // pred_check
          %p310 = pneg %p152
        $region66: #{distill_model_forward.6} parent=43 // pred_check_branch
          %312 = sbr.rel (%p310) target = $region68
        $region67: #{distill_model_forward.6} parent=43 // pred_region
          %313 = dma.done [#allocation13], 256
        $region68: #{distill_model_forward.6} parent=43 // pred_fallthru
          _
        %s314 = sand.u32 %s34, 1
        %s315 = scalar_lea.sflag [#allocation4], %s314
        %s316 = sand.u32 %s34, 1
        %s317 = smul.addr %s316, 4
        %s318 = scalar_lea.vmem [#allocation3], %s317
        %p319 = pneg %p47
        %p320 = pneg %p44
        %p321 = pneg %p68
        %p322 = pneg %p65
        %p323 = pneg %p89
        %p324 = pneg %p86
        %p325 = pneg %p110
        %p326 = pneg %p107
        %p327 = pneg %p131
        %p328 = pneg %p128
        %p329 = pneg %p152
        %p330 = pneg %p149
        %p331 = pneg %p178
        %p332 = pneg %p175
        %s333 = sand.u32 %s165, 1
        %s334 = scalar_lea.sflag [#allocation5], %s333
        %s335 = sand.u32 %s165, 1
        %s336 = smul.addr %s335, 8
        %s337 = scalar_lea.vmem [#allocation14], %s336
        %v339 = vld [vmem:[#allocation6] sm:$0x1]
        %v340 = vld [vmem:[%s289] sm:$0xf]
        %v341 = vld [vmem:[#allocation8] sm:$0xf]
        %v342 = vld [vmem:[#allocation8 + $0x4] sm:$0xf]
        %s343 = scalar_lea.vmem [#allocation8], 8
        %v344 = vld [vmem:[%s343] sm:$0xf]
        %v345 = vld [vmem:[%s343 + $0x4] sm:$0xf]
        %v348 = vunpack.c.l.b16 %v344
        %v349 = vunpack.c.l.b16 %v345
        %v350 = vpack.c.b16 %v349, %v348
        %v352 = vunpack.c.l.b16 %v340
        %v353 = vpack.c.b16 %v352, %v352
        %354 = vrot.lane.b32.xlu0 %v353, 127
        %v355 = vpop.permute.xlu0 %354
        %vm356 = vcmask 64512
        %v358 = vsel %vm356, %v350, 0
        %vm360 = vcmask 1043456
        %v362 = vsel %vm360, %v355, 0
        %364 = vmatprep.subr.bf16.mxu0 0
        %365 = vmatpush1.bf16.msra.mxu0 %v362
        %366 = vmatprep.subr.bf16.mxu0 0
        %367 = vmatpush1.bf16.msra.mxu0 0
        %368 = vmatprep.subr.bf16.mxu0 0
        %369 = vmatpush1.bf16.msra.mxu0 0
        %370 = vmatprep.subr.bf16.mxu0 0
        %371 = vmatpush1.bf16.msra.mxu0 0
        %372 = vmatprep.subr.bf16.mxu0 0
        %373 = vmatpush1.bf16.msra.mxu0 0
        %374 = vmatprep.subr.bf16.mxu0 0
        %375 = vmatpush1.bf16.msra.mxu0 0
        %376 = vmatprep.subr.bf16.mxu0 0
        %377 = vmatpush1.bf16.msra.mxu0 0
        %378 = vmatprep.subr.bf16.mxu0 0
        %379 = vmatpush1.bf16.msra.mxu0 0
        %380 = vmatprep.subr.bf16.mxu0 0
        %381 = vmatpush1.bf16.msra.mxu0 0
        %382 = vmatprep.subr.bf16.mxu0 0
        %383 = vmatpush1.bf16.msra.mxu0 0
        %384 = vmatprep.subr.bf16.mxu0 0
        %385 = vmatpush1.bf16.msra.mxu0 0
        %386 = vmatprep.subr.bf16.mxu0 0
        %387 = vmatpush1.bf16.msra.mxu0 0
        %388 = vmatprep.subr.bf16.mxu0 0
        %389 = vmatpush1.bf16.msra.mxu0 0
        %390 = vmatprep.subr.bf16.mxu0 0
        %391 = vmatpush1.bf16.msra.mxu0 0
        %392 = vmatprep.subr.bf16.mxu0 0
        %393 = vmatpush1.bf16.msra.mxu0 0
        %394 = vmatprep.subr.bf16.mxu0 0
        %395 = vmatpush1.bf16.msra.mxu0 0
        %396 = vmatprep.mubr.bf16.mxu0 0
        %397 = vmatmul.mubr.bf16.gmra.mrb[0].mxu0 %v358
        %v398 = vpop.f32.mrb[0].mxu0
        %v399 = vadd.f32 0.0, %v398
        %v400 = vpop.f32.mrb[0].mxu0
        %v401 = vpop.f32.mrb[0].mxu0
        %v402 = vadd.f32 0.0, %v401
        %v403 = vpop.f32.mrb[0].mxu0
        %404 = vdwg.mxu0
        %v407 = vunpack.c.l.b16 %v341
        %v408 = vunpack.c.l.b16 %v342
        %v409 = vpack.c.b16 %v408, %v407
        %v411 = vsel %vm356, %v409, 0
        %v414 = vsel %vm360, %v340, 0
        %416 = vmatprep.subr.bf16.mxu0 0
        %417 = vmatpush1.bf16.msra.mxu0 %v414
        %418 = vmatprep.subr.bf16.mxu0 0
        %419 = vmatpush1.bf16.msra.mxu0 0
        %420 = vmatprep.subr.bf16.mxu0 0
        %421 = vmatpush1.bf16.msra.mxu0 0
        %422 = vmatprep.subr.bf16.mxu0 0
        %423 = vmatpush1.bf16.msra.mxu0 0
        %424 = vmatprep.subr.bf16.mxu0 0
        %425 = vmatpush1.bf16.msra.mxu0 0
        %426 = vmatprep.subr.bf16.mxu0 0
        %427 = vmatpush1.bf16.msra.mxu0 0
        %428 = vmatprep.subr.bf16.mxu0 0
        %429 = vmatpush1.bf16.msra.mxu0 0
        %430 = vmatprep.subr.bf16.mxu0 0
        %431 = vmatpush1.bf16.msra.mxu0 0
        %432 = vmatprep.subr.bf16.mxu0 0
        %433 = vmatpush1.bf16.msra.mxu0 0
        %434 = vmatprep.subr.bf16.mxu0 0
        %435 = vmatpush1.bf16.msra.mxu0 0
        %436 = vmatprep.subr.bf16.mxu0 0
        %437 = vmatpush1.bf16.msra.mxu0 0
        %438 = vmatprep.subr.bf16.mxu0 0
        %439 = vmatpush1.bf16.msra.mxu0 0
        %440 = vmatprep.subr.bf16.mxu0 0
        %441 = vmatpush1.bf16.msra.mxu0 0
        %442 = vmatprep.subr.bf16.mxu0 0
        %443 = vmatpush1.bf16.msra.mxu0 0
        %444 = vmatprep.subr.bf16.mxu0 0
        %445 = vmatpush1.bf16.msra.mxu0 0
        %446 = vmatprep.subr.bf16.mxu0 0
        %447 = vmatpush1.bf16.msra.mxu0 0
        %448 = vmatprep.mubr.bf16.mxu0 0
        %449 = vmatmul.mubr.bf16.gmra.mrb[0].mxu0 %v411
        %v450 = vpop.f32.mrb[0].mxu0
        %v451 = vadd.f32 %v399, %v450
        %v452 = vpop.f32.mrb[0].mxu0
        %v453 = vpop.f32.mrb[0].mxu0
        %v454 = vadd.f32 %v402, %v453
        %v455 = vpop.f32.mrb[0].mxu0
        %456 = vdwg.mxu0
        %s457 = scalar_lea.vmem [#allocation8], 16
        %v458 = vld [vmem:[%s457] sm:$0xf]
        %v459 = vld [vmem:[%s457 + $0x4] sm:$0xf]
        %v462 = vunpack.c.l.b16 %v458
        %v463 = vunpack.c.l.b16 %v459
        %v464 = vpack.c.b16 %v463, %v462
        %465 = vrot.lane.b32.xlu0 %v353, 126
        %v466 = vpop.permute.xlu0 %465
        %v468 = vsel %vm356, %v464, 0
        %v471 = vsel %vm360, %v466, 0
        %473 = vmatprep.subr.bf16.mxu0 0
        %474 = vmatpush1.bf16.msra.mxu0 %v471
        %475 = vmatprep.subr.bf16.mxu0 0
        %476 = vmatpush1.bf16.msra.mxu0 0
        %477 = vmatprep.subr.bf16.mxu0 0
        %478 = vmatpush1.bf16.msra.mxu0 0
        %479 = vmatprep.subr.bf16.mxu0 0
        %480 = vmatpush1.bf16.msra.mxu0 0
        %481 = vmatprep.subr.bf16.mxu0 0
        %482 = vmatpush1.bf16.msra.mxu0 0
        %483 = vmatprep.subr.bf16.mxu0 0
        %484 = vmatpush1.bf16.msra.mxu0 0
        %485 = vmatprep.subr.bf16.mxu0 0
        %486 = vmatpush1.bf16.msra.mxu0 0
        %487 = vmatprep.subr.bf16.mxu0 0
        %488 = vmatpush1.bf16.msra.mxu0 0
        %489 = vmatprep.subr.bf16.mxu0 0
        %490 = vmatpush1.bf16.msra.mxu0 0
        %491 = vmatprep.subr.bf16.mxu0 0
        %492 = vmatpush1.bf16.msra.mxu0 0
        %493 = vmatprep.subr.bf16.mxu0 0
        %494 = vmatpush1.bf16.msra.mxu0 0
        %495 = vmatprep.subr.bf16.mxu0 0
        %496 = vmatpush1.bf16.msra.mxu0 0
        %497 = vmatprep.subr.bf16.mxu0 0
        %498 = vmatpush1.bf16.msra.mxu0 0
        %499 = vmatprep.subr.bf16.mxu0 0
        %500 = vmatpush1.bf16.msra.mxu0 0
        %501 = vmatprep.subr.bf16.mxu0 0
        %502 = vmatpush1.bf16.msra.mxu0 0
        %503 = vmatprep.subr.bf16.mxu0 0
        %504 = vmatpush1.bf16.msra.mxu0 0
        %505 = vmatprep.mubr.bf16.mxu0 0
        %506 = vmatmul.mubr.bf16.gmra.mrb[0].mxu0 %v468
        %v507 = vpop.f32.mrb[0].mxu0
        %v508 = vadd.f32 0.0, %v507
        %v509 = vpop.f32.mrb[0].mxu0
        %v510 = vpop.f32.mrb[0].mxu0
        %v511 = vadd.f32 0.0, %v510
        %v512 = vpop.f32.mrb[0].mxu0
        %513 = vdwg.mxu0
        %v514 = vadd.f32 %v451, %v508
        %v515 = vadd.f32 %v454, %v511
        %s516 = scalar_lea.vmem [#allocation8], 24
        %v517 = vld [vmem:[%s516] sm:$0xf]
        %v518 = vld [vmem:[%s516 + $0x4] sm:$0xf]
        %v521 = vunpack.c.l.b16 %v517
        %v522 = vunpack.c.l.b16 %v518
        %v523 = vpack.c.b16 %v522, %v521
        %524 = vrot.lane.b32.xlu0 %v353, 118
        %v525 = vpop.permute.xlu0 %524
        %v527 = vsel %vm356, %v523, 0
        %v530 = vsel %vm360, %v525, 0
        %532 = vmatprep.subr.bf16.mxu0 0
        %533 = vmatpush1.bf16.msra.mxu0 %v530
        %534 = vmatprep.subr.bf16.mxu0 0
        %535 = vmatpush1.bf16.msra.mxu0 0
        %536 = vmatprep.subr.bf16.mxu0 0
        %537 = vmatpush1.bf16.msra.mxu0 0
        %538 = vmatprep.subr.bf16.mxu0 0
        %539 = vmatpush1.bf16.msra.mxu0 0
        %540 = vmatprep.subr.bf16.mxu0 0
        %541 = vmatpush1.bf16.msra.mxu0 0
        %542 = vmatprep.subr.bf16.mxu0 0
        %543 = vmatpush1.bf16.msra.mxu0 0
        %544 = vmatprep.subr.bf16.mxu0 0
        %545 = vmatpush1.bf16.msra.mxu0 0
        %546 = vmatprep.subr.bf16.mxu0 0
        %547 = vmatpush1.bf16.msra.mxu0 0
        %548 = vmatprep.subr.bf16.mxu0 0
        %549 = vmatpush1.bf16.msra.mxu0 0
        %550 = vmatprep.subr.bf16.mxu0 0
        %551 = vmatpush1.bf16.msra.mxu0 0
        %552 = vmatprep.subr.bf16.mxu0 0
        %553 = vmatpush1.bf16.msra.mxu0 0
        %554 = vmatprep.subr.bf16.mxu0 0
        %555 = vmatpush1.bf16.msra.mxu0 0
        %556 = vmatprep.subr.bf16.mxu0 0
        %557 = vmatpush1.bf16.msra.mxu0 0
        %558 = vmatprep.subr.bf16.mxu0 0
        %559 = vmatpush1.bf16.msra.mxu0 0
        %560 = vmatprep.subr.bf16.mxu0 0
        %561 = vmatpush1.bf16.msra.mxu0 0
        %562 = vmatprep.subr.bf16.mxu0 0
        %563 = vmatpush1.bf16.msra.mxu0 0
        %564 = vmatprep.mubr.bf16.mxu0 0
        %565 = vmatmul.mubr.bf16.gmra.mrb[0].mxu0 %v527
        %v566 = vpop.f32.mrb[0].mxu0
        %v567 = vadd.f32 0.0, %v566
        %v568 = vpop.f32.mrb[0].mxu0
        %v569 = vpop.f32.mrb[0].mxu0
        %v570 = vadd.f32 0.0, %v569
        %v571 = vpop.f32.mrb[0].mxu0
        %572 = vdwg.mxu0
        %v573 = vadd.f32 %v514, %v567
        %v574 = vadd.f32 %v515, %v570
        %s575 = scalar_lea.vmem [#allocation8], 32
        %v576 = vld [vmem:[%s575] sm:$0xf]
        %v577 = vld [vmem:[%s575 + $0x4] sm:$0xf]
        %v580 = vunpack.c.l.b16 %v576
        %v581 = vunpack.c.l.b16 %v577
        %v582 = vpack.c.b16 %v581, %v580
        %583 = vrot.lane.b32.xlu0 %v353, 117
        %v584 = vpop.permute.xlu0 %583
        %v586 = vsel %vm356, %v582, 0
        %v589 = vsel %vm360, %v584, 0
        %591 = vmatprep.subr.bf16.mxu0 0
        %592 = vmatpush1.bf16.msra.mxu0 %v589
        %593 = vmatprep.subr.bf16.mxu0 0
        %594 = vmatpush1.bf16.msra.mxu0 0
        %595 = vmatprep.subr.bf16.mxu0 0
        %596 = vmatpush1.bf16.msra.mxu0 0
        %597 = vmatprep.subr.bf16.mxu0 0
        %598 = vmatpush1.bf16.msra.mxu0 0
        %599 = vmatprep.subr.bf16.mxu0 0
        %600 = vmatpush1.bf16.msra.mxu0 0
        %601 = vmatprep.subr.bf16.mxu0 0
        %602 = vmatpush1.bf16.msra.mxu0 0
        %603 = vmatprep.subr.bf16.mxu0 0
        %604 = vmatpush1.bf16.msra.mxu0 0
        %605 = vmatprep.subr.bf16.mxu0 0
        %606 = vmatpush1.bf16.msra.mxu0 0
        %607 = vmatprep.subr.bf16.mxu0 0
        %608 = vmatpush1.bf16.msra.mxu0 0
        %609 = vmatprep.subr.bf16.mxu0 0
        %610 = vmatpush1.bf16.msra.mxu0 0
        %611 = vmatprep.subr.bf16.mxu0 0
        %612 = vmatpush1.bf16.msra.mxu0 0
        %613 = vmatprep.subr.bf16.mxu0 0
        %614 = vmatpush1.bf16.msra.mxu0 0
        %615 = vmatprep.subr.bf16.mxu0 0
        %616 = vmatpush1.bf16.msra.mxu0 0
        %617 = vmatprep.subr.bf16.mxu0 0
        %618 = vmatpush1.bf16.msra.mxu0 0
        %619 = vmatprep.subr.bf16.mxu0 0
        %620 = vmatpush1.bf16.msra.mxu0 0
        %621 = vmatprep.subr.bf16.mxu0 0
        %622 = vmatpush1.bf16.msra.mxu0 0
        %623 = vmatprep.mubr.bf16.mxu0 0
        %624 = vmatmul.mubr.bf16.gmra.mrb[0].mxu0 %v586
        %v625 = vpop.f32.mrb[0].mxu0
        %v626 = vadd.f32 0.0, %v625
        %v627 = vpop.f32.mrb[0].mxu0
        %v628 = vpop.f32.mrb[0].mxu0
        %v629 = vadd.f32 0.0, %v628
        %v630 = vpop.f32.mrb[0].mxu0
        %631 = vdwg.mxu0
        %v632 = vadd.f32 %v573, %v626
        %v633 = vadd.f32 %v574, %v629
        %s634 = scalar_lea.vmem [#allocation8], 40
        %v635 = vld [vmem:[%s634] sm:$0xf]
        %v636 = vld [vmem:[%s634 + $0x4] sm:$0xf]
        %v639 = vunpack.c.l.b16 %v635
        %v640 = vunpack.c.l.b16 %v636
        %v641 = vpack.c.b16 %v640, %v639
        %642 = vrot.lane.b32.xlu0 %v353, 116
        %v643 = vpop.permute.xlu0 %642
        %v645 = vsel %vm356, %v641, 0
        %v648 = vsel %vm360, %v643, 0
        %650 = vmatprep.subr.bf16.mxu0 0
        %651 = vmatpush1.bf16.msra.mxu0 %v648
        %652 = vmatprep.subr.bf16.mxu0 0
        %653 = vmatpush1.bf16.msra.mxu0 0
        %654 = vmatprep.subr.bf16.mxu0 0
        %655 = vmatpush1.bf16.msra.mxu0 0
        %656 = vmatprep.subr.bf16.mxu0 0
        %657 = vmatpush1.bf16.msra.mxu0 0
        %658 = vmatprep.subr.bf16.mxu0 0
        %659 = vmatpush1.bf16.msra.mxu0 0
        %660 = vmatprep.subr.bf16.mxu0 0
        %661 = vmatpush1.bf16.msra.mxu0 0
        %662 = vmatprep.subr.bf16.mxu0 0
        %663 = vmatpush1.bf16.msra.mxu0 0
        %664 = vmatprep.subr.bf16.mxu0 0
        %665 = vmatpush1.bf16.msra.mxu0 0
        %666 = vmatprep.subr.bf16.mxu0 0
        %667 = vmatpush1.bf16.msra.mxu0 0
        %668 = vmatprep.subr.bf16.mxu0 0
        %669 = vmatpush1.bf16.msra.mxu0 0
        %670 = vmatprep.subr.bf16.mxu0 0
        %671 = vmatpush1.bf16.msra.mxu0 0
        %672 = vmatprep.subr.bf16.mxu0 0
        %673 = vmatpush1.bf16.msra.mxu0 0
        %674 = vmatprep.subr.bf16.mxu0 0
        %675 = vmatpush1.bf16.msra.mxu0 0
        %676 = vmatprep.subr.bf16.mxu0 0
        %677 = vmatpush1.bf16.msra.mxu0 0
        %678 = vmatprep.subr.bf16.mxu0 0
        %679 = vmatpush1.bf16.msra.mxu0 0
        %680 = vmatprep.subr.bf16.mxu0 0
        %681 = vmatpush1.bf16.msra.mxu0 0
        %682 = vmatprep.mubr.bf16.mxu0 0
        %683 = vmatmul.mubr.bf16.gmra.mrb[0].mxu0 %v645
        %v684 = vpop.f32.mrb[0].mxu0
        %v685 = vadd.f32 0.0, %v684
        %v686 = vpop.f32.mrb[0].mxu0
        %v687 = vpop.f32.mrb[0].mxu0
        %v688 = vadd.f32 0.0, %v687
        %v689 = vpop.f32.mrb[0].mxu0
        %690 = vdwg.mxu0
        %v691 = vadd.f32 %v632, %v685
        %v692 = vadd.f32 %v633, %v688
        %s693 = scalar_lea.vmem [#allocation8], 48
        %v694 = vld [vmem:[%s693] sm:$0xf]
        %v695 = vld [vmem:[%s693 + $0x4] sm:$0xf]
        %v698 = vunpack.c.l.b16 %v694
        %v699 = vunpack.c.l.b16 %v695
        %v700 = vpack.c.b16 %v699, %v698
        %701 = vrot.lane.b32.xlu0 %v353, 108
        %v702 = vpop.permute.xlu0 %701
        %v704 = vsel %vm356, %v700, 0
        %v707 = vsel %vm360, %v702, 0
        %709 = vmatprep.subr.bf16.mxu0 0
        %710 = vmatpush1.bf16.msra.mxu0 %v707
        %711 = vmatprep.subr.bf16.mxu0 0
        %712 = vmatpush1.bf16.msra.mxu0 0
        %713 = vmatprep.subr.bf16.mxu0 0
        %714 = vmatpush1.bf16.msra.mxu0 0
        %715 = vmatprep.subr.bf16.mxu0 0
        %716 = vmatpush1.bf16.msra.mxu0 0
        %717 = vmatprep.subr.bf16.mxu0 0
        %718 = vmatpush1.bf16.msra.mxu0 0
        %719 = vmatprep.subr.bf16.mxu0 0
        %720 = vmatpush1.bf16.msra.mxu0 0
        %721 = vmatprep.subr.bf16.mxu0 0
        %722 = vmatpush1.bf16.msra.mxu0 0
        %723 = vmatprep.subr.bf16.mxu0 0
        %724 = vmatpush1.bf16.msra.mxu0 0
        %725 = vmatprep.subr.bf16.mxu0 0
        %726 = vmatpush1.bf16.msra.mxu0 0
        %727 = vmatprep.subr.bf16.mxu0 0
        %728 = vmatpush1.bf16.msra.mxu0 0
        %729 = vmatprep.subr.bf16.mxu0 0
        %730 = vmatpush1.bf16.msra.mxu0 0
        %731 = vmatprep.subr.bf16.mxu0 0
        %732 = vmatpush1.bf16.msra.mxu0 0
        %733 = vmatprep.subr.bf16.mxu0 0
        %734 = vmatpush1.bf16.msra.mxu0 0
        %735 = vmatprep.subr.bf16.mxu0 0
        %736 = vmatpush1.bf16.msra.mxu0 0
        %737 = vmatprep.subr.bf16.mxu0 0
        %738 = vmatpush1.bf16.msra.mxu0 0
        %739 = vmatprep.subr.bf16.mxu0 0
        %740 = vmatpush1.bf16.msra.mxu0 0
        %741 = vmatprep.mubr.bf16.mxu0 0
        %742 = vmatmul.mubr.bf16.gmra.mrb[0].mxu0 %v704
        %v743 = vpop.f32.mrb[0].mxu0
        %v744 = vadd.f32 0.0, %v743
        %v745 = vpop.f32.mrb[0].mxu0
        %v746 = vpop.f32.mrb[0].mxu0
        %v747 = vadd.f32 0.0, %v746
        %v748 = vpop.f32.mrb[0].mxu0
        %749 = vdwg.mxu0
        %v750 = vadd.f32 %v691, %v744
        %v751 = vadd.f32 %v692, %v747
        %s752 = scalar_lea.vmem [#allocation8], 56
        %v753 = vld [vmem:[%s752] sm:$0xf]
        %v754 = vld [vmem:[%s752 + $0x4] sm:$0xf]
        %v757 = vunpack.c.l.b16 %v753
        %v758 = vunpack.c.l.b16 %v754
        %v759 = vpack.c.b16 %v758, %v757
        %760 = vrot.lane.b32.xlu0 %v353, 107
        %v761 = vpop.permute.xlu0 %760
        %v763 = vsel %vm356, %v759, 0
        %v766 = vsel %vm360, %v761, 0
        %768 = vmatprep.subr.bf16.mxu0 0
        %769 = vmatpush1.bf16.msra.mxu0 %v766
        %770 = vmatprep.subr.bf16.mxu0 0
        %771 = vmatpush1.bf16.msra.mxu0 0
        %772 = vmatprep.subr.bf16.mxu0 0
        %773 = vmatpush1.bf16.msra.mxu0 0
        %774 = vmatprep.subr.bf16.mxu0 0
        %775 = vmatpush1.bf16.msra.mxu0 0
        %776 = vmatprep.subr.bf16.mxu0 0
        %777 = vmatpush1.bf16.msra.mxu0 0
        %778 = vmatprep.subr.bf16.mxu0 0
        %779 = vmatpush1.bf16.msra.mxu0 0
        %780 = vmatprep.subr.bf16.mxu0 0
        %781 = vmatpush1.bf16.msra.mxu0 0
        %782 = vmatprep.subr.bf16.mxu0 0
        %783 = vmatpush1.bf16.msra.mxu0 0
        %784 = vmatprep.subr.bf16.mxu0 0
        %785 = vmatpush1.bf16.msra.mxu0 0
        %786 = vmatprep.subr.bf16.mxu0 0
        %787 = vmatpush1.bf16.msra.mxu0 0
        %788 = vmatprep.subr.bf16.mxu0 0
        %789 = vmatpush1.bf16.msra.mxu0 0
        %790 = vmatprep.subr.bf16.mxu0 0
        %791 = vmatpush1.bf16.msra.mxu0 0
        %792 = vmatprep.subr.bf16.mxu0 0
        %793 = vmatpush1.bf16.msra.mxu0 0
        %794 = vmatprep.subr.bf16.mxu0 0
        %795 = vmatpush1.bf16.msra.mxu0 0
        %796 = vmatprep.subr.bf16.mxu0 0
        %797 = vmatpush1.bf16.msra.mxu0 0
        %798 = vmatprep.subr.bf16.mxu0 0
        %799 = vmatpush1.bf16.msra.mxu0 0
        %800 = vmatprep.mubr.bf16.mxu0 0
        %801 = vmatmul.mubr.bf16.gmra.mrb[0].mxu0 %v763
        %v802 = vpop.f32.mrb[0].mxu0
        %v803 = vadd.f32 0.0, %v802
        %v804 = vpop.f32.mrb[0].mxu0
        %v805 = vpop.f32.mrb[0].mxu0
        %v806 = vadd.f32 0.0, %v805
        %v807 = vpop.f32.mrb[0].mxu0
        %808 = vdwg.mxu0
        %v809 = vadd.f32 %v750, %v803
        %v810 = vadd.f32 %v751, %v806
        %s811 = scalar_lea.vmem [#allocation8], 64
        %v812 = vld [vmem:[%s811] sm:$0xf]
        %v813 = vld [vmem:[%s811 + $0x4] sm:$0xf]
        %v816 = vunpack.c.l.b16 %v812
        %v817 = vunpack.c.l.b16 %v813
        %v818 = vpack.c.b16 %v817, %v816
        %819 = vrot.lane.b32.xlu0 %v353, 106
        %v820 = vpop.permute.xlu0 %819
        %v822 = vsel %vm356, %v818, 0
        %v825 = vsel %vm360, %v820, 0
        %827 = vmatprep.subr.bf16.mxu0 0
        %828 = vmatpush1.bf16.msra.mxu0 %v825
        %829 = vmatprep.subr.bf16.mxu0 0
        %830 = vmatpush1.bf16.msra.mxu0 0
        %831 = vmatprep.subr.bf16.mxu0 0
        %832 = vmatpush1.bf16.msra.mxu0 0
        %833 = vmatprep.subr.bf16.mxu0 0
        %834 = vmatpush1.bf16.msra.mxu0 0
        %835 = vmatprep.subr.bf16.mxu0 0
        %836 = vmatpush1.bf16.msra.mxu0 0
        %837 = vmatprep.subr.bf16.mxu0 0
        %838 = vmatpush1.bf16.msra.mxu0 0
        %839 = vmatprep.subr.bf16.mxu0 0
        %840 = vmatpush1.bf16.msra.mxu0 0
        %841 = vmatprep.subr.bf16.mxu0 0
        %842 = vmatpush1.bf16.msra.mxu0 0
        %843 = vmatprep.subr.bf16.mxu0 0
        %844 = vmatpush1.bf16.msra.mxu0 0
        %845 = vmatprep.subr.bf16.mxu0 0
        %846 = vmatpush1.bf16.msra.mxu0 0
        %847 = vmatprep.subr.bf16.mxu0 0
        %848 = vmatpush1.bf16.msra.mxu0 0
        %849 = vmatprep.subr.bf16.mxu0 0
        %850 = vmatpush1.bf16.msra.mxu0 0
        %851 = vmatprep.subr.bf16.mxu0 0
        %852 = vmatpush1.bf16.msra.mxu0 0
        %853 = vmatprep.subr.bf16.mxu0 0
        %854 = vmatpush1.bf16.msra.mxu0 0
        %855 = vmatprep.subr.bf16.mxu0 0
        %856 = vmatpush1.bf16.msra.mxu0 0
        %857 = vmatprep.subr.bf16.mxu0 0
        %858 = vmatpush1.bf16.msra.mxu0 0
        %859 = vmatprep.mubr.bf16.mxu0 0
        %860 = vmatmul.mubr.bf16.gmra.mrb[0].mxu0 %v822
        %v861 = vpop.f32.mrb[0].mxu0
        %v862 = vadd.f32 0.0, %v861
        %v863 = vpop.f32.mrb[0].mxu0
        %v864 = vpop.f32.mrb[0].mxu0
        %v865 = vadd.f32 0.0, %v864
        %v866 = vpop.f32.mrb[0].mxu0
        %867 = vdwg.mxu0
        %v868 = vadd.f32 %v809, %v862
        %v869 = vadd.f32 %v810, %v865
        %v870 = vld [vmem:[#allocation9] sm:$0xff]
        %v871 = vld [vmem:[#allocation9 + $0x8] sm:$0xff]
        %873 = vset.pattern.permute.xlu0 0
        %874 = vperm.xlu0 %873, %v870
        %v875 = vpop.permute.xlu0 %874
        %878 = vset.pattern.permute.xlu0 0
        %879 = vperm.xlu0 %878, %v871
        %v880 = vpop.permute.xlu0 %879
        %v882 = vadd.f32 %v868, %v875
        %v883 = vadd.f32 %v869, %v880
        %vm884 = vcmp.gt.f32.partialorder %v882, 0.0
        %vm885 = vcmp.gt.f32.partialorder %v883, 0.0
        %v886 = vmin.f32 %v882, 0.0
        %v887 = vmin.f32 %v883, 0.0
        %v888 = vmul.f32 %v886, 1.442695
        %v889 = vpow.pop %v888
        %v890 = vmul.f32 %v887, 1.442695
        %v891 = vpow.pop %v890
        %v892 = vsub.f32 %v889, 1.0
        %v893 = vsub.f32 %v891, 1.0
        %v894 = vsel %vm884, %v882, %v892
        %v895 = vsel %vm885, %v883, %v893
        %v897 = vlaneseq
        %v898 = vshrl.u32 %v897, 7
        %v899 = vsub.s32 0, %v898
        %v900 = vrot.slane %v339, %v899
        %v902 = vmul.f32 %v894, %v900
        %v903 = vmul.f32 %v895, %v900
        %vm904 = vcmask 818176
        %905 = vst.msk [vmem:[#allocation2] sm:$0xff] %vm904, 0
        %v906 = vpack.c.bf16 %v903, %v902
        %908 = vrot.lane.b32.xlu0 %v906, 11
        %v909 = vpop.permute.xlu0 %908
        %vm911 = vcmask 728152
        %912 = vst.msk [vmem:[#allocation2] sm:$0xff] %vm911, %v909
        %v913 = vld [vmem:[#allocation2] sm:$0xff]
        %v914 = vld [vmem:[#allocation11] sm:$0xf]
        %v915 = vld [vmem:[#allocation11 + $0x4] sm:$0xf]
        %s916 = scalar_lea.vmem [#allocation11], 8
        %v917 = vld [vmem:[%s916] sm:$0xf]
        %v918 = vld [vmem:[%s916 + $0x4] sm:$0xf]
        %v921 = vunpack.c.l.b16 %v917
        %v922 = vunpack.c.l.b16 %v918
        %v923 = vpack.c.b16 %v922, %v921
        %925 = vrot.lane.b32.xlu0 %v913, 127
        %v926 = vpop.permute.xlu0 %925
        %vm928 = vcmask 130048
        %v930 = vsel %vm928, %v923, 0
        %932 = vmatprep.subr.bf16.mxu0 0
        %933 = vmatpush1.bf16.msra.mxu0 %v926
        %934 = vmatprep.subr.bf16.mxu0 0
        %935 = vmatpush1.bf16.msra.mxu0 0
        %936 = vmatprep.subr.bf16.mxu0 0
        %937 = vmatpush1.bf16.msra.mxu0 0
        %938 = vmatprep.subr.bf16.mxu0 0
        %939 = vmatpush1.bf16.msra.mxu0 0
        %940 = vmatprep.subr.bf16.mxu0 0
        %941 = vmatpush1.bf16.msra.mxu0 0
        %942 = vmatprep.subr.bf16.mxu0 0
        %943 = vmatpush1.bf16.msra.mxu0 0
        %944 = vmatprep.subr.bf16.mxu0 0
        %945 = vmatpush1.bf16.msra.mxu0 0
        %946 = vmatprep.subr.bf16.mxu0 0
        %947 = vmatpush1.bf16.msra.mxu0 0
        %948 = vmatprep.subr.bf16.mxu0 0
        %949 = vmatpush1.bf16.msra.mxu0 0
        %950 = vmatprep.subr.bf16.mxu0 0
        %951 = vmatpush1.bf16.msra.mxu0 0
        %952 = vmatprep.subr.bf16.mxu0 0
        %953 = vmatpush1.bf16.msra.mxu0 0
        %954 = vmatprep.subr.bf16.mxu0 0
        %955 = vmatpush1.bf16.msra.mxu0 0
        %956 = vmatprep.subr.bf16.mxu0 0
        %957 = vmatpush1.bf16.msra.mxu0 0
        %958 = vmatprep.subr.bf16.mxu0 0
        %959 = vmatpush1.bf16.msra.mxu0 0
        %960 = vmatprep.subr.bf16.mxu0 0
        %961 = vmatpush1.bf16.msra.mxu0 0
        %962 = vmatprep.subr.bf16.mxu0 0
        %963 = vmatpush1.bf16.msra.mxu0 0
        %964 = vmatprep.mubr.bf16.mxu0 0
        %965 = vmatmul.mubr.bf16.gmra.mrb[0].mxu0 %v930
        %v966 = vpop.f32.mrb[0].mxu0
        %v967 = vadd.f32 0.0, %v966
        %v968 = vpop.f32.mrb[0].mxu0
        %v969 = vpop.f32.mrb[0].mxu0
        %v970 = vadd.f32 0.0, %v969
        %v971 = vpop.f32.mrb[0].mxu0
        %972 = vdwg.mxu0
        %v975 = vunpack.c.l.b16 %v914
        %v976 = vunpack.c.l.b16 %v915
        %v977 = vpack.c.b16 %v976, %v975
        %v979 = vsel %vm928, %v977, 0
        %981 = vmatprep.subr.bf16.mxu0 0
        %982 = vmatpush1.bf16.msra.mxu0 %v913
        %983 = vmatprep.subr.bf16.mxu0 0
        %984 = vmatpush1.bf16.msra.mxu0 0
        %985 = vmatprep.subr.bf16.mxu0 0
        %986 = vmatpush1.bf16.msra.mxu0 0
        %987 = vmatprep.subr.bf16.mxu0 0
        %988 = vmatpush1.bf16.msra.mxu0 0
        %989 = vmatprep.subr.bf16.mxu0 0
        %990 = vmatpush1.bf16.msra.mxu0 0
        %991 = vmatprep.subr.bf16.mxu0 0
        %992 = vmatpush1.bf16.msra.mxu0 0
        %993 = vmatprep.subr.bf16.mxu0 0
        %994 = vmatpush1.bf16.msra.mxu0 0
        %995 = vmatprep.subr.bf16.mxu0 0
        %996 = vmatpush1.bf16.msra.mxu0 0
        %997 = vmatprep.subr.bf16.mxu0 0
        %998 = vmatpush1.bf16.msra.mxu0 0
        %999 = vmatprep.subr.bf16.mxu0 0
        %1000 = vmatpush1.bf16.msra.mxu0 0
        %1001 = vmatprep.subr.bf16.mxu0 0
        %1002 = vmatpush1.bf16.msra.mxu0 0
        %1003 = vmatprep.subr.bf16.mxu0 0
        %1004 = vmatpush1.bf16.msra.mxu0 0
        %1005 = vmatprep.subr.bf16.mxu0 0
        %1006 = vmatpush1.bf16.msra.mxu0 0
        %1007 = vmatprep.subr.bf16.mxu0 0
        %1008 = vmatpush1.bf16.msra.mxu0 0
        %1009 = vmatprep.subr.bf16.mxu0 0
        %1010 = vmatpush1.bf16.msra.mxu0 0
        %1011 = vmatprep.subr.bf16.mxu0 0
        %1012 = vmatpush1.bf16.msra.mxu0 0
        %1013 = vmatprep.mubr.bf16.mxu0 0
        %1014 = vmatmul.mubr.bf16.gmra.mrb[0].mxu0 %v979
        %v1015 = vpop.f32.mrb[0].mxu0
        %v1016 = vadd.f32 %v967, %v1015
        %v1017 = vpop.f32.mrb[0].mxu0
        %v1018 = vpop.f32.mrb[0].mxu0
        %v1019 = vadd.f32 %v970, %v1018
        %v1020 = vpop.f32.mrb[0].mxu0
        %1021 = vdwg.mxu0
        %s1022 = scalar_lea.vmem [#allocation11], 16
        %v1023 = vld [vmem:[%s1022] sm:$0xf]
        %v1024 = vld [vmem:[%s1022 + $0x4] sm:$0xf]
        %v1027 = vunpack.c.l.b16 %v1023
        %v1028 = vunpack.c.l.b16 %v1024
        %v1029 = vpack.c.b16 %v1028, %v1027
        %1030 = vrot.lane.b32.xlu0 %v913, 126
        %v1031 = vpop.permute.xlu0 %1030
        %v1034 = vsel %vm928, %v1029, 0
        %1036 = vmatprep.subr.bf16.mxu0 0
        %1037 = vmatpush1.bf16.msra.mxu0 %v1031
        %1038 = vmatprep.subr.bf16.mxu0 0
        %1039 = vmatpush1.bf16.msra.mxu0 0
        %1040 = vmatprep.subr.bf16.mxu0 0
        %1041 = vmatpush1.bf16.msra.mxu0 0
        %1042 = vmatprep.subr.bf16.mxu0 0
        %1043 = vmatpush1.bf16.msra.mxu0 0
        %1044 = vmatprep.subr.bf16.mxu0 0
        %1045 = vmatpush1.bf16.msra.mxu0 0
        %1046 = vmatprep.subr.bf16.mxu0 0
        %1047 = vmatpush1.bf16.msra.mxu0 0
        %1048 = vmatprep.subr.bf16.mxu0 0
        %1049 = vmatpush1.bf16.msra.mxu0 0
        %1050 = vmatprep.subr.bf16.mxu0 0
        %1051 = vmatpush1.bf16.msra.mxu0 0
        %1052 = vmatprep.subr.bf16.mxu0 0
        %1053 = vmatpush1.bf16.msra.mxu0 0
        %1054 = vmatprep.subr.bf16.mxu0 0
        %1055 = vmatpush1.bf16.msra.mxu0 0
        %1056 = vmatprep.subr.bf16.mxu0 0
        %1057 = vmatpush1.bf16.msra.mxu0 0
        %1058 = vmatprep.subr.bf16.mxu0 0
        %1059 = vmatpush1.bf16.msra.mxu0 0
        %1060 = vmatprep.subr.bf16.mxu0 0
        %1061 = vmatpush1.bf16.msra.mxu0 0
        %1062 = vmatprep.subr.bf16.mxu0 0
        %1063 = vmatpush1.bf16.msra.mxu0 0
        %1064 = vmatprep.subr.bf16.mxu0 0
        %1065 = vmatpush1.bf16.msra.mxu0 0
        %1066 = vmatprep.subr.bf16.mxu0 0
        %1067 = vmatpush1.bf16.msra.mxu0 0
        %1068 = vmatprep.mubr.bf16.mxu0 0
        %1069 = vmatmul.mubr.bf16.gmra.mrb[0].mxu0 %v1034
        %v1070 = vpop.f32.mrb[0].mxu0
        %v1071 = vadd.f32 0.0, %v1070
        %v1072 = vpop.f32.mrb[0].mxu0
        %v1073 = vpop.f32.mrb[0].mxu0
        %v1074 = vadd.f32 0.0, %v1073
        %v1075 = vpop.f32.mrb[0].mxu0
        %1076 = vdwg.mxu0
        %v1077 = vadd.f32 %v1016, %v1071
        %v1078 = vadd.f32 %v1019, %v1074
        %s1079 = scalar_lea.vmem [#allocation11], 24
        %v1080 = vld [vmem:[%s1079] sm:$0xf]
        %v1081 = vld [vmem:[%s1079 + $0x4] sm:$0xf]
        %v1084 = vunpack.c.l.b16 %v1080
        %v1085 = vunpack.c.l.b16 %v1081
        %v1086 = vpack.c.b16 %v1085, %v1084
        %1087 = vrot.lane.b32.xlu0 %v913, 118
        %v1088 = vpop.permute.xlu0 %1087
        %v1091 = vsel %vm928, %v1086, 0
        %1093 = vmatprep.subr.bf16.mxu0 0
        %1094 = vmatpush1.bf16.msra.mxu0 %v1088
        %1095 = vmatprep.subr.bf16.mxu0 0
        %1096 = vmatpush1.bf16.msra.mxu0 0
        %1097 = vmatprep.subr.bf16.mxu0 0
        %1098 = vmatpush1.bf16.msra.mxu0 0
        %1099 = vmatprep.subr.bf16.mxu0 0
        %1100 = vmatpush1.bf16.msra.mxu0 0
        %1101 = vmatprep.subr.bf16.mxu0 0
        %1102 = vmatpush1.bf16.msra.mxu0 0
        %1103 = vmatprep.subr.bf16.mxu0 0
        %1104 = vmatpush1.bf16.msra.mxu0 0
        %1105 = vmatprep.subr.bf16.mxu0 0
        %1106 = vmatpush1.bf16.msra.mxu0 0
        %1107 = vmatprep.subr.bf16.mxu0 0
        %1108 = vmatpush1.bf16.msra.mxu0 0
        %1109 = vmatprep.subr.bf16.mxu0 0
        %1110 = vmatpush1.bf16.msra.mxu0 0
        %1111 = vmatprep.subr.bf16.mxu0 0
        %1112 = vmatpush1.bf16.msra.mxu0 0
        %1113 = vmatprep.subr.bf16.mxu0 0
        %1114 = vmatpush1.bf16.msra.mxu0 0
        %1115 = vmatprep.subr.bf16.mxu0 0
        %1116 = vmatpush1.bf16.msra.mxu0 0
        %1117 = vmatprep.subr.bf16.mxu0 0
        %1118 = vmatpush1.bf16.msra.mxu0 0
        %1119 = vmatprep.subr.bf16.mxu0 0
        %1120 = vmatpush1.bf16.msra.mxu0 0
        %1121 = vmatprep.subr.bf16.mxu0 0
        %1122 = vmatpush1.bf16.msra.mxu0 0
        %1123 = vmatprep.subr.bf16.mxu0 0
        %1124 = vmatpush1.bf16.msra.mxu0 0
        %1125 = vmatprep.mubr.bf16.mxu0 0
        %1126 = vmatmul.mubr.bf16.gmra.mrb[0].mxu0 %v1091
        %v1127 = vpop.f32.mrb[0].mxu0
        %v1128 = vadd.f32 0.0, %v1127
        %v1129 = vpop.f32.mrb[0].mxu0
        %v1130 = vpop.f32.mrb[0].mxu0
        %v1131 = vadd.f32 0.0, %v1130
        %v1132 = vpop.f32.mrb[0].mxu0
        %1133 = vdwg.mxu0
        %v1134 = vadd.f32 %v1077, %v1128
        %v1135 = vadd.f32 %v1078, %v1131
        %s1136 = scalar_lea.vmem [#allocation11], 32
        %v1137 = vld [vmem:[%s1136] sm:$0xf]
        %v1138 = vld [vmem:[%s1136 + $0x4] sm:$0xf]
        %v1141 = vunpack.c.l.b16 %v1137
        %v1142 = vunpack.c.l.b16 %v1138
        %v1143 = vpack.c.b16 %v1142, %v1141
        %1144 = vrot.lane.b32.xlu0 %v913, 117
        %v1145 = vpop.permute.xlu0 %1144
        %v1148 = vsel %vm928, %v1143, 0
        %1150 = vmatprep.subr.bf16.mxu0 0
        %1151 = vmatpush1.bf16.msra.mxu0 %v1145
        %1152 = vmatprep.subr.bf16.mxu0 0
        %1153 = vmatpush1.bf16.msra.mxu0 0
        %1154 = vmatprep.subr.bf16.mxu0 0
        %1155 = vmatpush1.bf16.msra.mxu0 0
        %1156 = vmatprep.subr.bf16.mxu0 0
        %1157 = vmatpush1.bf16.msra.mxu0 0
        %1158 = vmatprep.subr.bf16.mxu0 0
        %1159 = vmatpush1.bf16.msra.mxu0 0
        %1160 = vmatprep.subr.bf16.mxu0 0
        %1161 = vmatpush1.bf16.msra.mxu0 0
        %1162 = vmatprep.subr.bf16.mxu0 0
        %1163 = vmatpush1.bf16.msra.mxu0 0
        %1164 = vmatprep.subr.bf16.mxu0 0
        %1165 = vmatpush1.bf16.msra.mxu0 0
        %1166 = vmatprep.subr.bf16.mxu0 0
        %1167 = vmatpush1.bf16.msra.mxu0 0
        %1168 = vmatprep.subr.bf16.mxu0 0
        %1169 = vmatpush1.bf16.msra.mxu0 0
        %1170 = vmatprep.subr.bf16.mxu0 0
        %1171 = vmatpush1.bf16.msra.mxu0 0
        %1172 = vmatprep.subr.bf16.mxu0 0
        %1173 = vmatpush1.bf16.msra.mxu0 0
        %1174 = vmatprep.subr.bf16.mxu0 0
        %1175 = vmatpush1.bf16.msra.mxu0 0
        %1176 = vmatprep.subr.bf16.mxu0 0
        %1177 = vmatpush1.bf16.msra.mxu0 0
        %1178 = vmatprep.subr.bf16.mxu0 0
        %1179 = vmatpush1.bf16.msra.mxu0 0
        %1180 = vmatprep.subr.bf16.mxu0 0
        %1181 = vmatpush1.bf16.msra.mxu0 0
        %1182 = vmatprep.mubr.bf16.mxu0 0
        %1183 = vmatmul.mubr.bf16.gmra.mrb[0].mxu0 %v1148
        %v1184 = vpop.f32.mrb[0].mxu0
        %v1185 = vadd.f32 0.0, %v1184
        %v1186 = vpop.f32.mrb[0].mxu0
        %v1187 = vpop.f32.mrb[0].mxu0
        %v1188 = vadd.f32 0.0, %v1187
        %v1189 = vpop.f32.mrb[0].mxu0
        %1190 = vdwg.mxu0
        %v1191 = vadd.f32 %v1134, %v1185
        %v1192 = vadd.f32 %v1135, %v1188
        %s1193 = scalar_lea.vmem [#allocation11], 40
        %v1194 = vld [vmem:[%s1193] sm:$0xf]
        %v1195 = vld [vmem:[%s1193 + $0x4] sm:$0xf]
        %v1198 = vunpack.c.l.b16 %v1194
        %v1199 = vunpack.c.l.b16 %v1195
        %v1200 = vpack.c.b16 %v1199, %v1198
        %1201 = vrot.lane.b32.xlu0 %v913, 116
        %v1202 = vpop.permute.xlu0 %1201
        %v1205 = vsel %vm928, %v1200, 0
        %1207 = vmatprep.subr.bf16.mxu0 0
        %1208 = vmatpush1.bf16.msra.mxu0 %v1202
        %1209 = vmatprep.subr.bf16.mxu0 0
        %1210 = vmatpush1.bf16.msra.mxu0 0
        %1211 = vmatprep.subr.bf16.mxu0 0
        %1212 = vmatpush1.bf16.msra.mxu0 0
        %1213 = vmatprep.subr.bf16.mxu0 0
        %1214 = vmatpush1.bf16.msra.mxu0 0
        %1215 = vmatprep.subr.bf16.mxu0 0
        %1216 = vmatpush1.bf16.msra.mxu0 0
        %1217 = vmatprep.subr.bf16.mxu0 0
        %1218 = vmatpush1.bf16.msra.mxu0 0
        %1219 = vmatprep.subr.bf16.mxu0 0
        %1220 = vmatpush1.bf16.msra.mxu0 0
        %1221 = vmatprep.subr.bf16.mxu0 0
        %1222 = vmatpush1.bf16.msra.mxu0 0
        %1223 = vmatprep.subr.bf16.mxu0 0
        %1224 = vmatpush1.bf16.msra.mxu0 0
        %1225 = vmatprep.subr.bf16.mxu0 0
        %1226 = vmatpush1.bf16.msra.mxu0 0
        %1227 = vmatprep.subr.bf16.mxu0 0
        %1228 = vmatpush1.bf16.msra.mxu0 0
        %1229 = vmatprep.subr.bf16.mxu0 0
        %1230 = vmatpush1.bf16.msra.mxu0 0
        %1231 = vmatprep.subr.bf16.mxu0 0
        %1232 = vmatpush1.bf16.msra.mxu0 0
        %1233 = vmatprep.subr.bf16.mxu0 0
        %1234 = vmatpush1.bf16.msra.mxu0 0
        %1235 = vmatprep.subr.bf16.mxu0 0
        %1236 = vmatpush1.bf16.msra.mxu0 0
        %1237 = vmatprep.subr.bf16.mxu0 0
        %1238 = vmatpush1.bf16.msra.mxu0 0
        %1239 = vmatprep.mubr.bf16.mxu0 0
        %1240 = vmatmul.mubr.bf16.gmra.mrb[0].mxu0 %v1205
        %v1241 = vpop.f32.mrb[0].mxu0
        %v1242 = vadd.f32 0.0, %v1241
        %v1243 = vpop.f32.mrb[0].mxu0
        %v1244 = vpop.f32.mrb[0].mxu0
        %v1245 = vadd.f32 0.0, %v1244
        %v1246 = vpop.f32.mrb[0].mxu0
        %1247 = vdwg.mxu0
        %v1248 = vadd.f32 %v1191, %v1242
        %v1249 = vadd.f32 %v1192, %v1245
        %s1250 = scalar_lea.vmem [#allocation11], 48
        %v1251 = vld [vmem:[%s1250] sm:$0xf]
        %v1252 = vld [vmem:[%s1250 + $0x4] sm:$0xf]
        %v1255 = vunpack.c.l.b16 %v1251
        %v1256 = vunpack.c.l.b16 %v1252
        %v1257 = vpack.c.b16 %v1256, %v1255
        %1258 = vrot.lane.b32.xlu0 %v913, 108
        %v1259 = vpop.permute.xlu0 %1258
        %v1262 = vsel %vm928, %v1257, 0
        %1264 = vmatprep.subr.bf16.mxu0 0
        %1265 = vmatpush1.bf16.msra.mxu0 %v1259
        %1266 = vmatprep.subr.bf16.mxu0 0
        %1267 = vmatpush1.bf16.msra.mxu0 0
        %1268 = vmatprep.subr.bf16.mxu0 0
        %1269 = vmatpush1.bf16.msra.mxu0 0
        %1270 = vmatprep.subr.bf16.mxu0 0
        %1271 = vmatpush1.bf16.msra.mxu0 0
        %1272 = vmatprep.subr.bf16.mxu0 0
        %1273 = vmatpush1.bf16.msra.mxu0 0
        %1274 = vmatprep.subr.bf16.mxu0 0
        %1275 = vmatpush1.bf16.msra.mxu0 0
        %1276 = vmatprep.subr.bf16.mxu0 0
        %1277 = vmatpush1.bf16.msra.mxu0 0
        %1278 = vmatprep.subr.bf16.mxu0 0
        %1279 = vmatpush1.bf16.msra.mxu0 0
        %1280 = vmatprep.subr.bf16.mxu0 0
        %1281 = vmatpush1.bf16.msra.mxu0 0
        %1282 = vmatprep.subr.bf16.mxu0 0
        %1283 = vmatpush1.bf16.msra.mxu0 0
        %1284 = vmatprep.subr.bf16.mxu0 0
        %1285 = vmatpush1.bf16.msra.mxu0 0
        %1286 = vmatprep.subr.bf16.mxu0 0
        %1287 = vmatpush1.bf16.msra.mxu0 0
        %1288 = vmatprep.subr.bf16.mxu0 0
        %1289 = vmatpush1.bf16.msra.mxu0 0
        %1290 = vmatprep.subr.bf16.mxu0 0
        %1291 = vmatpush1.bf16.msra.mxu0 0
        %1292 = vmatprep.subr.bf16.mxu0 0
        %1293 = vmatpush1.bf16.msra.mxu0 0
        %1294 = vmatprep.subr.bf16.mxu0 0
        %1295 = vmatpush1.bf16.msra.mxu0 0
        %1296 = vmatprep.mubr.bf16.mxu0 0
        %1297 = vmatmul.mubr.bf16.gmra.mrb[0].mxu0 %v1262
        %v1298 = vpop.f32.mrb[0].mxu0
        %v1299 = vadd.f32 0.0, %v1298
        %v1300 = vpop.f32.mrb[0].mxu0
        %v1301 = vpop.f32.mrb[0].mxu0
        %v1302 = vadd.f32 0.0, %v1301
        %v1303 = vpop.f32.mrb[0].mxu0
        %1304 = vdwg.mxu0
        %v1305 = vadd.f32 %v1248, %v1299
        %v1306 = vadd.f32 %v1249, %v1302
        %s1307 = scalar_lea.vmem [#allocation11], 56
        %v1308 = vld [vmem:[%s1307] sm:$0xf]
        %v1309 = vld [vmem:[%s1307 + $0x4] sm:$0xf]
        %v1312 = vunpack.c.l.b16 %v1308
        %v1313 = vunpack.c.l.b16 %v1309
        %v1314 = vpack.c.b16 %v1313, %v1312
        %1315 = vrot.lane.b32.xlu0 %v913, 107
        %v1316 = vpop.permute.xlu0 %1315
        %v1319 = vsel %vm928, %v1314, 0
        %1321 = vmatprep.subr.bf16.mxu0 0
        %1322 = vmatpush1.bf16.msra.mxu0 %v1316
        %1323 = vmatprep.subr.bf16.mxu0 0
        %1324 = vmatpush1.bf16.msra.mxu0 0
        %1325 = vmatprep.subr.bf16.mxu0 0
        %1326 = vmatpush1.bf16.msra.mxu0 0
        %1327 = vmatprep.subr.bf16.mxu0 0
        %1328 = vmatpush1.bf16.msra.mxu0 0
        %1329 = vmatprep.subr.bf16.mxu0 0
        %1330 = vmatpush1.bf16.msra.mxu0 0
        %1331 = vmatprep.subr.bf16.mxu0 0
        %1332 = vmatpush1.bf16.msra.mxu0 0
        %1333 = vmatprep.subr.bf16.mxu0 0
        %1334 = vmatpush1.bf16.msra.mxu0 0
        %1335 = vmatprep.subr.bf16.mxu0 0
        %1336 = vmatpush1.bf16.msra.mxu0 0
        %1337 = vmatprep.subr.bf16.mxu0 0
        %1338 = vmatpush1.bf16.msra.mxu0 0
        %1339 = vmatprep.subr.bf16.mxu0 0
        %1340 = vmatpush1.bf16.msra.mxu0 0
        %1341 = vmatprep.subr.bf16.mxu0 0
        %1342 = vmatpush1.bf16.msra.mxu0 0
        %1343 = vmatprep.subr.bf16.mxu0 0
        %1344 = vmatpush1.bf16.msra.mxu0 0
        %1345 = vmatprep.subr.bf16.mxu0 0
        %1346 = vmatpush1.bf16.msra.mxu0 0
        %1347 = vmatprep.subr.bf16.mxu0 0
        %1348 = vmatpush1.bf16.msra.mxu0 0
        %1349 = vmatprep.subr.bf16.mxu0 0
        %1350 = vmatpush1.bf16.msra.mxu0 0
        %1351 = vmatprep.subr.bf16.mxu0 0
        %1352 = vmatpush1.bf16.msra.mxu0 0
        %1353 = vmatprep.mubr.bf16.mxu0 0
        %1354 = vmatmul.mubr.bf16.gmra.mrb[0].mxu0 %v1319
        %v1355 = vpop.f32.mrb[0].mxu0
        %v1356 = vadd.f32 0.0, %v1355
        %v1357 = vpop.f32.mrb[0].mxu0
        %v1358 = vpop.f32.mrb[0].mxu0
        %v1359 = vadd.f32 0.0, %v1358
        %v1360 = vpop.f32.mrb[0].mxu0
        %1361 = vdwg.mxu0
        %v1362 = vadd.f32 %v1305, %v1356
        %v1363 = vadd.f32 %v1306, %v1359
        %s1364 = scalar_lea.vmem [#allocation11], 64
        %v1365 = vld [vmem:[%s1364] sm:$0xf]
        %v1366 = vld [vmem:[%s1364 + $0x4] sm:$0xf]
        %v1369 = vunpack.c.l.b16 %v1365
        %v1370 = vunpack.c.l.b16 %v1366
        %v1371 = vpack.c.b16 %v1370, %v1369
        %1372 = vrot.lane.b32.xlu0 %v913, 106
        %v1373 = vpop.permute.xlu0 %1372
        %v1376 = vsel %vm928, %v1371, 0
        %1378 = vmatprep.subr.bf16.mxu0 0
        %1379 = vmatpush1.bf16.msra.mxu0 %v1373
        %1380 = vmatprep.subr.bf16.mxu0 0
        %1381 = vmatpush1.bf16.msra.mxu0 0
        %1382 = vmatprep.subr.bf16.mxu0 0
        %1383 = vmatpush1.bf16.msra.mxu0 0
        %1384 = vmatprep.subr.bf16.mxu0 0
        %1385 = vmatpush1.bf16.msra.mxu0 0
        %1386 = vmatprep.subr.bf16.mxu0 0
        %1387 = vmatpush1.bf16.msra.mxu0 0
        %1388 = vmatprep.subr.bf16.mxu0 0
        %1389 = vmatpush1.bf16.msra.mxu0 0
        %1390 = vmatprep.subr.bf16.mxu0 0
        %1391 = vmatpush1.bf16.msra.mxu0 0
        %1392 = vmatprep.subr.bf16.mxu0 0
        %1393 = vmatpush1.bf16.msra.mxu0 0
        %1394 = vmatprep.subr.bf16.mxu0 0
        %1395 = vmatpush1.bf16.msra.mxu0 0
        %1396 = vmatprep.subr.bf16.mxu0 0
        %1397 = vmatpush1.bf16.msra.mxu0 0
        %1398 = vmatprep.subr.bf16.mxu0 0
        %1399 = vmatpush1.bf16.msra.mxu0 0
        %1400 = vmatprep.subr.bf16.mxu0 0
        %1401 = vmatpush1.bf16.msra.mxu0 0
        %1402 = vmatprep.subr.bf16.mxu0 0
        %1403 = vmatpush1.bf16.msra.mxu0 0
        %1404 = vmatprep.subr.bf16.mxu0 0
        %1405 = vmatpush1.bf16.msra.mxu0 0
        %1406 = vmatprep.subr.bf16.mxu0 0
        %1407 = vmatpush1.bf16.msra.mxu0 0
        %1408 = vmatprep.subr.bf16.mxu0 0
        %1409 = vmatpush1.bf16.msra.mxu0 0
        %1410 = vmatprep.mubr.bf16.mxu0 0
        %1411 = vmatmul.mubr.bf16.gmra.mrb[0].mxu0 %v1376
        %v1412 = vpop.f32.mrb[0].mxu0
        %v1413 = vadd.f32 0.0, %v1412
        %v1414 = vpop.f32.mrb[0].mxu0
        %v1415 = vpop.f32.mrb[0].mxu0
        %v1416 = vadd.f32 0.0, %v1415
        %v1417 = vpop.f32.mrb[0].mxu0
        %1418 = vdwg.mxu0
        %v1419 = vadd.f32 %v1362, %v1413
        %v1420 = vadd.f32 %v1363, %v1416
        %v1421 = vld [vmem:[#allocation12] sm:$0xff]
        %v1422 = vld [vmem:[#allocation12 + $0x8] sm:$0xff]
        %1424 = vset.pattern.permute.xlu0 0
        %1425 = vperm.xlu0 %1424, %v1421
        %v1426 = vpop.permute.xlu0 %1425
        %1429 = vset.pattern.permute.xlu0 0
        %1430 = vperm.xlu0 %1429, %v1422
        %v1431 = vpop.permute.xlu0 %1430
        %v1433 = vadd.f32 %v1419, %v1426
        %v1434 = vadd.f32 %v1420, %v1431
        %vm1435 = vcmp.gt.f32.partialorder %v1433, 0.0
        %vm1436 = vcmp.gt.f32.partialorder %v1434, 0.0
        %v1437 = vmin.f32 %v1433, 0.0
        %v1438 = vmin.f32 %v1434, 0.0
        %v1439 = vmul.f32 %v1437, 1.442695
        %v1440 = vpow.pop %v1439
        %v1441 = vmul.f32 %v1438, 1.442695
        %v1442 = vpow.pop %v1441
        %v1443 = vsub.f32 %v1440, 1.0
        %v1444 = vsub.f32 %v1442, 1.0
        %v1445 = vsel %vm1435, %v1433, %v1443
        %v1446 = vsel %vm1436, %v1434, %v1444
        %v1447 = vmul.f32 %v1445, %v900
        %v1448 = vmul.f32 %v1446, %v900
        %vm1449 = vcmask 814080
        %1450 = vst.msk [vmem:[%s337] sm:$0xf] %vm1449, 0
        %1451 = vst.msk [vmem:[%s337 + $0x4] sm:$0xf] %vm1449, 0
        %v1452 = vpack.c.bf16 %v1448, %v1447
        %v1454 = vunpack.c.l.b16 %v1452
        %v1455 = vunpack.c.h.b16 %v1452
        %v1456 = vpack.c.b16 %v1454, %v1454
        %v1457 = vpack.c.b16 %v1455, %v1455
        %1458 = vrot.lane.b32.xlu0 %v1456, 11
        %v1459 = vpop.permute.xlu0 %1458
        %1460 = vrot.lane.b32.xlu0 %v1457, 11
        %v1461 = vpop.permute.xlu0 %1460
        %vm1464 = vcmask 724056
        %1465 = vst.msk [vmem:[%s337] sm:$0xf] %vm1464, %v1459
        %1466 = vst.msk [vmem:[%s337 + $0x4] sm:$0xf] %vm1464, %v1461
        %s1467 = sand.u32 %s165, 1
        %s1468 = scalar_lea.sflag [#allocation5], %s1467
        %s1469 = sand.u32 %s165, 1
        %s1470 = smul.addr %s1469, 8
        %s1471 = scalar_lea.vmem [#allocation14], %s1470
        // Predicated region
        $region69: #{distill_model_forward.6} parent=43 // pred_check
          %p1472 = pneg %p175
        $region70: #{distill_model_forward.6} parent=43 // pred_check_branch
          %1474 = sbr.rel (%p1472) target = $region72
        $region71: #{distill_model_forward.6} parent=43 // pred_region
          %s1476 = ssub.s32 128, 128
          %1477 = vsyncadd %s1468, %s1476
          %s1478 = smul.addr %s26, 2
          %s1479 = smul.addr %s1478, 64
          %s1480 = scalar_lea.hbm %s6, %s1479
          %s1481 = sshll.u32 %s1471, 4
          %s1482 = int_to_ptr.vmem [resolvable:$true] %s1481
          %1487 = dma.vmem_to_hbm [thread:$0]  %s1482, 128, %s1480, %s1468, 64, 64, 4
        $region72: #{distill_model_forward.6} parent=43 // pred_fallthru
          _
      $region44: #{distill_model_forward.6} parent=5 // pred_fallthru
        _
      %p1488 = scmp.le.s32.totalorder 2, %s21
      // Predicated region
      $region73: #{distill_model_forward.6} parent=5 // pred_check
        %p1489 = pneg %p1488
      $region74: #{distill_model_forward.6} parent=5 // pred_check_branch
        %1491 = sbr.rel (%p1489) target = $region76
      $region75: #{distill_model_forward.6} parent=5 // pred_region
        %s1492 = ssub.s32 %s21, 2
        // Predicated region
        $region77: #{distill_model_forward.6} parent=75 // pred_check
          %p1493 = pneg %p181
        $region78: #{distill_model_forward.6} parent=75 // pred_check_branch
          %1495 = sbr.rel (%p1493) target = $region80
        $region79: #{distill_model_forward.6} parent=75 // pred_region
          %s1496 = sand.u32 %s166, 1
          %s1497 = scalar_lea.sflag [#allocation5], %s1496
          %s1498 = sand.u32 %s166, 1
          %s1499 = smul.addr %s1498, 8
          %s1500 = scalar_lea.vmem [#allocation14], %s1499
          %1501 = dma.done %s1497, 128
        $region80: #{distill_model_forward.6} parent=75 // pred_fallthru
          _
      $region76: #{distill_model_forward.6} parent=5 // pred_fallthru
        _
    $region6: #{distill_model_forward.6} parent=1 // loop_footer
      %s25 = sadd.s32 1, %s21
    $region7: #{distill_model_forward.6} parent=1 // loop_footer_branch
      %20 = sbr.rel target = $region3
    $region8: #{distill_model_forward.6} parent=1 // loop_exit
      _
    %1502 = vsyncpa [#allocation4], 1
    %s1503 = scalar_lea.sflag [#allocation4], 1
    %1504 = vsyncpa %s1503, 1
    %1505 = vsyncpa [#allocation7], 1
    %1506 = vsyncpa [#allocation10], 1
    %1507 = vsyncpa [#allocation13], 1
    %1508 = vsyncpa [#allocation5], 1
    %s1509 = scalar_lea.sflag [#allocation5], 1
    %1510 = vsyncpa %s1509, 1

// kernel: distill_model_forward.7
$region0: #{distill_model_forward.7}
  #allocation0 [shape = 'u32[]', space=smem, size = 0x4, offset = 0x4, fixed_abs, tag = 'smem constant byte address 0x4 - core index']
  #allocation1 [shape = 'u32[144,128]{1,0:T(1,128)}', space=vmem, size = 0x12000, scoped, tag = 'internal scratch']
  %s0 = inlined_call_operand.hbm [shape: bf16[2,16,100], index: 0, kind: input, shape index: {}]
  %s1 = inlined_call_operand.hbm [shape: f32[1,78], index: 1, kind: input, shape index: {}]
  %s2 = inlined_call_operand.hbm [shape: bf16[9,8,16], index: 2, kind: input, shape index: {}]
  %s3 = inlined_call_operand.hbm [shape: f32[8,1], index: 3, kind: input, shape index: {}]
  %s4 = inlined_call_operand.hbm [shape: bf16[2,8,100], index: 4, kind: output, shape index: {}]
  %s5 = sld [smem:[#allocation0]]
  $region65: #{distill_model_forward.7} parent=0
    _
  %s7 = ssub.s32 1, %s5
  %s8 = scalar_select 0, %s7, %s5
  $region1: #{distill_model_forward.7} parent=0
    #allocation2 [shape = 'u8[8192]{0}', space=vmem, size = 0x2000, scoped, tag = 'input window, operand 0']
    #allocation3 [shape = 's32[2]{0}', space=sflag, size = 0x8, scoped, tag = 'scoped memory for distill_model_forward.7']
    #allocation4 [shape = 's32[2]{0}', space=sflag, size = 0x8, scoped, tag = 'scoped memory for distill_model_forward.7']
    #allocation5 [shape = 'u8[512]{0}', space=vmem, size = 0x400, scoped, tag = 'input window, operand 1, single buffered']
    #allocation6 [shape = 's32[1]{0}', space=sflag, size = 0x4, scoped, tag = 'scoped memory for distill_model_forward.7']
    #allocation7 [shape = 'u8[18432]{0}', space=vmem, size = 0x4800, scoped, tag = 'input window, operand 2, single buffered']
    #allocation8 [shape = 'u8[4096]{0}', space=vmem, size = 0x1000, scoped, tag = 'input window, operand 3, single buffered']
    #allocation9 [shape = 's32[1]{0}', space=sflag, size = 0x4, scoped, tag = 'scoped memory for distill_model_forward.7']
    #allocation10 [shape = 'u8[4096]{0}', space=vmem, size = 0x1000, scoped, tag = 'output window, operand 0']
    %9 = vsyncpa [#allocation3], 0
    %s10 = scalar_lea.sflag [#allocation3], 1
    %11 = vsyncpa %s10, 0
    %12 = vsyncpa [#allocation6], 0
    %13 = vsyncpa [#allocation9], 0
    %14 = vsyncpa [#allocation4], 0
    %s15 = scalar_lea.sflag [#allocation4], 1
    %16 = vsyncpa %s15, 0
    loop: start=0, step=1, limit=4
    $region2: #{distill_model_forward.7} parent=1 // loop_pre_header
      _
    $region3: #{distill_model_forward.7} parent=1 // loop_header
      %s18 = sphi 0, %s22
      %p19 = scmp.ge.s32.totalorder %s18, 4
      %s28 = sphi 0, %s30
      %s31 = sphi 0, %s28
      %s32 = sphi 0, %s31
      %s48 = sphi 0, %s32
      %s52 = sphi 0, %s52
      %s54 = sphi 0, %s52
      %s55 = sphi 0, %s54
      %s69 = sphi 0, %s55
      %s73 = sphi 0, %s73
      %s75 = sphi 0, %s73
      %s76 = sphi 0, %s75
      %s90 = sphi 0, %s76
      %s94 = sphi 0, %s94
      %s96 = sphi 0, %s94
      %s97 = sphi 0, %s96
      %s111 = sphi 0, %s97
      %s117 = sphi 0, %s119
      %s120 = sphi 0, %s117
      %s121 = sphi 0, %s120
      %s137 = sphi 0, %s121
    $region4: #{distill_model_forward.7} parent=1 // loop_header_branch
      %21 = sbr.rel (%p19) target = $region8
    $region5: #{distill_model_forward.7} parent=1 // loop_body
      %s23 = ssub.s32 %s18, 1
      %s24 = ssub.s32 %s18, 2
      %s25 = sadd.s32 %s18, 1
      %s26 = ssub.s32 %s18, %s25
      %p27 = scmp.eq.s32.totalorder %s26, 0
      %s29 = sadd.s32 %s28, 1
      %s30 = scalar_select %p27, %s28, %s29
      %p33 = pneg %p27
      %p34 = scmp.eq.s32.totalorder %s18, 1
      %p35 = por %p33, %p34
      %p36 = scmp.ne.s32.totalorder %s28, %s31
      %p37 = scmp.eq.s32.totalorder %s18, 0
      %p38 = por %p36, %p37
      %p39 = scmp.ne.s32.totalorder %s28, %s31
      %p40 = scmp.eq.s32.totalorder %s23, 1
      %p41 = por %p39, %p40
      %p42 = scmp.ne.s32.totalorder %s31, %s32
      %p43 = scmp.eq.s32.totalorder %s23, 0
      %p44 = por %p42, %p43
      %p45 = scmp.ne.s32.totalorder %s31, %s32
      %p46 = scmp.eq.s32.totalorder %s24, 1
      %p47 = por %p45, %p46
      %p49 = scmp.ne.s32.totalorder %s32, %s48
      %p50 = scmp.eq.s32.totalorder %s24, 0
      %p51 = por %p49, %p50
      %s53 = sadd.s32 %s52, 1
      %p56 = scmp.eq.s32.totalorder %s18, 1
      %p57 = scmp.ne.s32.totalorder %s52, %s54
      %p58 = scmp.eq.s32.totalorder %s18, 0
      %p59 = por %p57, %p58
      %p60 = scmp.ne.s32.totalorder %s52, %s54
      %p61 = scmp.eq.s32.totalorder %s23, 1
      %p62 = por %p60, %p61
      %p63 = scmp.ne.s32.totalorder %s54, %s55
      %p64 = scmp.eq.s32.totalorder %s23, 0
      %p65 = por %p63, %p64
      %p66 = scmp.ne.s32.totalorder %s54, %s55
      %p67 = scmp.eq.s32.totalorder %s24, 1
      %p68 = por %p66, %p67
      %p70 = scmp.ne.s32.totalorder %s55, %s69
      %p71 = scmp.eq.s32.totalorder %s24, 0
      %p72 = por %p70, %p71
      %s74 = sadd.s32 %s73, 1
      %p77 = scmp.eq.s32.totalorder %s18, 1
      %p78 = scmp.ne.s32.totalorder %s73, %s75
      %p79 = scmp.eq.s32.totalorder %s18, 0
      %p80 = por %p78, %p79
      %p81 = scmp.ne.s32.totalorder %s73, %s75
      %p82 = scmp.eq.s32.totalorder %s23, 1
      %p83 = por %p81, %p82
      %p84 = scmp.ne.s32.totalorder %s75, %s76
      %p85 = scmp.eq.s32.totalorder %s23, 0
      %p86 = por %p84, %p85
      %p87 = scmp.ne.s32.totalorder %s75, %s76
      %p88 = scmp.eq.s32.totalorder %s24, 1
      %p89 = por %p87, %p88
      %p91 = scmp.ne.s32.totalorder %s76, %s90
      %p92 = scmp.eq.s32.totalorder %s24, 0
      %p93 = por %p91, %p92
      %s95 = sadd.s32 %s94, 1
      %p98 = scmp.eq.s32.totalorder %s18, 1
      %p99 = scmp.ne.s32.totalorder %s94, %s96
      %p100 = scmp.eq.s32.totalorder %s18, 0
      %p101 = por %p99, %p100
      %p102 = scmp.ne.s32.totalorder %s94, %s96
      %p103 = scmp.eq.s32.totalorder %s23, 1
      %p104 = por %p102, %p103
      %p105 = scmp.ne.s32.totalorder %s96, %s97
      %p106 = scmp.eq.s32.totalorder %s23, 0
      %p107 = por %p105, %p106
      %p108 = scmp.ne.s32.totalorder %s96, %s97
      %p109 = scmp.eq.s32.totalorder %s24, 1
      %p110 = por %p108, %p109
      %p112 = scmp.ne.s32.totalorder %s97, %s111
      %p113 = scmp.eq.s32.totalorder %s24, 0
      %p114 = por %p112, %p113
      %s115 = ssub.s32 %s18, %s25
      %p116 = scmp.eq.s32.totalorder %s115, 0
      %s118 = sadd.s32 %s117, 1
      %s119 = scalar_select %p116, %s117, %s118
      %p122 = pneg %p116
      %p123 = scmp.eq.s32.totalorder %s18, 1
      %p124 = por %p122, %p123
      %p125 = scmp.ne.s32.totalorder %s117, %s120
      %p126 = scmp.eq.s32.totalorder %s18, 0
      %p127 = por %p125, %p126
      %p128 = scmp.ne.s32.totalorder %s117, %s120
      %p129 = scmp.eq.s32.totalorder %s23, 1
      %p130 = por %p128, %p129
      %p131 = scmp.ne.s32.totalorder %s120, %s121
      %p132 = scmp.eq.s32.totalorder %s23, 0
      %p133 = por %p131, %p132
      %p134 = scmp.ne.s32.totalorder %s120, %s121
      %p135 = scmp.eq.s32.totalorder %s24, 1
      %p136 = por %p134, %p135
      %p138 = scmp.ne.s32.totalorder %s121, %s137
      %p139 = scmp.eq.s32.totalorder %s24, 0
      %p140 = por %p138, %p139
      %p141 = scmp.le.s32.totalorder 1, %s18
      %p142 = scmp.lt.s32.totalorder %s18, 3
      %p143 = pnand %p141, %p142
      %p144 = pneg %p143
      // Predicated region
      $region9: #{distill_model_forward.7} parent=5 // pred_check
        _
      $region10: #{distill_model_forward.7} parent=5 // pred_check_branch
        %146 = sbr.rel (%p143) target = $region12
      $region11: #{distill_model_forward.7} parent=5 // pred_region
        %s147 = ssub.s32 %s18, 1
        // Predicated region
        $region13: #{distill_model_forward.7} parent=11 // pred_check
          %p148 = pneg %p65
        $region14: #{distill_model_forward.7} parent=11 // pred_check_branch
          %150 = sbr.rel (%p148) target = $region16
        $region15: #{distill_model_forward.7} parent=11 // pred_region
          %s152 = ssub.s32 16, 16
          %153 = vsyncadd [#allocation6], %s152
          %s155 = sshll.u32 [#allocation5], 4
          %s156 = int_to_ptr.vmem [resolvable:$true] %s155
          %158 = dma.hbm_to_vmem [thread:$0]  %s1, 16, %s156, [#allocation6]
        $region16: #{distill_model_forward.7} parent=11 // pred_fallthru
          _
        // Predicated region
        $region17: #{distill_model_forward.7} parent=11 // pred_check
          %p159 = pneg %p86
        $region18: #{distill_model_forward.7} parent=11 // pred_check_branch
          %161 = sbr.rel (%p159) target = $region20
        $region19: #{distill_model_forward.7} parent=11 // pred_region
          %s163 = ssub.s32 576, 576
          %164 = vsyncadd [#allocation6], %s163
          %s165 = sshll.u32 [#allocation7], 4
          %s166 = int_to_ptr.vmem [resolvable:$true] %s165
          %171 = dma.hbm_to_vmem [thread:$0]  %s2, 576, %s166, [#allocation6], 64, 64, 4
        $region20: #{distill_model_forward.7} parent=11 // pred_fallthru
          _
        // Predicated region
        $region21: #{distill_model_forward.7} parent=11 // pred_check
          %p172 = pneg %p107
        $region22: #{distill_model_forward.7} parent=11 // pred_check_branch
          %174 = sbr.rel (%p172) target = $region24
        $region23: #{distill_model_forward.7} parent=11 // pred_region
          %s176 = ssub.s32 128, 128
          %177 = vsyncadd [#allocation9], %s176
          %s179 = sshll.u32 [#allocation8], 4
          %s180 = int_to_ptr.vmem [resolvable:$true] %s179
          %182 = dma.hbm_to_vmem [thread:$0]  %s3, 128, %s180, [#allocation9]
        $region24: #{distill_model_forward.7} parent=11 // pred_fallthru
          _
      $region12: #{distill_model_forward.7} parent=5 // pred_fallthru
        _
      %p183 = scmp.lt.s32.totalorder %s18, 2
      // Predicated region
      $region25: #{distill_model_forward.7} parent=5 // pred_check
        %p184 = pneg %p183
      $region26: #{distill_model_forward.7} parent=5 // pred_check_branch
        %186 = sbr.rel (%p184) target = $region28
      $region27: #{distill_model_forward.7} parent=5 // pred_region
        // Predicated region
        $region29: #{distill_model_forward.7} parent=27 // pred_check
          %p187 = pneg %p38
        $region30: #{distill_model_forward.7} parent=27 // pred_check_branch
          %189 = sbr.rel (%p187) target = $region32
        $region31: #{distill_model_forward.7} parent=27 // pred_region
          %s190 = sand.u32 %s28, 1
          %s191 = scalar_lea.sflag [#allocation3], %s190
          %s192 = sand.u32 %s28, 1
          %s193 = smul.addr %s192, 8
          %s194 = scalar_lea.vmem [#allocation2], %s193
          %s196 = ssub.s32 128, 128
          %197 = vsyncadd %s191, %s196
          %s198 = smul.addr %s18, 2
          %s199 = smul.addr %s198, 64
          %s200 = scalar_lea.hbm %s0, %s199
          %s201 = sshll.u32 %s194, 4
          %s202 = int_to_ptr.vmem [resolvable:$true] %s201
          %207 = dma.hbm_to_vmem [thread:$0]  %s200, 128, %s202, %s191, 64, 64, 4
        $region32: #{distill_model_forward.7} parent=27 // pred_fallthru
          _
      $region28: #{distill_model_forward.7} parent=5 // pred_fallthru
        _
      %p208 = scmp.le.s32.totalorder 1, %s18
      %p209 = scmp.lt.s32.totalorder %s18, 3
      %p210 = pnand %p208, %p209
      %p211 = pneg %p210
      // Predicated region
      $region33: #{distill_model_forward.7} parent=5 // pred_check
        _
      $region34: #{distill_model_forward.7} parent=5 // pred_check_branch
        %213 = sbr.rel (%p210) target = $region36
      $region35: #{distill_model_forward.7} parent=5 // pred_region
        %s214 = ssub.s32 %s18, 1
        %s215 = sand.u32 %s31, 1
        %s216 = scalar_lea.sflag [#allocation3], %s215
        %s217 = sand.u32 %s31, 1
        %s218 = smul.addr %s217, 8
        %s219 = scalar_lea.vmem [#allocation2], %s218
        // Predicated region
        $region37: #{distill_model_forward.7} parent=35 // pred_check
          %p220 = pneg %p44
        $region38: #{distill_model_forward.7} parent=35 // pred_check_branch
          %222 = sbr.rel (%p220) target = $region40
        $region39: #{distill_model_forward.7} parent=35 // pred_region
          %223 = dma.done %s216, 128
        $region40: #{distill_model_forward.7} parent=35 // pred_fallthru
          _
        // Predicated region
        $region41: #{distill_model_forward.7} parent=35 // pred_check
          %p224 = pneg %p65
        $region42: #{distill_model_forward.7} parent=35 // pred_check_branch
          %226 = sbr.rel (%p224) target = $region44
        $region43: #{distill_model_forward.7} parent=35 // pred_region
          %227 = dma.done [#allocation6], 16
        $region44: #{distill_model_forward.7} parent=35 // pred_fallthru
          _
        // Predicated region
        $region45: #{distill_model_forward.7} parent=35 // pred_check
          %p228 = pneg %p86
        $region46: #{distill_model_forward.7} parent=35 // pred_check_branch
          %230 = sbr.rel (%p228) target = $region48
        $region47: #{distill_model_forward.7} parent=35 // pred_region
          %231 = dma.done [#allocation6], 576
        $region48: #{distill_model_forward.7} parent=35 // pred_fallthru
          _
        // Predicated region
        $region49: #{distill_model_forward.7} parent=35 // pred_check
          %p232 = pneg %p107
        $region50: #{distill_model_forward.7} parent=35 // pred_check_branch
          %234 = sbr.rel (%p232) target = $region52
        $region51: #{distill_model_forward.7} parent=35 // pred_region
          %235 = dma.done [#allocation9], 128
        $region52: #{distill_model_forward.7} parent=35 // pred_fallthru
          _
        %s236 = sand.u32 %s31, 1
        %s237 = scalar_lea.sflag [#allocation3], %s236
        %s238 = sand.u32 %s31, 1
        %s239 = smul.addr %s238, 8
        %s240 = scalar_lea.vmem [#allocation2], %s239
        %p241 = pneg %p44
        %p242 = pneg %p41
        %p243 = pneg %p65
        %p244 = pneg %p62
        %p245 = pneg %p86
        %p246 = pneg %p83
        %p247 = pneg %p107
        %p248 = pneg %p104
        %p249 = pneg %p133
        %p250 = pneg %p130
        %s251 = sand.u32 %s120, 1
        %s252 = scalar_lea.sflag [#allocation4], %s251
        %s253 = sand.u32 %s120, 1
        %s254 = smul.addr %s253, 4
        %s255 = scalar_lea.vmem [#allocation10], %s254
        %v257 = vld [vmem:[#allocation5] sm:$0x1]
        %v258 = vld [vmem:[%s219] sm:$0xf]
        %v259 = vld [vmem:[%s219 + $0x4] sm:$0xf]
        %v260 = vld [vmem:[#allocation7] sm:$0xf]
        %s261 = scalar_lea.vmem [#allocation7], 4
        %v262 = vld [vmem:[%s261] sm:$0xf]
        %v265 = vunpack.c.l.b16 %v258
        %v266 = vunpack.c.l.b16 %v259
        %v267 = vpack.c.b16 %v266, %v265
        %268 = vrot.lane.b32.xlu0 %v267, 127
        %v269 = vpop.permute.xlu0 %268
        %vm271 = vcmask 130048
        %v273 = vsel %vm271, %v262, 0
        %275 = vmatprep.subr.bf16.mxu0 0
        %276 = vmatpush1.bf16.msra.mxu0 %v269
        %277 = vmatprep.subr.bf16.mxu0 0
        %278 = vmatpush1.bf16.msra.mxu0 0
        %279 = vmatprep.subr.bf16.mxu0 0
        %280 = vmatpush1.bf16.msra.mxu0 0
        %281 = vmatprep.subr.bf16.mxu0 0
        %282 = vmatpush1.bf16.msra.mxu0 0
        %283 = vmatprep.subr.bf16.mxu0 0
        %284 = vmatpush1.bf16.msra.mxu0 0
        %285 = vmatprep.subr.bf16.mxu0 0
        %286 = vmatpush1.bf16.msra.mxu0 0
        %287 = vmatprep.subr.bf16.mxu0 0
        %288 = vmatpush1.bf16.msra.mxu0 0
        %289 = vmatprep.subr.bf16.mxu0 0
        %290 = vmatpush1.bf16.msra.mxu0 0
        %291 = vmatprep.subr.bf16.mxu0 0
        %292 = vmatpush1.bf16.msra.mxu0 0
        %293 = vmatprep.subr.bf16.mxu0 0
        %294 = vmatpush1.bf16.msra.mxu0 0
        %295 = vmatprep.subr.bf16.mxu0 0
        %296 = vmatpush1.bf16.msra.mxu0 0
        %297 = vmatprep.subr.bf16.mxu0 0
        %298 = vmatpush1.bf16.msra.mxu0 0
        %299 = vmatprep.subr.bf16.mxu0 0
        %300 = vmatpush1.bf16.msra.mxu0 0
        %301 = vmatprep.subr.bf16.mxu0 0
        %302 = vmatpush1.bf16.msra.mxu0 0
        %303 = vmatprep.subr.bf16.mxu0 0
        %304 = vmatpush1.bf16.msra.mxu0 0
        %305 = vmatprep.subr.bf16.mxu0 0
        %306 = vmatpush1.bf16.msra.mxu0 0
        %307 = vmatprep.mubr.bf16.mxu0 0
        %308 = vmatmul.mubr.bf16.gmra.mrb[0].mxu0 %v273
        %v309 = vpop.f32.mrb[0].mxu0
        %v310 = vadd.f32 0.0, %v309
        %v311 = vpop.f32.mrb[0].mxu0
        %v312 = vpop.f32.mrb[0].mxu0
        %v313 = vpop.f32.mrb[0].mxu0
        %314 = vdwg.mxu0
        %v317 = vsel %vm271, %v260, 0
        %319 = vmatprep.subr.bf16.mxu0 0
        %320 = vmatpush1.bf16.msra.mxu0 %v267
        %321 = vmatprep.subr.bf16.mxu0 0
        %322 = vmatpush1.bf16.msra.mxu0 0
        %323 = vmatprep.subr.bf16.mxu0 0
        %324 = vmatpush1.bf16.msra.mxu0 0
        %325 = vmatprep.subr.bf16.mxu0 0
        %326 = vmatpush1.bf16.msra.mxu0 0
        %327 = vmatprep.subr.bf16.mxu0 0
        %328 = vmatpush1.bf16.msra.mxu0 0
        %329 = vmatprep.subr.bf16.mxu0 0
        %330 = vmatpush1.bf16.msra.mxu0 0
        %331 = vmatprep.subr.bf16.mxu0 0
        %332 = vmatpush1.bf16.msra.mxu0 0
        %333 = vmatprep.subr.bf16.mxu0 0
        %334 = vmatpush1.bf16.msra.mxu0 0
        %335 = vmatprep.subr.bf16.mxu0 0
        %336 = vmatpush1.bf16.msra.mxu0 0
        %337 = vmatprep.subr.bf16.mxu0 0
        %338 = vmatpush1.bf16.msra.mxu0 0
        %339 = vmatprep.subr.bf16.mxu0 0
        %340 = vmatpush1.bf16.msra.mxu0 0
        %341 = vmatprep.subr.bf16.mxu0 0
        %342 = vmatpush1.bf16.msra.mxu0 0
        %343 = vmatprep.subr.bf16.mxu0 0
        %344 = vmatpush1.bf16.msra.mxu0 0
        %345 = vmatprep.subr.bf16.mxu0 0
        %346 = vmatpush1.bf16.msra.mxu0 0
        %347 = vmatprep.subr.bf16.mxu0 0
        %348 = vmatpush1.bf16.msra.mxu0 0
        %349 = vmatprep.subr.bf16.mxu0 0
        %350 = vmatpush1.bf16.msra.mxu0 0
        %351 = vmatprep.mubr.bf16.mxu0 0
        %352 = vmatmul.mubr.bf16.gmra.mrb[0].mxu0 %v317
        %v353 = vpop.f32.mrb[0].mxu0
        %v354 = vadd.f32 %v310, %v353
        %v355 = vpop.f32.mrb[0].mxu0
        %v356 = vpop.f32.mrb[0].mxu0
        %v357 = vpop.f32.mrb[0].mxu0
        %358 = vdwg.mxu0
        %s359 = scalar_lea.vmem [#allocation7], 8
        %v360 = vld [vmem:[%s359] sm:$0xf]
        %361 = vrot.lane.b32.xlu0 %v267, 126
        %v362 = vpop.permute.xlu0 %361
        %v365 = vsel %vm271, %v360, 0
        %367 = vmatprep.subr.bf16.mxu0 0
        %368 = vmatpush1.bf16.msra.mxu0 %v362
        %369 = vmatprep.subr.bf16.mxu0 0
        %370 = vmatpush1.bf16.msra.mxu0 0
        %371 = vmatprep.subr.bf16.mxu0 0
        %372 = vmatpush1.bf16.msra.mxu0 0
        %373 = vmatprep.subr.bf16.mxu0 0
        %374 = vmatpush1.bf16.msra.mxu0 0
        %375 = vmatprep.subr.bf16.mxu0 0
        %376 = vmatpush1.bf16.msra.mxu0 0
        %377 = vmatprep.subr.bf16.mxu0 0
        %378 = vmatpush1.bf16.msra.mxu0 0
        %379 = vmatprep.subr.bf16.mxu0 0
        %380 = vmatpush1.bf16.msra.mxu0 0
        %381 = vmatprep.subr.bf16.mxu0 0
        %382 = vmatpush1.bf16.msra.mxu0 0
        %383 = vmatprep.subr.bf16.mxu0 0
        %384 = vmatpush1.bf16.msra.mxu0 0
        %385 = vmatprep.subr.bf16.mxu0 0
        %386 = vmatpush1.bf16.msra.mxu0 0
        %387 = vmatprep.subr.bf16.mxu0 0
        %388 = vmatpush1.bf16.msra.mxu0 0
        %389 = vmatprep.subr.bf16.mxu0 0
        %390 = vmatpush1.bf16.msra.mxu0 0
        %391 = vmatprep.subr.bf16.mxu0 0
        %392 = vmatpush1.bf16.msra.mxu0 0
        %393 = vmatprep.subr.bf16.mxu0 0
        %394 = vmatpush1.bf16.msra.mxu0 0
        %395 = vmatprep.subr.bf16.mxu0 0
        %396 = vmatpush1.bf16.msra.mxu0 0
        %397 = vmatprep.subr.bf16.mxu0 0
        %398 = vmatpush1.bf16.msra.mxu0 0
        %399 = vmatprep.mubr.bf16.mxu0 0
        %400 = vmatmul.mubr.bf16.gmra.mrb[0].mxu0 %v365
        %v401 = vpop.f32.mrb[0].mxu0
        %v402 = vadd.f32 0.0, %v401
        %v403 = vpop.f32.mrb[0].mxu0
        %v404 = vpop.f32.mrb[0].mxu0
        %v405 = vpop.f32.mrb[0].mxu0
        %406 = vdwg.mxu0
        %v407 = vadd.f32 %v354, %v402
        %s408 = scalar_lea.vmem [#allocation7], 12
        %v409 = vld [vmem:[%s408] sm:$0xf]
        %410 = vrot.lane.b32.xlu0 %v267, 118
        %v411 = vpop.permute.xlu0 %410
        %v414 = vsel %vm271, %v409, 0
        %416 = vmatprep.subr.bf16.mxu0 0
        %417 = vmatpush1.bf16.msra.mxu0 %v411
        %418 = vmatprep.subr.bf16.mxu0 0
        %419 = vmatpush1.bf16.msra.mxu0 0
        %420 = vmatprep.subr.bf16.mxu0 0
        %421 = vmatpush1.bf16.msra.mxu0 0
        %422 = vmatprep.subr.bf16.mxu0 0
        %423 = vmatpush1.bf16.msra.mxu0 0
        %424 = vmatprep.subr.bf16.mxu0 0
        %425 = vmatpush1.bf16.msra.mxu0 0
        %426 = vmatprep.subr.bf16.mxu0 0
        %427 = vmatpush1.bf16.msra.mxu0 0
        %428 = vmatprep.subr.bf16.mxu0 0
        %429 = vmatpush1.bf16.msra.mxu0 0
        %430 = vmatprep.subr.bf16.mxu0 0
        %431 = vmatpush1.bf16.msra.mxu0 0
        %432 = vmatprep.subr.bf16.mxu0 0
        %433 = vmatpush1.bf16.msra.mxu0 0
        %434 = vmatprep.subr.bf16.mxu0 0
        %435 = vmatpush1.bf16.msra.mxu0 0
        %436 = vmatprep.subr.bf16.mxu0 0
        %437 = vmatpush1.bf16.msra.mxu0 0
        %438 = vmatprep.subr.bf16.mxu0 0
        %439 = vmatpush1.bf16.msra.mxu0 0
        %440 = vmatprep.subr.bf16.mxu0 0
        %441 = vmatpush1.bf16.msra.mxu0 0
        %442 = vmatprep.subr.bf16.mxu0 0
        %443 = vmatpush1.bf16.msra.mxu0 0
        %444 = vmatprep.subr.bf16.mxu0 0
        %445 = vmatpush1.bf16.msra.mxu0 0
        %446 = vmatprep.subr.bf16.mxu0 0
        %447 = vmatpush1.bf16.msra.mxu0 0
        %448 = vmatprep.mubr.bf16.mxu0 0
        %449 = vmatmul.mubr.bf16.gmra.mrb[0].mxu0 %v414
        %v450 = vpop.f32.mrb[0].mxu0
        %v451 = vadd.f32 0.0, %v450
        %v452 = vpop.f32.mrb[0].mxu0
        %v453 = vpop.f32.mrb[0].mxu0
        %v454 = vpop.f32.mrb[0].mxu0
        %455 = vdwg.mxu0
        %v456 = vadd.f32 %v407, %v451
        %s457 = scalar_lea.vmem [#allocation7], 16
        %v458 = vld [vmem:[%s457] sm:$0xf]
        %459 = vrot.lane.b32.xlu0 %v267, 117
        %v460 = vpop.permute.xlu0 %459
        %v463 = vsel %vm271, %v458, 0
        %465 = vmatprep.subr.bf16.mxu0 0
        %466 = vmatpush1.bf16.msra.mxu0 %v460
        %467 = vmatprep.subr.bf16.mxu0 0
        %468 = vmatpush1.bf16.msra.mxu0 0
        %469 = vmatprep.subr.bf16.mxu0 0
        %470 = vmatpush1.bf16.msra.mxu0 0
        %471 = vmatprep.subr.bf16.mxu0 0
        %472 = vmatpush1.bf16.msra.mxu0 0
        %473 = vmatprep.subr.bf16.mxu0 0
        %474 = vmatpush1.bf16.msra.mxu0 0
        %475 = vmatprep.subr.bf16.mxu0 0
        %476 = vmatpush1.bf16.msra.mxu0 0
        %477 = vmatprep.subr.bf16.mxu0 0
        %478 = vmatpush1.bf16.msra.mxu0 0
        %479 = vmatprep.subr.bf16.mxu0 0
        %480 = vmatpush1.bf16.msra.mxu0 0
        %481 = vmatprep.subr.bf16.mxu0 0
        %482 = vmatpush1.bf16.msra.mxu0 0
        %483 = vmatprep.subr.bf16.mxu0 0
        %484 = vmatpush1.bf16.msra.mxu0 0
        %485 = vmatprep.subr.bf16.mxu0 0
        %486 = vmatpush1.bf16.msra.mxu0 0
        %487 = vmatprep.subr.bf16.mxu0 0
        %488 = vmatpush1.bf16.msra.mxu0 0
        %489 = vmatprep.subr.bf16.mxu0 0
        %490 = vmatpush1.bf16.msra.mxu0 0
        %491 = vmatprep.subr.bf16.mxu0 0
        %492 = vmatpush1.bf16.msra.mxu0 0
        %493 = vmatprep.subr.bf16.mxu0 0
        %494 = vmatpush1.bf16.msra.mxu0 0
        %495 = vmatprep.subr.bf16.mxu0 0
        %496 = vmatpush1.bf16.msra.mxu0 0
        %497 = vmatprep.mubr.bf16.mxu0 0
        %498 = vmatmul.mubr.bf16.gmra.mrb[0].mxu0 %v463
        %v499 = vpop.f32.mrb[0].mxu0
        %v500 = vadd.f32 0.0, %v499
        %v501 = vpop.f32.mrb[0].mxu0
        %v502 = vpop.f32.mrb[0].mxu0
        %v503 = vpop.f32.mrb[0].mxu0
        %504 = vdwg.mxu0
        %v505 = vadd.f32 %v456, %v500
        %s506 = scalar_lea.vmem [#allocation7], 20
        %v507 = vld [vmem:[%s506] sm:$0xf]
        %508 = vrot.lane.b32.xlu0 %v267, 116
        %v509 = vpop.permute.xlu0 %508
        %v512 = vsel %vm271, %v507, 0
        %514 = vmatprep.subr.bf16.mxu0 0
        %515 = vmatpush1.bf16.msra.mxu0 %v509
        %516 = vmatprep.subr.bf16.mxu0 0
        %517 = vmatpush1.bf16.msra.mxu0 0
        %518 = vmatprep.subr.bf16.mxu0 0
        %519 = vmatpush1.bf16.msra.mxu0 0
        %520 = vmatprep.subr.bf16.mxu0 0
        %521 = vmatpush1.bf16.msra.mxu0 0
        %522 = vmatprep.subr.bf16.mxu0 0
        %523 = vmatpush1.bf16.msra.mxu0 0
        %524 = vmatprep.subr.bf16.mxu0 0
        %525 = vmatpush1.bf16.msra.mxu0 0
        %526 = vmatprep.subr.bf16.mxu0 0
        %527 = vmatpush1.bf16.msra.mxu0 0
        %528 = vmatprep.subr.bf16.mxu0 0
        %529 = vmatpush1.bf16.msra.mxu0 0
        %530 = vmatprep.subr.bf16.mxu0 0
        %531 = vmatpush1.bf16.msra.mxu0 0
        %532 = vmatprep.subr.bf16.mxu0 0
        %533 = vmatpush1.bf16.msra.mxu0 0
        %534 = vmatprep.subr.bf16.mxu0 0
        %535 = vmatpush1.bf16.msra.mxu0 0
        %536 = vmatprep.subr.bf16.mxu0 0
        %537 = vmatpush1.bf16.msra.mxu0 0
        %538 = vmatprep.subr.bf16.mxu0 0
        %539 = vmatpush1.bf16.msra.mxu0 0
        %540 = vmatprep.subr.bf16.mxu0 0
        %541 = vmatpush1.bf16.msra.mxu0 0
        %542 = vmatprep.subr.bf16.mxu0 0
        %543 = vmatpush1.bf16.msra.mxu0 0
        %544 = vmatprep.subr.bf16.mxu0 0
        %545 = vmatpush1.bf16.msra.mxu0 0
        %546 = vmatprep.mubr.bf16.mxu0 0
        %547 = vmatmul.mubr.bf16.gmra.mrb[0].mxu0 %v512
        %v548 = vpop.f32.mrb[0].mxu0
        %v549 = vadd.f32 0.0, %v548
        %v550 = vpop.f32.mrb[0].mxu0
        %v551 = vpop.f32.mrb[0].mxu0
        %v552 = vpop.f32.mrb[0].mxu0
        %553 = vdwg.mxu0
        %v554 = vadd.f32 %v505, %v549
        %s555 = scalar_lea.vmem [#allocation7], 24
        %v556 = vld [vmem:[%s555] sm:$0xf]
        %557 = vrot.lane.b32.xlu0 %v267, 108
        %v558 = vpop.permute.xlu0 %557
        %v561 = vsel %vm271, %v556, 0
        %563 = vmatprep.subr.bf16.mxu0 0
        %564 = vmatpush1.bf16.msra.mxu0 %v558
        %565 = vmatprep.subr.bf16.mxu0 0
        %566 = vmatpush1.bf16.msra.mxu0 0
        %567 = vmatprep.subr.bf16.mxu0 0
        %568 = vmatpush1.bf16.msra.mxu0 0
        %569 = vmatprep.subr.bf16.mxu0 0
        %570 = vmatpush1.bf16.msra.mxu0 0
        %571 = vmatprep.subr.bf16.mxu0 0
        %572 = vmatpush1.bf16.msra.mxu0 0
        %573 = vmatprep.subr.bf16.mxu0 0
        %574 = vmatpush1.bf16.msra.mxu0 0
        %575 = vmatprep.subr.bf16.mxu0 0
        %576 = vmatpush1.bf16.msra.mxu0 0
        %577 = vmatprep.subr.bf16.mxu0 0
        %578 = vmatpush1.bf16.msra.mxu0 0
        %579 = vmatprep.subr.bf16.mxu0 0
        %580 = vmatpush1.bf16.msra.mxu0 0
        %581 = vmatprep.subr.bf16.mxu0 0
        %582 = vmatpush1.bf16.msra.mxu0 0
        %583 = vmatprep.subr.bf16.mxu0 0
        %584 = vmatpush1.bf16.msra.mxu0 0
        %585 = vmatprep.subr.bf16.mxu0 0
        %586 = vmatpush1.bf16.msra.mxu0 0
        %587 = vmatprep.subr.bf16.mxu0 0
        %588 = vmatpush1.bf16.msra.mxu0 0
        %589 = vmatprep.subr.bf16.mxu0 0
        %590 = vmatpush1.bf16.msra.mxu0 0
        %591 = vmatprep.subr.bf16.mxu0 0
        %592 = vmatpush1.bf16.msra.mxu0 0
        %593 = vmatprep.subr.bf16.mxu0 0
        %594 = vmatpush1.bf16.msra.mxu0 0
        %595 = vmatprep.mubr.bf16.mxu0 0
        %596 = vmatmul.mubr.bf16.gmra.mrb[0].mxu0 %v561
        %v597 = vpop.f32.mrb[0].mxu0
        %v598 = vadd.f32 0.0, %v597
        %v599 = vpop.f32.mrb[0].mxu0
        %v600 = vpop.f32.mrb[0].mxu0
        %v601 = vpop.f32.mrb[0].mxu0
        %602 = vdwg.mxu0
        %v603 = vadd.f32 %v554, %v598
        %s604 = scalar_lea.vmem [#allocation7], 28
        %v605 = vld [vmem:[%s604] sm:$0xf]
        %606 = vrot.lane.b32.xlu0 %v267, 107
        %v607 = vpop.permute.xlu0 %606
        %v610 = vsel %vm271, %v605, 0
        %612 = vmatprep.subr.bf16.mxu0 0
        %613 = vmatpush1.bf16.msra.mxu0 %v607
        %614 = vmatprep.subr.bf16.mxu0 0
        %615 = vmatpush1.bf16.msra.mxu0 0
        %616 = vmatprep.subr.bf16.mxu0 0
        %617 = vmatpush1.bf16.msra.mxu0 0
        %618 = vmatprep.subr.bf16.mxu0 0
        %619 = vmatpush1.bf16.msra.mxu0 0
        %620 = vmatprep.subr.bf16.mxu0 0
        %621 = vmatpush1.bf16.msra.mxu0 0
        %622 = vmatprep.subr.bf16.mxu0 0
        %623 = vmatpush1.bf16.msra.mxu0 0
        %624 = vmatprep.subr.bf16.mxu0 0
        %625 = vmatpush1.bf16.msra.mxu0 0
        %626 = vmatprep.subr.bf16.mxu0 0
        %627 = vmatpush1.bf16.msra.mxu0 0
        %628 = vmatprep.subr.bf16.mxu0 0
        %629 = vmatpush1.bf16.msra.mxu0 0
        %630 = vmatprep.subr.bf16.mxu0 0
        %631 = vmatpush1.bf16.msra.mxu0 0
        %632 = vmatprep.subr.bf16.mxu0 0
        %633 = vmatpush1.bf16.msra.mxu0 0
        %634 = vmatprep.subr.bf16.mxu0 0
        %635 = vmatpush1.bf16.msra.mxu0 0
        %636 = vmatprep.subr.bf16.mxu0 0
        %637 = vmatpush1.bf16.msra.mxu0 0
        %638 = vmatprep.subr.bf16.mxu0 0
        %639 = vmatpush1.bf16.msra.mxu0 0
        %640 = vmatprep.subr.bf16.mxu0 0
        %641 = vmatpush1.bf16.msra.mxu0 0
        %642 = vmatprep.subr.bf16.mxu0 0
        %643 = vmatpush1.bf16.msra.mxu0 0
        %644 = vmatprep.mubr.bf16.mxu0 0
        %645 = vmatmul.mubr.bf16.gmra.mrb[0].mxu0 %v610
        %v646 = vpop.f32.mrb[0].mxu0
        %v647 = vadd.f32 0.0, %v646
        %v648 = vpop.f32.mrb[0].mxu0
        %v649 = vpop.f32.mrb[0].mxu0
        %v650 = vpop.f32.mrb[0].mxu0
        %651 = vdwg.mxu0
        %v652 = vadd.f32 %v603, %v647
        %s653 = scalar_lea.vmem [#allocation7], 32
        %v654 = vld [vmem:[%s653] sm:$0xf]
        %655 = vrot.lane.b32.xlu0 %v267, 106
        %v656 = vpop.permute.xlu0 %655
        %v659 = vsel %vm271, %v654, 0
        %661 = vmatprep.subr.bf16.mxu0 0
        %662 = vmatpush1.bf16.msra.mxu0 %v656
        %663 = vmatprep.subr.bf16.mxu0 0
        %664 = vmatpush1.bf16.msra.mxu0 0
        %665 = vmatprep.subr.bf16.mxu0 0
        %666 = vmatpush1.bf16.msra.mxu0 0
        %667 = vmatprep.subr.bf16.mxu0 0
        %668 = vmatpush1.bf16.msra.mxu0 0
        %669 = vmatprep.subr.bf16.mxu0 0
        %670 = vmatpush1.bf16.msra.mxu0 0
        %671 = vmatprep.subr.bf16.mxu0 0
        %672 = vmatpush1.bf16.msra.mxu0 0
        %673 = vmatprep.subr.bf16.mxu0 0
        %674 = vmatpush1.bf16.msra.mxu0 0
        %675 = vmatprep.subr.bf16.mxu0 0
        %676 = vmatpush1.bf16.msra.mxu0 0
        %677 = vmatprep.subr.bf16.mxu0 0
        %678 = vmatpush1.bf16.msra.mxu0 0
        %679 = vmatprep.subr.bf16.mxu0 0
        %680 = vmatpush1.bf16.msra.mxu0 0
        %681 = vmatprep.subr.bf16.mxu0 0
        %682 = vmatpush1.bf16.msra.mxu0 0
        %683 = vmatprep.subr.bf16.mxu0 0
        %684 = vmatpush1.bf16.msra.mxu0 0
        %685 = vmatprep.subr.bf16.mxu0 0
        %686 = vmatpush1.bf16.msra.mxu0 0
        %687 = vmatprep.subr.bf16.mxu0 0
        %688 = vmatpush1.bf16.msra.mxu0 0
        %689 = vmatprep.subr.bf16.mxu0 0
        %690 = vmatpush1.bf16.msra.mxu0 0
        %691 = vmatprep.subr.bf16.mxu0 0
        %692 = vmatpush1.bf16.msra.mxu0 0
        %693 = vmatprep.mubr.bf16.mxu0 0
        %694 = vmatmul.mubr.bf16.gmra.mrb[0].mxu0 %v659
        %v695 = vpop.f32.mrb[0].mxu0
        %v696 = vadd.f32 0.0, %v695
        %v697 = vpop.f32.mrb[0].mxu0
        %v698 = vpop.f32.mrb[0].mxu0
        %v699 = vpop.f32.mrb[0].mxu0
        %700 = vdwg.mxu0
        %v701 = vadd.f32 %v652, %v696
        %v702 = vld [vmem:[#allocation8] sm:$0xff]
        %704 = vset.pattern.permute.xlu0 0
        %705 = vperm.xlu0 %704, %v702
        %v706 = vpop.permute.xlu0 %705
        %v708 = vadd.f32 %v701, %v706
        %vm709 = vcmp.gt.f32.partialorder %v708, 0.0
        %v710 = vmin.f32 %v708, 0.0
        %v711 = vmul.f32 %v710, 1.442695
        %v712 = vpow.pop %v711
        %v713 = vsub.f32 %v712, 1.0
        %v714 = vsel %vm709, %v708, %v713
        %v716 = vlaneseq
        %v717 = vshrl.u32 %v716, 7
        %v718 = vsub.s32 0, %v717
        %v719 = vrot.slane %v257, %v718
        %v721 = vmul.f32 %v714, %v719
        %vm722 = vcmask 814080
        %723 = vst.msk [vmem:[%s255] sm:$0xf] %vm722, 0
        %v724 = vpack.c.bf16 %v721, %v721
        %v726 = vunpack.c.l.b16 %v724
        %v727 = vpack.c.b16 %v726, %v726
        %728 = vrot.lane.b32.xlu0 %v727, 11
        %v729 = vpop.permute.xlu0 %728
        %vm731 = vcmask 724056
        %732 = vst.msk [vmem:[%s255] sm:$0xf] %vm731, %v729
        %s733 = sand.u32 %s120, 1
        %s734 = scalar_lea.sflag [#allocation4], %s733
        %s735 = sand.u32 %s120, 1
        %s736 = smul.addr %s735, 4
        %s737 = scalar_lea.vmem [#allocation10], %s736
        // Predicated region
        $region53: #{distill_model_forward.7} parent=35 // pred_check
          %p738 = pneg %p130
        $region54: #{distill_model_forward.7} parent=35 // pred_check_branch
          %740 = sbr.rel (%p738) target = $region56
        $region55: #{distill_model_forward.7} parent=35 // pred_region
          %s742 = ssub.s32 64, 64
          %743 = vsyncadd %s734, %s742
          %s744 = smul.addr %s23, 64
          %s745 = scalar_lea.hbm %s4, %s744
          %s747 = sshll.u32 %s737, 4
          %s748 = int_to_ptr.vmem [resolvable:$true] %s747
          %750 = dma.vmem_to_hbm [thread:$0]  %s748, 64, %s745, %s734
        $region56: #{distill_model_forward.7} parent=35 // pred_fallthru
          _
      $region36: #{distill_model_forward.7} parent=5 // pred_fallthru
        _
      %p751 = scmp.le.s32.totalorder 2, %s18
      // Predicated region
      $region57: #{distill_model_forward.7} parent=5 // pred_check
        %p752 = pneg %p751
      $region58: #{distill_model_forward.7} parent=5 // pred_check_branch
        %754 = sbr.rel (%p752) target = $region60
      $region59: #{distill_model_forward.7} parent=5 // pred_region
        %s755 = ssub.s32 %s18, 2
        // Predicated region
        $region61: #{distill_model_forward.7} parent=59 // pred_check
          %p756 = pneg %p136
        $region62: #{distill_model_forward.7} parent=59 // pred_check_branch
          %758 = sbr.rel (%p756) target = $region64
        $region63: #{distill_model_forward.7} parent=59 // pred_region
          %s759 = sand.u32 %s121, 1
          %s760 = scalar_lea.sflag [#allocation4], %s759
          %s761 = sand.u32 %s121, 1
          %s762 = smul.addr %s761, 4
          %s763 = scalar_lea.vmem [#allocation10], %s762
          %764 = dma.done %s760, 64
        $region64: #{distill_model_forward.7} parent=59 // pred_fallthru
          _
      $region60: #{distill_model_forward.7} parent=5 // pred_fallthru
        _
    $region6: #{distill_model_forward.7} parent=1 // loop_footer
      %s22 = sadd.s32 1, %s18
    $region7: #{distill_model_forward.7} parent=1 // loop_footer_branch
      %17 = sbr.rel target = $region3
    $region8: #{distill_model_forward.7} parent=1 // loop_exit
      _
    %765 = vsyncpa [#allocation3], 1
    %s766 = scalar_lea.sflag [#allocation3], 1
    %767 = vsyncpa %s766, 1
    %768 = vsyncpa [#allocation6], 1
    %769 = vsyncpa [#allocation9], 1
    %770 = vsyncpa [#allocation4], 1
    %s771 = scalar_lea.sflag [#allocation4], 1
    %772 = vsyncpa %s771, 1

// kernel: distill_model_forward.9
$region0: #{distill_model_forward.9}
  #allocation0 [shape = 'u32[]', space=smem, size = 0x4, offset = 0x4, fixed_abs, tag = 'smem constant byte address 0x4 - core index']
  #allocation1 [shape = 'u32[144,128]{1,0:T(1,128)}', space=vmem, size = 0x12000, scoped, tag = 'internal scratch']
  #allocation2 [shape = 'bf16[1,8,324]{2,1,0:T(8,128)(2,1)}', space=vmem, size = 0x1800, scoped, tag = 'scratch operand']
  #allocation3 [shape = 'bf16[1,8,324]{2,1,0:T(8,128)(2,1)}', space=vmem, size = 0x1800, scoped, tag = 'scratch operand']
  %s0 = inlined_call_operand.hbm [shape: bf16[2,8,324], index: 0, kind: input, shape index: {}]
  %s1 = inlined_call_operand.hbm [shape: f32[1,286], index: 1, kind: input, shape index: {}]
  %s2 = inlined_call_operand.hbm [shape: bf16[9,8,8], index: 2, kind: input, shape index: {}]
  %s3 = inlined_call_operand.hbm [shape: f32[8,1], index: 3, kind: input, shape index: {}]
  %s4 = inlined_call_operand.hbm [shape: bf16[9,8,8], index: 4, kind: input, shape index: {}]
  %s5 = inlined_call_operand.hbm [shape: f32[8,1], index: 5, kind: input, shape index: {}]
  %s6 = inlined_call_operand.hbm [shape: bf16[9,2,8], index: 6, kind: input, shape index: {}]
  %s7 = inlined_call_operand.hbm [shape: f32[2,1], index: 7, kind: input, shape index: {}]
  %s8 = inlined_call_operand.hbm [shape: f32[2,2,324], index: 8, kind: output, shape index: {}]
  %s9 = sld [smem:[#allocation0]]
  $region97: #{distill_model_forward.9} parent=0
    _
  %s11 = ssub.s32 1, %s9
  %s12 = scalar_select 0, %s11, %s9
  $region1: #{distill_model_forward.9} parent=0
    #allocation4 [shape = 'u8[12288]{0}', space=vmem, size = 0x3000, scoped, tag = 'input window, operand 0']
    #allocation5 [shape = 's32[2]{0}', space=sflag, size = 0x8, scoped, tag = 'scoped memory for distill_model_forward.9']
    #allocation6 [shape = 's32[2]{0}', space=sflag, size = 0x8, scoped, tag = 'scoped memory for distill_model_forward.9']
    #allocation7 [shape = 'u8[1536]{0}', space=vmem, size = 0x800, scoped, tag = 'input window, operand 1, single buffered']
    #allocation8 [shape = 's32[1]{0}', space=sflag, size = 0x4, scoped, tag = 'scoped memory for distill_model_forward.9']
    #allocation9 [shape = 'u8[18432]{0}', space=vmem, size = 0x4800, scoped, tag = 'input window, operand 2, single buffered']
    #allocation10 [shape = 'u8[4096]{0}', space=vmem, size = 0x1000, scoped, tag = 'input window, operand 3, single buffered']
    #allocation11 [shape = 's32[1]{0}', space=sflag, size = 0x4, scoped, tag = 'scoped memory for distill_model_forward.9']
    #allocation12 [shape = 'u8[18432]{0}', space=vmem, size = 0x4800, scoped, tag = 'input window, operand 4, single buffered']
    #allocation13 [shape = 'u8[4096]{0}', space=vmem, size = 0x1000, scoped, tag = 'input window, operand 5, single buffered']
    #allocation14 [shape = 's32[1]{0}', space=sflag, size = 0x4, scoped, tag = 'scoped memory for distill_model_forward.9']
    #allocation15 [shape = 'u8[4608]{0}', space=vmem, size = 0x1400, scoped, tag = 'input window, operand 6, single buffered']
    #allocation16 [shape = 'u8[1024]{0}', space=vmem, size = 0x400, scoped, tag = 'input window, operand 7, single buffered']
    #allocation17 [shape = 's32[1]{0}', space=sflag, size = 0x4, scoped, tag = 'scoped memory for distill_model_forward.9']
    #allocation18 [shape = 'u8[6144]{0}', space=vmem, size = 0x1800, scoped, tag = 'output window, operand 0']
    %13 = vsyncpa [#allocation5], 0
    %s14 = scalar_lea.sflag [#allocation5], 1
    %15 = vsyncpa %s14, 0
    %16 = vsyncpa [#allocation8], 0
    %17 = vsyncpa [#allocation11], 0
    %18 = vsyncpa [#allocation14], 0
    %19 = vsyncpa [#allocation17], 0
    %20 = vsyncpa [#allocation6], 0
    %s21 = scalar_lea.sflag [#allocation6], 1
    %22 = vsyncpa %s21, 0
    loop: start=0, step=1, limit=4
    $region2: #{distill_model_forward.9} parent=1 // loop_pre_header
      _
    $region3: #{distill_model_forward.9} parent=1 // loop_header
      %s24 = sphi 0, %s28
      %p25 = scmp.ge.s32.totalorder %s24, 4
      %s34 = sphi 0, %s36
      %s37 = sphi 0, %s34
      %s38 = sphi 0, %s37
      %s54 = sphi 0, %s38
      %s58 = sphi 0, %s58
      %s60 = sphi 0, %s58
      %s61 = sphi 0, %s60
      %s75 = sphi 0, %s61
      %s79 = sphi 0, %s79
      %s81 = sphi 0, %s79
      %s82 = sphi 0, %s81
      %s96 = sphi 0, %s82
      %s100 = sphi 0, %s100
      %s102 = sphi 0, %s100
      %s103 = sphi 0, %s102
      %s117 = sphi 0, %s103
      %s121 = sphi 0, %s121
      %s123 = sphi 0, %s121
      %s124 = sphi 0, %s123
      %s138 = sphi 0, %s124
      %s142 = sphi 0, %s142
      %s144 = sphi 0, %s142
      %s145 = sphi 0, %s144
      %s159 = sphi 0, %s145
      %s163 = sphi 0, %s163
      %s165 = sphi 0, %s163
      %s166 = sphi 0, %s165
      %s180 = sphi 0, %s166
      %s184 = sphi 0, %s184
      %s186 = sphi 0, %s184
      %s187 = sphi 0, %s186
      %s201 = sphi 0, %s187
      %s207 = sphi 0, %s209
      %s210 = sphi 0, %s207
      %s211 = sphi 0, %s210
      %s227 = sphi 0, %s211
    $region4: #{distill_model_forward.9} parent=1 // loop_header_branch
      %27 = sbr.rel (%p25) target = $region8
    $region5: #{distill_model_forward.9} parent=1 // loop_body
      %s29 = ssub.s32 %s24, 1
      %s30 = ssub.s32 %s24, 2
      %s31 = sadd.s32 %s24, 1
      %s32 = ssub.s32 %s24, %s31
      %p33 = scmp.eq.s32.totalorder %s32, 0
      %s35 = sadd.s32 %s34, 1
      %s36 = scalar_select %p33, %s34, %s35
      %p39 = pneg %p33
      %p40 = scmp.eq.s32.totalorder %s24, 1
      %p41 = por %p39, %p40
      %p42 = scmp.ne.s32.totalorder %s34, %s37
      %p43 = scmp.eq.s32.totalorder %s24, 0
      %p44 = por %p42, %p43
      %p45 = scmp.ne.s32.totalorder %s34, %s37
      %p46 = scmp.eq.s32.totalorder %s29, 1
      %p47 = por %p45, %p46
      %p48 = scmp.ne.s32.totalorder %s37, %s38
      %p49 = scmp.eq.s32.totalorder %s29, 0
      %p50 = por %p48, %p49
      %p51 = scmp.ne.s32.totalorder %s37, %s38
      %p52 = scmp.eq.s32.totalorder %s30, 1
      %p53 = por %p51, %p52
      %p55 = scmp.ne.s32.totalorder %s38, %s54
      %p56 = scmp.eq.s32.totalorder %s30, 0
      %p57 = por %p55, %p56
      %s59 = sadd.s32 %s58, 1
      %p62 = scmp.eq.s32.totalorder %s24, 1
      %p63 = scmp.ne.s32.totalorder %s58, %s60
      %p64 = scmp.eq.s32.totalorder %s24, 0
      %p65 = por %p63, %p64
      %p66 = scmp.ne.s32.totalorder %s58, %s60
      %p67 = scmp.eq.s32.totalorder %s29, 1
      %p68 = por %p66, %p67
      %p69 = scmp.ne.s32.totalorder %s60, %s61
      %p70 = scmp.eq.s32.totalorder %s29, 0
      %p71 = por %p69, %p70
      %p72 = scmp.ne.s32.totalorder %s60, %s61
      %p73 = scmp.eq.s32.totalorder %s30, 1
      %p74 = por %p72, %p73
      %p76 = scmp.ne.s32.totalorder %s61, %s75
      %p77 = scmp.eq.s32.totalorder %s30, 0
      %p78 = por %p76, %p77
      %s80 = sadd.s32 %s79, 1
      %p83 = scmp.eq.s32.totalorder %s24, 1
      %p84 = scmp.ne.s32.totalorder %s79, %s81
      %p85 = scmp.eq.s32.totalorder %s24, 0
      %p86 = por %p84, %p85
      %p87 = scmp.ne.s32.totalorder %s79, %s81
      %p88 = scmp.eq.s32.totalorder %s29, 1
      %p89 = por %p87, %p88
      %p90 = scmp.ne.s32.totalorder %s81, %s82
      %p91 = scmp.eq.s32.totalorder %s29, 0
      %p92 = por %p90, %p91
      %p93 = scmp.ne.s32.totalorder %s81, %s82
      %p94 = scmp.eq.s32.totalorder %s30, 1
      %p95 = por %p93, %p94
      %p97 = scmp.ne.s32.totalorder %s82, %s96
      %p98 = scmp.eq.s32.totalorder %s30, 0
      %p99 = por %p97, %p98
      %s101 = sadd.s32 %s100, 1
      %p104 = scmp.eq.s32.totalorder %s24, 1
      %p105 = scmp.ne.s32.totalorder %s100, %s102
      %p106 = scmp.eq.s32.totalorder %s24, 0
      %p107 = por %p105, %p106
      %p108 = scmp.ne.s32.totalorder %s100, %s102
      %p109 = scmp.eq.s32.totalorder %s29, 1
      %p110 = por %p108, %p109
      %p111 = scmp.ne.s32.totalorder %s102, %s103
      %p112 = scmp.eq.s32.totalorder %s29, 0
      %p113 = por %p111, %p112
      %p114 = scmp.ne.s32.totalorder %s102, %s103
      %p115 = scmp.eq.s32.totalorder %s30, 1
      %p116 = por %p114, %p115
      %p118 = scmp.ne.s32.totalorder %s103, %s117
      %p119 = scmp.eq.s32.totalorder %s30, 0
      %p120 = por %p118, %p119
      %s122 = sadd.s32 %s121, 1
      %p125 = scmp.eq.s32.totalorder %s24, 1
      %p126 = scmp.ne.s32.totalorder %s121, %s123
      %p127 = scmp.eq.s32.totalorder %s24, 0
      %p128 = por %p126, %p127
      %p129 = scmp.ne.s32.totalorder %s121, %s123
      %p130 = scmp.eq.s32.totalorder %s29, 1
      %p131 = por %p129, %p130
      %p132 = scmp.ne.s32.totalorder %s123, %s124
      %p133 = scmp.eq.s32.totalorder %s29, 0
      %p134 = por %p132, %p133
      %p135 = scmp.ne.s32.totalorder %s123, %s124
      %p136 = scmp.eq.s32.totalorder %s30, 1
      %p137 = por %p135, %p136
      %p139 = scmp.ne.s32.totalorder %s124, %s138
      %p140 = scmp.eq.s32.totalorder %s30, 0
      %p141 = por %p139, %p140
      %s143 = sadd.s32 %s142, 1
      %p146 = scmp.eq.s32.totalorder %s24, 1
      %p147 = scmp.ne.s32.totalorder %s142, %s144
      %p148 = scmp.eq.s32.totalorder %s24, 0
      %p149 = por %p147, %p148
      %p150 = scmp.ne.s32.totalorder %s142, %s144
      %p151 = scmp.eq.s32.totalorder %s29, 1
      %p152 = por %p150, %p151
      %p153 = scmp.ne.s32.totalorder %s144, %s145
      %p154 = scmp.eq.s32.totalorder %s29, 0
      %p155 = por %p153, %p154
      %p156 = scmp.ne.s32.totalorder %s144, %s145
      %p157 = scmp.eq.s32.totalorder %s30, 1
      %p158 = por %p156, %p157
      %p160 = scmp.ne.s32.totalorder %s145, %s159
      %p161 = scmp.eq.s32.totalorder %s30, 0
      %p162 = por %p160, %p161
      %s164 = sadd.s32 %s163, 1
      %p167 = scmp.eq.s32.totalorder %s24, 1
      %p168 = scmp.ne.s32.totalorder %s163, %s165
      %p169 = scmp.eq.s32.totalorder %s24, 0
      %p170 = por %p168, %p169
      %p171 = scmp.ne.s32.totalorder %s163, %s165
      %p172 = scmp.eq.s32.totalorder %s29, 1
      %p173 = por %p171, %p172
      %p174 = scmp.ne.s32.totalorder %s165, %s166
      %p175 = scmp.eq.s32.totalorder %s29, 0
      %p176 = por %p174, %p175
      %p177 = scmp.ne.s32.totalorder %s165, %s166
      %p178 = scmp.eq.s32.totalorder %s30, 1
      %p179 = por %p177, %p178
      %p181 = scmp.ne.s32.totalorder %s166, %s180
      %p182 = scmp.eq.s32.totalorder %s30, 0
      %p183 = por %p181, %p182
      %s185 = sadd.s32 %s184, 1
      %p188 = scmp.eq.s32.totalorder %s24, 1
      %p189 = scmp.ne.s32.totalorder %s184, %s186
      %p190 = scmp.eq.s32.totalorder %s24, 0
      %p191 = por %p189, %p190
      %p192 = scmp.ne.s32.totalorder %s184, %s186
      %p193 = scmp.eq.s32.totalorder %s29, 1
      %p194 = por %p192, %p193
      %p195 = scmp.ne.s32.totalorder %s186, %s187
      %p196 = scmp.eq.s32.totalorder %s29, 0
      %p197 = por %p195, %p196
      %p198 = scmp.ne.s32.totalorder %s186, %s187
      %p199 = scmp.eq.s32.totalorder %s30, 1
      %p200 = por %p198, %p199
      %p202 = scmp.ne.s32.totalorder %s187, %s201
      %p203 = scmp.eq.s32.totalorder %s30, 0
      %p204 = por %p202, %p203
      %s205 = ssub.s32 %s24, %s31
      %p206 = scmp.eq.s32.totalorder %s205, 0
      %s208 = sadd.s32 %s207, 1
      %s209 = scalar_select %p206, %s207, %s208
      %p212 = pneg %p206
      %p213 = scmp.eq.s32.totalorder %s24, 1
      %p214 = por %p212, %p213
      %p215 = scmp.ne.s32.totalorder %s207, %s210
      %p216 = scmp.eq.s32.totalorder %s24, 0
      %p217 = por %p215, %p216
      %p218 = scmp.ne.s32.totalorder %s207, %s210
      %p219 = scmp.eq.s32.totalorder %s29, 1
      %p220 = por %p218, %p219
      %p221 = scmp.ne.s32.totalorder %s210, %s211
      %p222 = scmp.eq.s32.totalorder %s29, 0
      %p223 = por %p221, %p222
      %p224 = scmp.ne.s32.totalorder %s210, %s211
      %p225 = scmp.eq.s32.totalorder %s30, 1
      %p226 = por %p224, %p225
      %p228 = scmp.ne.s32.totalorder %s211, %s227
      %p229 = scmp.eq.s32.totalorder %s30, 0
      %p230 = por %p228, %p229
      %p231 = scmp.le.s32.totalorder 1, %s24
      %p232 = scmp.lt.s32.totalorder %s24, 3
      %p233 = pnand %p231, %p232
      %p234 = pneg %p233
      // Predicated region
      $region9: #{distill_model_forward.9} parent=5 // pred_check
        _
      $region10: #{distill_model_forward.9} parent=5 // pred_check_branch
        %236 = sbr.rel (%p233) target = $region12
      $region11: #{distill_model_forward.9} parent=5 // pred_region
        %s237 = ssub.s32 %s24, 1
        // Predicated region
        $region13: #{distill_model_forward.9} parent=11 // pred_check
          %p238 = pneg %p71
        $region14: #{distill_model_forward.9} parent=11 // pred_check_branch
          %240 = sbr.rel (%p238) target = $region16
        $region15: #{distill_model_forward.9} parent=11 // pred_region
          %s242 = ssub.s32 48, 48
          %243 = vsyncadd [#allocation8], %s242
          %s245 = sshll.u32 [#allocation7], 4
          %s246 = int_to_ptr.vmem [resolvable:$true] %s245
          %248 = dma.hbm_to_vmem [thread:$0]  %s1, 48, %s246, [#allocation8]
        $region16: #{distill_model_forward.9} parent=11 // pred_fallthru
          _
        // Predicated region
        $region17: #{distill_model_forward.9} parent=11 // pred_check
          %p249 = pneg %p92
        $region18: #{distill_model_forward.9} parent=11 // pred_check_branch
          %251 = sbr.rel (%p249) target = $region20
        $region19: #{distill_model_forward.9} parent=11 // pred_region
          %s253 = ssub.s32 576, 576
          %254 = vsyncadd [#allocation8], %s253
          %s255 = sshll.u32 [#allocation9], 4
          %s256 = int_to_ptr.vmem [resolvable:$true] %s255
          %261 = dma.hbm_to_vmem [thread:$0]  %s2, 576, %s256, [#allocation8], 64, 64, 4
        $region20: #{distill_model_forward.9} parent=11 // pred_fallthru
          _
        // Predicated region
        $region21: #{distill_model_forward.9} parent=11 // pred_check
          %p262 = pneg %p113
        $region22: #{distill_model_forward.9} parent=11 // pred_check_branch
          %264 = sbr.rel (%p262) target = $region24
        $region23: #{distill_model_forward.9} parent=11 // pred_region
          %s266 = ssub.s32 128, 128
          %267 = vsyncadd [#allocation11], %s266
          %s269 = sshll.u32 [#allocation10], 4
          %s270 = int_to_ptr.vmem [resolvable:$true] %s269
          %272 = dma.hbm_to_vmem [thread:$0]  %s3, 128, %s270, [#allocation11]
        $region24: #{distill_model_forward.9} parent=11 // pred_fallthru
          _
        // Predicated region
        $region25: #{distill_model_forward.9} parent=11 // pred_check
          %p273 = pneg %p134
        $region26: #{distill_model_forward.9} parent=11 // pred_check_branch
          %275 = sbr.rel (%p273) target = $region28
        $region27: #{distill_model_forward.9} parent=11 // pred_region
          %s277 = ssub.s32 576, 576
          %278 = vsyncadd [#allocation11], %s277
          %s279 = sshll.u32 [#allocation12], 4
          %s280 = int_to_ptr.vmem [resolvable:$true] %s279
          %285 = dma.hbm_to_vmem [thread:$0]  %s4, 576, %s280, [#allocation11], 64, 64, 4
        $region28: #{distill_model_forward.9} parent=11 // pred_fallthru
          _
        // Predicated region
        $region29: #{distill_model_forward.9} parent=11 // pred_check
          %p286 = pneg %p155
        $region30: #{distill_model_forward.9} parent=11 // pred_check_branch
          %288 = sbr.rel (%p286) target = $region32
        $region31: #{distill_model_forward.9} parent=11 // pred_region
          %s290 = ssub.s32 128, 128
          %291 = vsyncadd [#allocation14], %s290
          %s293 = sshll.u32 [#allocation13], 4
          %s294 = int_to_ptr.vmem [resolvable:$true] %s293
          %296 = dma.hbm_to_vmem [thread:$0]  %s5, 128, %s294, [#allocation14]
        $region32: #{distill_model_forward.9} parent=11 // pred_fallthru
          _
        // Predicated region
        $region33: #{distill_model_forward.9} parent=11 // pred_check
          %p297 = pneg %p176
        $region34: #{distill_model_forward.9} parent=11 // pred_check_branch
          %299 = sbr.rel (%p297) target = $region36
        $region35: #{distill_model_forward.9} parent=11 // pred_region
          %s301 = ssub.s32 144, 144
          %302 = vsyncadd [#allocation14], %s301
          %s303 = sshll.u32 [#allocation15], 4
          %s304 = int_to_ptr.vmem [resolvable:$true] %s303
          %309 = dma.hbm_to_vmem [thread:$0]  %s6, 144, %s304, [#allocation14], 16, 16, 1
        $region36: #{distill_model_forward.9} parent=11 // pred_fallthru
          _
        // Predicated region
        $region37: #{distill_model_forward.9} parent=11 // pred_check
          %p310 = pneg %p197
        $region38: #{distill_model_forward.9} parent=11 // pred_check_branch
          %312 = sbr.rel (%p310) target = $region40
        $region39: #{distill_model_forward.9} parent=11 // pred_region
          %s314 = ssub.s32 32, 32
          %315 = vsyncadd [#allocation17], %s314
          %s317 = sshll.u32 [#allocation16], 4
          %s318 = int_to_ptr.vmem [resolvable:$true] %s317
          %320 = dma.hbm_to_vmem [thread:$0]  %s7, 32, %s318, [#allocation17]
        $region40: #{distill_model_forward.9} parent=11 // pred_fallthru
          _
      $region12: #{distill_model_forward.9} parent=5 // pred_fallthru
        _
      %p321 = scmp.lt.s32.totalorder %s24, 2
      // Predicated region
      $region41: #{distill_model_forward.9} parent=5 // pred_check
        %p322 = pneg %p321
      $region42: #{distill_model_forward.9} parent=5 // pred_check_branch
        %324 = sbr.rel (%p322) target = $region44
      $region43: #{distill_model_forward.9} parent=5 // pred_region
        // Predicated region
        $region45: #{distill_model_forward.9} parent=43 // pred_check
          %p325 = pneg %p44
        $region46: #{distill_model_forward.9} parent=43 // pred_check_branch
          %327 = sbr.rel (%p325) target = $region48
        $region47: #{distill_model_forward.9} parent=43 // pred_region
          %s328 = sand.u32 %s34, 1
          %s329 = scalar_lea.sflag [#allocation5], %s328
          %s330 = sand.u32 %s34, 1
          %s331 = smul.addr %s330, 12
          %s332 = scalar_lea.vmem [#allocation4], %s331
          %s334 = ssub.s32 192, 192
          %335 = vsyncadd %s329, %s334
          %s336 = smul.addr %s24, 3
          %s337 = smul.addr %s336, 64
          %s338 = scalar_lea.hbm %s0, %s337
          %s340 = sshll.u32 %s332, 4
          %s341 = int_to_ptr.vmem [resolvable:$true] %s340
          %343 = dma.hbm_to_vmem [thread:$0]  %s338, 192, %s341, %s329
        $region48: #{distill_model_forward.9} parent=43 // pred_fallthru
          _
      $region44: #{distill_model_forward.9} parent=5 // pred_fallthru
        _
      %p344 = scmp.le.s32.totalorder 1, %s24
      %p345 = scmp.lt.s32.totalorder %s24, 3
      %p346 = pnand %p344, %p345
      %p347 = pneg %p346
      // Predicated region
      $region49: #{distill_model_forward.9} parent=5 // pred_check
        _
      $region50: #{distill_model_forward.9} parent=5 // pred_check_branch
        %349 = sbr.rel (%p346) target = $region52
      $region51: #{distill_model_forward.9} parent=5 // pred_region
        %s350 = ssub.s32 %s24, 1
        %s351 = sand.u32 %s37, 1
        %s352 = scalar_lea.sflag [#allocation5], %s351
        %s353 = sand.u32 %s37, 1
        %s354 = smul.addr %s353, 12
        %s355 = scalar_lea.vmem [#allocation4], %s354
        // Predicated region
        $region53: #{distill_model_forward.9} parent=51 // pred_check
          %p356 = pneg %p50
        $region54: #{distill_model_forward.9} parent=51 // pred_check_branch
          %358 = sbr.rel (%p356) target = $region56
        $region55: #{distill_model_forward.9} parent=51 // pred_region
          %359 = dma.done %s352, 192
        $region56: #{distill_model_forward.9} parent=51 // pred_fallthru
          _
        // Predicated region
        $region57: #{distill_model_forward.9} parent=51 // pred_check
          %p360 = pneg %p71
        $region58: #{distill_model_forward.9} parent=51 // pred_check_branch
          %362 = sbr.rel (%p360) target = $region60
        $region59: #{distill_model_forward.9} parent=51 // pred_region
          %363 = dma.done [#allocation8], 48
        $region60: #{distill_model_forward.9} parent=51 // pred_fallthru
          _
        // Predicated region
        $region61: #{distill_model_forward.9} parent=51 // pred_check
          %p364 = pneg %p92
        $region62: #{distill_model_forward.9} parent=51 // pred_check_branch
          %366 = sbr.rel (%p364) target = $region64
        $region63: #{distill_model_forward.9} parent=51 // pred_region
          %367 = dma.done [#allocation8], 576
        $region64: #{distill_model_forward.9} parent=51 // pred_fallthru
          _
        // Predicated region
        $region65: #{distill_model_forward.9} parent=51 // pred_check
          %p368 = pneg %p113
        $region66: #{distill_model_forward.9} parent=51 // pred_check_branch
          %370 = sbr.rel (%p368) target = $region68
        $region67: #{distill_model_forward.9} parent=51 // pred_region
          %371 = dma.done [#allocation11], 128
        $region68: #{distill_model_forward.9} parent=51 // pred_fallthru
          _
        // Predicated region
        $region69: #{distill_model_forward.9} parent=51 // pred_check
          %p372 = pneg %p134
        $region70: #{distill_model_forward.9} parent=51 // pred_check_branch
          %374 = sbr.rel (%p372) target = $region72
        $region71: #{distill_model_forward.9} parent=51 // pred_region
          %375 = dma.done [#allocation11], 576
        $region72: #{distill_model_forward.9} parent=51 // pred_fallthru
          _
        // Predicated region
        $region73: #{distill_model_forward.9} parent=51 // pred_check
          %p376 = pneg %p155
        $region74: #{distill_model_forward.9} parent=51 // pred_check_branch
          %378 = sbr.rel (%p376) target = $region76
        $region75: #{distill_model_forward.9} parent=51 // pred_region
          %379 = dma.done [#allocation14], 128
        $region76: #{distill_model_forward.9} parent=51 // pred_fallthru
          _
        // Predicated region
        $region77: #{distill_model_forward.9} parent=51 // pred_check
          %p380 = pneg %p176
        $region78: #{distill_model_forward.9} parent=51 // pred_check_branch
          %382 = sbr.rel (%p380) target = $region80
        $region79: #{distill_model_forward.9} parent=51 // pred_region
          %383 = dma.done [#allocation14], 144
        $region80: #{distill_model_forward.9} parent=51 // pred_fallthru
          _
        // Predicated region
        $region81: #{distill_model_forward.9} parent=51 // pred_check
          %p384 = pneg %p197
        $region82: #{distill_model_forward.9} parent=51 // pred_check_branch
          %386 = sbr.rel (%p384) target = $region84
        $region83: #{distill_model_forward.9} parent=51 // pred_region
          %387 = dma.done [#allocation17], 32
        $region84: #{distill_model_forward.9} parent=51 // pred_fallthru
          _
        %s388 = sand.u32 %s37, 1
        %s389 = scalar_lea.sflag [#allocation5], %s388
        %s390 = sand.u32 %s37, 1
        %s391 = smul.addr %s390, 12
        %s392 = scalar_lea.vmem [#allocation4], %s391
        %p393 = pneg %p50
        %p394 = pneg %p47
        %p395 = pneg %p71
        %p396 = pneg %p68
        %p397 = pneg %p92
        %p398 = pneg %p89
        %p399 = pneg %p113
        %p400 = pneg %p110
        %p401 = pneg %p134
        %p402 = pneg %p131
        %p403 = pneg %p155
        %p404 = pneg %p152
        %p405 = pneg %p176
        %p406 = pneg %p173
        %p407 = pneg %p197
        %p408 = pneg %p194
        %p409 = pneg %p223
        %p410 = pneg %p220
        %s411 = sand.u32 %s210, 1
        %s412 = scalar_lea.sflag [#allocation6], %s411
        %s413 = sand.u32 %s210, 1
        %s414 = smul.addr %s413, 6
        %s415 = scalar_lea.vmem [#allocation18], %s414
        %v417 = vld [vmem:[#allocation7] sm:$0x7]
        %v418 = vld [vmem:[%s355] sm:$0xff]
        %v419 = vld [vmem:[%s355 + $0x8] sm:$0xf]
        %v420 = vld [vmem:[#allocation9] sm:$0xf]
        %s421 = scalar_lea.vmem [#allocation9], 4
        %v422 = vld [vmem:[%s421] sm:$0xf]
        %v425 = vunpack.c.l.b16 %v418
        %v426 = vunpack.c.h.b16 %v418
        %v427 = vunpack.c.l.b16 %v419
        %v428 = vpack.c.b16 %v425, %v425
        %v429 = vpack.c.b16 %v426, %v426
        %v430 = vpack.c.b16 %v427, %v427
        %431 = vrot.lane.b32.xlu0 %v428, 127
        %v432 = vpop.permute.xlu0 %431
        %433 = vrot.lane.b32.xlu0 %v429, 127
        %v434 = vpop.permute.xlu0 %433
        %435 = vrot.lane.b32.xlu0 %v430, 127
        %v436 = vpop.permute.xlu0 %435
        %vm437 = vcmask 1039360
        %v438 = vsel %vm437, %v432, %v434
        %v439 = vsel %vm437, %v434, %v436
        %vm440 = vcmask 64512
        %v442 = vsel %vm440, %v422, 0
        %vm444 = vcmask 1043456
        %v446 = vsel %vm444, %v438, 0
        %v449 = vsel %vm444, %v439, 0
        %v452 = vsel %vm444, %v436, 0
        %454 = vmatprep.subr.bf16.mxu0 %v449
        %455 = vmatpush1.bf16.msra.mxu0 %v446
        %456 = vmatprep.subr.bf16.mxu0 0
        %457 = vmatpush1.bf16.msra.mxu0 0
        %458 = vmatprep.subr.bf16.mxu0 0
        %459 = vmatpush1.bf16.msra.mxu0 0
        %460 = vmatprep.subr.bf16.mxu0 0
        %461 = vmatpush1.bf16.msra.mxu0 0
        %462 = vmatprep.subr.bf16.mxu0 0
        %463 = vmatpush1.bf16.msra.mxu0 0
        %464 = vmatprep.subr.bf16.mxu0 0
        %465 = vmatpush1.bf16.msra.mxu0 0
        %466 = vmatprep.subr.bf16.mxu0 0
        %467 = vmatpush1.bf16.msra.mxu0 0
        %468 = vmatprep.subr.bf16.mxu0 0
        %469 = vmatpush1.bf16.msra.mxu0 0
        %470 = vmatprep.subr.bf16.mxu0 0
        %471 = vmatpush1.bf16.msra.mxu0 0
        %472 = vmatprep.subr.bf16.mxu0 0
        %473 = vmatpush1.bf16.msra.mxu0 0
        %474 = vmatprep.subr.bf16.mxu0 0
        %475 = vmatpush1.bf16.msra.mxu0 0
        %476 = vmatprep.subr.bf16.mxu0 0
        %477 = vmatpush1.bf16.msra.mxu0 0
        %478 = vmatprep.subr.bf16.mxu0 0
        %479 = vmatpush1.bf16.msra.mxu0 0
        %480 = vmatprep.subr.bf16.mxu0 0
        %481 = vmatpush1.bf16.msra.mxu0 0
        %482 = vmatprep.subr.bf16.mxu0 0
        %483 = vmatpush1.bf16.msra.mxu0 0
        %484 = vmatprep.subr.bf16.mxu0 0
        %485 = vmatpush1.bf16.msra.mxu0 0
        %486 = vmatprep.mubr.bf16.mxu0 0
        %487 = vmatmul.mubr.bf16.gmra.mrb[0].mxu0 %v442
        %v488 = vpop.f32.mrb[0].mxu0
        %v489 = vadd.f32 0.0, %v488
        %v490 = vpop.f32.mrb[0].mxu0
        %v491 = vadd.f32 0.0, %v490
        %v492 = vpop.f32.mrb[0].mxu0
        %v493 = vpop.f32.mrb[0].mxu0
        %494 = vdwg.mxu0
        %495 = vmatprep.subr.bf16.mxu0 0
        %496 = vmatpush1.bf16.msra.mxu0 %v452
        %497 = vmatprep.subr.bf16.mxu0 0
        %498 = vmatpush1.bf16.msra.mxu0 0
        %499 = vmatprep.subr.bf16.mxu0 0
        %500 = vmatpush1.bf16.msra.mxu0 0
        %501 = vmatprep.subr.bf16.mxu0 0
        %502 = vmatpush1.bf16.msra.mxu0 0
        %503 = vmatprep.subr.bf16.mxu0 0
        %504 = vmatpush1.bf16.msra.mxu0 0
        %505 = vmatprep.subr.bf16.mxu0 0
        %506 = vmatpush1.bf16.msra.mxu0 0
        %507 = vmatprep.subr.bf16.mxu0 0
        %508 = vmatpush1.bf16.msra.mxu0 0
        %509 = vmatprep.subr.bf16.mxu0 0
        %510 = vmatpush1.bf16.msra.mxu0 0
        %511 = vmatprep.subr.bf16.mxu0 0
        %512 = vmatpush1.bf16.msra.mxu0 0
        %513 = vmatprep.subr.bf16.mxu0 0
        %514 = vmatpush1.bf16.msra.mxu0 0
        %515 = vmatprep.subr.bf16.mxu0 0
        %516 = vmatpush1.bf16.msra.mxu0 0
        %517 = vmatprep.subr.bf16.mxu0 0
        %518 = vmatpush1.bf16.msra.mxu0 0
        %519 = vmatprep.subr.bf16.mxu0 0
        %520 = vmatpush1.bf16.msra.mxu0 0
        %521 = vmatprep.subr.bf16.mxu0 0
        %522 = vmatpush1.bf16.msra.mxu0 0
        %523 = vmatprep.subr.bf16.mxu0 0
        %524 = vmatpush1.bf16.msra.mxu0 0
        %525 = vmatprep.subr.bf16.mxu0 0
        %526 = vmatpush1.bf16.msra.mxu0 0
        %527 = vmatprep.mubr.bf16.mxu0 0
        %528 = vmatmul.mubr.bf16.gmra.mrb[0].mxu0 %v442
        %v529 = vpop.f32.mrb[0].mxu0
        %v530 = vadd.f32 0.0, %v529
        %v531 = vpop.f32.mrb[0].mxu0
        %v532 = vpop.f32.mrb[0].mxu0
        %v533 = vpop.f32.mrb[0].mxu0
        %534 = vdwg.mxu0
        %v536 = vsel %vm440, %v420, 0
        %v539 = vsel %vm444, %v428, 0
        %v542 = vsel %vm444, %v429, 0
        %v545 = vsel %vm444, %v430, 0
        %547 = vmatprep.subr.bf16.mxu0 %v542
        %548 = vmatpush1.bf16.msra.mxu0 %v539
        %549 = vmatprep.subr.bf16.mxu0 0
        %550 = vmatpush1.bf16.msra.mxu0 0
        %551 = vmatprep.subr.bf16.mxu0 0
        %552 = vmatpush1.bf16.msra.mxu0 0
        %553 = vmatprep.subr.bf16.mxu0 0
        %554 = vmatpush1.bf16.msra.mxu0 0
        %555 = vmatprep.subr.bf16.mxu0 0
        %556 = vmatpush1.bf16.msra.mxu0 0
        %557 = vmatprep.subr.bf16.mxu0 0
        %558 = vmatpush1.bf16.msra.mxu0 0
        %559 = vmatprep.subr.bf16.mxu0 0
        %560 = vmatpush1.bf16.msra.mxu0 0
        %561 = vmatprep.subr.bf16.mxu0 0
        %562 = vmatpush1.bf16.msra.mxu0 0
        %563 = vmatprep.subr.bf16.mxu0 0
        %564 = vmatpush1.bf16.msra.mxu0 0
        %565 = vmatprep.subr.bf16.mxu0 0
        %566 = vmatpush1.bf16.msra.mxu0 0
        %567 = vmatprep.subr.bf16.mxu0 0
        %568 = vmatpush1.bf16.msra.mxu0 0
        %569 = vmatprep.subr.bf16.mxu0 0
        %570 = vmatpush1.bf16.msra.mxu0 0
        %571 = vmatprep.subr.bf16.mxu0 0
        %572 = vmatpush1.bf16.msra.mxu0 0
        %573 = vmatprep.subr.bf16.mxu0 0
        %574 = vmatpush1.bf16.msra.mxu0 0
        %575 = vmatprep.subr.bf16.mxu0 0
        %576 = vmatpush1.bf16.msra.mxu0 0
        %577 = vmatprep.subr.bf16.mxu0 0
        %578 = vmatpush1.bf16.msra.mxu0 0
        %579 = vmatprep.mubr.bf16.mxu0 0
        %580 = vmatmul.mubr.bf16.gmra.mrb[0].mxu0 %v536
        %v581 = vpop.f32.mrb[0].mxu0
        %v582 = vadd.f32 %v489, %v581
        %v583 = vpop.f32.mrb[0].mxu0
        %v584 = vadd.f32 %v491, %v583
        %v585 = vpop.f32.mrb[0].mxu0
        %v586 = vpop.f32.mrb[0].mxu0
        %587 = vdwg.mxu0
        %588 = vmatprep.subr.bf16.mxu0 0
        %589 = vmatpush1.bf16.msra.mxu0 %v545
        %590 = vmatprep.subr.bf16.mxu0 0
        %591 = vmatpush1.bf16.msra.mxu0 0
        %592 = vmatprep.subr.bf16.mxu0 0
        %593 = vmatpush1.bf16.msra.mxu0 0
        %594 = vmatprep.subr.bf16.mxu0 0
        %595 = vmatpush1.bf16.msra.mxu0 0
        %596 = vmatprep.subr.bf16.mxu0 0
        %597 = vmatpush1.bf16.msra.mxu0 0
        %598 = vmatprep.subr.bf16.mxu0 0
        %599 = vmatpush1.bf16.msra.mxu0 0
        %600 = vmatprep.subr.bf16.mxu0 0
        %601 = vmatpush1.bf16.msra.mxu0 0
        %602 = vmatprep.subr.bf16.mxu0 0
        %603 = vmatpush1.bf16.msra.mxu0 0
        %604 = vmatprep.subr.bf16.mxu0 0
        %605 = vmatpush1.bf16.msra.mxu0 0
        %606 = vmatprep.subr.bf16.mxu0 0
        %607 = vmatpush1.bf16.msra.mxu0 0
        %608 = vmatprep.subr.bf16.mxu0 0
        %609 = vmatpush1.bf16.msra.mxu0 0
        %610 = vmatprep.subr.bf16.mxu0 0
        %611 = vmatpush1.bf16.msra.mxu0 0
        %612 = vmatprep.subr.bf16.mxu0 0
        %613 = vmatpush1.bf16.msra.mxu0 0
        %614 = vmatprep.subr.bf16.mxu0 0
        %615 = vmatpush1.bf16.msra.mxu0 0
        %616 = vmatprep.subr.bf16.mxu0 0
        %617 = vmatpush1.bf16.msra.mxu0 0
        %618 = vmatprep.subr.bf16.mxu0 0
        %619 = vmatpush1.bf16.msra.mxu0 0
        %620 = vmatprep.mubr.bf16.mxu0 0
        %621 = vmatmul.mubr.bf16.gmra.mrb[0].mxu0 %v536
        %v622 = vpop.f32.mrb[0].mxu0
        %v623 = vadd.f32 %v530, %v622
        %v624 = vpop.f32.mrb[0].mxu0
        %v625 = vpop.f32.mrb[0].mxu0
        %v626 = vpop.f32.mrb[0].mxu0
        %627 = vdwg.mxu0
        %s628 = scalar_lea.vmem [#allocation9], 8
        %v629 = vld [vmem:[%s628] sm:$0xf]
        %630 = vrot.lane.b32.xlu0 %v428, 126
        %v631 = vpop.permute.xlu0 %630
        %632 = vrot.lane.b32.xlu0 %v429, 126
        %v633 = vpop.permute.xlu0 %632
        %634 = vrot.lane.b32.xlu0 %v430, 126
        %v635 = vpop.permute.xlu0 %634
        %vm636 = vcmask 1031168
        %v637 = vsel %vm636, %v631, %v633
        %v638 = vsel %vm636, %v633, %v635
        %v640 = vsel %vm440, %v629, 0
        %v643 = vsel %vm444, %v637, 0
        %v646 = vsel %vm444, %v638, 0
        %v649 = vsel %vm444, %v635, 0
        %651 = vmatprep.subr.bf16.mxu0 %v646
        %652 = vmatpush1.bf16.msra.mxu0 %v643
        %653 = vmatprep.subr.bf16.mxu0 0
        %654 = vmatpush1.bf16.msra.mxu0 0
        %655 = vmatprep.subr.bf16.mxu0 0
        %656 = vmatpush1.bf16.msra.mxu0 0
        %657 = vmatprep.subr.bf16.mxu0 0
        %658 = vmatpush1.bf16.msra.mxu0 0
        %659 = vmatprep.subr.bf16.mxu0 0
        %660 = vmatpush1.bf16.msra.mxu0 0
        %661 = vmatprep.subr.bf16.mxu0 0
        %662 = vmatpush1.bf16.msra.mxu0 0
        %663 = vmatprep.subr.bf16.mxu0 0
        %664 = vmatpush1.bf16.msra.mxu0 0
        %665 = vmatprep.subr.bf16.mxu0 0
        %666 = vmatpush1.bf16.msra.mxu0 0
        %667 = vmatprep.subr.bf16.mxu0 0
        %668 = vmatpush1.bf16.msra.mxu0 0
        %669 = vmatprep.subr.bf16.mxu0 0
        %670 = vmatpush1.bf16.msra.mxu0 0
        %671 = vmatprep.subr.bf16.mxu0 0
        %672 = vmatpush1.bf16.msra.mxu0 0
        %673 = vmatprep.subr.bf16.mxu0 0
        %674 = vmatpush1.bf16.msra.mxu0 0
        %675 = vmatprep.subr.bf16.mxu0 0
        %676 = vmatpush1.bf16.msra.mxu0 0
        %677 = vmatprep.subr.bf16.mxu0 0
        %678 = vmatpush1.bf16.msra.mxu0 0
        %679 = vmatprep.subr.bf16.mxu0 0
        %680 = vmatpush1.bf16.msra.mxu0 0
        %681 = vmatprep.subr.bf16.mxu0 0
        %682 = vmatpush1.bf16.msra.mxu0 0
        %683 = vmatprep.mubr.bf16.mxu0 0
        %684 = vmatmul.mubr.bf16.gmra.mrb[0].mxu0 %v640
        %v685 = vpop.f32.mrb[0].mxu0
        %v686 = vadd.f32 0.0, %v685
        %v687 = vpop.f32.mrb[0].mxu0
        %v688 = vadd.f32 0.0, %v687
        %v689 = vpop.f32.mrb[0].mxu0
        %v690 = vpop.f32.mrb[0].mxu0
        %691 = vdwg.mxu0
        %692 = vmatprep.subr.bf16.mxu0 0
        %693 = vmatpush1.bf16.msra.mxu0 %v649
        %694 = vmatprep.subr.bf16.mxu0 0
        %695 = vmatpush1.bf16.msra.mxu0 0
        %696 = vmatprep.subr.bf16.mxu0 0
        %697 = vmatpush1.bf16.msra.mxu0 0
        %698 = vmatprep.subr.bf16.mxu0 0
        %699 = vmatpush1.bf16.msra.mxu0 0
        %700 = vmatprep.subr.bf16.mxu0 0
        %701 = vmatpush1.bf16.msra.mxu0 0
        %702 = vmatprep.subr.bf16.mxu0 0
        %703 = vmatpush1.bf16.msra.mxu0 0
        %704 = vmatprep.subr.bf16.mxu0 0
        %705 = vmatpush1.bf16.msra.mxu0 0
        %706 = vmatprep.subr.bf16.mxu0 0
        %707 = vmatpush1.bf16.msra.mxu0 0
        %708 = vmatprep.subr.bf16.mxu0 0
        %709 = vmatpush1.bf16.msra.mxu0 0
        %710 = vmatprep.subr.bf16.mxu0 0
        %711 = vmatpush1.bf16.msra.mxu0 0
        %712 = vmatprep.subr.bf16.mxu0 0
        %713 = vmatpush1.bf16.msra.mxu0 0
        %714 = vmatprep.subr.bf16.mxu0 0
        %715 = vmatpush1.bf16.msra.mxu0 0
        %716 = vmatprep.subr.bf16.mxu0 0
        %717 = vmatpush1.bf16.msra.mxu0 0
        %718 = vmatprep.subr.bf16.mxu0 0
        %719 = vmatpush1.bf16.msra.mxu0 0
        %720 = vmatprep.subr.bf16.mxu0 0
        %721 = vmatpush1.bf16.msra.mxu0 0
        %722 = vmatprep.subr.bf16.mxu0 0
        %723 = vmatpush1.bf16.msra.mxu0 0
        %724 = vmatprep.mubr.bf16.mxu0 0
        %725 = vmatmul.mubr.bf16.gmra.mrb[0].mxu0 %v640
        %v726 = vpop.f32.mrb[0].mxu0
        %v727 = vadd.f32 0.0, %v726
        %v728 = vpop.f32.mrb[0].mxu0
        %v729 = vpop.f32.mrb[0].mxu0
        %v730 = vpop.f32.mrb[0].mxu0
        %731 = vdwg.mxu0
        %v732 = vadd.f32 %v582, %v686
        %v733 = vadd.f32 %v584, %v688
        %v734 = vadd.f32 %v623, %v727
        %s735 = scalar_lea.vmem [#allocation9], 12
        %v736 = vld [vmem:[%s735] sm:$0xf]
        %737 = vrot.lane.b32.xlu0 %v428, 110
        %v738 = vpop.permute.xlu0 %737
        %739 = vrot.lane.b32.xlu0 %v429, 110
        %v740 = vpop.permute.xlu0 %739
        %741 = vrot.lane.b32.xlu0 %v430, 110
        %v742 = vpop.permute.xlu0 %741
        %vm743 = vcmask 900096
        %v744 = vsel %vm743, %v738, %v740
        %v745 = vsel %vm743, %v740, %v742
        %v747 = vsel %vm440, %v736, 0
        %v750 = vsel %vm444, %v744, 0
        %v753 = vsel %vm444, %v745, 0
        %v756 = vsel %vm444, %v742, 0
        %758 = vmatprep.subr.bf16.mxu0 %v753
        %759 = vmatpush1.bf16.msra.mxu0 %v750
        %760 = vmatprep.subr.bf16.mxu0 0
        %761 = vmatpush1.bf16.msra.mxu0 0
        %762 = vmatprep.subr.bf16.mxu0 0
        %763 = vmatpush1.bf16.msra.mxu0 0
        %764 = vmatprep.subr.bf16.mxu0 0
        %765 = vmatpush1.bf16.msra.mxu0 0
        %766 = vmatprep.subr.bf16.mxu0 0
        %767 = vmatpush1.bf16.msra.mxu0 0
        %768 = vmatprep.subr.bf16.mxu0 0
        %769 = vmatpush1.bf16.msra.mxu0 0
        %770 = vmatprep.subr.bf16.mxu0 0
        %771 = vmatpush1.bf16.msra.mxu0 0
        %772 = vmatprep.subr.bf16.mxu0 0
        %773 = vmatpush1.bf16.msra.mxu0 0
        %774 = vmatprep.subr.bf16.mxu0 0
        %775 = vmatpush1.bf16.msra.mxu0 0
        %776 = vmatprep.subr.bf16.mxu0 0
        %777 = vmatpush1.bf16.msra.mxu0 0
        %778 = vmatprep.subr.bf16.mxu0 0
        %779 = vmatpush1.bf16.msra.mxu0 0
        %780 = vmatprep.subr.bf16.mxu0 0
        %781 = vmatpush1.bf16.msra.mxu0 0
        %782 = vmatprep.subr.bf16.mxu0 0
        %783 = vmatpush1.bf16.msra.mxu0 0
        %784 = vmatprep.subr.bf16.mxu0 0
        %785 = vmatpush1.bf16.msra.mxu0 0
        %786 = vmatprep.subr.bf16.mxu0 0
        %787 = vmatpush1.bf16.msra.mxu0 0
        %788 = vmatprep.subr.bf16.mxu0 0
        %789 = vmatpush1.bf16.msra.mxu0 0
        %790 = vmatprep.mubr.bf16.mxu0 0
        %791 = vmatmul.mubr.bf16.gmra.mrb[0].mxu0 %v747
        %v792 = vpop.f32.mrb[0].mxu0
        %v793 = vadd.f32 0.0, %v792
        %v794 = vpop.f32.mrb[0].mxu0
        %v795 = vadd.f32 0.0, %v794
        %v796 = vpop.f32.mrb[0].mxu0
        %v797 = vpop.f32.mrb[0].mxu0
        %798 = vdwg.mxu0
        %799 = vmatprep.subr.bf16.mxu0 0
        %800 = vmatpush1.bf16.msra.mxu0 %v756
        %801 = vmatprep.subr.bf16.mxu0 0
        %802 = vmatpush1.bf16.msra.mxu0 0
        %803 = vmatprep.subr.bf16.mxu0 0
        %804 = vmatpush1.bf16.msra.mxu0 0
        %805 = vmatprep.subr.bf16.mxu0 0
        %806 = vmatpush1.bf16.msra.mxu0 0
        %807 = vmatprep.subr.bf16.mxu0 0
        %808 = vmatpush1.bf16.msra.mxu0 0
        %809 = vmatprep.subr.bf16.mxu0 0
        %810 = vmatpush1.bf16.msra.mxu0 0
        %811 = vmatprep.subr.bf16.mxu0 0
        %812 = vmatpush1.bf16.msra.mxu0 0
        %813 = vmatprep.subr.bf16.mxu0 0
        %814 = vmatpush1.bf16.msra.mxu0 0
        %815 = vmatprep.subr.bf16.mxu0 0
        %816 = vmatpush1.bf16.msra.mxu0 0
        %817 = vmatprep.subr.bf16.mxu0 0
        %818 = vmatpush1.bf16.msra.mxu0 0
        %819 = vmatprep.subr.bf16.mxu0 0
        %820 = vmatpush1.bf16.msra.mxu0 0
        %821 = vmatprep.subr.bf16.mxu0 0
        %822 = vmatpush1.bf16.msra.mxu0 0
        %823 = vmatprep.subr.bf16.mxu0 0
        %824 = vmatpush1.bf16.msra.mxu0 0
        %825 = vmatprep.subr.bf16.mxu0 0
        %826 = vmatpush1.bf16.msra.mxu0 0
        %827 = vmatprep.subr.bf16.mxu0 0
        %828 = vmatpush1.bf16.msra.mxu0 0
        %829 = vmatprep.subr.bf16.mxu0 0
        %830 = vmatpush1.bf16.msra.mxu0 0
        %831 = vmatprep.mubr.bf16.mxu0 0
        %832 = vmatmul.mubr.bf16.gmra.mrb[0].mxu0 %v747
        %v833 = vpop.f32.mrb[0].mxu0
        %v834 = vadd.f32 0.0, %v833
        %v835 = vpop.f32.mrb[0].mxu0
        %v836 = vpop.f32.mrb[0].mxu0
        %v837 = vpop.f32.mrb[0].mxu0
        %838 = vdwg.mxu0
        %v839 = vadd.f32 %v732, %v793
        %v840 = vadd.f32 %v733, %v795
        %v841 = vadd.f32 %v734, %v834
        %s842 = scalar_lea.vmem [#allocation9], 16
        %v843 = vld [vmem:[%s842] sm:$0xf]
        %844 = vrot.lane.b32.xlu0 %v428, 109
        %v845 = vpop.permute.xlu0 %844
        %846 = vrot.lane.b32.xlu0 %v429, 109
        %v847 = vpop.permute.xlu0 %846
        %848 = vrot.lane.b32.xlu0 %v430, 109
        %v849 = vpop.permute.xlu0 %848
        %vm850 = vcmask 891904
        %v851 = vsel %vm850, %v845, %v847
        %v852 = vsel %vm850, %v847, %v849
        %v854 = vsel %vm440, %v843, 0
        %v857 = vsel %vm444, %v851, 0
        %v860 = vsel %vm444, %v852, 0
        %v863 = vsel %vm444, %v849, 0
        %865 = vmatprep.subr.bf16.mxu0 %v860
        %866 = vmatpush1.bf16.msra.mxu0 %v857
        %867 = vmatprep.subr.bf16.mxu0 0
        %868 = vmatpush1.bf16.msra.mxu0 0
        %869 = vmatprep.subr.bf16.mxu0 0
        %870 = vmatpush1.bf16.msra.mxu0 0
        %871 = vmatprep.subr.bf16.mxu0 0
        %872 = vmatpush1.bf16.msra.mxu0 0
        %873 = vmatprep.subr.bf16.mxu0 0
        %874 = vmatpush1.bf16.msra.mxu0 0
        %875 = vmatprep.subr.bf16.mxu0 0
        %876 = vmatpush1.bf16.msra.mxu0 0
        %877 = vmatprep.subr.bf16.mxu0 0
        %878 = vmatpush1.bf16.msra.mxu0 0
        %879 = vmatprep.subr.bf16.mxu0 0
        %880 = vmatpush1.bf16.msra.mxu0 0
        %881 = vmatprep.subr.bf16.mxu0 0
        %882 = vmatpush1.bf16.msra.mxu0 0
        %883 = vmatprep.subr.bf16.mxu0 0
        %884 = vmatpush1.bf16.msra.mxu0 0
        %885 = vmatprep.subr.bf16.mxu0 0
        %886 = vmatpush1.bf16.msra.mxu0 0
        %887 = vmatprep.subr.bf16.mxu0 0
        %888 = vmatpush1.bf16.msra.mxu0 0
        %889 = vmatprep.subr.bf16.mxu0 0
        %890 = vmatpush1.bf16.msra.mxu0 0
        %891 = vmatprep.subr.bf16.mxu0 0
        %892 = vmatpush1.bf16.msra.mxu0 0
        %893 = vmatprep.subr.bf16.mxu0 0
        %894 = vmatpush1.bf16.msra.mxu0 0
        %895 = vmatprep.subr.bf16.mxu0 0
        %896 = vmatpush1.bf16.msra.mxu0 0
        %897 = vmatprep.mubr.bf16.mxu0 0
        %898 = vmatmul.mubr.bf16.gmra.mrb[0].mxu0 %v854
        %v899 = vpop.f32.mrb[0].mxu0
        %v900 = vadd.f32 0.0, %v899
        %v901 = vpop.f32.mrb[0].mxu0
        %v902 = vadd.f32 0.0, %v901
        %v903 = vpop.f32.mrb[0].mxu0
        %v904 = vpop.f32.mrb[0].mxu0
        %905 = vdwg.mxu0
        %906 = vmatprep.subr.bf16.mxu0 0
        %907 = vmatpush1.bf16.msra.mxu0 %v863
        %908 = vmatprep.subr.bf16.mxu0 0
        %909 = vmatpush1.bf16.msra.mxu0 0
        %910 = vmatprep.subr.bf16.mxu0 0
        %911 = vmatpush1.bf16.msra.mxu0 0
        %912 = vmatprep.subr.bf16.mxu0 0
        %913 = vmatpush1.bf16.msra.mxu0 0
        %914 = vmatprep.subr.bf16.mxu0 0
        %915 = vmatpush1.bf16.msra.mxu0 0
        %916 = vmatprep.subr.bf16.mxu0 0
        %917 = vmatpush1.bf16.msra.mxu0 0
        %918 = vmatprep.subr.bf16.mxu0 0
        %919 = vmatpush1.bf16.msra.mxu0 0
        %920 = vmatprep.subr.bf16.mxu0 0
        %921 = vmatpush1.bf16.msra.mxu0 0
        %922 = vmatprep.subr.bf16.mxu0 0
        %923 = vmatpush1.bf16.msra.mxu0 0
        %924 = vmatprep.subr.bf16.mxu0 0
        %925 = vmatpush1.bf16.msra.mxu0 0
        %926 = vmatprep.subr.bf16.mxu0 0
        %927 = vmatpush1.bf16.msra.mxu0 0
        %928 = vmatprep.subr.bf16.mxu0 0
        %929 = vmatpush1.bf16.msra.mxu0 0
        %930 = vmatprep.subr.bf16.mxu0 0
        %931 = vmatpush1.bf16.msra.mxu0 0
        %932 = vmatprep.subr.bf16.mxu0 0
        %933 = vmatpush1.bf16.msra.mxu0 0
        %934 = vmatprep.subr.bf16.mxu0 0
        %935 = vmatpush1.bf16.msra.mxu0 0
        %936 = vmatprep.subr.bf16.mxu0 0
        %937 = vmatpush1.bf16.msra.mxu0 0
        %938 = vmatprep.mubr.bf16.mxu0 0
        %939 = vmatmul.mubr.bf16.gmra.mrb[0].mxu0 %v854
        %v940 = vpop.f32.mrb[0].mxu0
        %v941 = vadd.f32 0.0, %v940
        %v942 = vpop.f32.mrb[0].mxu0
        %v943 = vpop.f32.mrb[0].mxu0
        %v944 = vpop.f32.mrb[0].mxu0
        %945 = vdwg.mxu0
        %v946 = vadd.f32 %v839, %v900
        %v947 = vadd.f32 %v840, %v902
        %v948 = vadd.f32 %v841, %v941
        %s949 = scalar_lea.vmem [#allocation9], 20
        %v950 = vld [vmem:[%s949] sm:$0xf]
        %951 = vrot.lane.b32.xlu0 %v428, 108
        %v952 = vpop.permute.xlu0 %951
        %953 = vrot.lane.b32.xlu0 %v429, 108
        %v954 = vpop.permute.xlu0 %953
        %955 = vrot.lane.b32.xlu0 %v430, 108
        %v956 = vpop.permute.xlu0 %955
        %vm957 = vcmask 883712
        %v958 = vsel %vm957, %v952, %v954
        %v959 = vsel %vm957, %v954, %v956
        %v961 = vsel %vm440, %v950, 0
        %v964 = vsel %vm444, %v958, 0
        %v967 = vsel %vm444, %v959, 0
        %v970 = vsel %vm444, %v956, 0
        %972 = vmatprep.subr.bf16.mxu0 %v967
        %973 = vmatpush1.bf16.msra.mxu0 %v964
        %974 = vmatprep.subr.bf16.mxu0 0
        %975 = vmatpush1.bf16.msra.mxu0 0
        %976 = vmatprep.subr.bf16.mxu0 0
        %977 = vmatpush1.bf16.msra.mxu0 0
        %978 = vmatprep.subr.bf16.mxu0 0
        %979 = vmatpush1.bf16.msra.mxu0 0
        %980 = vmatprep.subr.bf16.mxu0 0
        %981 = vmatpush1.bf16.msra.mxu0 0
        %982 = vmatprep.subr.bf16.mxu0 0
        %983 = vmatpush1.bf16.msra.mxu0 0
        %984 = vmatprep.subr.bf16.mxu0 0
        %985 = vmatpush1.bf16.msra.mxu0 0
        %986 = vmatprep.subr.bf16.mxu0 0
        %987 = vmatpush1.bf16.msra.mxu0 0
        %988 = vmatprep.subr.bf16.mxu0 0
        %989 = vmatpush1.bf16.msra.mxu0 0
        %990 = vmatprep.subr.bf16.mxu0 0
        %991 = vmatpush1.bf16.msra.mxu0 0
        %992 = vmatprep.subr.bf16.mxu0 0
        %993 = vmatpush1.bf16.msra.mxu0 0
        %994 = vmatprep.subr.bf16.mxu0 0
        %995 = vmatpush1.bf16.msra.mxu0 0
        %996 = vmatprep.subr.bf16.mxu0 0
        %997 = vmatpush1.bf16.msra.mxu0 0
        %998 = vmatprep.subr.bf16.mxu0 0
        %999 = vmatpush1.bf16.msra.mxu0 0
        %1000 = vmatprep.subr.bf16.mxu0 0
        %1001 = vmatpush1.bf16.msra.mxu0 0
        %1002 = vmatprep.subr.bf16.mxu0 0
        %1003 = vmatpush1.bf16.msra.mxu0 0
        %1004 = vmatprep.mubr.bf16.mxu0 0
        %1005 = vmatmul.mubr.bf16.gmra.mrb[0].mxu0 %v961
        %v1006 = vpop.f32.mrb[0].mxu0
        %v1007 = vadd.f32 0.0, %v1006
        %v1008 = vpop.f32.mrb[0].mxu0
        %v1009 = vadd.f32 0.0, %v1008
        %v1010 = vpop.f32.mrb[0].mxu0
        %v1011 = vpop.f32.mrb[0].mxu0
        %1012 = vdwg.mxu0
        %1013 = vmatprep.subr.bf16.mxu0 0
        %1014 = vmatpush1.bf16.msra.mxu0 %v970
        %1015 = vmatprep.subr.bf16.mxu0 0
        %1016 = vmatpush1.bf16.msra.mxu0 0
        %1017 = vmatprep.subr.bf16.mxu0 0
        %1018 = vmatpush1.bf16.msra.mxu0 0
        %1019 = vmatprep.subr.bf16.mxu0 0
        %1020 = vmatpush1.bf16.msra.mxu0 0
        %1021 = vmatprep.subr.bf16.mxu0 0
        %1022 = vmatpush1.bf16.msra.mxu0 0
        %1023 = vmatprep.subr.bf16.mxu0 0
        %1024 = vmatpush1.bf16.msra.mxu0 0
        %1025 = vmatprep.subr.bf16.mxu0 0
        %1026 = vmatpush1.bf16.msra.mxu0 0
        %1027 = vmatprep.subr.bf16.mxu0 0
        %1028 = vmatpush1.bf16.msra.mxu0 0
        %1029 = vmatprep.subr.bf16.mxu0 0
        %1030 = vmatpush1.bf16.msra.mxu0 0
        %1031 = vmatprep.subr.bf16.mxu0 0
        %1032 = vmatpush1.bf16.msra.mxu0 0
        %1033 = vmatprep.subr.bf16.mxu0 0
        %1034 = vmatpush1.bf16.msra.mxu0 0
        %1035 = vmatprep.subr.bf16.mxu0 0
        %1036 = vmatpush1.bf16.msra.mxu0 0
        %1037 = vmatprep.subr.bf16.mxu0 0
        %1038 = vmatpush1.bf16.msra.mxu0 0
        %1039 = vmatprep.subr.bf16.mxu0 0
        %1040 = vmatpush1.bf16.msra.mxu0 0
        %1041 = vmatprep.subr.bf16.mxu0 0
        %1042 = vmatpush1.bf16.msra.mxu0 0
        %1043 = vmatprep.subr.bf16.mxu0 0
        %1044 = vmatpush1.bf16.msra.mxu0 0
        %1045 = vmatprep.mubr.bf16.mxu0 0
        %1046 = vmatmul.mubr.bf16.gmra.mrb[0].mxu0 %v961
        %v1047 = vpop.f32.mrb[0].mxu0
        %v1048 = vadd.f32 0.0, %v1047
        %v1049 = vpop.f32.mrb[0].mxu0
        %v1050 = vpop.f32.mrb[0].mxu0
        %v1051 = vpop.f32.mrb[0].mxu0
        %1052 = vdwg.mxu0
        %v1053 = vadd.f32 %v946, %v1007
        %v1054 = vadd.f32 %v947, %v1009
        %v1055 = vadd.f32 %v948, %v1048
        %s1056 = scalar_lea.vmem [#allocation9], 24
        %v1057 = vld [vmem:[%s1056] sm:$0xf]
        %1058 = vrot.lane.b32.xlu0 %v428, 92
        %v1059 = vpop.permute.xlu0 %1058
        %1060 = vrot.lane.b32.xlu0 %v429, 92
        %v1061 = vpop.permute.xlu0 %1060
        %1062 = vrot.lane.b32.xlu0 %v430, 92
        %v1063 = vpop.permute.xlu0 %1062
        %vm1064 = vcmask 752640
        %v1065 = vsel %vm1064, %v1059, %v1061
        %v1066 = vsel %vm1064, %v1061, %v1063
        %v1068 = vsel %vm440, %v1057, 0
        %v1071 = vsel %vm444, %v1065, 0
        %v1074 = vsel %vm444, %v1066, 0
        %v1077 = vsel %vm444, %v1063, 0
        %1079 = vmatprep.subr.bf16.mxu0 %v1074
        %1080 = vmatpush1.bf16.msra.mxu0 %v1071
        %1081 = vmatprep.subr.bf16.mxu0 0
        %1082 = vmatpush1.bf16.msra.mxu0 0
        %1083 = vmatprep.subr.bf16.mxu0 0
        %1084 = vmatpush1.bf16.msra.mxu0 0
        %1085 = vmatprep.subr.bf16.mxu0 0
        %1086 = vmatpush1.bf16.msra.mxu0 0
        %1087 = vmatprep.subr.bf16.mxu0 0
        %1088 = vmatpush1.bf16.msra.mxu0 0
        %1089 = vmatprep.subr.bf16.mxu0 0
        %1090 = vmatpush1.bf16.msra.mxu0 0
        %1091 = vmatprep.subr.bf16.mxu0 0
        %1092 = vmatpush1.bf16.msra.mxu0 0
        %1093 = vmatprep.subr.bf16.mxu0 0
        %1094 = vmatpush1.bf16.msra.mxu0 0
        %1095 = vmatprep.subr.bf16.mxu0 0
        %1096 = vmatpush1.bf16.msra.mxu0 0
        %1097 = vmatprep.subr.bf16.mxu0 0
        %1098 = vmatpush1.bf16.msra.mxu0 0
        %1099 = vmatprep.subr.bf16.mxu0 0
        %1100 = vmatpush1.bf16.msra.mxu0 0
        %1101 = vmatprep.subr.bf16.mxu0 0
        %1102 = vmatpush1.bf16.msra.mxu0 0
        %1103 = vmatprep.subr.bf16.mxu0 0
        %1104 = vmatpush1.bf16.msra.mxu0 0
        %1105 = vmatprep.subr.bf16.mxu0 0
        %1106 = vmatpush1.bf16.msra.mxu0 0
        %1107 = vmatprep.subr.bf16.mxu0 0
        %1108 = vmatpush1.bf16.msra.mxu0 0
        %1109 = vmatprep.subr.bf16.mxu0 0
        %1110 = vmatpush1.bf16.msra.mxu0 0
        %1111 = vmatprep.mubr.bf16.mxu0 0
        %1112 = vmatmul.mubr.bf16.gmra.mrb[0].mxu0 %v1068
        %v1113 = vpop.f32.mrb[0].mxu0
        %v1114 = vadd.f32 0.0, %v1113
        %v1115 = vpop.f32.mrb[0].mxu0
        %v1116 = vadd.f32 0.0, %v1115
        %v1117 = vpop.f32.mrb[0].mxu0
        %v1118 = vpop.f32.mrb[0].mxu0
        %1119 = vdwg.mxu0
        %1120 = vmatprep.subr.bf16.mxu0 0
        %1121 = vmatpush1.bf16.msra.mxu0 %v1077
        %1122 = vmatprep.subr.bf16.mxu0 0
        %1123 = vmatpush1.bf16.msra.mxu0 0
        %1124 = vmatprep.subr.bf16.mxu0 0
        %1125 = vmatpush1.bf16.msra.mxu0 0
        %1126 = vmatprep.subr.bf16.mxu0 0
        %1127 = vmatpush1.bf16.msra.mxu0 0
        %1128 = vmatprep.subr.bf16.mxu0 0
        %1129 = vmatpush1.bf16.msra.mxu0 0
        %1130 = vmatprep.subr.bf16.mxu0 0
        %1131 = vmatpush1.bf16.msra.mxu0 0
        %1132 = vmatprep.subr.bf16.mxu0 0
        %1133 = vmatpush1.bf16.msra.mxu0 0
        %1134 = vmatprep.subr.bf16.mxu0 0
        %1135 = vmatpush1.bf16.msra.mxu0 0
        %1136 = vmatprep.subr.bf16.mxu0 0
        %1137 = vmatpush1.bf16.msra.mxu0 0
        %1138 = vmatprep.subr.bf16.mxu0 0
        %1139 = vmatpush1.bf16.msra.mxu0 0
        %1140 = vmatprep.subr.bf16.mxu0 0
        %1141 = vmatpush1.bf16.msra.mxu0 0
        %1142 = vmatprep.subr.bf16.mxu0 0
        %1143 = vmatpush1.bf16.msra.mxu0 0
        %1144 = vmatprep.subr.bf16.mxu0 0
        %1145 = vmatpush1.bf16.msra.mxu0 0
        %1146 = vmatprep.subr.bf16.mxu0 0
        %1147 = vmatpush1.bf16.msra.mxu0 0
        %1148 = vmatprep.subr.bf16.mxu0 0
        %1149 = vmatpush1.bf16.msra.mxu0 0
        %1150 = vmatprep.subr.bf16.mxu0 0
        %1151 = vmatpush1.bf16.msra.mxu0 0
        %1152 = vmatprep.mubr.bf16.mxu0 0
        %1153 = vmatmul.mubr.bf16.gmra.mrb[0].mxu0 %v1068
        %v1154 = vpop.f32.mrb[0].mxu0
        %v1155 = vadd.f32 0.0, %v1154
        %v1156 = vpop.f32.mrb[0].mxu0
        %v1157 = vpop.f32.mrb[0].mxu0
        %v1158 = vpop.f32.mrb[0].mxu0
        %1159 = vdwg.mxu0
        %v1160 = vadd.f32 %v1053, %v1114
        %v1161 = vadd.f32 %v1054, %v1116
        %v1162 = vadd.f32 %v1055, %v1155
        %s1163 = scalar_lea.vmem [#allocation9], 28
        %v1164 = vld [vmem:[%s1163] sm:$0xf]
        %1165 = vrot.lane.b32.xlu0 %v428, 91
        %v1166 = vpop.permute.xlu0 %1165
        %1167 = vrot.lane.b32.xlu0 %v429, 91
        %v1168 = vpop.permute.xlu0 %1167
        %1169 = vrot.lane.b32.xlu0 %v430, 91
        %v1170 = vpop.permute.xlu0 %1169
        %vm1171 = vcmask 744448
        %v1172 = vsel %vm1171, %v1166, %v1168
        %v1173 = vsel %vm1171, %v1168, %v1170
        %v1175 = vsel %vm440, %v1164, 0
        %v1178 = vsel %vm444, %v1172, 0
        %v1181 = vsel %vm444, %v1173, 0
        %v1184 = vsel %vm444, %v1170, 0
        %1186 = vmatprep.subr.bf16.mxu0 %v1181
        %1187 = vmatpush1.bf16.msra.mxu0 %v1178
        %1188 = vmatprep.subr.bf16.mxu0 0
        %1189 = vmatpush1.bf16.msra.mxu0 0
        %1190 = vmatprep.subr.bf16.mxu0 0
        %1191 = vmatpush1.bf16.msra.mxu0 0
        %1192 = vmatprep.subr.bf16.mxu0 0
        %1193 = vmatpush1.bf16.msra.mxu0 0
        %1194 = vmatprep.subr.bf16.mxu0 0
        %1195 = vmatpush1.bf16.msra.mxu0 0
        %1196 = vmatprep.subr.bf16.mxu0 0
        %1197 = vmatpush1.bf16.msra.mxu0 0
        %1198 = vmatprep.subr.bf16.mxu0 0
        %1199 = vmatpush1.bf16.msra.mxu0 0
        %1200 = vmatprep.subr.bf16.mxu0 0
        %1201 = vmatpush1.bf16.msra.mxu0 0
        %1202 = vmatprep.subr.bf16.mxu0 0
        %1203 = vmatpush1.bf16.msra.mxu0 0
        %1204 = vmatprep.subr.bf16.mxu0 0
        %1205 = vmatpush1.bf16.msra.mxu0 0
        %1206 = vmatprep.subr.bf16.mxu0 0
        %1207 = vmatpush1.bf16.msra.mxu0 0
        %1208 = vmatprep.subr.bf16.mxu0 0
        %1209 = vmatpush1.bf16.msra.mxu0 0
        %1210 = vmatprep.subr.bf16.mxu0 0
        %1211 = vmatpush1.bf16.msra.mxu0 0
        %1212 = vmatprep.subr.bf16.mxu0 0
        %1213 = vmatpush1.bf16.msra.mxu0 0
        %1214 = vmatprep.subr.bf16.mxu0 0
        %1215 = vmatpush1.bf16.msra.mxu0 0
        %1216 = vmatprep.subr.bf16.mxu0 0
        %1217 = vmatpush1.bf16.msra.mxu0 0
        %1218 = vmatprep.mubr.bf16.mxu0 0
        %1219 = vmatmul.mubr.bf16.gmra.mrb[0].mxu0 %v1175
        %v1220 = vpop.f32.mrb[0].mxu0
        %v1221 = vadd.f32 0.0, %v1220
        %v1222 = vpop.f32.mrb[0].mxu0
        %v1223 = vadd.f32 0.0, %v1222
        %v1224 = vpop.f32.mrb[0].mxu0
        %v1225 = vpop.f32.mrb[0].mxu0
        %1226 = vdwg.mxu0
        %1227 = vmatprep.subr.bf16.mxu0 0
        %1228 = vmatpush1.bf16.msra.mxu0 %v1184
        %1229 = vmatprep.subr.bf16.mxu0 0
        %1230 = vmatpush1.bf16.msra.mxu0 0
        %1231 = vmatprep.subr.bf16.mxu0 0
        %1232 = vmatpush1.bf16.msra.mxu0 0
        %1233 = vmatprep.subr.bf16.mxu0 0
        %1234 = vmatpush1.bf16.msra.mxu0 0
        %1235 = vmatprep.subr.bf16.mxu0 0
        %1236 = vmatpush1.bf16.msra.mxu0 0
        %1237 = vmatprep.subr.bf16.mxu0 0
        %1238 = vmatpush1.bf16.msra.mxu0 0
        %1239 = vmatprep.subr.bf16.mxu0 0
        %1240 = vmatpush1.bf16.msra.mxu0 0
        %1241 = vmatprep.subr.bf16.mxu0 0
        %1242 = vmatpush1.bf16.msra.mxu0 0
        %1243 = vmatprep.subr.bf16.mxu0 0
        %1244 = vmatpush1.bf16.msra.mxu0 0
        %1245 = vmatprep.subr.bf16.mxu0 0
        %1246 = vmatpush1.bf16.msra.mxu0 0
        %1247 = vmatprep.subr.bf16.mxu0 0
        %1248 = vmatpush1.bf16.msra.mxu0 0
        %1249 = vmatprep.subr.bf16.mxu0 0
        %1250 = vmatpush1.bf16.msra.mxu0 0
        %1251 = vmatprep.subr.bf16.mxu0 0
        %1252 = vmatpush1.bf16.msra.mxu0 0
        %1253 = vmatprep.subr.bf16.mxu0 0
        %1254 = vmatpush1.bf16.msra.mxu0 0
        %1255 = vmatprep.subr.bf16.mxu0 0
        %1256 = vmatpush1.bf16.msra.mxu0 0
        %1257 = vmatprep.subr.bf16.mxu0 0
        %1258 = vmatpush1.bf16.msra.mxu0 0
        %1259 = vmatprep.mubr.bf16.mxu0 0
        %1260 = vmatmul.mubr.bf16.gmra.mrb[0].mxu0 %v1175
        %v1261 = vpop.f32.mrb[0].mxu0
        %v1262 = vadd.f32 0.0, %v1261
        %v1263 = vpop.f32.mrb[0].mxu0
        %v1264 = vpop.f32.mrb[0].mxu0
        %v1265 = vpop.f32.mrb[0].mxu0
        %1266 = vdwg.mxu0
        %v1267 = vadd.f32 %v1160, %v1221
        %v1268 = vadd.f32 %v1161, %v1223
        %v1269 = vadd.f32 %v1162, %v1262
        %s1270 = scalar_lea.vmem [#allocation9], 32
        %v1271 = vld [vmem:[%s1270] sm:$0xf]
        %1272 = vrot.lane.b32.xlu0 %v428, 90
        %v1273 = vpop.permute.xlu0 %1272
        %1274 = vrot.lane.b32.xlu0 %v429, 90
        %v1275 = vpop.permute.xlu0 %1274
        %1276 = vrot.lane.b32.xlu0 %v430, 90
        %v1277 = vpop.permute.xlu0 %1276
        %vm1278 = vcmask 736256
        %v1279 = vsel %vm1278, %v1273, %v1275
        %v1280 = vsel %vm1278, %v1275, %v1277
        %v1282 = vsel %vm440, %v1271, 0
        %v1285 = vsel %vm444, %v1279, 0
        %v1288 = vsel %vm444, %v1280, 0
        %v1291 = vsel %vm444, %v1277, 0
        %1293 = vmatprep.subr.bf16.mxu0 %v1288
        %1294 = vmatpush1.bf16.msra.mxu0 %v1285
        %1295 = vmatprep.subr.bf16.mxu0 0
        %1296 = vmatpush1.bf16.msra.mxu0 0
        %1297 = vmatprep.subr.bf16.mxu0 0
        %1298 = vmatpush1.bf16.msra.mxu0 0
        %1299 = vmatprep.subr.bf16.mxu0 0
        %1300 = vmatpush1.bf16.msra.mxu0 0
        %1301 = vmatprep.subr.bf16.mxu0 0
        %1302 = vmatpush1.bf16.msra.mxu0 0
        %1303 = vmatprep.subr.bf16.mxu0 0
        %1304 = vmatpush1.bf16.msra.mxu0 0
        %1305 = vmatprep.subr.bf16.mxu0 0
        %1306 = vmatpush1.bf16.msra.mxu0 0
        %1307 = vmatprep.subr.bf16.mxu0 0
        %1308 = vmatpush1.bf16.msra.mxu0 0
        %1309 = vmatprep.subr.bf16.mxu0 0
        %1310 = vmatpush1.bf16.msra.mxu0 0
        %1311 = vmatprep.subr.bf16.mxu0 0
        %1312 = vmatpush1.bf16.msra.mxu0 0
        %1313 = vmatprep.subr.bf16.mxu0 0
        %1314 = vmatpush1.bf16.msra.mxu0 0
        %1315 = vmatprep.subr.bf16.mxu0 0
        %1316 = vmatpush1.bf16.msra.mxu0 0
        %1317 = vmatprep.subr.bf16.mxu0 0
        %1318 = vmatpush1.bf16.msra.mxu0 0
        %1319 = vmatprep.subr.bf16.mxu0 0
        %1320 = vmatpush1.bf16.msra.mxu0 0
        %1321 = vmatprep.subr.bf16.mxu0 0
        %1322 = vmatpush1.bf16.msra.mxu0 0
        %1323 = vmatprep.subr.bf16.mxu0 0
        %1324 = vmatpush1.bf16.msra.mxu0 0
        %1325 = vmatprep.mubr.bf16.mxu0 0
        %1326 = vmatmul.mubr.bf16.gmra.mrb[0].mxu0 %v1282
        %v1327 = vpop.f32.mrb[0].mxu0
        %v1328 = vadd.f32 0.0, %v1327
        %v1329 = vpop.f32.mrb[0].mxu0
        %v1330 = vadd.f32 0.0, %v1329
        %v1331 = vpop.f32.mrb[0].mxu0
        %v1332 = vpop.f32.mrb[0].mxu0
        %1333 = vdwg.mxu0
        %1334 = vmatprep.subr.bf16.mxu0 0
        %1335 = vmatpush1.bf16.msra.mxu0 %v1291
        %1336 = vmatprep.subr.bf16.mxu0 0
        %1337 = vmatpush1.bf16.msra.mxu0 0
        %1338 = vmatprep.subr.bf16.mxu0 0
        %1339 = vmatpush1.bf16.msra.mxu0 0
        %1340 = vmatprep.subr.bf16.mxu0 0
        %1341 = vmatpush1.bf16.msra.mxu0 0
        %1342 = vmatprep.subr.bf16.mxu0 0
        %1343 = vmatpush1.bf16.msra.mxu0 0
        %1344 = vmatprep.subr.bf16.mxu0 0
        %1345 = vmatpush1.bf16.msra.mxu0 0
        %1346 = vmatprep.subr.bf16.mxu0 0
        %1347 = vmatpush1.bf16.msra.mxu0 0
        %1348 = vmatprep.subr.bf16.mxu0 0
        %1349 = vmatpush1.bf16.msra.mxu0 0
        %1350 = vmatprep.subr.bf16.mxu0 0
        %1351 = vmatpush1.bf16.msra.mxu0 0
        %1352 = vmatprep.subr.bf16.mxu0 0
        %1353 = vmatpush1.bf16.msra.mxu0 0
        %1354 = vmatprep.subr.bf16.mxu0 0
        %1355 = vmatpush1.bf16.msra.mxu0 0
        %1356 = vmatprep.subr.bf16.mxu0 0
        %1357 = vmatpush1.bf16.msra.mxu0 0
        %1358 = vmatprep.subr.bf16.mxu0 0
        %1359 = vmatpush1.bf16.msra.mxu0 0
        %1360 = vmatprep.subr.bf16.mxu0 0
        %1361 = vmatpush1.bf16.msra.mxu0 0
        %1362 = vmatprep.subr.bf16.mxu0 0
        %1363 = vmatpush1.bf16.msra.mxu0 0
        %1364 = vmatprep.subr.bf16.mxu0 0
        %1365 = vmatpush1.bf16.msra.mxu0 0
        %1366 = vmatprep.mubr.bf16.mxu0 0
        %1367 = vmatmul.mubr.bf16.gmra.mrb[0].mxu0 %v1282
        %v1368 = vpop.f32.mrb[0].mxu0
        %v1369 = vadd.f32 0.0, %v1368
        %v1370 = vpop.f32.mrb[0].mxu0
        %v1371 = vpop.f32.mrb[0].mxu0
        %v1372 = vpop.f32.mrb[0].mxu0
        %1373 = vdwg.mxu0
        %v1374 = vadd.f32 %v1267, %v1328
        %v1375 = vadd.f32 %v1268, %v1330
        %v1376 = vadd.f32 %v1269, %v1369
        %v1377 = vld [vmem:[#allocation10] sm:$0xff]
        %1379 = vset.pattern.permute.xlu0 0
        %1380 = vperm.xlu0 %1379, %v1377
        %v1381 = vpop.permute.xlu0 %1380
        %v1383 = vadd.f32 %v1374, %v1381
        %v1384 = vadd.f32 %v1375, %v1381
        %v1385 = vadd.f32 %v1376, %v1381
        %vm1386 = vcmp.gt.f32.partialorder %v1383, 0.0
        %vm1387 = vcmp.gt.f32.partialorder %v1384, 0.0
        %vm1388 = vcmp.gt.f32.partialorder %v1385, 0.0
        %v1389 = vmin.f32 %v1383, 0.0
        %v1390 = vmin.f32 %v1384, 0.0
        %v1391 = vmin.f32 %v1385, 0.0
        %v1392 = vmul.f32 %v1389, 1.442695
        %v1393 = vpow.pop %v1392
        %v1394 = vmul.f32 %v1390, 1.442695
        %v1395 = vpow.pop %v1394
        %v1396 = vmul.f32 %v1391, 1.442695
        %v1397 = vpow.pop %v1396
        %v1398 = vsub.f32 %v1393, 1.0
        %v1399 = vsub.f32 %v1395, 1.0
        %v1400 = vsub.f32 %v1397, 1.0
        %v1401 = vsel %vm1386, %v1383, %v1398
        %v1402 = vsel %vm1387, %v1384, %v1399
        %v1403 = vsel %vm1388, %v1385, %v1400
        %v1405 = vlaneseq
        %v1406 = vshrl.u32 %v1405, 7
        %v1407 = vsub.s32 0, %v1406
        %v1408 = vrot.slane %v417, %v1407
        %v1409 = vlaneseq
        %v1410 = vshrl.u32 %v1409, 7
        %v1411 = vsub.s32 1, %v1410
        %v1412 = vrot.slane %v417, %v1411
        %v1413 = vlaneseq
        %v1414 = vshrl.u32 %v1413, 7
        %v1415 = vsub.s32 2, %v1414
        %v1416 = vrot.slane %v417, %v1415
        %v1420 = vmul.f32 %v1401, %v1408
        %v1421 = vmul.f32 %v1402, %v1412
        %v1422 = vmul.f32 %v1403, %v1416
        %1423 = vst [vmem:[#allocation2] sm:$0xff] 0
        %vm1424 = vcmask 551936
        %1425 = vst.msk [vmem:[#allocation2 + $0x8] sm:$0xf] %vm1424, 0
        %v1426 = vpack.c.bf16 %v1420, %v1420
        %v1427 = vpack.c.bf16 %v1421, %v1421
        %v1428 = vpack.c.bf16 %v1422, %v1422
        %v1432 = vunpack.c.l.b16 %v1426
        %v1433 = vunpack.c.l.b16 %v1427
        %v1434 = vunpack.c.l.b16 %v1428
        %v1435 = vpack.c.b16 %v1433, %v1432
        %v1436 = vpack.c.b16 %v1434, %v1434
        %1437 = vrot.lane.b32.xlu0 %v1435, 19
        %v1438 = vpop.permute.xlu0 %1437
        %1439 = vrot.lane.b32.xlu0 %v1436, 19
        %v1440 = vpop.permute.xlu0 %1439
        %v1441 = vrot.slane %v1438, 4
        %vm1442 = vcmask 154624
        %v1443 = vsel %vm1442, %v1441, %v1438
        %v1444 = vsel %vm1442, %v1441, %v1440
        %vm1447 = vcmask 1043608
        %vm1448 = vcmask 1047556
        %vm1449 = vmor %vm1448, %vm1447
        %1450 = vst.msk [vmem:[#allocation2] sm:$0xff] %vm1449, %v1443
        %vm1451 = vcmask 396288
        %1452 = vst.msk [vmem:[#allocation2 + $0x8] sm:$0xf] %vm1451, %v1444
        %v1453 = vld [vmem:[#allocation2] sm:$0xff]
        %v1454 = vld [vmem:[#allocation2 + $0x8] sm:$0xf]
        %v1455 = vld [vmem:[#allocation12] sm:$0xf]
        %s1456 = scalar_lea.vmem [#allocation12], 4
        %v1457 = vld [vmem:[%s1456] sm:$0xf]
        %v1460 = vunpack.c.l.b16 %v1453
        %v1461 = vunpack.c.h.b16 %v1453
        %v1462 = vunpack.c.l.b16 %v1454
        %v1463 = vpack.c.b16 %v1460, %v1460
        %v1464 = vpack.c.b16 %v1461, %v1461
        %v1465 = vpack.c.b16 %v1462, %v1462
        %1466 = vrot.lane.b32.xlu0 %v1463, 127
        %v1467 = vpop.permute.xlu0 %1466
        %1468 = vrot.lane.b32.xlu0 %v1464, 127
        %v1469 = vpop.permute.xlu0 %1468
        %1470 = vrot.lane.b32.xlu0 %v1465, 127
        %v1471 = vpop.permute.xlu0 %1470
        %v1472 = vsel %vm437, %v1467, %v1469
        %v1473 = vsel %vm437, %v1469, %v1471
        %v1475 = vsel %vm440, %v1457, 0
        %v1478 = vsel %vm444, %v1472, 0
        %v1481 = vsel %vm444, %v1473, 0
        %v1484 = vsel %vm444, %v1471, 0
        %1486 = vmatprep.subr.bf16.mxu0 %v1481
        %1487 = vmatpush1.bf16.msra.mxu0 %v1478
        %1488 = vmatprep.subr.bf16.mxu0 0
        %1489 = vmatpush1.bf16.msra.mxu0 0
        %1490 = vmatprep.subr.bf16.mxu0 0
        %1491 = vmatpush1.bf16.msra.mxu0 0
        %1492 = vmatprep.subr.bf16.mxu0 0
        %1493 = vmatpush1.bf16.msra.mxu0 0
        %1494 = vmatprep.subr.bf16.mxu0 0
        %1495 = vmatpush1.bf16.msra.mxu0 0
        %1496 = vmatprep.subr.bf16.mxu0 0
        %1497 = vmatpush1.bf16.msra.mxu0 0
        %1498 = vmatprep.subr.bf16.mxu0 0
        %1499 = vmatpush1.bf16.msra.mxu0 0
        %1500 = vmatprep.subr.bf16.mxu0 0
        %1501 = vmatpush1.bf16.msra.mxu0 0
        %1502 = vmatprep.subr.bf16.mxu0 0
        %1503 = vmatpush1.bf16.msra.mxu0 0
        %1504 = vmatprep.subr.bf16.mxu0 0
        %1505 = vmatpush1.bf16.msra.mxu0 0
        %1506 = vmatprep.subr.bf16.mxu0 0
        %1507 = vmatpush1.bf16.msra.mxu0 0
        %1508 = vmatprep.subr.bf16.mxu0 0
        %1509 = vmatpush1.bf16.msra.mxu0 0
        %1510 = vmatprep.subr.bf16.mxu0 0
        %1511 = vmatpush1.bf16.msra.mxu0 0
        %1512 = vmatprep.subr.bf16.mxu0 0
        %1513 = vmatpush1.bf16.msra.mxu0 0
        %1514 = vmatprep.subr.bf16.mxu0 0
        %1515 = vmatpush1.bf16.msra.mxu0 0
        %1516 = vmatprep.subr.bf16.mxu0 0
        %1517 = vmatpush1.bf16.msra.mxu0 0
        %1518 = vmatprep.mubr.bf16.mxu0 0
        %1519 = vmatmul.mubr.bf16.gmra.mrb[0].mxu0 %v1475
        %v1520 = vpop.f32.mrb[0].mxu0
        %v1521 = vadd.f32 0.0, %v1520
        %v1522 = vpop.f32.mrb[0].mxu0
        %v1523 = vadd.f32 0.0, %v1522
        %v1524 = vpop.f32.mrb[0].mxu0
        %v1525 = vpop.f32.mrb[0].mxu0
        %1526 = vdwg.mxu0
        %1527 = vmatprep.subr.bf16.mxu0 0
        %1528 = vmatpush1.bf16.msra.mxu0 %v1484
        %1529 = vmatprep.subr.bf16.mxu0 0
        %1530 = vmatpush1.bf16.msra.mxu0 0
        %1531 = vmatprep.subr.bf16.mxu0 0
        %1532 = vmatpush1.bf16.msra.mxu0 0
        %1533 = vmatprep.subr.bf16.mxu0 0
        %1534 = vmatpush1.bf16.msra.mxu0 0
        %1535 = vmatprep.subr.bf16.mxu0 0
        %1536 = vmatpush1.bf16.msra.mxu0 0
        %1537 = vmatprep.subr.bf16.mxu0 0
        %1538 = vmatpush1.bf16.msra.mxu0 0
        %1539 = vmatprep.subr.bf16.mxu0 0
        %1540 = vmatpush1.bf16.msra.mxu0 0
        %1541 = vmatprep.subr.bf16.mxu0 0
        %1542 = vmatpush1.bf16.msra.mxu0 0
        %1543 = vmatprep.subr.bf16.mxu0 0
        %1544 = vmatpush1.bf16.msra.mxu0 0
        %1545 = vmatprep.subr.bf16.mxu0 0
        %1546 = vmatpush1.bf16.msra.mxu0 0
        %1547 = vmatprep.subr.bf16.mxu0 0
        %1548 = vmatpush1.bf16.msra.mxu0 0
        %1549 = vmatprep.subr.bf16.mxu0 0
        %1550 = vmatpush1.bf16.msra.mxu0 0
        %1551 = vmatprep.subr.bf16.mxu0 0
        %1552 = vmatpush1.bf16.msra.mxu0 0
        %1553 = vmatprep.subr.bf16.mxu0 0
        %1554 = vmatpush1.bf16.msra.mxu0 0
        %1555 = vmatprep.subr.bf16.mxu0 0
        %1556 = vmatpush1.bf16.msra.mxu0 0
        %1557 = vmatprep.subr.bf16.mxu0 0
        %1558 = vmatpush1.bf16.msra.mxu0 0
        %1559 = vmatprep.mubr.bf16.mxu0 0
        %1560 = vmatmul.mubr.bf16.gmra.mrb[0].mxu0 %v1475
        %v1561 = vpop.f32.mrb[0].mxu0
        %v1562 = vadd.f32 0.0, %v1561
        %v1563 = vpop.f32.mrb[0].mxu0
        %v1564 = vpop.f32.mrb[0].mxu0
        %v1565 = vpop.f32.mrb[0].mxu0
        %1566 = vdwg.mxu0
        %v1568 = vsel %vm440, %v1455, 0
        %v1571 = vsel %vm444, %v1463, 0
        %v1574 = vsel %vm444, %v1464, 0
        %v1577 = vsel %vm444, %v1465, 0
        %1579 = vmatprep.subr.bf16.mxu0 %v1574
        %1580 = vmatpush1.bf16.msra.mxu0 %v1571
        %1581 = vmatprep.subr.bf16.mxu0 0
        %1582 = vmatpush1.bf16.msra.mxu0 0
        %1583 = vmatprep.subr.bf16.mxu0 0
        %1584 = vmatpush1.bf16.msra.mxu0 0
        %1585 = vmatprep.subr.bf16.mxu0 0
        %1586 = vmatpush1.bf16.msra.mxu0 0
        %1587 = vmatprep.subr.bf16.mxu0 0
        %1588 = vmatpush1.bf16.msra.mxu0 0
        %1589 = vmatprep.subr.bf16.mxu0 0
        %1590 = vmatpush1.bf16.msra.mxu0 0
        %1591 = vmatprep.subr.bf16.mxu0 0
        %1592 = vmatpush1.bf16.msra.mxu0 0
        %1593 = vmatprep.subr.bf16.mxu0 0
        %1594 = vmatpush1.bf16.msra.mxu0 0
        %1595 = vmatprep.subr.bf16.mxu0 0
        %1596 = vmatpush1.bf16.msra.mxu0 0
        %1597 = vmatprep.subr.bf16.mxu0 0
        %1598 = vmatpush1.bf16.msra.mxu0 0
        %1599 = vmatprep.subr.bf16.mxu0 0
        %1600 = vmatpush1.bf16.msra.mxu0 0
        %1601 = vmatprep.subr.bf16.mxu0 0
        %1602 = vmatpush1.bf16.msra.mxu0 0
        %1603 = vmatprep.subr.bf16.mxu0 0
        %1604 = vmatpush1.bf16.msra.mxu0 0
        %1605 = vmatprep.subr.bf16.mxu0 0
        %1606 = vmatpush1.bf16.msra.mxu0 0
        %1607 = vmatprep.subr.bf16.mxu0 0
        %1608 = vmatpush1.bf16.msra.mxu0 0
        %1609 = vmatprep.subr.bf16.mxu0 0
        %1610 = vmatpush1.bf16.msra.mxu0 0
        %1611 = vmatprep.mubr.bf16.mxu0 0
        %1612 = vmatmul.mubr.bf16.gmra.mrb[0].mxu0 %v1568
        %v1613 = vpop.f32.mrb[0].mxu0
        %v1614 = vadd.f32 %v1521, %v1613
        %v1615 = vpop.f32.mrb[0].mxu0
        %v1616 = vadd.f32 %v1523, %v1615
        %v1617 = vpop.f32.mrb[0].mxu0
        %v1618 = vpop.f32.mrb[0].mxu0
        %1619 = vdwg.mxu0
        %1620 = vmatprep.subr.bf16.mxu0 0
        %1621 = vmatpush1.bf16.msra.mxu0 %v1577
        %1622 = vmatprep.subr.bf16.mxu0 0
        %1623 = vmatpush1.bf16.msra.mxu0 0
        %1624 = vmatprep.subr.bf16.mxu0 0
        %1625 = vmatpush1.bf16.msra.mxu0 0
        %1626 = vmatprep.subr.bf16.mxu0 0
        %1627 = vmatpush1.bf16.msra.mxu0 0
        %1628 = vmatprep.subr.bf16.mxu0 0
        %1629 = vmatpush1.bf16.msra.mxu0 0
        %1630 = vmatprep.subr.bf16.mxu0 0
        %1631 = vmatpush1.bf16.msra.mxu0 0
        %1632 = vmatprep.subr.bf16.mxu0 0
        %1633 = vmatpush1.bf16.msra.mxu0 0
        %1634 = vmatprep.subr.bf16.mxu0 0
        %1635 = vmatpush1.bf16.msra.mxu0 0
        %1636 = vmatprep.subr.bf16.mxu0 0
        %1637 = vmatpush1.bf16.msra.mxu0 0
        %1638 = vmatprep.subr.bf16.mxu0 0
        %1639 = vmatpush1.bf16.msra.mxu0 0
        %1640 = vmatprep.subr.bf16.mxu0 0
        %1641 = vmatpush1.bf16.msra.mxu0 0
        %1642 = vmatprep.subr.bf16.mxu0 0
        %1643 = vmatpush1.bf16.msra.mxu0 0
        %1644 = vmatprep.subr.bf16.mxu0 0
        %1645 = vmatpush1.bf16.msra.mxu0 0
        %1646 = vmatprep.subr.bf16.mxu0 0
        %1647 = vmatpush1.bf16.msra.mxu0 0
        %1648 = vmatprep.subr.bf16.mxu0 0
        %1649 = vmatpush1.bf16.msra.mxu0 0
        %1650 = vmatprep.subr.bf16.mxu0 0
        %1651 = vmatpush1.bf16.msra.mxu0 0
        %1652 = vmatprep.mubr.bf16.mxu0 0
        %1653 = vmatmul.mubr.bf16.gmra.mrb[0].mxu0 %v1568
        %v1654 = vpop.f32.mrb[0].mxu0
        %v1655 = vadd.f32 %v1562, %v1654
        %v1656 = vpop.f32.mrb[0].mxu0
        %v1657 = vpop.f32.mrb[0].mxu0
        %v1658 = vpop.f32.mrb[0].mxu0
        %1659 = vdwg.mxu0
        %s1660 = scalar_lea.vmem [#allocation12], 8
        %v1661 = vld [vmem:[%s1660] sm:$0xf]
        %1662 = vrot.lane.b32.xlu0 %v1463, 126
        %v1663 = vpop.permute.xlu0 %1662
        %1664 = vrot.lane.b32.xlu0 %v1464, 126
        %v1665 = vpop.permute.xlu0 %1664
        %1666 = vrot.lane.b32.xlu0 %v1465, 126
        %v1667 = vpop.permute.xlu0 %1666
        %v1668 = vsel %vm636, %v1663, %v1665
        %v1669 = vsel %vm636, %v1665, %v1667
        %v1671 = vsel %vm440, %v1661, 0
        %v1674 = vsel %vm444, %v1668, 0
        %v1677 = vsel %vm444, %v1669, 0
        %v1680 = vsel %vm444, %v1667, 0
        %1682 = vmatprep.subr.bf16.mxu0 %v1677
        %1683 = vmatpush1.bf16.msra.mxu0 %v1674
        %1684 = vmatprep.subr.bf16.mxu0 0
        %1685 = vmatpush1.bf16.msra.mxu0 0
        %1686 = vmatprep.subr.bf16.mxu0 0
        %1687 = vmatpush1.bf16.msra.mxu0 0
        %1688 = vmatprep.subr.bf16.mxu0 0
        %1689 = vmatpush1.bf16.msra.mxu0 0
        %1690 = vmatprep.subr.bf16.mxu0 0
        %1691 = vmatpush1.bf16.msra.mxu0 0
        %1692 = vmatprep.subr.bf16.mxu0 0
        %1693 = vmatpush1.bf16.msra.mxu0 0
        %1694 = vmatprep.subr.bf16.mxu0 0
        %1695 = vmatpush1.bf16.msra.mxu0 0
        %1696 = vmatprep.subr.bf16.mxu0 0
        %1697 = vmatpush1.bf16.msra.mxu0 0
        %1698 = vmatprep.subr.bf16.mxu0 0
        %1699 = vmatpush1.bf16.msra.mxu0 0
        %1700 = vmatprep.subr.bf16.mxu0 0
        %1701 = vmatpush1.bf16.msra.mxu0 0
        %1702 = vmatprep.subr.bf16.mxu0 0
        %1703 = vmatpush1.bf16.msra.mxu0 0
        %1704 = vmatprep.subr.bf16.mxu0 0
        %1705 = vmatpush1.bf16.msra.mxu0 0
        %1706 = vmatprep.subr.bf16.mxu0 0
        %1707 = vmatpush1.bf16.msra.mxu0 0
        %1708 = vmatprep.subr.bf16.mxu0 0
        %1709 = vmatpush1.bf16.msra.mxu0 0
        %1710 = vmatprep.subr.bf16.mxu0 0
        %1711 = vmatpush1.bf16.msra.mxu0 0
        %1712 = vmatprep.subr.bf16.mxu0 0
        %1713 = vmatpush1.bf16.msra.mxu0 0
        %1714 = vmatprep.mubr.bf16.mxu0 0
        %1715 = vmatmul.mubr.bf16.gmra.mrb[0].mxu0 %v1671
        %v1716 = vpop.f32.mrb[0].mxu0
        %v1717 = vadd.f32 0.0, %v1716
        %v1718 = vpop.f32.mrb[0].mxu0
        %v1719 = vadd.f32 0.0, %v1718
        %v1720 = vpop.f32.mrb[0].mxu0
        %v1721 = vpop.f32.mrb[0].mxu0
        %1722 = vdwg.mxu0
        %1723 = vmatprep.subr.bf16.mxu0 0
        %1724 = vmatpush1.bf16.msra.mxu0 %v1680
        %1725 = vmatprep.subr.bf16.mxu0 0
        %1726 = vmatpush1.bf16.msra.mxu0 0
        %1727 = vmatprep.subr.bf16.mxu0 0
        %1728 = vmatpush1.bf16.msra.mxu0 0
        %1729 = vmatprep.subr.bf16.mxu0 0
        %1730 = vmatpush1.bf16.msra.mxu0 0
        %1731 = vmatprep.subr.bf16.mxu0 0
        %1732 = vmatpush1.bf16.msra.mxu0 0
        %1733 = vmatprep.subr.bf16.mxu0 0
        %1734 = vmatpush1.bf16.msra.mxu0 0
        %1735 = vmatprep.subr.bf16.mxu0 0
        %1736 = vmatpush1.bf16.msra.mxu0 0
        %1737 = vmatprep.subr.bf16.mxu0 0
        %1738 = vmatpush1.bf16.msra.mxu0 0
        %1739 = vmatprep.subr.bf16.mxu0 0
        %1740 = vmatpush1.bf16.msra.mxu0 0
        %1741 = vmatprep.subr.bf16.mxu0 0
        %1742 = vmatpush1.bf16.msra.mxu0 0
        %1743 = vmatprep.subr.bf16.mxu0 0
        %1744 = vmatpush1.bf16.msra.mxu0 0
        %1745 = vmatprep.subr.bf16.mxu0 0
        %1746 = vmatpush1.bf16.msra.mxu0 0
        %1747 = vmatprep.subr.bf16.mxu0 0
        %1748 = vmatpush1.bf16.msra.mxu0 0
        %1749 = vmatprep.subr.bf16.mxu0 0
        %1750 = vmatpush1.bf16.msra.mxu0 0
        %1751 = vmatprep.subr.bf16.mxu0 0
        %1752 = vmatpush1.bf16.msra.mxu0 0
        %1753 = vmatprep.subr.bf16.mxu0 0
        %1754 = vmatpush1.bf16.msra.mxu0 0
        %1755 = vmatprep.mubr.bf16.mxu0 0
        %1756 = vmatmul.mubr.bf16.gmra.mrb[0].mxu0 %v1671
        %v1757 = vpop.f32.mrb[0].mxu0
        %v1758 = vadd.f32 0.0, %v1757
        %v1759 = vpop.f32.mrb[0].mxu0
        %v1760 = vpop.f32.mrb[0].mxu0
        %v1761 = vpop.f32.mrb[0].mxu0
        %1762 = vdwg.mxu0
        %v1763 = vadd.f32 %v1614, %v1717
        %v1764 = vadd.f32 %v1616, %v1719
        %v1765 = vadd.f32 %v1655, %v1758
        %s1766 = scalar_lea.vmem [#allocation12], 12
        %v1767 = vld [vmem:[%s1766] sm:$0xf]
        %1768 = vrot.lane.b32.xlu0 %v1463, 110
        %v1769 = vpop.permute.xlu0 %1768
        %1770 = vrot.lane.b32.xlu0 %v1464, 110
        %v1771 = vpop.permute.xlu0 %1770
        %1772 = vrot.lane.b32.xlu0 %v1465, 110
        %v1773 = vpop.permute.xlu0 %1772
        %v1774 = vsel %vm743, %v1769, %v1771
        %v1775 = vsel %vm743, %v1771, %v1773
        %v1777 = vsel %vm440, %v1767, 0
        %v1780 = vsel %vm444, %v1774, 0
        %v1783 = vsel %vm444, %v1775, 0
        %v1786 = vsel %vm444, %v1773, 0
        %1788 = vmatprep.subr.bf16.mxu0 %v1783
        %1789 = vmatpush1.bf16.msra.mxu0 %v1780
        %1790 = vmatprep.subr.bf16.mxu0 0
        %1791 = vmatpush1.bf16.msra.mxu0 0
        %1792 = vmatprep.subr.bf16.mxu0 0
        %1793 = vmatpush1.bf16.msra.mxu0 0
        %1794 = vmatprep.subr.bf16.mxu0 0
        %1795 = vmatpush1.bf16.msra.mxu0 0
        %1796 = vmatprep.subr.bf16.mxu0 0
        %1797 = vmatpush1.bf16.msra.mxu0 0
        %1798 = vmatprep.subr.bf16.mxu0 0
        %1799 = vmatpush1.bf16.msra.mxu0 0
        %1800 = vmatprep.subr.bf16.mxu0 0
        %1801 = vmatpush1.bf16.msra.mxu0 0
        %1802 = vmatprep.subr.bf16.mxu0 0
        %1803 = vmatpush1.bf16.msra.mxu0 0
        %1804 = vmatprep.subr.bf16.mxu0 0
        %1805 = vmatpush1.bf16.msra.mxu0 0
        %1806 = vmatprep.subr.bf16.mxu0 0
        %1807 = vmatpush1.bf16.msra.mxu0 0
        %1808 = vmatprep.subr.bf16.mxu0 0
        %1809 = vmatpush1.bf16.msra.mxu0 0
        %1810 = vmatprep.subr.bf16.mxu0 0
        %1811 = vmatpush1.bf16.msra.mxu0 0
        %1812 = vmatprep.subr.bf16.mxu0 0
        %1813 = vmatpush1.bf16.msra.mxu0 0
        %1814 = vmatprep.subr.bf16.mxu0 0
        %1815 = vmatpush1.bf16.msra.mxu0 0
        %1816 = vmatprep.subr.bf16.mxu0 0
        %1817 = vmatpush1.bf16.msra.mxu0 0
        %1818 = vmatprep.subr.bf16.mxu0 0
        %1819 = vmatpush1.bf16.msra.mxu0 0
        %1820 = vmatprep.mubr.bf16.mxu0 0
        %1821 = vmatmul.mubr.bf16.gmra.mrb[0].mxu0 %v1777
        %v1822 = vpop.f32.mrb[0].mxu0
        %v1823 = vadd.f32 0.0, %v1822
        %v1824 = vpop.f32.mrb[0].mxu0
        %v1825 = vadd.f32 0.0, %v1824
        %v1826 = vpop.f32.mrb[0].mxu0
        %v1827 = vpop.f32.mrb[0].mxu0
        %1828 = vdwg.mxu0
        %1829 = vmatprep.subr.bf16.mxu0 0
        %1830 = vmatpush1.bf16.msra.mxu0 %v1786
        %1831 = vmatprep.subr.bf16.mxu0 0
        %1832 = vmatpush1.bf16.msra.mxu0 0
        %1833 = vmatprep.subr.bf16.mxu0 0
        %1834 = vmatpush1.bf16.msra.mxu0 0
        %1835 = vmatprep.subr.bf16.mxu0 0
        %1836 = vmatpush1.bf16.msra.mxu0 0
        %1837 = vmatprep.subr.bf16.mxu0 0
        %1838 = vmatpush1.bf16.msra.mxu0 0
        %1839 = vmatprep.subr.bf16.mxu0 0
        %1840 = vmatpush1.bf16.msra.mxu0 0
        %1841 = vmatprep.subr.bf16.mxu0 0
        %1842 = vmatpush1.bf16.msra.mxu0 0
        %1843 = vmatprep.subr.bf16.mxu0 0
        %1844 = vmatpush1.bf16.msra.mxu0 0
        %1845 = vmatprep.subr.bf16.mxu0 0
        %1846 = vmatpush1.bf16.msra.mxu0 0
        %1847 = vmatprep.subr.bf16.mxu0 0
        %1848 = vmatpush1.bf16.msra.mxu0 0
        %1849 = vmatprep.subr.bf16.mxu0 0
        %1850 = vmatpush1.bf16.msra.mxu0 0
        %1851 = vmatprep.subr.bf16.mxu0 0
        %1852 = vmatpush1.bf16.msra.mxu0 0
        %1853 = vmatprep.subr.bf16.mxu0 0
        %1854 = vmatpush1.bf16.msra.mxu0 0
        %1855 = vmatprep.subr.bf16.mxu0 0
        %1856 = vmatpush1.bf16.msra.mxu0 0
        %1857 = vmatprep.subr.bf16.mxu0 0
        %1858 = vmatpush1.bf16.msra.mxu0 0
        %1859 = vmatprep.subr.bf16.mxu0 0
        %1860 = vmatpush1.bf16.msra.mxu0 0
        %1861 = vmatprep.mubr.bf16.mxu0 0
        %1862 = vmatmul.mubr.bf16.gmra.mrb[0].mxu0 %v1777
        %v1863 = vpop.f32.mrb[0].mxu0
        %v1864 = vadd.f32 0.0, %v1863
        %v1865 = vpop.f32.mrb[0].mxu0
        %v1866 = vpop.f32.mrb[0].mxu0
        %v1867 = vpop.f32.mrb[0].mxu0
        %1868 = vdwg.mxu0
        %v1869 = vadd.f32 %v1763, %v1823
        %v1870 = vadd.f32 %v1764, %v1825
        %v1871 = vadd.f32 %v1765, %v1864
        %s1872 = scalar_lea.vmem [#allocation12], 16
        %v1873 = vld [vmem:[%s1872] sm:$0xf]
        %1874 = vrot.lane.b32.xlu0 %v1463, 109
        %v1875 = vpop.permute.xlu0 %1874
        %1876 = vrot.lane.b32.xlu0 %v1464, 109
        %v1877 = vpop.permute.xlu0 %1876
        %1878 = vrot.lane.b32.xlu0 %v1465, 109
        %v1879 = vpop.permute.xlu0 %1878
        %v1880 = vsel %vm850, %v1875, %v1877
        %v1881 = vsel %vm850, %v1877, %v1879
        %v1883 = vsel %vm440, %v1873, 0
        %v1886 = vsel %vm444, %v1880, 0
        %v1889 = vsel %vm444, %v1881, 0
        %v1892 = vsel %vm444, %v1879, 0
        %1894 = vmatprep.subr.bf16.mxu0 %v1889
        %1895 = vmatpush1.bf16.msra.mxu0 %v1886
        %1896 = vmatprep.subr.bf16.mxu0 0
        %1897 = vmatpush1.bf16.msra.mxu0 0
        %1898 = vmatprep.subr.bf16.mxu0 0
        %1899 = vmatpush1.bf16.msra.mxu0 0
        %1900 = vmatprep.subr.bf16.mxu0 0
        %1901 = vmatpush1.bf16.msra.mxu0 0
        %1902 = vmatprep.subr.bf16.mxu0 0
        %1903 = vmatpush1.bf16.msra.mxu0 0
        %1904 = vmatprep.subr.bf16.mxu0 0
        %1905 = vmatpush1.bf16.msra.mxu0 0
        %1906 = vmatprep.subr.bf16.mxu0 0
        %1907 = vmatpush1.bf16.msra.mxu0 0
        %1908 = vmatprep.subr.bf16.mxu0 0
        %1909 = vmatpush1.bf16.msra.mxu0 0
        %1910 = vmatprep.subr.bf16.mxu0 0
        %1911 = vmatpush1.bf16.msra.mxu0 0
        %1912 = vmatprep.subr.bf16.mxu0 0
        %1913 = vmatpush1.bf16.msra.mxu0 0
        %1914 = vmatprep.subr.bf16.mxu0 0
        %1915 = vmatpush1.bf16.msra.mxu0 0
        %1916 = vmatprep.subr.bf16.mxu0 0
        %1917 = vmatpush1.bf16.msra.mxu0 0
        %1918 = vmatprep.subr.bf16.mxu0 0
        %1919 = vmatpush1.bf16.msra.mxu0 0
        %1920 = vmatprep.subr.bf16.mxu0 0
        %1921 = vmatpush1.bf16.msra.mxu0 0
        %1922 = vmatprep.subr.bf16.mxu0 0
        %1923 = vmatpush1.bf16.msra.mxu0 0
        %1924 = vmatprep.subr.bf16.mxu0 0
        %1925 = vmatpush1.bf16.msra.mxu0 0
        %1926 = vmatprep.mubr.bf16.mxu0 0
        %1927 = vmatmul.mubr.bf16.gmra.mrb[0].mxu0 %v1883
        %v1928 = vpop.f32.mrb[0].mxu0
        %v1929 = vadd.f32 0.0, %v1928
        %v1930 = vpop.f32.mrb[0].mxu0
        %v1931 = vadd.f32 0.0, %v1930
        %v1932 = vpop.f32.mrb[0].mxu0
        %v1933 = vpop.f32.mrb[0].mxu0
        %1934 = vdwg.mxu0
        %1935 = vmatprep.subr.bf16.mxu0 0
        %1936 = vmatpush1.bf16.msra.mxu0 %v1892
        %1937 = vmatprep.subr.bf16.mxu0 0
        %1938 = vmatpush1.bf16.msra.mxu0 0
        %1939 = vmatprep.subr.bf16.mxu0 0
        %1940 = vmatpush1.bf16.msra.mxu0 0
        %1941 = vmatprep.subr.bf16.mxu0 0
        %1942 = vmatpush1.bf16.msra.mxu0 0
        %1943 = vmatprep.subr.bf16.mxu0 0
        %1944 = vmatpush1.bf16.msra.mxu0 0
        %1945 = vmatprep.subr.bf16.mxu0 0
        %1946 = vmatpush1.bf16.msra.mxu0 0
        %1947 = vmatprep.subr.bf16.mxu0 0
        %1948 = vmatpush1.bf16.msra.mxu0 0
        %1949 = vmatprep.subr.bf16.mxu0 0
        %1950 = vmatpush1.bf16.msra.mxu0 0
        %1951 = vmatprep.subr.bf16.mxu0 0
        %1952 = vmatpush1.bf16.msra.mxu0 0
        %1953 = vmatprep.subr.bf16.mxu0 0
        %1954 = vmatpush1.bf16.msra.mxu0 0
        %1955 = vmatprep.subr.bf16.mxu0 0
        %1956 = vmatpush1.bf16.msra.mxu0 0
        %1957 = vmatprep.subr.bf16.mxu0 0
        %1958 = vmatpush1.bf16.msra.mxu0 0
        %1959 = vmatprep.subr.bf16.mxu0 0
        %1960 = vmatpush1.bf16.msra.mxu0 0
        %1961 = vmatprep.subr.bf16.mxu0 0
        %1962 = vmatpush1.bf16.msra.mxu0 0
        %1963 = vmatprep.subr.bf16.mxu0 0
        %1964 = vmatpush1.bf16.msra.mxu0 0
        %1965 = vmatprep.subr.bf16.mxu0 0
        %1966 = vmatpush1.bf16.msra.mxu0 0
        %1967 = vmatprep.mubr.bf16.mxu0 0
        %1968 = vmatmul.mubr.bf16.gmra.mrb[0].mxu0 %v1883
        %v1969 = vpop.f32.mrb[0].mxu0
        %v1970 = vadd.f32 0.0, %v1969
        %v1971 = vpop.f32.mrb[0].mxu0
        %v1972 = vpop.f32.mrb[0].mxu0
        %v1973 = vpop.f32.mrb[0].mxu0
        %1974 = vdwg.mxu0
        %v1975 = vadd.f32 %v1869, %v1929
        %v1976 = vadd.f32 %v1870, %v1931
        %v1977 = vadd.f32 %v1871, %v1970
        %s1978 = scalar_lea.vmem [#allocation12], 20
        %v1979 = vld [vmem:[%s1978] sm:$0xf]
        %1980 = vrot.lane.b32.xlu0 %v1463, 108
        %v1981 = vpop.permute.xlu0 %1980
        %1982 = vrot.lane.b32.xlu0 %v1464, 108
        %v1983 = vpop.permute.xlu0 %1982
        %1984 = vrot.lane.b32.xlu0 %v1465, 108
        %v1985 = vpop.permute.xlu0 %1984
        %v1986 = vsel %vm957, %v1981, %v1983
        %v1987 = vsel %vm957, %v1983, %v1985
        %v1989 = vsel %vm440, %v1979, 0
        %v1992 = vsel %vm444, %v1986, 0
        %v1995 = vsel %vm444, %v1987, 0
        %v1998 = vsel %vm444, %v1985, 0
        %2000 = vmatprep.subr.bf16.mxu0 %v1995
        %2001 = vmatpush1.bf16.msra.mxu0 %v1992
        %2002 = vmatprep.subr.bf16.mxu0 0
        %2003 = vmatpush1.bf16.msra.mxu0 0
        %2004 = vmatprep.subr.bf16.mxu0 0
        %2005 = vmatpush1.bf16.msra.mxu0 0
        %2006 = vmatprep.subr.bf16.mxu0 0
        %2007 = vmatpush1.bf16.msra.mxu0 0
        %2008 = vmatprep.subr.bf16.mxu0 0
        %2009 = vmatpush1.bf16.msra.mxu0 0
        %2010 = vmatprep.subr.bf16.mxu0 0
        %2011 = vmatpush1.bf16.msra.mxu0 0
        %2012 = vmatprep.subr.bf16.mxu0 0
        %2013 = vmatpush1.bf16.msra.mxu0 0
        %2014 = vmatprep.subr.bf16.mxu0 0
        %2015 = vmatpush1.bf16.msra.mxu0 0
        %2016 = vmatprep.subr.bf16.mxu0 0
        %2017 = vmatpush1.bf16.msra.mxu0 0
        %2018 = vmatprep.subr.bf16.mxu0 0
        %2019 = vmatpush1.bf16.msra.mxu0 0
        %2020 = vmatprep.subr.bf16.mxu0 0
        %2021 = vmatpush1.bf16.msra.mxu0 0
        %2022 = vmatprep.subr.bf16.mxu0 0
        %2023 = vmatpush1.bf16.msra.mxu0 0
        %2024 = vmatprep.subr.bf16.mxu0 0
        %2025 = vmatpush1.bf16.msra.mxu0 0
        %2026 = vmatprep.subr.bf16.mxu0 0
        %2027 = vmatpush1.bf16.msra.mxu0 0
        %2028 = vmatprep.subr.bf16.mxu0 0
        %2029 = vmatpush1.bf16.msra.mxu0 0
        %2030 = vmatprep.subr.bf16.mxu0 0
        %2031 = vmatpush1.bf16.msra.mxu0 0
        %2032 = vmatprep.mubr.bf16.mxu0 0
        %2033 = vmatmul.mubr.bf16.gmra.mrb[0].mxu0 %v1989
        %v2034 = vpop.f32.mrb[0].mxu0
        %v2035 = vadd.f32 0.0, %v2034
        %v2036 = vpop.f32.mrb[0].mxu0
        %v2037 = vadd.f32 0.0, %v2036
        %v2038 = vpop.f32.mrb[0].mxu0
        %v2039 = vpop.f32.mrb[0].mxu0
        %2040 = vdwg.mxu0
        %2041 = vmatprep.subr.bf16.mxu0 0
        %2042 = vmatpush1.bf16.msra.mxu0 %v1998
        %2043 = vmatprep.subr.bf16.mxu0 0
        %2044 = vmatpush1.bf16.msra.mxu0 0
        %2045 = vmatprep.subr.bf16.mxu0 0
        %2046 = vmatpush1.bf16.msra.mxu0 0
        %2047 = vmatprep.subr.bf16.mxu0 0
        %2048 = vmatpush1.bf16.msra.mxu0 0
        %2049 = vmatprep.subr.bf16.mxu0 0
        %2050 = vmatpush1.bf16.msra.mxu0 0
        %2051 = vmatprep.subr.bf16.mxu0 0
        %2052 = vmatpush1.bf16.msra.mxu0 0
        %2053 = vmatprep.subr.bf16.mxu0 0
        %2054 = vmatpush1.bf16.msra.mxu0 0
        %2055 = vmatprep.subr.bf16.mxu0 0
        %2056 = vmatpush1.bf16.msra.mxu0 0
        %2057 = vmatprep.subr.bf16.mxu0 0
        %2058 = vmatpush1.bf16.msra.mxu0 0
        %2059 = vmatprep.subr.bf16.mxu0 0
        %2060 = vmatpush1.bf16.msra.mxu0 0
        %2061 = vmatprep.subr.bf16.mxu0 0
        %2062 = vmatpush1.bf16.msra.mxu0 0
        %2063 = vmatprep.subr.bf16.mxu0 0
        %2064 = vmatpush1.bf16.msra.mxu0 0
        %2065 = vmatprep.subr.bf16.mxu0 0
        %2066 = vmatpush1.bf16.msra.mxu0 0
        %2067 = vmatprep.subr.bf16.mxu0 0
        %2068 = vmatpush1.bf16.msra.mxu0 0
        %2069 = vmatprep.subr.bf16.mxu0 0
        %2070 = vmatpush1.bf16.msra.mxu0 0
        %2071 = vmatprep.subr.bf16.mxu0 0
        %2072 = vmatpush1.bf16.msra.mxu0 0
        %2073 = vmatprep.mubr.bf16.mxu0 0
        %2074 = vmatmul.mubr.bf16.gmra.mrb[0].mxu0 %v1989
        %v2075 = vpop.f32.mrb[0].mxu0
        %v2076 = vadd.f32 0.0, %v2075
        %v2077 = vpop.f32.mrb[0].mxu0
        %v2078 = vpop.f32.mrb[0].mxu0
        %v2079 = vpop.f32.mrb[0].mxu0
        %2080 = vdwg.mxu0
        %v2081 = vadd.f32 %v1975, %v2035
        %v2082 = vadd.f32 %v1976, %v2037
        %v2083 = vadd.f32 %v1977, %v2076
        %s2084 = scalar_lea.vmem [#allocation12], 24
        %v2085 = vld [vmem:[%s2084] sm:$0xf]
        %2086 = vrot.lane.b32.xlu0 %v1463, 92
        %v2087 = vpop.permute.xlu0 %2086
        %2088 = vrot.lane.b32.xlu0 %v1464, 92
        %v2089 = vpop.permute.xlu0 %2088
        %2090 = vrot.lane.b32.xlu0 %v1465, 92
        %v2091 = vpop.permute.xlu0 %2090
        %v2092 = vsel %vm1064, %v2087, %v2089
        %v2093 = vsel %vm1064, %v2089, %v2091
        %v2095 = vsel %vm440, %v2085, 0
        %v2098 = vsel %vm444, %v2092, 0
        %v2101 = vsel %vm444, %v2093, 0
        %v2104 = vsel %vm444, %v2091, 0
        %2106 = vmatprep.subr.bf16.mxu0 %v2101
        %2107 = vmatpush1.bf16.msra.mxu0 %v2098
        %2108 = vmatprep.subr.bf16.mxu0 0
        %2109 = vmatpush1.bf16.msra.mxu0 0
        %2110 = vmatprep.subr.bf16.mxu0 0
        %2111 = vmatpush1.bf16.msra.mxu0 0
        %2112 = vmatprep.subr.bf16.mxu0 0
        %2113 = vmatpush1.bf16.msra.mxu0 0
        %2114 = vmatprep.subr.bf16.mxu0 0
        %2115 = vmatpush1.bf16.msra.mxu0 0
        %2116 = vmatprep.subr.bf16.mxu0 0
        %2117 = vmatpush1.bf16.msra.mxu0 0
        %2118 = vmatprep.subr.bf16.mxu0 0
        %2119 = vmatpush1.bf16.msra.mxu0 0
        %2120 = vmatprep.subr.bf16.mxu0 0
        %2121 = vmatpush1.bf16.msra.mxu0 0
        %2122 = vmatprep.subr.bf16.mxu0 0
        %2123 = vmatpush1.bf16.msra.mxu0 0
        %2124 = vmatprep.subr.bf16.mxu0 0
        %2125 = vmatpush1.bf16.msra.mxu0 0
        %2126 = vmatprep.subr.bf16.mxu0 0
        %2127 = vmatpush1.bf16.msra.mxu0 0
        %2128 = vmatprep.subr.bf16.mxu0 0
        %2129 = vmatpush1.bf16.msra.mxu0 0
        %2130 = vmatprep.subr.bf16.mxu0 0
        %2131 = vmatpush1.bf16.msra.mxu0 0
        %2132 = vmatprep.subr.bf16.mxu0 0
        %2133 = vmatpush1.bf16.msra.mxu0 0
        %2134 = vmatprep.subr.bf16.mxu0 0
        %2135 = vmatpush1.bf16.msra.mxu0 0
        %2136 = vmatprep.subr.bf16.mxu0 0
        %2137 = vmatpush1.bf16.msra.mxu0 0
        %2138 = vmatprep.mubr.bf16.mxu0 0
        %2139 = vmatmul.mubr.bf16.gmra.mrb[0].mxu0 %v2095
        %v2140 = vpop.f32.mrb[0].mxu0
        %v2141 = vadd.f32 0.0, %v2140
        %v2142 = vpop.f32.mrb[0].mxu0
        %v2143 = vadd.f32 0.0, %v2142
        %v2144 = vpop.f32.mrb[0].mxu0
        %v2145 = vpop.f32.mrb[0].mxu0
        %2146 = vdwg.mxu0
        %2147 = vmatprep.subr.bf16.mxu0 0
        %2148 = vmatpush1.bf16.msra.mxu0 %v2104
        %2149 = vmatprep.subr.bf16.mxu0 0
        %2150 = vmatpush1.bf16.msra.mxu0 0
        %2151 = vmatprep.subr.bf16.mxu0 0
        %2152 = vmatpush1.bf16.msra.mxu0 0
        %2153 = vmatprep.subr.bf16.mxu0 0
        %2154 = vmatpush1.bf16.msra.mxu0 0
        %2155 = vmatprep.subr.bf16.mxu0 0
        %2156 = vmatpush1.bf16.msra.mxu0 0
        %2157 = vmatprep.subr.bf16.mxu0 0
        %2158 = vmatpush1.bf16.msra.mxu0 0
        %2159 = vmatprep.subr.bf16.mxu0 0
        %2160 = vmatpush1.bf16.msra.mxu0 0
        %2161 = vmatprep.subr.bf16.mxu0 0
        %2162 = vmatpush1.bf16.msra.mxu0 0
        %2163 = vmatprep.subr.bf16.mxu0 0
        %2164 = vmatpush1.bf16.msra.mxu0 0
        %2165 = vmatprep.subr.bf16.mxu0 0
        %2166 = vmatpush1.bf16.msra.mxu0 0
        %2167 = vmatprep.subr.bf16.mxu0 0
        %2168 = vmatpush1.bf16.msra.mxu0 0
        %2169 = vmatprep.subr.bf16.mxu0 0
        %2170 = vmatpush1.bf16.msra.mxu0 0
        %2171 = vmatprep.subr.bf16.mxu0 0
        %2172 = vmatpush1.bf16.msra.mxu0 0
        %2173 = vmatprep.subr.bf16.mxu0 0
        %2174 = vmatpush1.bf16.msra.mxu0 0
        %2175 = vmatprep.subr.bf16.mxu0 0
        %2176 = vmatpush1.bf16.msra.mxu0 0
        %2177 = vmatprep.subr.bf16.mxu0 0
        %2178 = vmatpush1.bf16.msra.mxu0 0
        %2179 = vmatprep.mubr.bf16.mxu0 0
        %2180 = vmatmul.mubr.bf16.gmra.mrb[0].mxu0 %v2095
        %v2181 = vpop.f32.mrb[0].mxu0
        %v2182 = vadd.f32 0.0, %v2181
        %v2183 = vpop.f32.mrb[0].mxu0
        %v2184 = vpop.f32.mrb[0].mxu0
        %v2185 = vpop.f32.mrb[0].mxu0
        %2186 = vdwg.mxu0
        %v2187 = vadd.f32 %v2081, %v2141
        %v2188 = vadd.f32 %v2082, %v2143
        %v2189 = vadd.f32 %v2083, %v2182
        %s2190 = scalar_lea.vmem [#allocation12], 28
        %v2191 = vld [vmem:[%s2190] sm:$0xf]
        %2192 = vrot.lane.b32.xlu0 %v1463, 91
        %v2193 = vpop.permute.xlu0 %2192
        %2194 = vrot.lane.b32.xlu0 %v1464, 91
        %v2195 = vpop.permute.xlu0 %2194
        %2196 = vrot.lane.b32.xlu0 %v1465, 91
        %v2197 = vpop.permute.xlu0 %2196
        %v2198 = vsel %vm1171, %v2193, %v2195
        %v2199 = vsel %vm1171, %v2195, %v2197
        %v2201 = vsel %vm440, %v2191, 0
        %v2204 = vsel %vm444, %v2198, 0
        %v2207 = vsel %vm444, %v2199, 0
        %v2210 = vsel %vm444, %v2197, 0
        %2212 = vmatprep.subr.bf16.mxu0 %v2207
        %2213 = vmatpush1.bf16.msra.mxu0 %v2204
        %2214 = vmatprep.subr.bf16.mxu0 0
        %2215 = vmatpush1.bf16.msra.mxu0 0
        %2216 = vmatprep.subr.bf16.mxu0 0
        %2217 = vmatpush1.bf16.msra.mxu0 0
        %2218 = vmatprep.subr.bf16.mxu0 0
        %2219 = vmatpush1.bf16.msra.mxu0 0
        %2220 = vmatprep.subr.bf16.mxu0 0
        %2221 = vmatpush1.bf16.msra.mxu0 0
        %2222 = vmatprep.subr.bf16.mxu0 0
        %2223 = vmatpush1.bf16.msra.mxu0 0
        %2224 = vmatprep.subr.bf16.mxu0 0
        %2225 = vmatpush1.bf16.msra.mxu0 0
        %2226 = vmatprep.subr.bf16.mxu0 0
        %2227 = vmatpush1.bf16.msra.mxu0 0
        %2228 = vmatprep.subr.bf16.mxu0 0
        %2229 = vmatpush1.bf16.msra.mxu0 0
        %2230 = vmatprep.subr.bf16.mxu0 0
        %2231 = vmatpush1.bf16.msra.mxu0 0
        %2232 = vmatprep.subr.bf16.mxu0 0
        %2233 = vmatpush1.bf16.msra.mxu0 0
        %2234 = vmatprep.subr.bf16.mxu0 0
        %2235 = vmatpush1.bf16.msra.mxu0 0
        %2236 = vmatprep.subr.bf16.mxu0 0
        %2237 = vmatpush1.bf16.msra.mxu0 0
        %2238 = vmatprep.subr.bf16.mxu0 0
        %2239 = vmatpush1.bf16.msra.mxu0 0
        %2240 = vmatprep.subr.bf16.mxu0 0
        %2241 = vmatpush1.bf16.msra.mxu0 0
        %2242 = vmatprep.subr.bf16.mxu0 0
        %2243 = vmatpush1.bf16.msra.mxu0 0
        %2244 = vmatprep.mubr.bf16.mxu0 0
        %2245 = vmatmul.mubr.bf16.gmra.mrb[0].mxu0 %v2201
        %v2246 = vpop.f32.mrb[0].mxu0
        %v2247 = vadd.f32 0.0, %v2246
        %v2248 = vpop.f32.mrb[0].mxu0
        %v2249 = vadd.f32 0.0, %v2248
        %v2250 = vpop.f32.mrb[0].mxu0
        %v2251 = vpop.f32.mrb[0].mxu0
        %2252 = vdwg.mxu0
        %2253 = vmatprep.subr.bf16.mxu0 0
        %2254 = vmatpush1.bf16.msra.mxu0 %v2210
        %2255 = vmatprep.subr.bf16.mxu0 0
        %2256 = vmatpush1.bf16.msra.mxu0 0
        %2257 = vmatprep.subr.bf16.mxu0 0
        %2258 = vmatpush1.bf16.msra.mxu0 0
        %2259 = vmatprep.subr.bf16.mxu0 0
        %2260 = vmatpush1.bf16.msra.mxu0 0
        %2261 = vmatprep.subr.bf16.mxu0 0
        %2262 = vmatpush1.bf16.msra.mxu0 0
        %2263 = vmatprep.subr.bf16.mxu0 0
        %2264 = vmatpush1.bf16.msra.mxu0 0
        %2265 = vmatprep.subr.bf16.mxu0 0
        %2266 = vmatpush1.bf16.msra.mxu0 0
        %2267 = vmatprep.subr.bf16.mxu0 0
        %2268 = vmatpush1.bf16.msra.mxu0 0
        %2269 = vmatprep.subr.bf16.mxu0 0
        %2270 = vmatpush1.bf16.msra.mxu0 0
        %2271 = vmatprep.subr.bf16.mxu0 0
        %2272 = vmatpush1.bf16.msra.mxu0 0
        %2273 = vmatprep.subr.bf16.mxu0 0
        %2274 = vmatpush1.bf16.msra.mxu0 0
        %2275 = vmatprep.subr.bf16.mxu0 0
        %2276 = vmatpush1.bf16.msra.mxu0 0
        %2277 = vmatprep.subr.bf16.mxu0 0
        %2278 = vmatpush1.bf16.msra.mxu0 0
        %2279 = vmatprep.subr.bf16.mxu0 0
        %2280 = vmatpush1.bf16.msra.mxu0 0
        %2281 = vmatprep.subr.bf16.mxu0 0
        %2282 = vmatpush1.bf16.msra.mxu0 0
        %2283 = vmatprep.subr.bf16.mxu0 0
        %2284 = vmatpush1.bf16.msra.mxu0 0
        %2285 = vmatprep.mubr.bf16.mxu0 0
        %2286 = vmatmul.mubr.bf16.gmra.mrb[0].mxu0 %v2201
        %v2287 = vpop.f32.mrb[0].mxu0
        %v2288 = vadd.f32 0.0, %v2287
        %v2289 = vpop.f32.mrb[0].mxu0
        %v2290 = vpop.f32.mrb[0].mxu0
        %v2291 = vpop.f32.mrb[0].mxu0
        %2292 = vdwg.mxu0
        %v2293 = vadd.f32 %v2187, %v2247
        %v2294 = vadd.f32 %v2188, %v2249
        %v2295 = vadd.f32 %v2189, %v2288
        %s2296 = scalar_lea.vmem [#allocation12], 32
        %v2297 = vld [vmem:[%s2296] sm:$0xf]
        %2298 = vrot.lane.b32.xlu0 %v1463, 90
        %v2299 = vpop.permute.xlu0 %2298
        %2300 = vrot.lane.b32.xlu0 %v1464, 90
        %v2301 = vpop.permute.xlu0 %2300
        %2302 = vrot.lane.b32.xlu0 %v1465, 90
        %v2303 = vpop.permute.xlu0 %2302
        %v2304 = vsel %vm1278, %v2299, %v2301
        %v2305 = vsel %vm1278, %v2301, %v2303
        %v2307 = vsel %vm440, %v2297, 0
        %v2310 = vsel %vm444, %v2304, 0
        %v2313 = vsel %vm444, %v2305, 0
        %v2316 = vsel %vm444, %v2303, 0
        %2318 = vmatprep.subr.bf16.mxu0 %v2313
        %2319 = vmatpush1.bf16.msra.mxu0 %v2310
        %2320 = vmatprep.subr.bf16.mxu0 0
        %2321 = vmatpush1.bf16.msra.mxu0 0
        %2322 = vmatprep.subr.bf16.mxu0 0
        %2323 = vmatpush1.bf16.msra.mxu0 0
        %2324 = vmatprep.subr.bf16.mxu0 0
        %2325 = vmatpush1.bf16.msra.mxu0 0
        %2326 = vmatprep.subr.bf16.mxu0 0
        %2327 = vmatpush1.bf16.msra.mxu0 0
        %2328 = vmatprep.subr.bf16.mxu0 0
        %2329 = vmatpush1.bf16.msra.mxu0 0
        %2330 = vmatprep.subr.bf16.mxu0 0
        %2331 = vmatpush1.bf16.msra.mxu0 0
        %2332 = vmatprep.subr.bf16.mxu0 0
        %2333 = vmatpush1.bf16.msra.mxu0 0
        %2334 = vmatprep.subr.bf16.mxu0 0
        %2335 = vmatpush1.bf16.msra.mxu0 0
        %2336 = vmatprep.subr.bf16.mxu0 0
        %2337 = vmatpush1.bf16.msra.mxu0 0
        %2338 = vmatprep.subr.bf16.mxu0 0
        %2339 = vmatpush1.bf16.msra.mxu0 0
        %2340 = vmatprep.subr.bf16.mxu0 0
        %2341 = vmatpush1.bf16.msra.mxu0 0
        %2342 = vmatprep.subr.bf16.mxu0 0
        %2343 = vmatpush1.bf16.msra.mxu0 0
        %2344 = vmatprep.subr.bf16.mxu0 0
        %2345 = vmatpush1.bf16.msra.mxu0 0
        %2346 = vmatprep.subr.bf16.mxu0 0
        %2347 = vmatpush1.bf16.msra.mxu0 0
        %2348 = vmatprep.subr.bf16.mxu0 0
        %2349 = vmatpush1.bf16.msra.mxu0 0
        %2350 = vmatprep.mubr.bf16.mxu0 0
        %2351 = vmatmul.mubr.bf16.gmra.mrb[0].mxu0 %v2307
        %v2352 = vpop.f32.mrb[0].mxu0
        %v2353 = vadd.f32 0.0, %v2352
        %v2354 = vpop.f32.mrb[0].mxu0
        %v2355 = vadd.f32 0.0, %v2354
        %v2356 = vpop.f32.mrb[0].mxu0
        %v2357 = vpop.f32.mrb[0].mxu0
        %2358 = vdwg.mxu0
        %2359 = vmatprep.subr.bf16.mxu0 0
        %2360 = vmatpush1.bf16.msra.mxu0 %v2316
        %2361 = vmatprep.subr.bf16.mxu0 0
        %2362 = vmatpush1.bf16.msra.mxu0 0
        %2363 = vmatprep.subr.bf16.mxu0 0
        %2364 = vmatpush1.bf16.msra.mxu0 0
        %2365 = vmatprep.subr.bf16.mxu0 0
        %2366 = vmatpush1.bf16.msra.mxu0 0
        %2367 = vmatprep.subr.bf16.mxu0 0
        %2368 = vmatpush1.bf16.msra.mxu0 0
        %2369 = vmatprep.subr.bf16.mxu0 0
        %2370 = vmatpush1.bf16.msra.mxu0 0
        %2371 = vmatprep.subr.bf16.mxu0 0
        %2372 = vmatpush1.bf16.msra.mxu0 0
        %2373 = vmatprep.subr.bf16.mxu0 0
        %2374 = vmatpush1.bf16.msra.mxu0 0
        %2375 = vmatprep.subr.bf16.mxu0 0
        %2376 = vmatpush1.bf16.msra.mxu0 0
        %2377 = vmatprep.subr.bf16.mxu0 0
        %2378 = vmatpush1.bf16.msra.mxu0 0
        %2379 = vmatprep.subr.bf16.mxu0 0
        %2380 = vmatpush1.bf16.msra.mxu0 0
        %2381 = vmatprep.subr.bf16.mxu0 0
        %2382 = vmatpush1.bf16.msra.mxu0 0
        %2383 = vmatprep.subr.bf16.mxu0 0
        %2384 = vmatpush1.bf16.msra.mxu0 0
        %2385 = vmatprep.subr.bf16.mxu0 0
        %2386 = vmatpush1.bf16.msra.mxu0 0
        %2387 = vmatprep.subr.bf16.mxu0 0
        %2388 = vmatpush1.bf16.msra.mxu0 0
        %2389 = vmatprep.subr.bf16.mxu0 0
        %2390 = vmatpush1.bf16.msra.mxu0 0
        %2391 = vmatprep.mubr.bf16.mxu0 0
        %2392 = vmatmul.mubr.bf16.gmra.mrb[0].mxu0 %v2307
        %v2393 = vpop.f32.mrb[0].mxu0
        %v2394 = vadd.f32 0.0, %v2393
        %v2395 = vpop.f32.mrb[0].mxu0
        %v2396 = vpop.f32.mrb[0].mxu0
        %v2397 = vpop.f32.mrb[0].mxu0
        %2398 = vdwg.mxu0
        %v2399 = vadd.f32 %v2293, %v2353
        %v2400 = vadd.f32 %v2294, %v2355
        %v2401 = vadd.f32 %v2295, %v2394
        %v2402 = vld [vmem:[#allocation13] sm:$0xff]
        %2404 = vset.pattern.permute.xlu0 0
        %2405 = vperm.xlu0 %2404, %v2402
        %v2406 = vpop.permute.xlu0 %2405
        %v2408 = vadd.f32 %v2399, %v2406
        %v2409 = vadd.f32 %v2400, %v2406
        %v2410 = vadd.f32 %v2401, %v2406
        %vm2411 = vcmp.gt.f32.partialorder %v2408, 0.0
        %vm2412 = vcmp.gt.f32.partialorder %v2409, 0.0
        %vm2413 = vcmp.gt.f32.partialorder %v2410, 0.0
        %v2414 = vmin.f32 %v2408, 0.0
        %v2415 = vmin.f32 %v2409, 0.0
        %v2416 = vmin.f32 %v2410, 0.0
        %v2417 = vmul.f32 %v2414, 1.442695
        %v2418 = vpow.pop %v2417
        %v2419 = vmul.f32 %v2415, 1.442695
        %v2420 = vpow.pop %v2419
        %v2421 = vmul.f32 %v2416, 1.442695
        %v2422 = vpow.pop %v2421
        %v2423 = vsub.f32 %v2418, 1.0
        %v2424 = vsub.f32 %v2420, 1.0
        %v2425 = vsub.f32 %v2422, 1.0
        %v2426 = vsel %vm2411, %v2408, %v2423
        %v2427 = vsel %vm2412, %v2409, %v2424
        %v2428 = vsel %vm2413, %v2410, %v2425
        %v2429 = vmul.f32 %v2426, %v1408
        %v2430 = vmul.f32 %v2427, %v1412
        %v2431 = vmul.f32 %v2428, %v1416
        %2432 = vst [vmem:[#allocation3] sm:$0xff] 0
        %2433 = vst.msk [vmem:[#allocation3 + $0x8] sm:$0xf] %vm1424, 0
        %v2434 = vpack.c.bf16 %v2429, %v2429
        %v2435 = vpack.c.bf16 %v2430, %v2430
        %v2436 = vpack.c.bf16 %v2431, %v2431
        %v2440 = vunpack.c.l.b16 %v2434
        %v2441 = vunpack.c.l.b16 %v2435
        %v2442 = vunpack.c.l.b16 %v2436
        %v2443 = vpack.c.b16 %v2441, %v2440
        %v2444 = vpack.c.b16 %v2442, %v2442
        %2445 = vrot.lane.b32.xlu0 %v2443, 19
        %v2446 = vpop.permute.xlu0 %2445
        %2447 = vrot.lane.b32.xlu0 %v2444, 19
        %v2448 = vpop.permute.xlu0 %2447
        %v2449 = vrot.slane %v2446, 4
        %v2450 = vsel %vm1442, %v2449, %v2446
        %v2451 = vsel %vm1442, %v2449, %v2448
        %2454 = vst.msk [vmem:[#allocation3] sm:$0xff] %vm1449, %v2450
        %2455 = vst.msk [vmem:[#allocation3 + $0x8] sm:$0xf] %vm1451, %v2451
        %v2456 = vld [vmem:[#allocation3] sm:$0xff]
        %v2457 = vld [vmem:[#allocation3 + $0x8] sm:$0xf]
        %v2458 = vld [vmem:[#allocation15] sm:$0x1]
        %s2459 = scalar_lea.vmem [#allocation15], 1
        %v2460 = vld [vmem:[%s2459] sm:$0x1]
        %v2463 = vunpack.c.l.b16 %v2456
        %v2464 = vunpack.c.h.b16 %v2456
        %v2465 = vunpack.c.l.b16 %v2457
        %v2466 = vpack.c.b16 %v2463, %v2463
        %v2467 = vpack.c.b16 %v2464, %v2464
        %v2468 = vpack.c.b16 %v2465, %v2465
        %2469 = vrot.lane.b32.xlu0 %v2466, 127
        %v2470 = vpop.permute.xlu0 %2469
        %2471 = vrot.lane.b32.xlu0 %v2467, 127
        %v2472 = vpop.permute.xlu0 %2471
        %2473 = vrot.lane.b32.xlu0 %v2468, 127
        %v2474 = vpop.permute.xlu0 %2473
        %v2475 = vsel %vm437, %v2470, %v2472
        %v2476 = vsel %vm437, %v2472, %v2474
        %v2478 = vsel %vm440, %v2460, 0
        %v2481 = vsel %vm444, %v2475, 0
        %v2484 = vsel %vm444, %v2476, 0
        %v2487 = vsel %vm444, %v2474, 0
        %2489 = vmatprep.subr.bf16.mxu0 %v2484
        %2490 = vmatpush1.bf16.msra.mxu0 %v2481
        %2491 = vmatprep.subr.bf16.mxu0 0
        %2492 = vmatpush1.bf16.msra.mxu0 0
        %2493 = vmatprep.subr.bf16.mxu0 0
        %2494 = vmatpush1.bf16.msra.mxu0 0
        %2495 = vmatprep.subr.bf16.mxu0 0
        %2496 = vmatpush1.bf16.msra.mxu0 0
        %2497 = vmatprep.subr.bf16.mxu0 0
        %2498 = vmatpush1.bf16.msra.mxu0 0
        %2499 = vmatprep.subr.bf16.mxu0 0
        %2500 = vmatpush1.bf16.msra.mxu0 0
        %2501 = vmatprep.subr.bf16.mxu0 0
        %2502 = vmatpush1.bf16.msra.mxu0 0
        %2503 = vmatprep.subr.bf16.mxu0 0
        %2504 = vmatpush1.bf16.msra.mxu0 0
        %2505 = vmatprep.subr.bf16.mxu0 0
        %2506 = vmatpush1.bf16.msra.mxu0 0
        %2507 = vmatprep.subr.bf16.mxu0 0
        %2508 = vmatpush1.bf16.msra.mxu0 0
        %2509 = vmatprep.subr.bf16.mxu0 0
        %2510 = vmatpush1.bf16.msra.mxu0 0
        %2511 = vmatprep.subr.bf16.mxu0 0
        %2512 = vmatpush1.bf16.msra.mxu0 0
        %2513 = vmatprep.subr.bf16.mxu0 0
        %2514 = vmatpush1.bf16.msra.mxu0 0
        %2515 = vmatprep.subr.bf16.mxu0 0
        %2516 = vmatpush1.bf16.msra.mxu0 0
        %2517 = vmatprep.subr.bf16.mxu0 0
        %2518 = vmatpush1.bf16.msra.mxu0 0
        %2519 = vmatprep.subr.bf16.mxu0 0
        %2520 = vmatpush1.bf16.msra.mxu0 0
        %2521 = vmatprep.mubr.bf16.mxu0 0
        %2522 = vmatmul.mubr.bf16.gmra.mrb[0].mxu0 %v2478
        %v2523 = vpop.f32.mrb[0].mxu0
        %v2524 = vadd.f32 0.0, %v2523
        %v2525 = vpop.f32.mrb[0].mxu0
        %v2526 = vadd.f32 0.0, %v2525
        %v2527 = vpop.f32.mrb[0].mxu0
        %v2528 = vpop.f32.mrb[0].mxu0
        %2529 = vdwg.mxu0
        %2530 = vmatprep.subr.bf16.mxu0 0
        %2531 = vmatpush1.bf16.msra.mxu0 %v2487
        %2532 = vmatprep.subr.bf16.mxu0 0
        %2533 = vmatpush1.bf16.msra.mxu0 0
        %2534 = vmatprep.subr.bf16.mxu0 0
        %2535 = vmatpush1.bf16.msra.mxu0 0
        %2536 = vmatprep.subr.bf16.mxu0 0
        %2537 = vmatpush1.bf16.msra.mxu0 0
        %2538 = vmatprep.subr.bf16.mxu0 0
        %2539 = vmatpush1.bf16.msra.mxu0 0
        %2540 = vmatprep.subr.bf16.mxu0 0
        %2541 = vmatpush1.bf16.msra.mxu0 0
        %2542 = vmatprep.subr.bf16.mxu0 0
        %2543 = vmatpush1.bf16.msra.mxu0 0
        %2544 = vmatprep.subr.bf16.mxu0 0
        %2545 = vmatpush1.bf16.msra.mxu0 0
        %2546 = vmatprep.subr.bf16.mxu0 0
        %2547 = vmatpush1.bf16.msra.mxu0 0
        %2548 = vmatprep.subr.bf16.mxu0 0
        %2549 = vmatpush1.bf16.msra.mxu0 0
        %2550 = vmatprep.subr.bf16.mxu0 0
        %2551 = vmatpush1.bf16.msra.mxu0 0
        %2552 = vmatprep.subr.bf16.mxu0 0
        %2553 = vmatpush1.bf16.msra.mxu0 0
        %2554 = vmatprep.subr.bf16.mxu0 0
        %2555 = vmatpush1.bf16.msra.mxu0 0
        %2556 = vmatprep.subr.bf16.mxu0 0
        %2557 = vmatpush1.bf16.msra.mxu0 0
        %2558 = vmatprep.subr.bf16.mxu0 0
        %2559 = vmatpush1.bf16.msra.mxu0 0
        %2560 = vmatprep.subr.bf16.mxu0 0
        %2561 = vmatpush1.bf16.msra.mxu0 0
        %2562 = vmatprep.mubr.bf16.mxu0 0
        %2563 = vmatmul.mubr.bf16.gmra.mrb[0].mxu0 %v2478
        %v2564 = vpop.f32.mrb[0].mxu0
        %v2565 = vadd.f32 0.0, %v2564
        %v2566 = vpop.f32.mrb[0].mxu0
        %v2567 = vpop.f32.mrb[0].mxu0
        %v2568 = vpop.f32.mrb[0].mxu0
        %2569 = vdwg.mxu0
        %v2571 = vsel %vm440, %v2458, 0
        %v2574 = vsel %vm444, %v2466, 0
        %v2577 = vsel %vm444, %v2467, 0
        %v2580 = vsel %vm444, %v2468, 0
        %2582 = vmatprep.subr.bf16.mxu0 %v2577
        %2583 = vmatpush1.bf16.msra.mxu0 %v2574
        %2584 = vmatprep.subr.bf16.mxu0 0
        %2585 = vmatpush1.bf16.msra.mxu0 0
        %2586 = vmatprep.subr.bf16.mxu0 0
        %2587 = vmatpush1.bf16.msra.mxu0 0
        %2588 = vmatprep.subr.bf16.mxu0 0
        %2589 = vmatpush1.bf16.msra.mxu0 0
        %2590 = vmatprep.subr.bf16.mxu0 0
        %2591 = vmatpush1.bf16.msra.mxu0 0
        %2592 = vmatprep.subr.bf16.mxu0 0
        %2593 = vmatpush1.bf16.msra.mxu0 0
        %2594 = vmatprep.subr.bf16.mxu0 0
        %2595 = vmatpush1.bf16.msra.mxu0 0
        %2596 = vmatprep.subr.bf16.mxu0 0
        %2597 = vmatpush1.bf16.msra.mxu0 0
        %2598 = vmatprep.subr.bf16.mxu0 0
        %2599 = vmatpush1.bf16.msra.mxu0 0
        %2600 = vmatprep.subr.bf16.mxu0 0
        %2601 = vmatpush1.bf16.msra.mxu0 0
        %2602 = vmatprep.subr.bf16.mxu0 0
        %2603 = vmatpush1.bf16.msra.mxu0 0
        %2604 = vmatprep.subr.bf16.mxu0 0
        %2605 = vmatpush1.bf16.msra.mxu0 0
        %2606 = vmatprep.subr.bf16.mxu0 0
        %2607 = vmatpush1.bf16.msra.mxu0 0
        %2608 = vmatprep.subr.bf16.mxu0 0
        %2609 = vmatpush1.bf16.msra.mxu0 0
        %2610 = vmatprep.subr.bf16.mxu0 0
        %2611 = vmatpush1.bf16.msra.mxu0 0
        %2612 = vmatprep.subr.bf16.mxu0 0
        %2613 = vmatpush1.bf16.msra.mxu0 0
        %2614 = vmatprep.mubr.bf16.mxu0 0
        %2615 = vmatmul.mubr.bf16.gmra.mrb[0].mxu0 %v2571
        %v2616 = vpop.f32.mrb[0].mxu0
        %v2617 = vadd.f32 %v2524, %v2616
        %v2618 = vpop.f32.mrb[0].mxu0
        %v2619 = vadd.f32 %v2526, %v2618
        %v2620 = vpop.f32.mrb[0].mxu0
        %v2621 = vpop.f32.mrb[0].mxu0
        %2622 = vdwg.mxu0
        %2623 = vmatprep.subr.bf16.mxu0 0
        %2624 = vmatpush1.bf16.msra.mxu0 %v2580
        %2625 = vmatprep.subr.bf16.mxu0 0
        %2626 = vmatpush1.bf16.msra.mxu0 0
        %2627 = vmatprep.subr.bf16.mxu0 0
        %2628 = vmatpush1.bf16.msra.mxu0 0
        %2629 = vmatprep.subr.bf16.mxu0 0
        %2630 = vmatpush1.bf16.msra.mxu0 0
        %2631 = vmatprep.subr.bf16.mxu0 0
        %2632 = vmatpush1.bf16.msra.mxu0 0
        %2633 = vmatprep.subr.bf16.mxu0 0
        %2634 = vmatpush1.bf16.msra.mxu0 0
        %2635 = vmatprep.subr.bf16.mxu0 0
        %2636 = vmatpush1.bf16.msra.mxu0 0
        %2637 = vmatprep.subr.bf16.mxu0 0
        %2638 = vmatpush1.bf16.msra.mxu0 0
        %2639 = vmatprep.subr.bf16.mxu0 0
        %2640 = vmatpush1.bf16.msra.mxu0 0
        %2641 = vmatprep.subr.bf16.mxu0 0
        %2642 = vmatpush1.bf16.msra.mxu0 0
        %2643 = vmatprep.subr.bf16.mxu0 0
        %2644 = vmatpush1.bf16.msra.mxu0 0
        %2645 = vmatprep.subr.bf16.mxu0 0
        %2646 = vmatpush1.bf16.msra.mxu0 0
        %2647 = vmatprep.subr.bf16.mxu0 0
        %2648 = vmatpush1.bf16.msra.mxu0 0
        %2649 = vmatprep.subr.bf16.mxu0 0
        %2650 = vmatpush1.bf16.msra.mxu0 0
        %2651 = vmatprep.subr.bf16.mxu0 0
        %2652 = vmatpush1.bf16.msra.mxu0 0
        %2653 = vmatprep.subr.bf16.mxu0 0
        %2654 = vmatpush1.bf16.msra.mxu0 0
        %2655 = vmatprep.mubr.bf16.mxu0 0
        %2656 = vmatmul.mubr.bf16.gmra.mrb[0].mxu0 %v2571
        %v2657 = vpop.f32.mrb[0].mxu0
        %v2658 = vadd.f32 %v2565, %v2657
        %v2659 = vpop.f32.mrb[0].mxu0
        %v2660 = vpop.f32.mrb[0].mxu0
        %v2661 = vpop.f32.mrb[0].mxu0
        %2662 = vdwg.mxu0
        %s2663 = scalar_lea.vmem [#allocation15], 2
        %v2664 = vld [vmem:[%s2663] sm:$0x1]
        %2665 = vrot.lane.b32.xlu0 %v2466, 126
        %v2666 = vpop.permute.xlu0 %2665
        %2667 = vrot.lane.b32.xlu0 %v2467, 126
        %v2668 = vpop.permute.xlu0 %2667
        %2669 = vrot.lane.b32.xlu0 %v2468, 126
        %v2670 = vpop.permute.xlu0 %2669
        %v2671 = vsel %vm636, %v2666, %v2668
        %v2672 = vsel %vm636, %v2668, %v2670
        %v2674 = vsel %vm440, %v2664, 0
        %v2677 = vsel %vm444, %v2671, 0
        %v2680 = vsel %vm444, %v2672, 0
        %v2683 = vsel %vm444, %v2670, 0
        %2685 = vmatprep.subr.bf16.mxu0 %v2680
        %2686 = vmatpush1.bf16.msra.mxu0 %v2677
        %2687 = vmatprep.subr.bf16.mxu0 0
        %2688 = vmatpush1.bf16.msra.mxu0 0
        %2689 = vmatprep.subr.bf16.mxu0 0
        %2690 = vmatpush1.bf16.msra.mxu0 0
        %2691 = vmatprep.subr.bf16.mxu0 0
        %2692 = vmatpush1.bf16.msra.mxu0 0
        %2693 = vmatprep.subr.bf16.mxu0 0
        %2694 = vmatpush1.bf16.msra.mxu0 0
        %2695 = vmatprep.subr.bf16.mxu0 0
        %2696 = vmatpush1.bf16.msra.mxu0 0
        %2697 = vmatprep.subr.bf16.mxu0 0
        %2698 = vmatpush1.bf16.msra.mxu0 0
        %2699 = vmatprep.subr.bf16.mxu0 0
        %2700 = vmatpush1.bf16.msra.mxu0 0
        %2701 = vmatprep.subr.bf16.mxu0 0
        %2702 = vmatpush1.bf16.msra.mxu0 0
        %2703 = vmatprep.subr.bf16.mxu0 0
        %2704 = vmatpush1.bf16.msra.mxu0 0
        %2705 = vmatprep.subr.bf16.mxu0 0
        %2706 = vmatpush1.bf16.msra.mxu0 0
        %2707 = vmatprep.subr.bf16.mxu0 0
        %2708 = vmatpush1.bf16.msra.mxu0 0
        %2709 = vmatprep.subr.bf16.mxu0 0
        %2710 = vmatpush1.bf16.msra.mxu0 0
        %2711 = vmatprep.subr.bf16.mxu0 0
        %2712 = vmatpush1.bf16.msra.mxu0 0
        %2713 = vmatprep.subr.bf16.mxu0 0
        %2714 = vmatpush1.bf16.msra.mxu0 0
        %2715 = vmatprep.subr.bf16.mxu0 0
        %2716 = vmatpush1.bf16.msra.mxu0 0
        %2717 = vmatprep.mubr.bf16.mxu0 0
        %2718 = vmatmul.mubr.bf16.gmra.mrb[0].mxu0 %v2674
        %v2719 = vpop.f32.mrb[0].mxu0
        %v2720 = vadd.f32 0.0, %v2719
        %v2721 = vpop.f32.mrb[0].mxu0
        %v2722 = vadd.f32 0.0, %v2721
        %v2723 = vpop.f32.mrb[0].mxu0
        %v2724 = vpop.f32.mrb[0].mxu0
        %2725 = vdwg.mxu0
        %2726 = vmatprep.subr.bf16.mxu0 0
        %2727 = vmatpush1.bf16.msra.mxu0 %v2683
        %2728 = vmatprep.subr.bf16.mxu0 0
        %2729 = vmatpush1.bf16.msra.mxu0 0
        %2730 = vmatprep.subr.bf16.mxu0 0
        %2731 = vmatpush1.bf16.msra.mxu0 0
        %2732 = vmatprep.subr.bf16.mxu0 0
        %2733 = vmatpush1.bf16.msra.mxu0 0
        %2734 = vmatprep.subr.bf16.mxu0 0
        %2735 = vmatpush1.bf16.msra.mxu0 0
        %2736 = vmatprep.subr.bf16.mxu0 0
        %2737 = vmatpush1.bf16.msra.mxu0 0
        %2738 = vmatprep.subr.bf16.mxu0 0
        %2739 = vmatpush1.bf16.msra.mxu0 0
        %2740 = vmatprep.subr.bf16.mxu0 0
        %2741 = vmatpush1.bf16.msra.mxu0 0
        %2742 = vmatprep.subr.bf16.mxu0 0
        %2743 = vmatpush1.bf16.msra.mxu0 0
        %2744 = vmatprep.subr.bf16.mxu0 0
        %2745 = vmatpush1.bf16.msra.mxu0 0
        %2746 = vmatprep.subr.bf16.mxu0 0
        %2747 = vmatpush1.bf16.msra.mxu0 0
        %2748 = vmatprep.subr.bf16.mxu0 0
        %2749 = vmatpush1.bf16.msra.mxu0 0
        %2750 = vmatprep.subr.bf16.mxu0 0
        %2751 = vmatpush1.bf16.msra.mxu0 0
        %2752 = vmatprep.subr.bf16.mxu0 0
        %2753 = vmatpush1.bf16.msra.mxu0 0
        %2754 = vmatprep.subr.bf16.mxu0 0
        %2755 = vmatpush1.bf16.msra.mxu0 0
        %2756 = vmatprep.subr.bf16.mxu0 0
        %2757 = vmatpush1.bf16.msra.mxu0 0
        %2758 = vmatprep.mubr.bf16.mxu0 0
        %2759 = vmatmul.mubr.bf16.gmra.mrb[0].mxu0 %v2674
        %v2760 = vpop.f32.mrb[0].mxu0
        %v2761 = vadd.f32 0.0, %v2760
        %v2762 = vpop.f32.mrb[0].mxu0
        %v2763 = vpop.f32.mrb[0].mxu0
        %v2764 = vpop.f32.mrb[0].mxu0
        %2765 = vdwg.mxu0
        %v2766 = vadd.f32 %v2617, %v2720
        %v2767 = vadd.f32 %v2619, %v2722
        %v2768 = vadd.f32 %v2658, %v2761
        %s2769 = scalar_lea.vmem [#allocation15], 3
        %v2770 = vld [vmem:[%s2769] sm:$0x1]
        %2771 = vrot.lane.b32.xlu0 %v2466, 110
        %v2772 = vpop.permute.xlu0 %2771
        %2773 = vrot.lane.b32.xlu0 %v2467, 110
        %v2774 = vpop.permute.xlu0 %2773
        %2775 = vrot.lane.b32.xlu0 %v2468, 110
        %v2776 = vpop.permute.xlu0 %2775
        %v2777 = vsel %vm743, %v2772, %v2774
        %v2778 = vsel %vm743, %v2774, %v2776
        %v2780 = vsel %vm440, %v2770, 0
        %v2783 = vsel %vm444, %v2777, 0
        %v2786 = vsel %vm444, %v2778, 0
        %v2789 = vsel %vm444, %v2776, 0
        %2791 = vmatprep.subr.bf16.mxu0 %v2786
        %2792 = vmatpush1.bf16.msra.mxu0 %v2783
        %2793 = vmatprep.subr.bf16.mxu0 0
        %2794 = vmatpush1.bf16.msra.mxu0 0
        %2795 = vmatprep.subr.bf16.mxu0 0
        %2796 = vmatpush1.bf16.msra.mxu0 0
        %2797 = vmatprep.subr.bf16.mxu0 0
        %2798 = vmatpush1.bf16.msra.mxu0 0
        %2799 = vmatprep.subr.bf16.mxu0 0
        %2800 = vmatpush1.bf16.msra.mxu0 0
        %2801 = vmatprep.subr.bf16.mxu0 0
        %2802 = vmatpush1.bf16.msra.mxu0 0
        %2803 = vmatprep.subr.bf16.mxu0 0
        %2804 = vmatpush1.bf16.msra.mxu0 0
        %2805 = vmatprep.subr.bf16.mxu0 0
        %2806 = vmatpush1.bf16.msra.mxu0 0
        %2807 = vmatprep.subr.bf16.mxu0 0
        %2808 = vmatpush1.bf16.msra.mxu0 0
        %2809 = vmatprep.subr.bf16.mxu0 0
        %2810 = vmatpush1.bf16.msra.mxu0 0
        %2811 = vmatprep.subr.bf16.mxu0 0
        %2812 = vmatpush1.bf16.msra.mxu0 0
        %2813 = vmatprep.subr.bf16.mxu0 0
        %2814 = vmatpush1.bf16.msra.mxu0 0
        %2815 = vmatprep.subr.bf16.mxu0 0
        %2816 = vmatpush1.bf16.msra.mxu0 0
        %2817 = vmatprep.subr.bf16.mxu0 0
        %2818 = vmatpush1.bf16.msra.mxu0 0
        %2819 = vmatprep.subr.bf16.mxu0 0
        %2820 = vmatpush1.bf16.msra.mxu0 0
        %2821 = vmatprep.subr.bf16.mxu0 0
        %2822 = vmatpush1.bf16.msra.mxu0 0
        %2823 = vmatprep.mubr.bf16.mxu0 0
        %2824 = vmatmul.mubr.bf16.gmra.mrb[0].mxu0 %v2780
        %v2825 = vpop.f32.mrb[0].mxu0
        %v2826 = vadd.f32 0.0, %v2825
        %v2827 = vpop.f32.mrb[0].mxu0
        %v2828 = vadd.f32 0.0, %v2827
        %v2829 = vpop.f32.mrb[0].mxu0
        %v2830 = vpop.f32.mrb[0].mxu0
        %2831 = vdwg.mxu0
        %2832 = vmatprep.subr.bf16.mxu0 0
        %2833 = vmatpush1.bf16.msra.mxu0 %v2789
        %2834 = vmatprep.subr.bf16.mxu0 0
        %2835 = vmatpush1.bf16.msra.mxu0 0
        %2836 = vmatprep.subr.bf16.mxu0 0
        %2837 = vmatpush1.bf16.msra.mxu0 0
        %2838 = vmatprep.subr.bf16.mxu0 0
        %2839 = vmatpush1.bf16.msra.mxu0 0
        %2840 = vmatprep.subr.bf16.mxu0 0
        %2841 = vmatpush1.bf16.msra.mxu0 0
        %2842 = vmatprep.subr.bf16.mxu0 0
        %2843 = vmatpush1.bf16.msra.mxu0 0
        %2844 = vmatprep.subr.bf16.mxu0 0
        %2845 = vmatpush1.bf16.msra.mxu0 0
        %2846 = vmatprep.subr.bf16.mxu0 0
        %2847 = vmatpush1.bf16.msra.mxu0 0
        %2848 = vmatprep.subr.bf16.mxu0 0
        %2849 = vmatpush1.bf16.msra.mxu0 0
        %2850 = vmatprep.subr.bf16.mxu0 0
        %2851 = vmatpush1.bf16.msra.mxu0 0
        %2852 = vmatprep.subr.bf16.mxu0 0
        %2853 = vmatpush1.bf16.msra.mxu0 0
        %2854 = vmatprep.subr.bf16.mxu0 0
        %2855 = vmatpush1.bf16.msra.mxu0 0
        %2856 = vmatprep.subr.bf16.mxu0 0
        %2857 = vmatpush1.bf16.msra.mxu0 0
        %2858 = vmatprep.subr.bf16.mxu0 0
        %2859 = vmatpush1.bf16.msra.mxu0 0
        %2860 = vmatprep.subr.bf16.mxu0 0
        %2861 = vmatpush1.bf16.msra.mxu0 0
        %2862 = vmatprep.subr.bf16.mxu0 0
        %2863 = vmatpush1.bf16.msra.mxu0 0
        %2864 = vmatprep.mubr.bf16.mxu0 0
        %2865 = vmatmul.mubr.bf16.gmra.mrb[0].mxu0 %v2780
        %v2866 = vpop.f32.mrb[0].mxu0
        %v2867 = vadd.f32 0.0, %v2866
        %v2868 = vpop.f32.mrb[0].mxu0
        %v2869 = vpop.f32.mrb[0].mxu0
        %v2870 = vpop.f32.mrb[0].mxu0
        %2871 = vdwg.mxu0
        %v2872 = vadd.f32 %v2766, %v2826
        %v2873 = vadd.f32 %v2767, %v2828
        %v2874 = vadd.f32 %v2768, %v2867
        %s2875 = scalar_lea.vmem [#allocation15], 4
        %v2876 = vld [vmem:[%s2875] sm:$0x1]
        %2877 = vrot.lane.b32.xlu0 %v2466, 109
        %v2878 = vpop.permute.xlu0 %2877
        %2879 = vrot.lane.b32.xlu0 %v2467, 109
        %v2880 = vpop.permute.xlu0 %2879
        %2881 = vrot.lane.b32.xlu0 %v2468, 109
        %v2882 = vpop.permute.xlu0 %2881
        %v2883 = vsel %vm850, %v2878, %v2880
        %v2884 = vsel %vm850, %v2880, %v2882
        %v2886 = vsel %vm440, %v2876, 0
        %v2889 = vsel %vm444, %v2883, 0
        %v2892 = vsel %vm444, %v2884, 0
        %v2895 = vsel %vm444, %v2882, 0
        %2897 = vmatprep.subr.bf16.mxu0 %v2892
        %2898 = vmatpush1.bf16.msra.mxu0 %v2889
        %2899 = vmatprep.subr.bf16.mxu0 0
        %2900 = vmatpush1.bf16.msra.mxu0 0
        %2901 = vmatprep.subr.bf16.mxu0 0
        %2902 = vmatpush1.bf16.msra.mxu0 0
        %2903 = vmatprep.subr.bf16.mxu0 0
        %2904 = vmatpush1.bf16.msra.mxu0 0
        %2905 = vmatprep.subr.bf16.mxu0 0
        %2906 = vmatpush1.bf16.msra.mxu0 0
        %2907 = vmatprep.subr.bf16.mxu0 0
        %2908 = vmatpush1.bf16.msra.mxu0 0
        %2909 = vmatprep.subr.bf16.mxu0 0
        %2910 = vmatpush1.bf16.msra.mxu0 0
        %2911 = vmatprep.subr.bf16.mxu0 0
        %2912 = vmatpush1.bf16.msra.mxu0 0
        %2913 = vmatprep.subr.bf16.mxu0 0
        %2914 = vmatpush1.bf16.msra.mxu0 0
        %2915 = vmatprep.subr.bf16.mxu0 0
        %2916 = vmatpush1.bf16.msra.mxu0 0
        %2917 = vmatprep.subr.bf16.mxu0 0
        %2918 = vmatpush1.bf16.msra.mxu0 0
        %2919 = vmatprep.subr.bf16.mxu0 0
        %2920 = vmatpush1.bf16.msra.mxu0 0
        %2921 = vmatprep.subr.bf16.mxu0 0
        %2922 = vmatpush1.bf16.msra.mxu0 0
        %2923 = vmatprep.subr.bf16.mxu0 0
        %2924 = vmatpush1.bf16.msra.mxu0 0
        %2925 = vmatprep.subr.bf16.mxu0 0
        %2926 = vmatpush1.bf16.msra.mxu0 0
        %2927 = vmatprep.subr.bf16.mxu0 0
        %2928 = vmatpush1.bf16.msra.mxu0 0
        %2929 = vmatprep.mubr.bf16.mxu0 0
        %2930 = vmatmul.mubr.bf16.gmra.mrb[0].mxu0 %v2886
        %v2931 = vpop.f32.mrb[0].mxu0
        %v2932 = vadd.f32 0.0, %v2931
        %v2933 = vpop.f32.mrb[0].mxu0
        %v2934 = vadd.f32 0.0, %v2933
        %v2935 = vpop.f32.mrb[0].mxu0
        %v2936 = vpop.f32.mrb[0].mxu0
        %2937 = vdwg.mxu0
        %2938 = vmatprep.subr.bf16.mxu0 0
        %2939 = vmatpush1.bf16.msra.mxu0 %v2895
        %2940 = vmatprep.subr.bf16.mxu0 0
        %2941 = vmatpush1.bf16.msra.mxu0 0
        %2942 = vmatprep.subr.bf16.mxu0 0
        %2943 = vmatpush1.bf16.msra.mxu0 0
        %2944 = vmatprep.subr.bf16.mxu0 0
        %2945 = vmatpush1.bf16.msra.mxu0 0
        %2946 = vmatprep.subr.bf16.mxu0 0
        %2947 = vmatpush1.bf16.msra.mxu0 0
        %2948 = vmatprep.subr.bf16.mxu0 0
        %2949 = vmatpush1.bf16.msra.mxu0 0
        %2950 = vmatprep.subr.bf16.mxu0 0
        %2951 = vmatpush1.bf16.msra.mxu0 0
        %2952 = vmatprep.subr.bf16.mxu0 0
        %2953 = vmatpush1.bf16.msra.mxu0 0
        %2954 = vmatprep.subr.bf16.mxu0 0
        %2955 = vmatpush1.bf16.msra.mxu0 0
        %2956 = vmatprep.subr.bf16.mxu0 0
        %2957 = vmatpush1.bf16.msra.mxu0 0
        %2958 = vmatprep.subr.bf16.mxu0 0
        %2959 = vmatpush1.bf16.msra.mxu0 0
        %2960 = vmatprep.subr.bf16.mxu0 0
        %2961 = vmatpush1.bf16.msra.mxu0 0
        %2962 = vmatprep.subr.bf16.mxu0 0
        %2963 = vmatpush1.bf16.msra.mxu0 0
        %2964 = vmatprep.subr.bf16.mxu0 0
        %2965 = vmatpush1.bf16.msra.mxu0 0
        %2966 = vmatprep.subr.bf16.mxu0 0
        %2967 = vmatpush1.bf16.msra.mxu0 0
        %2968 = vmatprep.subr.bf16.mxu0 0
        %2969 = vmatpush1.bf16.msra.mxu0 0
        %2970 = vmatprep.mubr.bf16.mxu0 0
        %2971 = vmatmul.mubr.bf16.gmra.mrb[0].mxu0 %v2886
        %v2972 = vpop.f32.mrb[0].mxu0
        %v2973 = vadd.f32 0.0, %v2972
        %v2974 = vpop.f32.mrb[0].mxu0
        %v2975 = vpop.f32.mrb[0].mxu0
        %v2976 = vpop.f32.mrb[0].mxu0
        %2977 = vdwg.mxu0
        %v2978 = vadd.f32 %v2872, %v2932
        %v2979 = vadd.f32 %v2873, %v2934
        %v2980 = vadd.f32 %v2874, %v2973
        %s2981 = scalar_lea.vmem [#allocation15], 5
        %v2982 = vld [vmem:[%s2981] sm:$0x1]
        %2983 = vrot.lane.b32.xlu0 %v2466, 108
        %v2984 = vpop.permute.xlu0 %2983
        %2985 = vrot.lane.b32.xlu0 %v2467, 108
        %v2986 = vpop.permute.xlu0 %2985
        %2987 = vrot.lane.b32.xlu0 %v2468, 108
        %v2988 = vpop.permute.xlu0 %2987
        %v2989 = vsel %vm957, %v2984, %v2986
        %v2990 = vsel %vm957, %v2986, %v2988
        %v2992 = vsel %vm440, %v2982, 0
        %v2995 = vsel %vm444, %v2989, 0
        %v2998 = vsel %vm444, %v2990, 0
        %v3001 = vsel %vm444, %v2988, 0
        %3003 = vmatprep.subr.bf16.mxu0 %v2998
        %3004 = vmatpush1.bf16.msra.mxu0 %v2995
        %3005 = vmatprep.subr.bf16.mxu0 0
        %3006 = vmatpush1.bf16.msra.mxu0 0
        %3007 = vmatprep.subr.bf16.mxu0 0
        %3008 = vmatpush1.bf16.msra.mxu0 0
        %3009 = vmatprep.subr.bf16.mxu0 0
        %3010 = vmatpush1.bf16.msra.mxu0 0
        %3011 = vmatprep.subr.bf16.mxu0 0
        %3012 = vmatpush1.bf16.msra.mxu0 0
        %3013 = vmatprep.subr.bf16.mxu0 0
        %3014 = vmatpush1.bf16.msra.mxu0 0
        %3015 = vmatprep.subr.bf16.mxu0 0
        %3016 = vmatpush1.bf16.msra.mxu0 0
        %3017 = vmatprep.subr.bf16.mxu0 0
        %3018 = vmatpush1.bf16.msra.mxu0 0
        %3019 = vmatprep.subr.bf16.mxu0 0
        %3020 = vmatpush1.bf16.msra.mxu0 0
        %3021 = vmatprep.subr.bf16.mxu0 0
        %3022 = vmatpush1.bf16.msra.mxu0 0
        %3023 = vmatprep.subr.bf16.mxu0 0
        %3024 = vmatpush1.bf16.msra.mxu0 0
        %3025 = vmatprep.subr.bf16.mxu0 0
        %3026 = vmatpush1.bf16.msra.mxu0 0
        %3027 = vmatprep.subr.bf16.mxu0 0
        %3028 = vmatpush1.bf16.msra.mxu0 0
        %3029 = vmatprep.subr.bf16.mxu0 0
        %3030 = vmatpush1.bf16.msra.mxu0 0
        %3031 = vmatprep.subr.bf16.mxu0 0
        %3032 = vmatpush1.bf16.msra.mxu0 0
        %3033 = vmatprep.subr.bf16.mxu0 0
        %3034 = vmatpush1.bf16.msra.mxu0 0
        %3035 = vmatprep.mubr.bf16.mxu0 0
        %3036 = vmatmul.mubr.bf16.gmra.mrb[0].mxu0 %v2992
        %v3037 = vpop.f32.mrb[0].mxu0
        %v3038 = vadd.f32 0.0, %v3037
        %v3039 = vpop.f32.mrb[0].mxu0
        %v3040 = vadd.f32 0.0, %v3039
        %v3041 = vpop.f32.mrb[0].mxu0
        %v3042 = vpop.f32.mrb[0].mxu0
        %3043 = vdwg.mxu0
        %3044 = vmatprep.subr.bf16.mxu0 0
        %3045 = vmatpush1.bf16.msra.mxu0 %v3001
        %3046 = vmatprep.subr.bf16.mxu0 0
        %3047 = vmatpush1.bf16.msra.mxu0 0
        %3048 = vmatprep.subr.bf16.mxu0 0
        %3049 = vmatpush1.bf16.msra.mxu0 0
        %3050 = vmatprep.subr.bf16.mxu0 0
        %3051 = vmatpush1.bf16.msra.mxu0 0
        %3052 = vmatprep.subr.bf16.mxu0 0
        %3053 = vmatpush1.bf16.msra.mxu0 0
        %3054 = vmatprep.subr.bf16.mxu0 0
        %3055 = vmatpush1.bf16.msra.mxu0 0
        %3056 = vmatprep.subr.bf16.mxu0 0
        %3057 = vmatpush1.bf16.msra.mxu0 0
        %3058 = vmatprep.subr.bf16.mxu0 0
        %3059 = vmatpush1.bf16.msra.mxu0 0
        %3060 = vmatprep.subr.bf16.mxu0 0
        %3061 = vmatpush1.bf16.msra.mxu0 0
        %3062 = vmatprep.subr.bf16.mxu0 0
        %3063 = vmatpush1.bf16.msra.mxu0 0
        %3064 = vmatprep.subr.bf16.mxu0 0
        %3065 = vmatpush1.bf16.msra.mxu0 0
        %3066 = vmatprep.subr.bf16.mxu0 0
        %3067 = vmatpush1.bf16.msra.mxu0 0
        %3068 = vmatprep.subr.bf16.mxu0 0
        %3069 = vmatpush1.bf16.msra.mxu0 0
        %3070 = vmatprep.subr.bf16.mxu0 0
        %3071 = vmatpush1.bf16.msra.mxu0 0
        %3072 = vmatprep.subr.bf16.mxu0 0
        %3073 = vmatpush1.bf16.msra.mxu0 0
        %3074 = vmatprep.subr.bf16.mxu0 0
        %3075 = vmatpush1.bf16.msra.mxu0 0
        %3076 = vmatprep.mubr.bf16.mxu0 0
        %3077 = vmatmul.mubr.bf16.gmra.mrb[0].mxu0 %v2992
        %v3078 = vpop.f32.mrb[0].mxu0
        %v3079 = vadd.f32 0.0, %v3078
        %v3080 = vpop.f32.mrb[0].mxu0
        %v3081 = vpop.f32.mrb[0].mxu0
        %v3082 = vpop.f32.mrb[0].mxu0
        %3083 = vdwg.mxu0
        %v3084 = vadd.f32 %v2978, %v3038
        %v3085 = vadd.f32 %v2979, %v3040
        %v3086 = vadd.f32 %v2980, %v3079
        %s3087 = scalar_lea.vmem [#allocation15], 6
        %v3088 = vld [vmem:[%s3087] sm:$0x1]
        %3089 = vrot.lane.b32.xlu0 %v2466, 92
        %v3090 = vpop.permute.xlu0 %3089
        %3091 = vrot.lane.b32.xlu0 %v2467, 92
        %v3092 = vpop.permute.xlu0 %3091
        %3093 = vrot.lane.b32.xlu0 %v2468, 92
        %v3094 = vpop.permute.xlu0 %3093
        %v3095 = vsel %vm1064, %v3090, %v3092
        %v3096 = vsel %vm1064, %v3092, %v3094
        %v3098 = vsel %vm440, %v3088, 0
        %v3101 = vsel %vm444, %v3095, 0
        %v3104 = vsel %vm444, %v3096, 0
        %v3107 = vsel %vm444, %v3094, 0
        %3109 = vmatprep.subr.bf16.mxu0 %v3104
        %3110 = vmatpush1.bf16.msra.mxu0 %v3101
        %3111 = vmatprep.subr.bf16.mxu0 0
        %3112 = vmatpush1.bf16.msra.mxu0 0
        %3113 = vmatprep.subr.bf16.mxu0 0
        %3114 = vmatpush1.bf16.msra.mxu0 0
        %3115 = vmatprep.subr.bf16.mxu0 0
        %3116 = vmatpush1.bf16.msra.mxu0 0
        %3117 = vmatprep.subr.bf16.mxu0 0
        %3118 = vmatpush1.bf16.msra.mxu0 0
        %3119 = vmatprep.subr.bf16.mxu0 0
        %3120 = vmatpush1.bf16.msra.mxu0 0
        %3121 = vmatprep.subr.bf16.mxu0 0
        %3122 = vmatpush1.bf16.msra.mxu0 0
        %3123 = vmatprep.subr.bf16.mxu0 0
        %3124 = vmatpush1.bf16.msra.mxu0 0
        %3125 = vmatprep.subr.bf16.mxu0 0
        %3126 = vmatpush1.bf16.msra.mxu0 0
        %3127 = vmatprep.subr.bf16.mxu0 0
        %3128 = vmatpush1.bf16.msra.mxu0 0
        %3129 = vmatprep.subr.bf16.mxu0 0
        %3130 = vmatpush1.bf16.msra.mxu0 0
        %3131 = vmatprep.subr.bf16.mxu0 0
        %3132 = vmatpush1.bf16.msra.mxu0 0
        %3133 = vmatprep.subr.bf16.mxu0 0
        %3134 = vmatpush1.bf16.msra.mxu0 0
        %3135 = vmatprep.subr.bf16.mxu0 0
        %3136 = vmatpush1.bf16.msra.mxu0 0
        %3137 = vmatprep.subr.bf16.mxu0 0
        %3138 = vmatpush1.bf16.msra.mxu0 0
        %3139 = vmatprep.subr.bf16.mxu0 0
        %3140 = vmatpush1.bf16.msra.mxu0 0
        %3141 = vmatprep.mubr.bf16.mxu0 0
        %3142 = vmatmul.mubr.bf16.gmra.mrb[0].mxu0 %v3098
        %v3143 = vpop.f32.mrb[0].mxu0
        %v3144 = vadd.f32 0.0, %v3143
        %v3145 = vpop.f32.mrb[0].mxu0
        %v3146 = vadd.f32 0.0, %v3145
        %v3147 = vpop.f32.mrb[0].mxu0
        %v3148 = vpop.f32.mrb[0].mxu0
        %3149 = vdwg.mxu0
        %3150 = vmatprep.subr.bf16.mxu0 0
        %3151 = vmatpush1.bf16.msra.mxu0 %v3107
        %3152 = vmatprep.subr.bf16.mxu0 0
        %3153 = vmatpush1.bf16.msra.mxu0 0
        %3154 = vmatprep.subr.bf16.mxu0 0
        %3155 = vmatpush1.bf16.msra.mxu0 0
        %3156 = vmatprep.subr.bf16.mxu0 0
        %3157 = vmatpush1.bf16.msra.mxu0 0
        %3158 = vmatprep.subr.bf16.mxu0 0
        %3159 = vmatpush1.bf16.msra.mxu0 0
        %3160 = vmatprep.subr.bf16.mxu0 0
        %3161 = vmatpush1.bf16.msra.mxu0 0
        %3162 = vmatprep.subr.bf16.mxu0 0
        %3163 = vmatpush1.bf16.msra.mxu0 0
        %3164 = vmatprep.subr.bf16.mxu0 0
        %3165 = vmatpush1.bf16.msra.mxu0 0
        %3166 = vmatprep.subr.bf16.mxu0 0
        %3167 = vmatpush1.bf16.msra.mxu0 0
        %3168 = vmatprep.subr.bf16.mxu0 0
        %3169 = vmatpush1.bf16.msra.mxu0 0
        %3170 = vmatprep.subr.bf16.mxu0 0
        %3171 = vmatpush1.bf16.msra.mxu0 0
        %3172 = vmatprep.subr.bf16.mxu0 0
        %3173 = vmatpush1.bf16.msra.mxu0 0
        %3174 = vmatprep.subr.bf16.mxu0 0
        %3175 = vmatpush1.bf16.msra.mxu0 0
        %3176 = vmatprep.subr.bf16.mxu0 0
        %3177 = vmatpush1.bf16.msra.mxu0 0
        %3178 = vmatprep.subr.bf16.mxu0 0
        %3179 = vmatpush1.bf16.msra.mxu0 0
        %3180 = vmatprep.subr.bf16.mxu0 0
        %3181 = vmatpush1.bf16.msra.mxu0 0
        %3182 = vmatprep.mubr.bf16.mxu0 0
        %3183 = vmatmul.mubr.bf16.gmra.mrb[0].mxu0 %v3098
        %v3184 = vpop.f32.mrb[0].mxu0
        %v3185 = vadd.f32 0.0, %v3184
        %v3186 = vpop.f32.mrb[0].mxu0
        %v3187 = vpop.f32.mrb[0].mxu0
        %v3188 = vpop.f32.mrb[0].mxu0
        %3189 = vdwg.mxu0
        %v3190 = vadd.f32 %v3084, %v3144
        %v3191 = vadd.f32 %v3085, %v3146
        %v3192 = vadd.f32 %v3086, %v3185
        %s3193 = scalar_lea.vmem [#allocation15], 7
        %v3194 = vld [vmem:[%s3193] sm:$0x1]
        %3195 = vrot.lane.b32.xlu0 %v2466, 91
        %v3196 = vpop.permute.xlu0 %3195
        %3197 = vrot.lane.b32.xlu0 %v2467, 91
        %v3198 = vpop.permute.xlu0 %3197
        %3199 = vrot.lane.b32.xlu0 %v2468, 91
        %v3200 = vpop.permute.xlu0 %3199
        %v3201 = vsel %vm1171, %v3196, %v3198
        %v3202 = vsel %vm1171, %v3198, %v3200
        %v3204 = vsel %vm440, %v3194, 0
        %v3207 = vsel %vm444, %v3201, 0
        %v3210 = vsel %vm444, %v3202, 0
        %v3213 = vsel %vm444, %v3200, 0
        %3215 = vmatprep.subr.bf16.mxu0 %v3210
        %3216 = vmatpush1.bf16.msra.mxu0 %v3207
        %3217 = vmatprep.subr.bf16.mxu0 0
        %3218 = vmatpush1.bf16.msra.mxu0 0
        %3219 = vmatprep.subr.bf16.mxu0 0
        %3220 = vmatpush1.bf16.msra.mxu0 0
        %3221 = vmatprep.subr.bf16.mxu0 0
        %3222 = vmatpush1.bf16.msra.mxu0 0
        %3223 = vmatprep.subr.bf16.mxu0 0
        %3224 = vmatpush1.bf16.msra.mxu0 0
        %3225 = vmatprep.subr.bf16.mxu0 0
        %3226 = vmatpush1.bf16.msra.mxu0 0
        %3227 = vmatprep.subr.bf16.mxu0 0
        %3228 = vmatpush1.bf16.msra.mxu0 0
        %3229 = vmatprep.subr.bf16.mxu0 0
        %3230 = vmatpush1.bf16.msra.mxu0 0
        %3231 = vmatprep.subr.bf16.mxu0 0
        %3232 = vmatpush1.bf16.msra.mxu0 0
        %3233 = vmatprep.subr.bf16.mxu0 0
        %3234 = vmatpush1.bf16.msra.mxu0 0
        %3235 = vmatprep.subr.bf16.mxu0 0
        %3236 = vmatpush1.bf16.msra.mxu0 0
        %3237 = vmatprep.subr.bf16.mxu0 0
        %3238 = vmatpush1.bf16.msra.mxu0 0
        %3239 = vmatprep.subr.bf16.mxu0 0
        %3240 = vmatpush1.bf16.msra.mxu0 0
        %3241 = vmatprep.subr.bf16.mxu0 0
        %3242 = vmatpush1.bf16.msra.mxu0 0
        %3243 = vmatprep.subr.bf16.mxu0 0
        %3244 = vmatpush1.bf16.msra.mxu0 0
        %3245 = vmatprep.subr.bf16.mxu0 0
        %3246 = vmatpush1.bf16.msra.mxu0 0
        %3247 = vmatprep.mubr.bf16.mxu0 0
        %3248 = vmatmul.mubr.bf16.gmra.mrb[0].mxu0 %v3204
        %v3249 = vpop.f32.mrb[0].mxu0
        %v3250 = vadd.f32 0.0, %v3249
        %v3251 = vpop.f32.mrb[0].mxu0
        %v3252 = vadd.f32 0.0, %v3251
        %v3253 = vpop.f32.mrb[0].mxu0
        %v3254 = vpop.f32.mrb[0].mxu0
        %3255 = vdwg.mxu0
        %3256 = vmatprep.subr.bf16.mxu0 0
        %3257 = vmatpush1.bf16.msra.mxu0 %v3213
        %3258 = vmatprep.subr.bf16.mxu0 0
        %3259 = vmatpush1.bf16.msra.mxu0 0
        %3260 = vmatprep.subr.bf16.mxu0 0
        %3261 = vmatpush1.bf16.msra.mxu0 0
        %3262 = vmatprep.subr.bf16.mxu0 0
        %3263 = vmatpush1.bf16.msra.mxu0 0
        %3264 = vmatprep.subr.bf16.mxu0 0
        %3265 = vmatpush1.bf16.msra.mxu0 0
        %3266 = vmatprep.subr.bf16.mxu0 0
        %3267 = vmatpush1.bf16.msra.mxu0 0
        %3268 = vmatprep.subr.bf16.mxu0 0
        %3269 = vmatpush1.bf16.msra.mxu0 0
        %3270 = vmatprep.subr.bf16.mxu0 0
        %3271 = vmatpush1.bf16.msra.mxu0 0
        %3272 = vmatprep.subr.bf16.mxu0 0
        %3273 = vmatpush1.bf16.msra.mxu0 0
        %3274 = vmatprep.subr.bf16.mxu0 0
        %3275 = vmatpush1.bf16.msra.mxu0 0
        %3276 = vmatprep.subr.bf16.mxu0 0
        %3277 = vmatpush1.bf16.msra.mxu0 0
        %3278 = vmatprep.subr.bf16.mxu0 0
        %3279 = vmatpush1.bf16.msra.mxu0 0
        %3280 = vmatprep.subr.bf16.mxu0 0
        %3281 = vmatpush1.bf16.msra.mxu0 0
        %3282 = vmatprep.subr.bf16.mxu0 0
        %3283 = vmatpush1.bf16.msra.mxu0 0
        %3284 = vmatprep.subr.bf16.mxu0 0
        %3285 = vmatpush1.bf16.msra.mxu0 0
        %3286 = vmatprep.subr.bf16.mxu0 0
        %3287 = vmatpush1.bf16.msra.mxu0 0
        %3288 = vmatprep.mubr.bf16.mxu0 0
        %3289 = vmatmul.mubr.bf16.gmra.mrb[0].mxu0 %v3204
        %v3290 = vpop.f32.mrb[0].mxu0
        %v3291 = vadd.f32 0.0, %v3290
        %v3292 = vpop.f32.mrb[0].mxu0
        %v3293 = vpop.f32.mrb[0].mxu0
        %v3294 = vpop.f32.mrb[0].mxu0
        %3295 = vdwg.mxu0
        %v3296 = vadd.f32 %v3190, %v3250
        %v3297 = vadd.f32 %v3191, %v3252
        %v3298 = vadd.f32 %v3192, %v3291
        %s3299 = scalar_lea.vmem [#allocation15], 8
        %v3300 = vld [vmem:[%s3299] sm:$0x1]
        %3301 = vrot.lane.b32.xlu0 %v2466, 90
        %v3302 = vpop.permute.xlu0 %3301
        %3303 = vrot.lane.b32.xlu0 %v2467, 90
        %v3304 = vpop.permute.xlu0 %3303
        %3305 = vrot.lane.b32.xlu0 %v2468, 90
        %v3306 = vpop.permute.xlu0 %3305
        %v3307 = vsel %vm1278, %v3302, %v3304
        %v3308 = vsel %vm1278, %v3304, %v3306
        %v3310 = vsel %vm440, %v3300, 0
        %v3313 = vsel %vm444, %v3307, 0
        %v3316 = vsel %vm444, %v3308, 0
        %v3319 = vsel %vm444, %v3306, 0
        %3321 = vmatprep.subr.bf16.mxu0 %v3316
        %3322 = vmatpush1.bf16.msra.mxu0 %v3313
        %3323 = vmatprep.subr.bf16.mxu0 0
        %3324 = vmatpush1.bf16.msra.mxu0 0
        %3325 = vmatprep.subr.bf16.mxu0 0
        %3326 = vmatpush1.bf16.msra.mxu0 0
        %3327 = vmatprep.subr.bf16.mxu0 0
        %3328 = vmatpush1.bf16.msra.mxu0 0
        %3329 = vmatprep.subr.bf16.mxu0 0
        %3330 = vmatpush1.bf16.msra.mxu0 0
        %3331 = vmatprep.subr.bf16.mxu0 0
        %3332 = vmatpush1.bf16.msra.mxu0 0
        %3333 = vmatprep.subr.bf16.mxu0 0
        %3334 = vmatpush1.bf16.msra.mxu0 0
        %3335 = vmatprep.subr.bf16.mxu0 0
        %3336 = vmatpush1.bf16.msra.mxu0 0
        %3337 = vmatprep.subr.bf16.mxu0 0
        %3338 = vmatpush1.bf16.msra.mxu0 0
        %3339 = vmatprep.subr.bf16.mxu0 0
        %3340 = vmatpush1.bf16.msra.mxu0 0
        %3341 = vmatprep.subr.bf16.mxu0 0
        %3342 = vmatpush1.bf16.msra.mxu0 0
        %3343 = vmatprep.subr.bf16.mxu0 0
        %3344 = vmatpush1.bf16.msra.mxu0 0
        %3345 = vmatprep.subr.bf16.mxu0 0
        %3346 = vmatpush1.bf16.msra.mxu0 0
        %3347 = vmatprep.subr.bf16.mxu0 0
        %3348 = vmatpush1.bf16.msra.mxu0 0
        %3349 = vmatprep.subr.bf16.mxu0 0
        %3350 = vmatpush1.bf16.msra.mxu0 0
        %3351 = vmatprep.subr.bf16.mxu0 0
        %3352 = vmatpush1.bf16.msra.mxu0 0
        %3353 = vmatprep.mubr.bf16.mxu0 0
        %3354 = vmatmul.mubr.bf16.gmra.mrb[0].mxu0 %v3310
        %v3355 = vpop.f32.mrb[0].mxu0
        %v3356 = vadd.f32 0.0, %v3355
        %v3357 = vpop.f32.mrb[0].mxu0
        %v3358 = vadd.f32 0.0, %v3357
        %v3359 = vpop.f32.mrb[0].mxu0
        %v3360 = vpop.f32.mrb[0].mxu0
        %3361 = vdwg.mxu0
        %3362 = vmatprep.subr.bf16.mxu0 0
        %3363 = vmatpush1.bf16.msra.mxu0 %v3319
        %3364 = vmatprep.subr.bf16.mxu0 0
        %3365 = vmatpush1.bf16.msra.mxu0 0
        %3366 = vmatprep.subr.bf16.mxu0 0
        %3367 = vmatpush1.bf16.msra.mxu0 0
        %3368 = vmatprep.subr.bf16.mxu0 0
        %3369 = vmatpush1.bf16.msra.mxu0 0
        %3370 = vmatprep.subr.bf16.mxu0 0
        %3371 = vmatpush1.bf16.msra.mxu0 0
        %3372 = vmatprep.subr.bf16.mxu0 0
        %3373 = vmatpush1.bf16.msra.mxu0 0
        %3374 = vmatprep.subr.bf16.mxu0 0
        %3375 = vmatpush1.bf16.msra.mxu0 0
        %3376 = vmatprep.subr.bf16.mxu0 0
        %3377 = vmatpush1.bf16.msra.mxu0 0
        %3378 = vmatprep.subr.bf16.mxu0 0
        %3379 = vmatpush1.bf16.msra.mxu0 0
        %3380 = vmatprep.subr.bf16.mxu0 0
        %3381 = vmatpush1.bf16.msra.mxu0 0
        %3382 = vmatprep.subr.bf16.mxu0 0
        %3383 = vmatpush1.bf16.msra.mxu0 0
        %3384 = vmatprep.subr.bf16.mxu0 0
        %3385 = vmatpush1.bf16.msra.mxu0 0
        %3386 = vmatprep.subr.bf16.mxu0 0
        %3387 = vmatpush1.bf16.msra.mxu0 0
        %3388 = vmatprep.subr.bf16.mxu0 0
        %3389 = vmatpush1.bf16.msra.mxu0 0
        %3390 = vmatprep.subr.bf16.mxu0 0
        %3391 = vmatpush1.bf16.msra.mxu0 0
        %3392 = vmatprep.subr.bf16.mxu0 0
        %3393 = vmatpush1.bf16.msra.mxu0 0
        %3394 = vmatprep.mubr.bf16.mxu0 0
        %3395 = vmatmul.mubr.bf16.gmra.mrb[0].mxu0 %v3310
        %v3396 = vpop.f32.mrb[0].mxu0
        %v3397 = vadd.f32 0.0, %v3396
        %v3398 = vpop.f32.mrb[0].mxu0
        %v3399 = vpop.f32.mrb[0].mxu0
        %v3400 = vpop.f32.mrb[0].mxu0
        %3401 = vdwg.mxu0
        %v3402 = vadd.f32 %v3296, %v3356
        %v3403 = vadd.f32 %v3297, %v3358
        %v3404 = vadd.f32 %v3298, %v3397
        %v3405 = vld [vmem:[#allocation16] sm:$0x3]
        %3407 = vset.pattern.permute.xlu0 0
        %3408 = vperm.xlu0 %3407, %v3405
        %v3409 = vpop.permute.xlu0 %3408
        %v3411 = vadd.f32 %v3402, %v3409
        %v3412 = vadd.f32 %v3403, %v3409
        %v3413 = vadd.f32 %v3404, %v3409
        %v3414 = vxor.u32 %v3411, 2147483648
        %v3415 = vxor.u32 %v3412, 2147483648
        %v3416 = vxor.u32 %v3413, 2147483648
        %v3417 = vmul.f32 %v3414, 1.442695
        %v3418 = vpow.pop %v3417
        %v3419 = vmul.f32 %v3415, 1.442695
        %v3420 = vpow.pop %v3419
        %v3421 = vmul.f32 %v3416, 1.442695
        %v3422 = vpow.pop %v3421
        %v3423 = vadd.f32 %v3418, 1.0
        %v3424 = vadd.f32 %v3420, 1.0
        %v3425 = vadd.f32 %v3422, 1.0
        %v3426 = vrcp.pop %v3423
        %v3427 = vmul.f32 1.0, %v3426
        %v3428 = vrcp.pop %v3424
        %v3429 = vmul.f32 1.0, %v3428
        %v3430 = vrcp.pop %v3425
        %v3431 = vmul.f32 1.0, %v3430
        %v3432 = vmul.f32 %v3427, 0.3
        %v3433 = vmul.f32 %v3429, 0.3
        %v3434 = vmul.f32 %v3431, 0.3
        %v3435 = vmul.f32 %v3432, %v1408
        %v3436 = vmul.f32 %v3433, %v1412
        %v3437 = vmul.f32 %v3434, %v1416
        %vm3438 = vcmask 1041408
        %vm3439 = vcmask 1043458
        %vm3440 = vmor %vm3439, %vm3438
        %vm3441 = vcmask 553988
        %vm3442 = vmor %vm3441, %vm3440
        %3443 = vst.msk [vmem:[%s415] sm:$0x3f] %vm3442, 0.0
        %v3447 = vcombine.low %v3435, %v3436
        %v3449 = vunpack.c.l.s4 1983009808
        %v3450 = vunpack.c.0.s8 %v3449
        %v3451 = vlaneseq
        %v3452 = vshrl.u32 %v3451, 7
        %v3453 = vsub.s32 %v3450, %v3452
        %v3454 = vrot.slane %v3447, %v3453
        %v3456 = vunpack.c.l.s4 1983009808
        %v3457 = vunpack.c.0.s8 %v3456
        %v3458 = vlaneseq
        %v3459 = vshrl.u32 %v3458, 7
        %v3460 = vsub.s32 %v3457, %v3459
        %v3461 = vrot.slane %v3437, %v3460
        %v3462 = vcombine.low %v3454, %v3461
        %3463 = vrot.lane.b32.xlu0 %v3462, 19
        %v3464 = vpop.permute.xlu0 %3463
        %v3465 = vrot.slane %v3464, 6
        %vm3466 = vcmask 154624
        %v3467 = vsel %vm3466, %v3465, %v3464
        %vm3469 = vcmask 1041560
        %vm3470 = vmor %vm3439, %vm3469
        %vm3471 = vcmask 398340
        %vm3472 = vmor %vm3471, %vm3470
        %3473 = vst.msk [vmem:[%s415] sm:$0x3f] %vm3472, %v3467
        %s3474 = sand.u32 %s210, 1
        %s3475 = scalar_lea.sflag [#allocation6], %s3474
        %s3476 = sand.u32 %s210, 1
        %s3477 = smul.addr %s3476, 6
        %s3478 = scalar_lea.vmem [#allocation18], %s3477
        // Predicated region
        $region85: #{distill_model_forward.9} parent=51 // pred_check
          %p3479 = pneg %p220
        $region86: #{distill_model_forward.9} parent=51 // pred_check_branch
          %3481 = sbr.rel (%p3479) target = $region88
        $region87: #{distill_model_forward.9} parent=51 // pred_region
          %s3483 = ssub.s32 96, 96
          %3484 = vsyncadd %s3475, %s3483
          %s3485 = smul.addr %s29, 3
          %s3486 = smul.addr %s3485, 32
          %s3487 = scalar_lea.hbm %s8, %s3486
          %s3489 = sshll.u32 %s3478, 4
          %s3490 = int_to_ptr.vmem [resolvable:$true] %s3489
          %3492 = dma.vmem_to_hbm [thread:$0]  %s3490, 96, %s3487, %s3475
        $region88: #{distill_model_forward.9} parent=51 // pred_fallthru
          _
      $region52: #{distill_model_forward.9} parent=5 // pred_fallthru
        _
      %p3493 = scmp.le.s32.totalorder 2, %s24
      // Predicated region
      $region89: #{distill_model_forward.9} parent=5 // pred_check
        %p3494 = pneg %p3493
      $region90: #{distill_model_forward.9} parent=5 // pred_check_branch
        %3496 = sbr.rel (%p3494) target = $region92
      $region91: #{distill_model_forward.9} parent=5 // pred_region
        %s3497 = ssub.s32 %s24, 2
        // Predicated region
        $region93: #{distill_model_forward.9} parent=91 // pred_check
          %p3498 = pneg %p226
        $region94: #{distill_model_forward.9} parent=91 // pred_check_branch
          %3500 = sbr.rel (%p3498) target = $region96
        $region95: #{distill_model_forward.9} parent=91 // pred_region
          %s3501 = sand.u32 %s211, 1
          %s3502 = scalar_lea.sflag [#allocation6], %s3501
          %s3503 = sand.u32 %s211, 1
          %s3504 = smul.addr %s3503, 6
          %s3505 = scalar_lea.vmem [#allocation18], %s3504
          %3506 = dma.done %s3502, 96
        $region96: #{distill_model_forward.9} parent=91 // pred_fallthru
          _
      $region92: #{distill_model_forward.9} parent=5 // pred_fallthru
        _
    $region6: #{distill_model_forward.9} parent=1 // loop_footer
      %s28 = sadd.s32 1, %s24
    $region7: #{distill_model_forward.9} parent=1 // loop_footer_branch
      %23 = sbr.rel target = $region3
    $region8: #{distill_model_forward.9} parent=1 // loop_exit
      _
    %3507 = vsyncpa [#allocation5], 1
    %s3508 = scalar_lea.sflag [#allocation5], 1
    %3509 = vsyncpa %s3508, 1
    %3510 = vsyncpa [#allocation8], 1
    %3511 = vsyncpa [#allocation11], 1
    %3512 = vsyncpa [#allocation14], 1
    %3513 = vsyncpa [#allocation17], 1
    %3514 = vsyncpa [#allocation6], 1
    %s3515 = scalar_lea.sflag [#allocation6], 1
    %3516 = vsyncpa %s3515, 1

</llo_original>
